<compile_context>
chip_gen: v7x
topology: tpu7x:2x2x1
jax: 0.10.0
libtpu: 0.0.40
codegen_flags: <defaults>
</compile_context>

<pallas_src>
import functools

import jax
import jax.numpy as jnp
from jax import lax
from jax.experimental import pallas as pl
from jax.experimental.pallas import tpu as pltpu


_VMEM_LIMIT = 32 * 1024 * 1024
_LN_EPS = 1e-5


# ---------------------------------------------------------------------------
# Tiling helpers (static shapes only)
# ---------------------------------------------------------------------------

def _rup(x, m):
    return (x + m - 1) // m * m


def _tile_n(N):
    if N % 256 == 0:
        return 256
    if N % 128 == 0:
        return 128
    if N <= 512:
        return N            # full-dim block (allowed even if not 128-aligned)
    return None             # needs padding


def _tile_k(K):
    for t in (512, 256, 128):
        if K % t == 0:
            return t
    if K <= 1024:
        return K
    return None


def _tile_m(M, n_j_blocks):
    cands = [t for t in range(8, min(M, 256) + 1, 8) if M % t == 0]
    if not cands:
        return None
    if n_j_blocks >= 2:
        return max(cands)
    # keep >=2 i-blocks when possible so both v7x TensorCores get work
    two = [t for t in cands if M // t >= 2]
    return max(two) if two else max(cands)


def _row_tile(R, cap=512):
    cands = [t for t in range(8, min(R, cap) + 1, 8) if R % t == 0]
    if not cands:
        return R
    two = [t for t in cands if R // t >= 2]
    return max(two) if two else max(cands)


# ---------------------------------------------------------------------------
# Pallas kernels
# ---------------------------------------------------------------------------

def _mm_kernel(a_ref, b_ref, s_ref, t_ref, o_ref, acc_ref):
    """bf16 x bf16 matmul, f32 VMEM accumulator, per-column affine epilogue."""
    @pl.when(pl.program_id(2) == 0)
    def _():
        acc_ref[...] = jnp.zeros_like(acc_ref)

    acc_ref[...] += jnp.dot(a_ref[...], b_ref[...],
                            preferred_element_type=jnp.float32)

    @pl.when(pl.program_id(2) == pl.num_programs(2) - 1)
    def _():
        y = acc_ref[...] * s_ref[...] + t_ref[...]
        o_ref[...] = y.astype(o_ref.dtype)


def _mm_ln_kernel(a_ref, b_ref, g_ref, be_ref, s_ref, t_ref, o_ref):
    """Row-LayerNorm fused as the matmul prologue (single full-K block)."""
    a = a_ref[...].astype(jnp.float32)
    mu = jnp.mean(a, axis=-1, keepdims=True)
    var = jnp.mean(jnp.square(a - mu), axis=-1, keepdims=True)
    an = (a - mu) * lax.rsqrt(var + _LN_EPS) * g_ref[...] + be_ref[...]
    acc = jnp.dot(an.astype(jnp.bfloat16), b_ref[...],
                  preferred_element_type=jnp.float32)
    y = acc * s_ref[...] + t_ref[...]
    o_ref[...] = y.astype(o_ref.dtype)


def _ln_kernel(x_ref, g_ref, b_ref, o_ref):
    x = x_ref[...].astype(jnp.float32)
    mu = jnp.mean(x, axis=-1, keepdims=True)
    var = jnp.mean(jnp.square(x - mu), axis=-1, keepdims=True)
    y = (x - mu) * lax.rsqrt(var + _LN_EPS) * g_ref[...] + b_ref[...]
    o_ref[...] = y.astype(o_ref.dtype)


def _attn_kernel(q_ref, k_ref, v_ref, o_ref):
    """All heads of one batch element; softmax scale already folded into q."""
    q = q_ref[0]                     # (heads, n, hd) bf16
    k = k_ref[0]
    v = v_ref[0]
    s = jnp.einsum('hqd,hkd->hqk', q, k, preferred_element_type=jnp.float32)
    m = jnp.max(s, axis=-1, keepdims=True)
    p = jnp.exp(s - m)
    l = jnp.sum(p, axis=-1, keepdims=True)
    o = jnp.einsum('hqk,hkd->hqd', p.astype(v.dtype), v,
                   preferred_element_type=jnp.float32)
    o_ref[0] = (o / l).astype(o_ref.dtype)


def _gate_fuse_kernel(a_ref, w_ref, bias_ref, x_ref, y_ref, r_ref, i_ref, o_ref):
    """g = sigmoid(a @ w + bias);  o = g*x + (1-g)*y + rgb + ir  (one pass)."""
    z = jnp.dot(a_ref[...], w_ref[...], preferred_element_type=jnp.float32)
    g = 1.0 / (1.0 + jnp.exp(-(z + bias_ref[...])))
    o_ref[...] = (g * x_ref[...] + (1.0 - g) * y_ref[...]
                  + r_ref[...] + i_ref[...]).astype(o_ref.dtype)


# ---------------------------------------------------------------------------
# Pallas wrappers (all called from inside one jax.jit)
# ---------------------------------------------------------------------------

def matmul_fused(a, b, *, shift=None, scale=None, ln=None,
                 out_dtype=jnp.float32):
    """epilogue(prologue(a) @ b).

    prologue: optional row LayerNorm of `a` over K  (ln = (gamma, beta)).
    epilogue: per-output-column  y = acc * scale + shift  (None -> 1 / 0).
    Weights `b` are bf16; activations are cast to bf16 only inside the MXU path.
    """
    M, K = a.shape
    Kb, N = b.shape
    assert K == Kb

    tn = _tile_n(N)
    Np = N if tn is not None else _rup(N, 128)
    tn = tn if tn is not None else 128

    s = jnp.ones((N,), jnp.float32) if scale is None else scale.astype(jnp.float32)
    t = jnp.zeros((N,), jnp.float32) if shift is None else shift.astype(jnp.float32)
    bm = b.astype(jnp.bfloat16)
    if Np != N:
        bm = jnp.pad(bm, ((0, 0), (0, Np - N)))
        s = jnp.pad(s, (0, Np - N))
        t = jnp.pad(t, (0, Np - N))
    s = s.reshape(1, Np)
    t = t.reshape(1, Np)

    n_j = Np // tn
    tm = _tile_m(M, n_j)
    Mp = M if tm is not None else _rup(M, 8)
    if tm is None:
        tm = _tile_m(Mp, n_j)

    if ln is not None:
        # K stays whole so the row statistics are exact; A enters VMEM as f32.
        am = a.astype(jnp.float32)
        if Mp != M:
            am = jnp.pad(am, ((0, Mp - M), (0, 0)))
        g = ln[0].astype(jnp.float32).reshape(1, K)
        be = ln[1].astype(jnp.float32).reshape(1, K)
        out = pl.pallas_call(
            _mm_ln_kernel,
            out_shape=jax.ShapeDtypeStruct((Mp, Np), out_dtype),
            grid_spec=pltpu.PrefetchScalarGridSpec(
                num_scalar_prefetch=0,
                grid=(Mp // tm, n_j),
                in_specs=[pl.BlockSpec((tm, K), lambda i, j: (i, 0)),
                          pl.BlockSpec((K, tn), lambda i, j: (0, j)),
                          pl.BlockSpec((1, K), lambda i, j: (0, 0)),
                          pl.BlockSpec((1, K), lambda i, j: (0, 0)),
                          pl.BlockSpec((1, tn), lambda i, j: (0, j)),
                          pl.BlockSpec((1, tn), lambda i, j: (0, j))],
                out_specs=pl.BlockSpec((tm, tn), lambda i, j: (i, j))),
            compiler_params=pltpu.CompilerParams(
                dimension_semantics=("parallel", "parallel"),
                vmem_limit_bytes=_VMEM_LIMIT),
        )(am, bm, g, be, s, t)
    else:
        tk = _tile_k(K)
        Kp = K if tk is not None else _rup(K, 128)
        tk = tk if tk is not None else 512
        am = a.astype(jnp.bfloat16)
        if (Mp, Kp) != (M, K):
            am = jnp.pad(am, ((0, Mp - M), (0, Kp - K)))
        if Kp != K:
            bm = jnp.pad(bm, ((0, Kp - K), (0, 0)))
        out = pl.pallas_call(
            _mm_kernel,
            out_shape=jax.ShapeDtypeStruct((Mp, Np), out_dtype),
            grid_spec=pltpu.PrefetchScalarGridSpec(
                num_scalar_prefetch=0,
                grid=(Mp // tm, n_j, Kp // tk),
                in_specs=[pl.BlockSpec((tm, tk), lambda i, j, k: (i, k)),
                          pl.BlockSpec((tk, tn), lambda i, j, k: (k, j)),
                          pl.BlockSpec((1, tn), lambda i, j, k: (0, j)),
                          pl.BlockSpec((1, tn), lambda i, j, k: (0, j))],
                out_specs=pl.BlockSpec((tm, tn), lambda i, j, k: (i, j)),
                scratch_shapes=[pltpu.VMEM((tm, tn), jnp.float32)]),
            compiler_params=pltpu.CompilerParams(
                dimension_semantics=("parallel", "parallel", "arbitrary"),
                vmem_limit_bytes=_VMEM_LIMIT),
        )(am, bm, s, t)

    if (Mp, Np) != (M, N):
        out = out[:M, :N]
    return out


def layernorm_pallas(x2d, gamma, beta, out_dtype=jnp.float32):
    R, C = x2d.shape
    tr = _row_tile(R)
    return pl.pallas_call(
        _ln_kernel,
        out_shape=jax.ShapeDtypeStruct((R, C), out_dtype),
        grid_spec=pltpu.PrefetchScalarGridSpec(
            num_scalar_prefetch=0,
            grid=(R // tr,),
            in_specs=[pl.BlockSpec((tr, C), lambda i: (i, 0)),
                      pl.BlockSpec((1, C), lambda i: (0, 0)),
                      pl.BlockSpec((1, C), lambda i: (0, 0))],
            out_specs=pl.BlockSpec((tr, C), lambda i: (i, 0))),
        compiler_params=pltpu.CompilerParams(
            dimension_semantics=("parallel",),
            vmem_limit_bytes=_VMEM_LIMIT),
    )(x2d, gamma.reshape(1, C).astype(jnp.float32),
      beta.reshape(1, C).astype(jnp.float32))


def attention_pallas(q, k, v):
    """softmax(q k^T) v per (batch, head); q is pre-scaled. Inputs (B, h, n, d)."""
    B, h, n, d = q.shape
    spec = pl.BlockSpec((1, h, n, d), lambda b: (b, 0, 0, 0))
    return pl.pallas_call(
        _attn_kernel,
        out_shape=jax.ShapeDtypeStruct((B, h, n, d), jnp.bfloat16),
        grid_spec=pltpu.PrefetchScalarGridSpec(
            num_scalar_prefetch=0,
            grid=(B,),
            in_specs=[spec, spec, spec],
            out_specs=spec),
        compiler_params=pltpu.CompilerParams(
            dimension_semantics=("parallel",),
            vmem_limit_bytes=_VMEM_LIMIT),
    )(q.astype(jnp.bfloat16), k.astype(jnp.bfloat16), v.astype(jnp.bfloat16))


def gated_fuse_pallas(xo, yo, rgb_t, ir_t, w, bias):
    """Fusion head: g = sigmoid(cat(xo, yo) @ w + b); out = g*xo + (1-g)*yo + rgb + ir."""
    B, S, C = xo.shape
    M = B * S
    a = jnp.concatenate([xo, yo], axis=-1).reshape(M, 2 * C).astype(jnp.bfloat16)
    x2 = xo.reshape(M, C).astype(jnp.float32)
    y2 = yo.reshape(M, C).astype(jnp.float32)
    r2 = rgb_t.reshape(M, C).astype(jnp.float32)
    i2 = ir_t.reshape(M, C).astype(jnp.float32)
    tm = _row_tile(M, cap=256)
    row = lambda i: (i, 0)
    out = pl.pallas_call(
        _gate_fuse_kernel,
        out_shape=jax.ShapeDtypeStruct((M, C), jnp.float32),
        grid_spec=pltpu.PrefetchScalarGridSpec(
            num_scalar_prefetch=0,
            grid=(M // tm,),
            in_specs=[pl.BlockSpec((tm, 2 * C), row),
                      pl.BlockSpec((2 * C, C), lambda i: (0, 0)),
                      pl.BlockSpec((1, C), lambda i: (0, 0)),
                      pl.BlockSpec((tm, C), row),
                      pl.BlockSpec((tm, C), row),
                      pl.BlockSpec((tm, C), row),
                      pl.BlockSpec((tm, C), row)],
            out_specs=pl.BlockSpec((tm, C), row)),
        compiler_params=pltpu.CompilerParams(
            dimension_semantics=("parallel",),
            vmem_limit_bytes=_VMEM_LIMIT),
    )(a, w.astype(jnp.bfloat16), bias.reshape(1, C).astype(jnp.float32),
      x2, y2, r2, i2)
    return out.reshape(B, S, C)


# ---------------------------------------------------------------------------
# Module forward
# ---------------------------------------------------------------------------

def mhsa_fwd(p, x, heads):
    """Pre-norm multi-head self-attention; LN fused into the qkv matmul prologue."""
    B, T, D = x.shape
    hd = D // heads
    qkv = matmul_fused(x.reshape(B * T, D), p['wqkv'],
                       ln=(p['ln1_g'], p['ln1_b']),
                       out_dtype=jnp.bfloat16)                        # (B*T, 3D)
    qkv = qkv.reshape(B, T, 3, heads, hd).transpose(2, 0, 3, 1, 4)     # (3, B, h, T, hd)
    scale = float(hd) ** -0.5
    q = (qkv[0].astype(jnp.float32) * scale).astype(jnp.bfloat16)      # fold softmax scale into q
    k, v = qkv[1], qkv[2]
    o = attention_pallas(q, k, v)                                      # (B, h, T, hd) bf16
    o = o.transpose(0, 2, 1, 3).reshape(B * T, D)
    o = matmul_fused(o, p['wproj'], shift=p['bproj'], out_dtype=jnp.float32)
    return o.reshape(B, T, D)


def transformer_layer_fwd(p, x, heads):
    B, T, D = x.shape
    x = x + mhsa_fwd(p, x, heads)                                      # dropout: eval -> identity
    h = matmul_fused(x.reshape(B * T, D), p['wfc1'],
                     ln=(p['ln2_g'], p['ln2_b']), shift=p['bfc1'],
                     out_dtype=jnp.bfloat16)
    # TODO(synk): exact-erf GELU stays in (jitted) XLA glue; erf lowering inside Mosaic is not guaranteed.
    h = jax.nn.gelu(h.astype(jnp.float32), approximate=False)
    h = matmul_fused(h, p['wfc2'], shift=p['bfc2'], out_dtype=jnp.float32)
    return x + h.reshape(B, T, D)


def transformerfusion_forward(P, rgb, ir, *, heads):
    B, C, H, W = rgb.shape
    hw = H * W
    # permute(0,2,3,1).view(B,-1,C).permute(0,2,1)  ==  reshape(B, C, H*W)
    x = rgb.reshape(B, C, hw) + P['pos_rgb']
    y = ir.reshape(B, C, hw) + P['pos_ir']
    for lp in P['tr_rgb']:
        x = transformer_layer_fwd(lp, x, heads)
    for lp in P['tr_ir']:
        y = transformer_layer_fwd(lp, y, heads)

    # rgb branch: the original module computes pre_head_ln(x) and then discards it
    # (x_output keeps the un-normalised activations) -> not computed here.
    xo = jnp.transpose(x, (0, 2, 1))                                    # (B, hw, C)
    yo = layernorm_pallas(jnp.transpose(y, (0, 2, 1)).reshape(B * hw, C),
                          P['phln_g'], P['phln_b']).reshape(B, hw, C)   # ir branch IS normalised

    rgb_t = jnp.transpose(rgb.reshape(B, C, hw), (0, 2, 1))
    ir_t = jnp.transpose(ir.reshape(B, C, hw), (0, 2, 1))
    # TODO(synk): the Attention(dim=c) fusion head is not defined in the provided spec;
    # implemented as a sigmoid-gated 1x1-conv fusion (g = sigmoid(Conv1x1(cat(x, y))),
    # fuse = g*x + (1-g)*y) with the final "+ rgb + ir" residual fused into the same kernel.
    out = gated_fuse_pallas(xo, yo, rgb_t, ir_t, P['attn_w'], P['attn_b'])
    return jnp.transpose(out, (0, 2, 1)).reshape(B, C, H, W)


# ---------------------------------------------------------------------------
# Deterministic synthetic parameter init (eval-mode module)
# ---------------------------------------------------------------------------

class KeyGen:
    def __init__(self, key):
        self.key = key

    def __call__(self):
        self.key, sub = jax.random.split(self.key)
        return sub


def _init_linear_w(kg, din, dout):
    # weights stored pre-cast to bf16 (MXU-native); biases stay f32 in the epilogue
    return (jax.random.normal(kg(), (din, dout), jnp.float32)
            / jnp.sqrt(din)).astype(jnp.bfloat16)


def init_transformer_layer(kg, dim, mlp_dim):
    return {'ln1_g': jnp.ones((dim,), jnp.float32),
            'ln1_b': jnp.zeros((dim,), jnp.float32),
            'wqkv': _init_linear_w(kg, dim, 3 * dim),        # qkv_bias=False (TransBTS-style)
            'wproj': _init_linear_w(kg, dim, dim),
            'bproj': jnp.zeros((dim,), jnp.float32),
            'ln2_g': jnp.ones((dim,), jnp.float32),
            'ln2_b': jnp.zeros((dim,), jnp.float32),
            'wfc1': _init_linear_w(kg, dim, mlp_dim),
            'bfc1': jnp.zeros((mlp_dim,), jnp.float32),
            'wfc2': _init_linear_w(kg, mlp_dim, dim),
            'bfc2': jnp.zeros((dim,), jnp.float32)}


def init_params(key, B, C, hw, depth=4, mlp_dim=1024):
    kg = KeyGen(key)
    return {
        # LearnedPositionalEncoding: nn.Parameter(torch.zeros(b, c, hw))
        'pos_rgb': jnp.zeros((B, C, hw), jnp.float32),
        'pos_ir': jnp.zeros((B, C, hw), jnp.float32),
        'tr_rgb': [init_transformer_layer(kg, hw, mlp_dim) for _ in range(depth)],
        'tr_ir': [init_transformer_layer(kg, hw, mlp_dim) for _ in range(depth)],
        'phln_g': jnp.ones((C,), jnp.float32),               # pre_head_ln (shared)
        'phln_b': jnp.zeros((C,), jnp.float32),
        'attn_w': _init_linear_w(kg, 2 * C, C),               # fusion-head 1x1 conv
        'attn_b': jnp.zeros((C,), jnp.float32),
    }


# ---------------------------------------------------------------------------
# Main
# ---------------------------------------------------------------------------

if __name__ == "__main__":
    # heads=10 is hard-coded in the reference module and the transformer
    # embedding dim is H*W, so H*W must be a multiple of 10.
    B, C, H, W = 2, 64, 8, 20            # rgb / ir: (B, C, H, W); hw=160, head_dim=16
    HEADS, DEPTH, MLP = 10, 4, 1024      # hard-coded in the reference module

    kx, ky, kp = jax.random.split(jax.random.PRNGKey(0), 3)
    rgb = jax.random.normal(kx, (B, C, H, W), jnp.float32)
    ir = jax.random.normal(ky, (B, C, H, W), jnp.float32)
    params = init_params(kp, B, C, H * W, depth=DEPTH, mlp_dim=MLP)

    fwd = jax.jit(functools.partial(transformerfusion_forward, heads=HEADS))
    out = jax.block_until_ready(fwd(params, rgb, ir))

    assert out.shape == (B, C, H, W), out.shape
    assert bool(jnp.all(jnp.isfinite(out)))
    print("KERNEL_OK")
</pallas_src>

<mosaic_0001>
module attributes {stable_mosaic.version = 11 : i64} {
  func.func @_mm_ln_kernel(%arg0: i32, %arg1: i32, %arg2: memref<64x160xf32, #tpu.memory_space<vmem>>, %arg3: memref<160x480xbf16, #tpu.memory_space<vmem>>, %arg4: memref<1x160xf32, #tpu.memory_space<vmem>>, %arg5: memref<1x160xf32, #tpu.memory_space<vmem>>, %arg6: memref<1x480xf32, #tpu.memory_space<vmem>>, %arg7: memref<1x480xf32, #tpu.memory_space<vmem>>, %arg8: memref<64x480xbf16, #tpu.memory_space<vmem>>) attributes {dimension_semantics = [#tpu.dimension_semantics<parallel>, #tpu.dimension_semantics<parallel>], iteration_bounds = array<i64: 2, 1>, scalar_prefetch = 0 : i64, scratch_operands = 0 : i64, tpu.core_type = #tpu.core_type<tc>, window_params = [{transform_indices = @transform_0, window_bounds = array<i64: 64, 160>}, {transform_indices = @transform_1, window_bounds = array<i64: 160, 480>}, {pipeline_mode = #tpu.pipeline_mode<synchronous>, transform_indices = @transform_2, window_bounds = array<i64: 1, 160>}, {pipeline_mode = #tpu.pipeline_mode<synchronous>, transform_indices = @transform_3, window_bounds = array<i64: 1, 160>}, {transform_indices = @transform_4, window_bounds = array<i64: 1, 480>}, {transform_indices = @transform_5, window_bounds = array<i64: 1, 480>}, {transform_indices = @transform_6, window_bounds = array<i64: 64, 480>}]} {
    %c0 = arith.constant 0 : index
    %c0_0 = arith.constant 0 : index
    %0 = vector.load %arg2[%c0, %c0_0] : memref<64x160xf32, #tpu.memory_space<vmem>>, vector<64x160xf32>
    %cst = arith.constant dense<0.000000e+00> : vector<64xf32>
    %1 = vector.multi_reduction <add>, %0, %cst [1] : vector<64x160xf32> to vector<64xf32>
    %2 = vector.shape_cast %1 : vector<64xf32> to vector<64x1xf32>
    %cst_1 = arith.constant 1.600000e+02 : f32
    %3 = vector.broadcast %cst_1 : f32 to vector<64x1xf32>
    %4 = arith.divf %2, %3 : vector<64x1xf32>
    %5 = vector.broadcast %4 : vector<64x1xf32> to vector<64x160xf32>
    %6 = arith.subf %0, %5 : vector<64x160xf32>
    %7 = arith.mulf %6, %6 : vector<64x160xf32>
    %cst_2 = arith.constant dense<0.000000e+00> : vector<64xf32>
    %8 = vector.multi_reduction <add>, %7, %cst_2 [1] : vector<64x160xf32> to vector<64xf32>
    %9 = vector.shape_cast %8 : vector<64xf32> to vector<64x1xf32>
    %cst_3 = arith.constant 1.600000e+02 : f32
    %10 = vector.broadcast %cst_3 : f32 to vector<64x1xf32>
    %11 = arith.divf %9, %10 : vector<64x1xf32>
    %12 = vector.broadcast %4 : vector<64x1xf32> to vector<64x160xf32>
    %13 = arith.subf %0, %12 : vector<64x160xf32>
    %cst_4 = arith.constant 9.99999974E-6 : f32
    %14 = vector.broadcast %cst_4 : f32 to vector<64x1xf32>
    %15 = arith.addf %11, %14 : vector<64x1xf32>
    %16 = math.rsqrt %15 : vector<64x1xf32>
    %17 = vector.broadcast %16 : vector<64x1xf32> to vector<64x160xf32>
    %18 = arith.mulf %13, %17 : vector<64x160xf32>
    %c0_5 = arith.constant 0 : index
    %c0_6 = arith.constant 0 : index
    %19 = vector.load %arg4[%c0_5, %c0_6] : memref<1x160xf32, #tpu.memory_space<vmem>>, vector<1x160xf32>
    %20 = vector.broadcast %19 : vector<1x160xf32> to vector<64x160xf32>
    %21 = arith.mulf %18, %20 : vector<64x160xf32>
    %c0_7 = arith.constant 0 : index
    %c0_8 = arith.constant 0 : index
    %22 = vector.load %arg5[%c0_7, %c0_8] : memref<1x160xf32, #tpu.memory_space<vmem>>, vector<1x160xf32>
    %23 = vector.broadcast %22 : vector<1x160xf32> to vector<64x160xf32>
    %24 = arith.addf %21, %23 : vector<64x160xf32>
    %25 = arith.truncf %24 : vector<64x160xf32> to vector<64x160xbf16>
    %c0_9 = arith.constant 0 : index
    %c0_10 = arith.constant 0 : index
    %26 = vector.load %arg3[%c0_9, %c0_10] : memref<160x480xbf16, #tpu.memory_space<vmem>>, vector<160x480xbf16>
    %cst_11 = arith.constant dense<0.000000e+00> : vector<64x480xf32>
    %27 = tpu.matmul %25, %26, %cst_11 {dimension_numbers = #tpu.dot_dimension_numbers<[1], [0], [0], [1], [0, 0, 1, 1], [], []>} : vector<64x160xbf16>, vector<160x480xbf16>, vector<64x480xf32> -> vector<64x480xf32>
    %c0_12 = arith.constant 0 : index
    %c0_13 = arith.constant 0 : index
    %28 = vector.load %arg6[%c0_12, %c0_13] : memref<1x480xf32, #tpu.memory_space<vmem>>, vector<1x480xf32>
    %29 = vector.broadcast %28 : vector<1x480xf32> to vector<64x480xf32>
    %30 = arith.mulf %27, %29 : vector<64x480xf32>
    %c0_14 = arith.constant 0 : index
    %c0_15 = arith.constant 0 : index
    %31 = vector.load %arg7[%c0_14, %c0_15] : memref<1x480xf32, #tpu.memory_space<vmem>>, vector<1x480xf32>
    %32 = vector.broadcast %31 : vector<1x480xf32> to vector<64x480xf32>
    %33 = arith.addf %30, %32 : vector<64x480xf32>
    %34 = arith.truncf %33 : vector<64x480xf32> to vector<64x480xbf16>
    %c0_16 = arith.constant 0 : index
    %c0_17 = arith.constant 0 : index
    %35 = vector.load %arg8[%c0_16, %c0_17] : memref<64x480xbf16, #tpu.memory_space<vmem>>, vector<64x480xbf16>
    tpu.vector_store %arg8[%c0_16, %c0_17], %34 {strides = array<i32>} : memref<64x480xbf16, #tpu.memory_space<vmem>>, vector<64x480xbf16>,
    return
  }
  func.func @transform_0(%arg0: i32, %arg1: i32) -> (i32, i32) {
    %c0_i32 = arith.constant 0 : i32
    %c0_i32_0 = arith.constant 0 : i32
    return %arg0, %c0_i32 : i32, i32
  }
  func.func @transform_1(%arg0: i32, %arg1: i32) -> (i32, i32) {
    %c0_i32 = arith.constant 0 : i32
    %c0_i32_0 = arith.constant 0 : i32
    return %c0_i32, %arg1 : i32, i32
  }
  func.func @transform_2(%arg0: i32, %arg1: i32) -> (i32, i32) {
    %c0_i32 = arith.constant 0 : i32
    %c0_i32_0 = arith.constant 0 : i32
    %c0_i32_1 = arith.constant 0 : i32
    return %c0_i32, %c0_i32_0 : i32, i32
  }
  func.func @transform_3(%arg0: i32, %arg1: i32) -> (i32, i32) {
    %c0_i32 = arith.constant 0 : i32
    %c0_i32_0 = arith.constant 0 : i32
    %c0_i32_1 = arith.constant 0 : i32
    return %c0_i32, %c0_i32_0 : i32, i32
  }
  func.func @transform_4(%arg0: i32, %arg1: i32) -> (i32, i32) {
    %c0_i32 = arith.constant 0 : i32
    %c0_i32_0 = arith.constant 0 : i32
    return %c0_i32, %arg1 : i32, i32
  }
  func.func @transform_5(%arg0: i32, %arg1: i32) -> (i32, i32) {
    %c0_i32 = arith.constant 0 : i32
    %c0_i32_0 = arith.constant 0 : i32
    return %c0_i32, %arg1 : i32, i32
  }
  func.func @transform_6(%arg0: i32, %arg1: i32) -> (i32, i32) {
    %c0_i32 = arith.constant 0 : i32
    return %arg0, %arg1 : i32, i32
  }
}

module attributes {stable_mosaic.version = 11 : i64} {
  func.func @_attn_kernel(%arg0: i32, %arg1: memref<1x10x64x16xbf16, #tpu.memory_space<vmem>>, %arg2: memref<1x10x64x16xbf16, #tpu.memory_space<vmem>>, %arg3: memref<1x10x64x16xbf16, #tpu.memory_space<vmem>>, %arg4: memref<1x10x64x16xbf16, #tpu.memory_space<vmem>>) attributes {dimension_semantics = [#tpu.dimension_semantics<parallel>], iteration_bounds = array<i64: 2>, scalar_prefetch = 0 : i64, scratch_operands = 0 : i64, tpu.core_type = #tpu.core_type<tc>, window_params = [{transform_indices = @transform_0, window_bounds = array<i64: 1, 10, 64, 16>}, {transform_indices = @transform_1, window_bounds = array<i64: 1, 10, 64, 16>}, {transform_indices = @transform_2, window_bounds = array<i64: 1, 10, 64, 16>}, {transform_indices = @transform_3, window_bounds = array<i64: 1, 10, 64, 16>}]} {
    %c0 = arith.constant 0 : index
    %c0_0 = arith.constant 0 : index
    %c0_1 = arith.constant 0 : index
    %c0_2 = arith.constant 0 : index
    %0 = vector.load %arg1[%c0, %c0_0, %c0_1, %c0_2] : memref<1x10x64x16xbf16, #tpu.memory_space<vmem>>, vector<1x10x64x16xbf16>
    %1 = vector.shape_cast %0 : vector<1x10x64x16xbf16> to vector<10x64x16xbf16>
    %c0_3 = arith.constant 0 : index
    %c0_4 = arith.constant 0 : index
    %c0_5 = arith.constant 0 : index
    %c0_6 = arith.constant 0 : index
    %2 = vector.load %arg2[%c0_3, %c0_4, %c0_5, %c0_6] : memref<1x10x64x16xbf16, #tpu.memory_space<vmem>>, vector<1x10x64x16xbf16>
    %3 = vector.shape_cast %2 : vector<1x10x64x16xbf16> to vector<10x64x16xbf16>
    %c0_7 = arith.constant 0 : index
    %c0_8 = arith.constant 0 : index
    %c0_9 = arith.constant 0 : index
    %c0_10 = arith.constant 0 : index
    %4 = vector.load %arg3[%c0_7, %c0_8, %c0_9, %c0_10] : memref<1x10x64x16xbf16, #tpu.memory_space<vmem>>, vector<1x10x64x16xbf16>
    %5 = vector.shape_cast %4 : vector<1x10x64x16xbf16> to vector<10x64x16xbf16>
    "tpu.trace_start"() <{level = 10 : i32, message = "hqd,hkd->hqk"}> : () -> ()
    %cst = arith.constant dense<0.000000e+00> : vector<10x64x64xf32>
    %6 = tpu.matmul %1, %3, %cst {dimension_numbers = #tpu.dot_dimension_numbers<[2], [2], [1], [1], [0, 0, 0, 1, 1, 1], [0], [0]>} : vector<10x64x16xbf16>, vector<10x64x16xbf16>, vector<10x64x64xf32> -> vector<10x64x64xf32>
    "tpu.trace_stop"() : () -> ()
    %cst_11 = arith.constant dense<0xFF800000> : vector<10x64xf32>
    %7 = vector.multi_reduction <maximumf>, %6, %cst_11 [2] : vector<10x64x64xf32> to vector<10x64xf32>
    %8 = vector.shape_cast %7 : vector<10x64xf32> to vector<10x64x1xf32>
    %9 = vector.broadcast %8 : vector<10x64x1xf32> to vector<10x64x64xf32>
    %10 = arith.subf %6, %9 : vector<10x64x64xf32>
    %11 = math.exp %10 : vector<10x64x64xf32>
    %cst_12 = arith.constant dense<0.000000e+00> : vector<10x64xf32>
    %12 = vector.multi_reduction <add>, %11, %cst_12 [2] : vector<10x64x64xf32> to vector<10x64xf32>
    %13 = vector.shape_cast %12 : vector<10x64xf32> to vector<10x64x1xf32>
    %14 = arith.truncf %11 : vector<10x64x64xf32> to vector<10x64x64xbf16>
    "tpu.trace_start"() <{level = 10 : i32, message = "hqk,hkd->hqd"}> : () -> ()
    %cst_13 = arith.constant dense<0.000000e+00> : vector<10x64x16xf32>
    %15 = tpu.matmul %14, %5, %cst_13 {dimension_numbers = #tpu.dot_dimension_numbers<[2], [1], [1], [2], [0, 0, 0, 1, 1, 2], [0], [0]>} : vector<10x64x64xbf16>, vector<10x64x16xbf16>, vector<10x64x16xf32> -> vector<10x64x16xf32>
    "tpu.trace_stop"() : () -> ()
    %16 = vector.broadcast %13 : vector<10x64x1xf32> to vector<10x64x16xf32>
    %17 = arith.divf %15, %16 : vector<10x64x16xf32>
    %18 = arith.truncf %17 : vector<10x64x16xf32> to vector<10x64x16xbf16>
    %c0_14 = arith.constant 0 : index
    %c0_15 = arith.constant 0 : index
    %c0_16 = arith.constant 0 : index
    %c0_17 = arith.constant 0 : index
    %19 = vector.load %arg4[%c0_14, %c0_15, %c0_16, %c0_17] : memref<1x10x64x16xbf16, #tpu.memory_space<vmem>>, vector<1x10x64x16xbf16>
    %20 = vector.shape_cast %19 : vector<1x10x64x16xbf16> to vector<10x64x16xbf16>
    %21 = vector.shape_cast %18 : vector<10x64x16xbf16> to vector<1x10x64x16xbf16>
    tpu.vector_store %arg4[%c0_14, %c0_15, %c0_16, %c0_17], %21 {strides = array<i32>} : memref<1x10x64x16xbf16, #tpu.memory_space<vmem>>, vector<1x10x64x16xbf16>,
    return
  }
  func.func @transform_0(%arg0: i32) -> (i32, i32, i32, i32) {
    %c0_i32 = arith.constant 0 : i32
    %c0_i32_0 = arith.constant 0 : i32
    %c0_i32_1 = arith.constant 0 : i32
    %c0_i32_2 = arith.constant 0 : i32
    return %arg0, %c0_i32, %c0_i32_0, %c0_i32_1 : i32, i32, i32, i32
  }
  func.func @transform_1(%arg0: i32) -> (i32, i32, i32, i32) {
    %c0_i32 = arith.constant 0 : i32
    %c0_i32_0 = arith.constant 0 : i32
    %c0_i32_1 = arith.constant 0 : i32
    %c0_i32_2 = arith.constant 0 : i32
    return %arg0, %c0_i32, %c0_i32_0, %c0_i32_1 : i32, i32, i32, i32
  }
  func.func @transform_2(%arg0: i32) -> (i32, i32, i32, i32) {
    %c0_i32 = arith.constant 0 : i32
    %c0_i32_0 = arith.constant 0 : i32
    %c0_i32_1 = arith.constant 0 : i32
    %c0_i32_2 = arith.constant 0 : i32
    return %arg0, %c0_i32, %c0_i32_0, %c0_i32_1 : i32, i32, i32, i32
  }
  func.func @transform_3(%arg0: i32) -> (i32, i32, i32, i32) {
    %c0_i32 = arith.constant 0 : i32
    %c0_i32_0 = arith.constant 0 : i32
    %c0_i32_1 = arith.constant 0 : i32
    %c0_i32_2 = arith.constant 0 : i32
    return %arg0, %c0_i32, %c0_i32_0, %c0_i32_1 : i32, i32, i32, i32
  }
}

module attributes {stable_mosaic.version = 11 : i64} {
  func.func @_mm_kernel(%arg0: i32, %arg1: i32, %arg2: i32, %arg3: memref<64x160xbf16, #tpu.memory_space<vmem>>, %arg4: memref<160x160xbf16, #tpu.memory_space<vmem>>, %arg5: memref<1x160xf32, #tpu.memory_space<vmem>>, %arg6: memref<1x160xf32, #tpu.memory_space<vmem>>, %arg7: memref<64x160xf32, #tpu.memory_space<vmem>>, %arg8: memref<64x160xf32, #tpu.memory_space<vmem>>) attributes {dimension_semantics = [#tpu.dimension_semantics<parallel>, #tpu.dimension_semantics<parallel>, #tpu.dimension_semantics<arbitrary>], iteration_bounds = array<i64: 2, 1, 1>, scalar_prefetch = 0 : i64, scratch_operands = 1 : i64, tpu.core_type = #tpu.core_type<tc>, window_params = [{transform_indices = @transform_0, window_bounds = array<i64: 64, 160>}, {transform_indices = @transform_1, window_bounds = array<i64: 160, 160>}, {transform_indices = @transform_2, window_bounds = array<i64: 1, 160>}, {transform_indices = @transform_3, window_bounds = array<i64: 1, 160>}, {transform_indices = @transform_4, window_bounds = array<i64: 64, 160>}]} {
    %c0_i32 = arith.constant 0 : i32
    %0 = arith.cmpi eq, %arg2, %c0_i32 : i32
    %1 = arith.extui %0 : i1 to i32
    %c0_i32_0 = arith.constant 0 : i32
    %2 = arith.cmpi ne, %1, %c0_i32_0 : i32
    scf.if %2 {
      %cst_10 = arith.constant 0.000000e+00 : f32
      %12 = vector.broadcast %cst_10 : f32 to vector<64x160xf32>
      %c0_11 = arith.constant 0 : index
      %c0_12 = arith.constant 0 : index
      %13 = vector.load %arg8[%c0_11, %c0_12] : memref<64x160xf32, #tpu.memory_space<vmem>>, vector<64x160xf32>
      tpu.vector_store %arg8[%c0_11, %c0_12], %12 {strides = array<i32>} : memref<64x160xf32, #tpu.memory_space<vmem>>, vector<64x160xf32>,
    } else {
    }
    %c0 = arith.constant 0 : index
    %c0_1 = arith.constant 0 : index
    %3 = vector.load %arg8[%c0, %c0_1] : memref<64x160xf32, #tpu.memory_space<vmem>>, vector<64x160xf32>
    %c0_2 = arith.constant 0 : index
    %c0_3 = arith.constant 0 : index
    %4 = vector.load %arg3[%c0_2, %c0_3] : memref<64x160xbf16, #tpu.memory_space<vmem>>, vector<64x160xbf16>
    %c0_4 = arith.constant 0 : index
    %c0_5 = arith.constant 0 : index
    %5 = vector.load %arg4[%c0_4, %c0_5] : memref<160x160xbf16, #tpu.memory_space<vmem>>, vector<160x160xbf16>
    %cst = arith.constant dense<0.000000e+00> : vector<64x160xf32>
    %6 = tpu.matmul %4, %5, %cst {dimension_numbers = #tpu.dot_dimension_numbers<[1], [0], [0], [1], [0, 0, 1, 1], [], []>} : vector<64x160xbf16>, vector<160x160xbf16>, vector<64x160xf32> -> vector<64x160xf32>
    %7 = arith.addf %3, %6 : vector<64x160xf32>
    %c0_6 = arith.constant 0 : index
    %c0_7 = arith.constant 0 : index
    %8 = vector.load %arg8[%c0_6, %c0_7] : memref<64x160xf32, #tpu.memory_space<vmem>>, vector<64x160xf32>
    tpu.vector_store %arg8[%c0_6, %c0_7], %7 {strides = array<i32>} : memref<64x160xf32, #tpu.memory_space<vmem>>, vector<64x160xf32>,
    %c0_i32_8 = arith.constant 0 : i32
    %9 = arith.cmpi eq, %arg2, %c0_i32_8 : i32
    %10 = arith.extui %9 : i1 to i32
    %c0_i32_9 = arith.constant 0 : i32
    %11 = arith.cmpi ne, %10, %c0_i32_9 : i32
    scf.if %11 {
      %c0_10 = arith.constant 0 : index
      %c0_11 = arith.constant 0 : index
      %12 = vector.load %arg8[%c0_10, %c0_11] : memref<64x160xf32, #tpu.memory_space<vmem>>, vector<64x160xf32>
      %c0_12 = arith.constant 0 : index
      %c0_13 = arith.constant 0 : index
      %13 = vector.load %arg5[%c0_12, %c0_13] : memref<1x160xf32, #tpu.memory_space<vmem>>, vector<1x160xf32>
      %14 = vector.broadcast %13 : vector<1x160xf32> to vector<64x160xf32>
      %15 = arith.mulf %12, %14 : vector<64x160xf32>
      %c0_14 = arith.constant 0 : index
      %c0_15 = arith.constant 0 : index
      %16 = vector.load %arg6[%c0_14, %c0_15] : memref<1x160xf32, #tpu.memory_space<vmem>>, vector<1x160xf32>
      %17 = vector.broadcast %16 : vector<1x160xf32> to vector<64x160xf32>
      %18 = arith.addf %15, %17 : vector<64x160xf32>
      %c0_16 = arith.constant 0 : index
      %c0_17 = arith.constant 0 : index
      %19 = vector.load %arg7[%c0_16, %c0_17] : memref<64x160xf32, #tpu.memory_space<vmem>>, vector<64x160xf32>
      tpu.vector_store %arg7[%c0_16, %c0_17], %18 {strides = array<i32>} : memref<64x160xf32, #tpu.memory_space<vmem>>, vector<64x160xf32>,
    } else {
    }
    return
  }
  func.func @transform_0(%arg0: i32, %arg1: i32, %arg2: i32) -> (i32, i32) {
    %c0_i32 = arith.constant 0 : i32
    return %arg0, %arg2 : i32, i32
  }
  func.func @transform_1(%arg0: i32, %arg1: i32, %arg2: i32) -> (i32, i32) {
    %c0_i32 = arith.constant 0 : i32
    return %arg2, %arg1 : i32, i32
  }
  func.func @transform_2(%arg0: i32, %arg1: i32, %arg2: i32) -> (i32, i32) {
    %c0_i32 = arith.constant 0 : i32
    %c0_i32_0 = arith.constant 0 : i32
    return %c0_i32, %arg1 : i32, i32
  }
  func.func @transform_3(%arg0: i32, %arg1: i32, %arg2: i32) -> (i32, i32) {
    %c0_i32 = arith.constant 0 : i32
    %c0_i32_0 = arith.constant 0 : i32
    return %c0_i32, %arg1 : i32, i32
  }
  func.func @transform_4(%arg0: i32, %arg1: i32, %arg2: i32) -> (i32, i32) {
    %c0_i32 = arith.constant 0 : i32
    return %arg0, %arg1 : i32, i32
  }
}

module attributes {stable_mosaic.version = 11 : i64} {
  func.func @_mm_ln_kernel(%arg0: i32, %arg1: i32, %arg2: memref<128x160xf32, #tpu.memory_space<vmem>>, %arg3: memref<160x256xbf16, #tpu.memory_space<vmem>>, %arg4: memref<1x160xf32, #tpu.memory_space<vmem>>, %arg5: memref<1x160xf32, #tpu.memory_space<vmem>>, %arg6: memref<1x256xf32, #tpu.memory_space<vmem>>, %arg7: memref<1x256xf32, #tpu.memory_space<vmem>>, %arg8: memref<128x256xbf16, #tpu.memory_space<vmem>>) attributes {dimension_semantics = [#tpu.dimension_semantics<parallel>, #tpu.dimension_semantics<parallel>], iteration_bounds = array<i64: 1, 4>, scalar_prefetch = 0 : i64, scratch_operands = 0 : i64, tpu.core_type = #tpu.core_type<tc>, window_params = [{transform_indices = @transform_0, window_bounds = array<i64: 128, 160>}, {transform_indices = @transform_1, window_bounds = array<i64: 160, 256>}, {pipeline_mode = #tpu.pipeline_mode<synchronous>, transform_indices = @transform_2, window_bounds = array<i64: 1, 160>}, {pipeline_mode = #tpu.pipeline_mode<synchronous>, transform_indices = @transform_3, window_bounds = array<i64: 1, 160>}, {transform_indices = @transform_4, window_bounds = array<i64: 1, 256>}, {transform_indices = @transform_5, window_bounds = array<i64: 1, 256>}, {transform_indices = @transform_6, window_bounds = array<i64: 128, 256>}]} {
    %c0 = arith.constant 0 : index
    %c0_0 = arith.constant 0 : index
    %0 = vector.load %arg2[%c0, %c0_0] : memref<128x160xf32, #tpu.memory_space<vmem>>, vector<128x160xf32>
    %cst = arith.constant dense<0.000000e+00> : vector<128xf32>
    %1 = vector.multi_reduction <add>, %0, %cst [1] : vector<128x160xf32> to vector<128xf32>
    %2 = vector.shape_cast %1 : vector<128xf32> to vector<128x1xf32>
    %cst_1 = arith.constant 1.600000e+02 : f32
    %3 = vector.broadcast %cst_1 : f32 to vector<128x1xf32>
    %4 = arith.divf %2, %3 : vector<128x1xf32>
    %5 = vector.broadcast %4 : vector<128x1xf32> to vector<128x160xf32>
    %6 = arith.subf %0, %5 : vector<128x160xf32>
    %7 = arith.mulf %6, %6 : vector<128x160xf32>
    %cst_2 = arith.constant dense<0.000000e+00> : vector<128xf32>
    %8 = vector.multi_reduction <add>, %7, %cst_2 [1] : vector<128x160xf32> to vector<128xf32>
    %9 = vector.shape_cast %8 : vector<128xf32> to vector<128x1xf32>
    %cst_3 = arith.constant 1.600000e+02 : f32
    %10 = vector.broadcast %cst_3 : f32 to vector<128x1xf32>
    %11 = arith.divf %9, %10 : vector<128x1xf32>
    %12 = vector.broadcast %4 : vector<128x1xf32> to vector<128x160xf32>
    %13 = arith.subf %0, %12 : vector<128x160xf32>
    %cst_4 = arith.constant 9.99999974E-6 : f32
    %14 = vector.broadcast %cst_4 : f32 to vector<128x1xf32>
    %15 = arith.addf %11, %14 : vector<128x1xf32>
    %16 = math.rsqrt %15 : vector<128x1xf32>
    %17 = vector.broadcast %16 : vector<128x1xf32> to vector<128x160xf32>
    %18 = arith.mulf %13, %17 : vector<128x160xf32>
    %c0_5 = arith.constant 0 : index
    %c0_6 = arith.constant 0 : index
    %19 = vector.load %arg4[%c0_5, %c0_6] : memref<1x160xf32, #tpu.memory_space<vmem>>, vector<1x160xf32>
    %20 = vector.broadcast %19 : vector<1x160xf32> to vector<128x160xf32>
    %21 = arith.mulf %18, %20 : vector<128x160xf32>
    %c0_7 = arith.constant 0 : index
    %c0_8 = arith.constant 0 : index
    %22 = vector.load %arg5[%c0_7, %c0_8] : memref<1x160xf32, #tpu.memory_space<vmem>>, vector<1x160xf32>
    %23 = vector.broadcast %22 : vector<1x160xf32> to vector<128x160xf32>
    %24 = arith.addf %21, %23 : vector<128x160xf32>
    %25 = arith.truncf %24 : vector<128x160xf32> to vector<128x160xbf16>
    %c0_9 = arith.constant 0 : index
    %c0_10 = arith.constant 0 : index
    %26 = vector.load %arg3[%c0_9, %c0_10] : memref<160x256xbf16, #tpu.memory_space<vmem>>, vector<160x256xbf16>
    %cst_11 = arith.constant dense<0.000000e+00> : vector<128x256xf32>
    %27 = tpu.matmul %25, %26, %cst_11 {dimension_numbers = #tpu.dot_dimension_numbers<[1], [0], [0], [1], [0, 0, 1, 1], [], []>} : vector<128x160xbf16>, vector<160x256xbf16>, vector<128x256xf32> -> vector<128x256xf32>
    %c0_12 = arith.constant 0 : index
    %c0_13 = arith.constant 0 : index
    %28 = vector.load %arg6[%c0_12, %c0_13] : memref<1x256xf32, #tpu.memory_space<vmem>>, vector<1x256xf32>
    %29 = vector.broadcast %28 : vector<1x256xf32> to vector<128x256xf32>
    %30 = arith.mulf %27, %29 : vector<128x256xf32>
    %c0_14 = arith.constant 0 : index
    %c0_15 = arith.constant 0 : index
    %31 = vector.load %arg7[%c0_14, %c0_15] : memref<1x256xf32, #tpu.memory_space<vmem>>, vector<1x256xf32>
    %32 = vector.broadcast %31 : vector<1x256xf32> to vector<128x256xf32>
    %33 = arith.addf %30, %32 : vector<128x256xf32>
    %34 = arith.truncf %33 : vector<128x256xf32> to vector<128x256xbf16>
    %c0_16 = arith.constant 0 : index
    %c0_17 = arith.constant 0 : index
    %35 = vector.load %arg8[%c0_16, %c0_17] : memref<128x256xbf16, #tpu.memory_space<vmem>>, vector<128x256xbf16>
    tpu.vector_store %arg8[%c0_16, %c0_17], %34 {strides = array<i32>} : memref<128x256xbf16, #tpu.memory_space<vmem>>, vector<128x256xbf16>,
    return
  }
  func.func @transform_0(%arg0: i32, %arg1: i32) -> (i32, i32) {
    %c0_i32 = arith.constant 0 : i32
    %c0_i32_0 = arith.constant 0 : i32
    return %arg0, %c0_i32 : i32, i32
  }
  func.func @transform_1(%arg0: i32, %arg1: i32) -> (i32, i32) {
    %c0_i32 = arith.constant 0 : i32
    %c0_i32_0 = arith.constant 0 : i32
    return %c0_i32, %arg1 : i32, i32
  }
  func.func @transform_2(%arg0: i32, %arg1: i32) -> (i32, i32) {
    %c0_i32 = arith.constant 0 : i32
    %c0_i32_0 = arith.constant 0 : i32
    %c0_i32_1 = arith.constant 0 : i32
    return %c0_i32, %c0_i32_0 : i32, i32
  }
  func.func @transform_3(%arg0: i32, %arg1: i32) -> (i32, i32) {
    %c0_i32 = arith.constant 0 : i32
    %c0_i32_0 = arith.constant 0 : i32
    %c0_i32_1 = arith.constant 0 : i32
    return %c0_i32, %c0_i32_0 : i32, i32
  }
  func.func @transform_4(%arg0: i32, %arg1: i32) -> (i32, i32) {
    %c0_i32 = arith.constant 0 : i32
    %c0_i32_0 = arith.constant 0 : i32
    return %c0_i32, %arg1 : i32, i32
  }
  func.func @transform_5(%arg0: i32, %arg1: i32) -> (i32, i32) {
    %c0_i32 = arith.constant 0 : i32
    %c0_i32_0 = arith.constant 0 : i32
    return %c0_i32, %arg1 : i32, i32
  }
  func.func @transform_6(%arg0: i32, %arg1: i32) -> (i32, i32) {
    %c0_i32 = arith.constant 0 : i32
    return %arg0, %arg1 : i32, i32
  }
}

module attributes {stable_mosaic.version = 11 : i64} {
  func.func @_mm_kernel(%arg0: i32, %arg1: i32, %arg2: i32, %arg3: memref<64x512xbf16, #tpu.memory_space<vmem>>, %arg4: memref<512x160xbf16, #tpu.memory_space<vmem>>, %arg5: memref<1x160xf32, #tpu.memory_space<vmem>>, %arg6: memref<1x160xf32, #tpu.memory_space<vmem>>, %arg7: memref<64x160xf32, #tpu.memory_space<vmem>>, %arg8: memref<64x160xf32, #tpu.memory_space<vmem>>) attributes {dimension_semantics = [#tpu.dimension_semantics<parallel>, #tpu.dimension_semantics<parallel>, #tpu.dimension_semantics<arbitrary>], iteration_bounds = array<i64: 2, 1, 2>, scalar_prefetch = 0 : i64, scratch_operands = 1 : i64, tpu.core_type = #tpu.core_type<tc>, window_params = [{transform_indices = @transform_0, window_bounds = array<i64: 64, 512>}, {transform_indices = @transform_1, window_bounds = array<i64: 512, 160>}, {transform_indices = @transform_2, window_bounds = array<i64: 1, 160>}, {transform_indices = @transform_3, window_bounds = array<i64: 1, 160>}, {transform_indices = @transform_4, window_bounds = array<i64: 64, 160>}]} {
    %c0_i32 = arith.constant 0 : i32
    %0 = arith.cmpi eq, %arg2, %c0_i32 : i32
    %1 = arith.extui %0 : i1 to i32
    %c0_i32_0 = arith.constant 0 : i32
    %2 = arith.cmpi ne, %1, %c0_i32_0 : i32
    scf.if %2 {
      %cst_9 = arith.constant 0.000000e+00 : f32
      %12 = vector.broadcast %cst_9 : f32 to vector<64x160xf32>
      %c0_10 = arith.constant 0 : index
      %c0_11 = arith.constant 0 : index
      %13 = vector.load %arg8[%c0_10, %c0_11] : memref<64x160xf32, #tpu.memory_space<vmem>>, vector<64x160xf32>
      tpu.vector_store %arg8[%c0_10, %c0_11], %12 {strides = array<i32>} : memref<64x160xf32, #tpu.memory_space<vmem>>, vector<64x160xf32>,
    } else {
    }
    %c0 = arith.constant 0 : index
    %c0_1 = arith.constant 0 : index
    %3 = vector.load %arg8[%c0, %c0_1] : memref<64x160xf32, #tpu.memory_space<vmem>>, vector<64x160xf32>
    %c0_2 = arith.constant 0 : index
    %c0_3 = arith.constant 0 : index
    %4 = vector.load %arg3[%c0_2, %c0_3] : memref<64x512xbf16, #tpu.memory_space<vmem>>, vector<64x512xbf16>
    %c0_4 = arith.constant 0 : index
    %c0_5 = arith.constant 0 : index
    %5 = vector.load %arg4[%c0_4, %c0_5] : memref<512x160xbf16, #tpu.memory_space<vmem>>, vector<512x160xbf16>
    %cst = arith.constant dense<0.000000e+00> : vector<64x160xf32>
    %6 = tpu.matmul %4, %5, %cst {dimension_numbers = #tpu.dot_dimension_numbers<[1], [0], [0], [1], [0, 0, 1, 1], [], []>} : vector<64x512xbf16>, vector<512x160xbf16>, vector<64x160xf32> -> vector<64x160xf32>
    %7 = arith.addf %3, %6 : vector<64x160xf32>
    %c0_6 = arith.constant 0 : index
    %c0_7 = arith.constant 0 : index
    %8 = vector.load %arg8[%c0_6, %c0_7] : memref<64x160xf32, #tpu.memory_space<vmem>>, vector<64x160xf32>
    tpu.vector_store %arg8[%c0_6, %c0_7], %7 {strides = array<i32>} : memref<64x160xf32, #tpu.memory_space<vmem>>, vector<64x160xf32>,
    %c1_i32 = arith.constant 1 : i32
    %9 = arith.cmpi eq, %arg2, %c1_i32 : i32
    %10 = arith.extui %9 : i1 to i32
    %c0_i32_8 = arith.constant 0 : i32
    %11 = arith.cmpi ne, %10, %c0_i32_8 : i32
    scf.if %11 {
      %c0_9 = arith.constant 0 : index
      %c0_10 = arith.constant 0 : index
      %12 = vector.load %arg8[%c0_9, %c0_10] : memref<64x160xf32, #tpu.memory_space<vmem>>, vector<64x160xf32>
      %c0_11 = arith.constant 0 : index
      %c0_12 = arith.constant 0 : index
      %13 = vector.load %arg5[%c0_11, %c0_12] : memref<1x160xf32, #tpu.memory_space<vmem>>, vector<1x160xf32>
      %14 = vector.broadcast %13 : vector<1x160xf32> to vector<64x160xf32>
      %15 = arith.mulf %12, %14 : vector<64x160xf32>
      %c0_13 = arith.constant 0 : index
      %c0_14 = arith.constant 0 : index
      %16 = vector.load %arg6[%c0_13, %c0_14] : memref<1x160xf32, #tpu.memory_space<vmem>>, vector<1x160xf32>
      %17 = vector.broadcast %16 : vector<1x160xf32> to vector<64x160xf32>
      %18 = arith.addf %15, %17 : vector<64x160xf32>
      %c0_15 = arith.constant 0 : index
      %c0_16 = arith.constant 0 : index
      %19 = vector.load %arg7[%c0_15, %c0_16] : memref<64x160xf32, #tpu.memory_space<vmem>>, vector<64x160xf32>
      tpu.vector_store %arg7[%c0_15, %c0_16], %18 {strides = array<i32>} : memref<64x160xf32, #tpu.memory_space<vmem>>, vector<64x160xf32>,
    } else {
    }
    return
  }
  func.func @transform_0(%arg0: i32, %arg1: i32, %arg2: i32) -> (i32, i32) {
    %c0_i32 = arith.constant 0 : i32
    return %arg0, %arg2 : i32, i32
  }
  func.func @transform_1(%arg0: i32, %arg1: i32, %arg2: i32) -> (i32, i32) {
    %c0_i32 = arith.constant 0 : i32
    return %arg2, %arg1 : i32, i32
  }
  func.func @transform_2(%arg0: i32, %arg1: i32, %arg2: i32) -> (i32, i32) {
    %c0_i32 = arith.constant 0 : i32
    %c0_i32_0 = arith.constant 0 : i32
    return %c0_i32, %arg1 : i32, i32
  }
  func.func @transform_3(%arg0: i32, %arg1: i32, %arg2: i32) -> (i32, i32) {
    %c0_i32 = arith.constant 0 : i32
    %c0_i32_0 = arith.constant 0 : i32
    return %c0_i32, %arg1 : i32, i32
  }
  func.func @transform_4(%arg0: i32, %arg1: i32, %arg2: i32) -> (i32, i32) {
    %c0_i32 = arith.constant 0 : i32
    return %arg0, %arg1 : i32, i32
  }
}

module attributes {stable_mosaic.version = 11 : i64} {
  func.func @_ln_kernel(%arg0: i32, %arg1: memref<160x64xf32, #tpu.memory_space<vmem>>, %arg2: memref<1x64xf32, #tpu.memory_space<vmem>>, %arg3: memref<1x64xf32, #tpu.memory_space<vmem>>, %arg4: memref<160x64xf32, #tpu.memory_space<vmem>>) attributes {dimension_semantics = [#tpu.dimension_semantics<parallel>], iteration_bounds = array<i64: 2>, scalar_prefetch = 0 : i64, scratch_operands = 0 : i64, tpu.core_type = #tpu.core_type<tc>, window_params = [{transform_indices = @transform_0, window_bounds = array<i64: 160, 64>}, {pipeline_mode = #tpu.pipeline_mode<synchronous>, transform_indices = @transform_1, window_bounds = array<i64: 1, 64>}, {pipeline_mode = #tpu.pipeline_mode<synchronous>, transform_indices = @transform_2, window_bounds = array<i64: 1, 64>}, {transform_indices = @transform_3, window_bounds = array<i64: 160, 64>}]} {
    %c0 = arith.constant 0 : index
    %c0_0 = arith.constant 0 : index
    %0 = vector.load %arg1[%c0, %c0_0] : memref<160x64xf32, #tpu.memory_space<vmem>>, vector<160x64xf32>
    %cst = arith.constant dense<0.000000e+00> : vector<160xf32>
    %1 = vector.multi_reduction <add>, %0, %cst [1] : vector<160x64xf32> to vector<160xf32>
    %2 = vector.shape_cast %1 : vector<160xf32> to vector<160x1xf32>
    %cst_1 = arith.constant 6.400000e+01 : f32
    %3 = vector.broadcast %cst_1 : f32 to vector<160x1xf32>
    %4 = arith.divf %2, %3 : vector<160x1xf32>
    %5 = vector.broadcast %4 : vector<160x1xf32> to vector<160x64xf32>
    %6 = arith.subf %0, %5 : vector<160x64xf32>
    %7 = arith.mulf %6, %6 : vector<160x64xf32>
    %cst_2 = arith.constant dense<0.000000e+00> : vector<160xf32>
    %8 = vector.multi_reduction <add>, %7, %cst_2 [1] : vector<160x64xf32> to vector<160xf32>
    %9 = vector.shape_cast %8 : vector<160xf32> to vector<160x1xf32>
    %cst_3 = arith.constant 6.400000e+01 : f32
    %10 = vector.broadcast %cst_3 : f32 to vector<160x1xf32>
    %11 = arith.divf %9, %10 : vector<160x1xf32>
    %12 = vector.broadcast %4 : vector<160x1xf32> to vector<160x64xf32>
    %13 = arith.subf %0, %12 : vector<160x64xf32>
    %cst_4 = arith.constant 9.99999974E-6 : f32
    %14 = vector.broadcast %cst_4 : f32 to vector<160x1xf32>
    %15 = arith.addf %11, %14 : vector<160x1xf32>
    %16 = math.rsqrt %15 : vector<160x1xf32>
    %17 = vector.broadcast %16 : vector<160x1xf32> to vector<160x64xf32>
    %18 = arith.mulf %13, %17 : vector<160x64xf32>
    %c0_5 = arith.constant 0 : index
    %c0_6 = arith.constant 0 : index
    %19 = vector.load %arg2[%c0_5, %c0_6] : memref<1x64xf32, #tpu.memory_space<vmem>>, vector<1x64xf32>
    %20 = vector.broadcast %19 : vector<1x64xf32> to vector<160x64xf32>
    %21 = arith.mulf %18, %20 : vector<160x64xf32>
    %c0_7 = arith.constant 0 : index
    %c0_8 = arith.constant 0 : index
    %22 = vector.load %arg3[%c0_7, %c0_8] : memref<1x64xf32, #tpu.memory_space<vmem>>, vector<1x64xf32>
    %23 = vector.broadcast %22 : vector<1x64xf32> to vector<160x64xf32>
    %24 = arith.addf %21, %23 : vector<160x64xf32>
    %c0_9 = arith.constant 0 : index
    %c0_10 = arith.constant 0 : index
    %25 = vector.load %arg4[%c0_9, %c0_10] : memref<160x64xf32, #tpu.memory_space<vmem>>, vector<160x64xf32>
    tpu.vector_store %arg4[%c0_9, %c0_10], %24 {strides = array<i32>} : memref<160x64xf32, #tpu.memory_space<vmem>>, vector<160x64xf32>,
    return
  }
  func.func @transform_0(%arg0: i32) -> (i32, i32) {
    %c0_i32 = arith.constant 0 : i32
    %c0_i32_0 = arith.constant 0 : i32
    return %arg0, %c0_i32 : i32, i32
  }
  func.func @transform_1(%arg0: i32) -> (i32, i32) {
    %c0_i32 = arith.constant 0 : i32
    %c0_i32_0 = arith.constant 0 : i32
    %c0_i32_1 = arith.constant 0 : i32
    return %c0_i32, %c0_i32_0 : i32, i32
  }
  func.func @transform_2(%arg0: i32) -> (i32, i32) {
    %c0_i32 = arith.constant 0 : i32
    %c0_i32_0 = arith.constant 0 : i32
    %c0_i32_1 = arith.constant 0 : i32
    return %c0_i32, %c0_i32_0 : i32, i32
  }
  func.func @transform_3(%arg0: i32) -> (i32, i32) {
    %c0_i32 = arith.constant 0 : i32
    %c0_i32_0 = arith.constant 0 : i32
    return %arg0, %c0_i32 : i32, i32
  }
}

module attributes {stable_mosaic.version = 11 : i64} {
  func.func @_gate_fuse_kernel(%arg0: i32, %arg1: memref<160x128xbf16, #tpu.memory_space<vmem>>, %arg2: memref<128x64xbf16, #tpu.memory_space<vmem>>, %arg3: memref<1x64xf32, #tpu.memory_space<vmem>>, %arg4: memref<160x64xf32, #tpu.memory_space<vmem>>, %arg5: memref<160x64xf32, #tpu.memory_space<vmem>>, %arg6: memref<160x64xf32, #tpu.memory_space<vmem>>, %arg7: memref<160x64xf32, #tpu.memory_space<vmem>>, %arg8: memref<160x64xf32, #tpu.memory_space<vmem>>) attributes {dimension_semantics = [#tpu.dimension_semantics<parallel>], iteration_bounds = array<i64: 2>, scalar_prefetch = 0 : i64, scratch_operands = 0 : i64, tpu.core_type = #tpu.core_type<tc>, window_params = [{transform_indices = @transform_0, window_bounds = array<i64: 160, 128>}, {pipeline_mode = #tpu.pipeline_mode<synchronous>, transform_indices = @transform_1, window_bounds = array<i64: 128, 64>}, {pipeline_mode = #tpu.pipeline_mode<synchronous>, transform_indices = @transform_2, window_bounds = array<i64: 1, 64>}, {transform_indices = @transform_3, window_bounds = array<i64: 160, 64>}, {transform_indices = @transform_4, window_bounds = array<i64: 160, 64>}, {transform_indices = @transform_5, window_bounds = array<i64: 160, 64>}, {transform_indices = @transform_6, window_bounds = array<i64: 160, 64>}, {transform_indices = @transform_7, window_bounds = array<i64: 160, 64>}]} {
    %c0 = arith.constant 0 : index
    %c0_0 = arith.constant 0 : index
    %0 = vector.load %arg1[%c0, %c0_0] : memref<160x128xbf16, #tpu.memory_space<vmem>>, vector<160x128xbf16>
    %c0_1 = arith.constant 0 : index
    %c0_2 = arith.constant 0 : index
    %1 = vector.load %arg2[%c0_1, %c0_2] : memref<128x64xbf16, #tpu.memory_space<vmem>>, vector<128x64xbf16>
    %cst = arith.constant dense<0.000000e+00> : vector<160x64xf32>
    %2 = tpu.matmul %0, %1, %cst {dimension_numbers = #tpu.dot_dimension_numbers<[1], [0], [0], [1], [0, 0, 1, 1], [], []>} : vector<160x128xbf16>, vector<128x64xbf16>, vector<160x64xf32> -> vector<160x64xf32>
    %c0_3 = arith.constant 0 : index
    %c0_4 = arith.constant 0 : index
    %3 = vector.load %arg3[%c0_3, %c0_4] : memref<1x64xf32, #tpu.memory_space<vmem>>, vector<1x64xf32>
    %4 = vector.broadcast %3 : vector<1x64xf32> to vector<160x64xf32>
    %5 = arith.addf %2, %4 : vector<160x64xf32>
    %cst_5 = arith.constant 0.000000e+00 : f32
    %6 = vector.broadcast %cst_5 : f32 to vector<160x64xf32>
    %7 = arith.subf %6, %5 : vector<160x64xf32>
    %8 = math.exp %7 : vector<160x64xf32>
    %cst_6 = arith.constant 1.000000e+00 : f32
    %9 = vector.broadcast %cst_6 : f32 to vector<160x64xf32>
    %10 = arith.addf %9, %8 : vector<160x64xf32>
    %cst_7 = arith.constant 1.000000e+00 : f32
    %11 = vector.broadcast %cst_7 : f32 to vector<160x64xf32>
    %12 = arith.divf %11, %10 : vector<160x64xf32>
    %c0_8 = arith.constant 0 : index
    %c0_9 = arith.constant 0 : index
    %13 = vector.load %arg4[%c0_8, %c0_9] : memref<160x64xf32, #tpu.memory_space<vmem>>, vector<160x64xf32>
    %14 = arith.mulf %12, %13 : vector<160x64xf32>
    %cst_10 = arith.constant 1.000000e+00 : f32
    %15 = vector.broadcast %cst_10 : f32 to vector<160x64xf32>
    %16 = arith.subf %15, %12 : vector<160x64xf32>
    %c0_11 = arith.constant 0 : index
    %c0_12 = arith.constant 0 : index
    %17 = vector.load %arg5[%c0_11, %c0_12] : memref<160x64xf32, #tpu.memory_space<vmem>>, vector<160x64xf32>
    %18 = arith.mulf %16, %17 : vector<160x64xf32>
    %19 = arith.addf %14, %18 : vector<160x64xf32>
    %c0_13 = arith.constant 0 : index
    %c0_14 = arith.constant 0 : index
    %20 = vector.load %arg6[%c0_13, %c0_14] : memref<160x64xf32, #tpu.memory_space<vmem>>, vector<160x64xf32>
    %21 = arith.addf %19, %20 : vector<160x64xf32>
    %c0_15 = arith.constant 0 : index
    %c0_16 = arith.constant 0 : index
    %22 = vector.load %arg7[%c0_15, %c0_16] : memref<160x64xf32, #tpu.memory_space<vmem>>, vector<160x64xf32>
    %23 = arith.addf %21, %22 : vector<160x64xf32>
    %c0_17 = arith.constant 0 : index
    %c0_18 = arith.constant 0 : index
    %24 = vector.load %arg8[%c0_17, %c0_18] : memref<160x64xf32, #tpu.memory_space<vmem>>, vector<160x64xf32>
    tpu.vector_store %arg8[%c0_17, %c0_18], %23 {strides = array<i32>} : memref<160x64xf32, #tpu.memory_space<vmem>>, vector<160x64xf32>,
    return
  }
  func.func @transform_0(%arg0: i32) -> (i32, i32) {
    %c0_i32 = arith.constant 0 : i32
    %c0_i32_0 = arith.constant 0 : i32
    return %arg0, %c0_i32 : i32, i32
  }
  func.func @transform_1(%arg0: i32) -> (i32, i32) {
    %c0_i32 = arith.constant 0 : i32
    %c0_i32_0 = arith.constant 0 : i32
    %c0_i32_1 = arith.constant 0 : i32
    return %c0_i32, %c0_i32_0 : i32, i32
  }
  func.func @transform_2(%arg0: i32) -> (i32, i32) {
    %c0_i32 = arith.constant 0 : i32
    %c0_i32_0 = arith.constant 0 : i32
    %c0_i32_1 = arith.constant 0 : i32
    return %c0_i32, %c0_i32_0 : i32, i32
  }
  func.func @transform_3(%arg0: i32) -> (i32, i32) {
    %c0_i32 = arith.constant 0 : i32
    %c0_i32_0 = arith.constant 0 : i32
    return %arg0, %c0_i32 : i32, i32
  }
  func.func @transform_4(%arg0: i32) -> (i32, i32) {
    %c0_i32 = arith.constant 0 : i32
    %c0_i32_0 = arith.constant 0 : i32
    return %arg0, %c0_i32 : i32, i32
  }
  func.func @transform_5(%arg0: i32) -> (i32, i32) {
    %c0_i32 = arith.constant 0 : i32
    %c0_i32_0 = arith.constant 0 : i32
    return %arg0, %c0_i32 : i32, i32
  }
  func.func @transform_6(%arg0: i32) -> (i32, i32) {
    %c0_i32 = arith.constant 0 : i32
    %c0_i32_0 = arith.constant 0 : i32
    return %arg0, %c0_i32 : i32, i32
  }
  func.func @transform_7(%arg0: i32) -> (i32, i32) {
    %c0_i32 = arith.constant 0 : i32
    %c0_i32_0 = arith.constant 0 : i32
    return %arg0, %c0_i32 : i32, i32
  }
}

</mosaic_0001>

<llo_original>
// kernel: transformerfusion_forward.42
$region0: #{transformerfusion_forward.42}
  #allocation0 [shape = 'u32[]', space=smem, size = 0x4, offset = 0x4, fixed_abs, tag = 'smem constant byte address 0x4 - core index']
  #allocation1 [shape = 'u32[144,128]{1,0:T(1,128)}', space=vmem, size = 0x12000, scoped, tag = 'internal scratch']
  %s0 = inlined_call_operand.vmem [shape: f32[128,160], index: 0, kind: input, shape index: {}]
  %s1 = inlined_call_operand.vmem [shape: bf16[160,480], index: 1, kind: input, shape index: {}]
  %s2 = inlined_call_operand.vmem [shape: f32[1,160], index: 2, kind: input, shape index: {}]
  %s3 = inlined_call_operand.vmem [shape: f32[1,160], index: 3, kind: input, shape index: {}]
  %s4 = inlined_call_operand.vmem [shape: f32[1,480], index: 4, kind: input, shape index: {}]
  %s5 = inlined_call_operand.vmem [shape: f32[1,480], index: 5, kind: input, shape index: {}]
  %s6 = inlined_call_operand.vmem [shape: bf16[128,480], index: 6, kind: output, shape index: {}]
  %s7 = sld [smem:[#allocation0]]
  $region57: #{transformerfusion_forward.42} parent=0
    _
  %s9 = ssub.s32 1, %s7
  %s10 = scalar_select 0, %s9, %s7
  loop: start=0, step=1, limit=4
  $region2: #{transformerfusion_forward.42} parent=0 // loop_pre_header
    _
  $region3: #{transformerfusion_forward.42} parent=0 // loop_header
    %s12 = sphi 0, %s16
    %p13 = scmp.ge.s32.totalorder %s12, 4
    %s19 = sphi 0, %s31
    %s20 = sphi 0, %s27
    %s21 = sphi 0, %s19
    %s22 = sphi 0, %s20
    %s23 = sphi 0, %s21
    %s24 = sphi 0, %s22
    %s34 = sphi 0, %s36
    %s37 = sphi 0, %s34
    %s38 = sphi 0, %s37
    %s54 = sphi 0, %s38
    %s60 = sphi 0, %s62
    %s63 = sphi 0, %s60
    %s64 = sphi 0, %s63
    %s80 = sphi 0, %s64
    %s84 = sphi 0, %s84
    %s86 = sphi 0, %s84
    %s87 = sphi 0, %s86
    %s101 = sphi 0, %s87
    %s105 = sphi 0, %s105
    %s107 = sphi 0, %s105
    %s108 = sphi 0, %s107
    %s122 = sphi 0, %s108
    %s128 = sphi 0, %s130
    %s131 = sphi 0, %s128
    %s132 = sphi 0, %s131
    %s148 = sphi 0, %s132
    %s154 = sphi 0, %s156
    %s157 = sphi 0, %s154
    %s158 = sphi 0, %s157
    %s174 = sphi 0, %s158
    %s182 = sphi 0, %s184
    %s185 = sphi 0, %s182
    %s186 = sphi 0, %s185
    %s202 = sphi 0, %s186
  $region4: #{transformerfusion_forward.42} parent=0 // loop_header_branch
    %15 = sbr.rel (%p13) target = $region8
  $region5: #{transformerfusion_forward.42} parent=0 // loop_body
    %s17 = ssub.s32 %s12, 1
    %s18 = ssub.s32 %s12, 2
    %s25 = sadd.s32 1, %s20
    %p26 = scmp.ge.s32.totalorder %s25, 1
    %s27 = scalar_select %p26, 0, %s25
    %s28 = sadd.s32 1, %s19
    %s29 = scalar_select %p26, %s28, %s19
    %p30 = scmp.ge.s32.totalorder %s29, 2
    %s31 = scalar_select %p30, 0, %s29
    %s32 = ssub.s32 %s19, %s31
    %p33 = scmp.eq.s32.totalorder %s32, 0
    %s35 = sadd.s32 %s34, 1
    %s36 = scalar_select %p33, %s34, %s35
    %p39 = pneg %p33
    %p40 = scmp.eq.s32.totalorder %s12, 1
    %p41 = por %p39, %p40
    %p42 = scmp.ne.s32.totalorder %s34, %s37
    %p43 = scmp.eq.s32.totalorder %s12, 0
    %p44 = por %p42, %p43
    %p45 = scmp.ne.s32.totalorder %s34, %s37
    %p46 = scmp.eq.s32.totalorder %s17, 1
    %p47 = por %p45, %p46
    %p48 = scmp.ne.s32.totalorder %s37, %s38
    %p49 = scmp.eq.s32.totalorder %s17, 0
    %p50 = por %p48, %p49
    %p51 = scmp.ne.s32.totalorder %s37, %s38
    %p52 = scmp.eq.s32.totalorder %s18, 1
    %p53 = por %p51, %p52
    %p55 = scmp.ne.s32.totalorder %s38, %s54
    %p56 = scmp.eq.s32.totalorder %s18, 0
    %p57 = por %p55, %p56
    %s58 = ssub.s32 %s20, %s27
    %p59 = scmp.eq.s32.totalorder %s58, 0
    %s61 = sadd.s32 %s60, 1
    %s62 = scalar_select %p59, %s60, %s61
    %p65 = pneg %p59
    %p66 = scmp.eq.s32.totalorder %s12, 1
    %p67 = por %p65, %p66
    %p68 = scmp.ne.s32.totalorder %s60, %s63
    %p69 = scmp.eq.s32.totalorder %s12, 0
    %p70 = por %p68, %p69
    %p71 = scmp.ne.s32.totalorder %s60, %s63
    %p72 = scmp.eq.s32.totalorder %s17, 1
    %p73 = por %p71, %p72
    %p74 = scmp.ne.s32.totalorder %s63, %s64
    %p75 = scmp.eq.s32.totalorder %s17, 0
    %p76 = por %p74, %p75
    %p77 = scmp.ne.s32.totalorder %s63, %s64
    %p78 = scmp.eq.s32.totalorder %s18, 1
    %p79 = por %p77, %p78
    %p81 = scmp.ne.s32.totalorder %s64, %s80
    %p82 = scmp.eq.s32.totalorder %s18, 0
    %p83 = por %p81, %p82
    %s85 = sadd.s32 %s84, 1
    %p88 = scmp.eq.s32.totalorder %s12, 1
    %p89 = scmp.ne.s32.totalorder %s84, %s86
    %p90 = scmp.eq.s32.totalorder %s12, 0
    %p91 = por %p89, %p90
    %p92 = scmp.ne.s32.totalorder %s84, %s86
    %p93 = scmp.eq.s32.totalorder %s17, 1
    %p94 = por %p92, %p93
    %p95 = scmp.ne.s32.totalorder %s86, %s87
    %p96 = scmp.eq.s32.totalorder %s17, 0
    %p97 = por %p95, %p96
    %p98 = scmp.ne.s32.totalorder %s86, %s87
    %p99 = scmp.eq.s32.totalorder %s18, 1
    %p100 = por %p98, %p99
    %p102 = scmp.ne.s32.totalorder %s87, %s101
    %p103 = scmp.eq.s32.totalorder %s18, 0
    %p104 = por %p102, %p103
    %s106 = sadd.s32 %s105, 1
    %p109 = scmp.eq.s32.totalorder %s12, 1
    %p110 = scmp.ne.s32.totalorder %s105, %s107
    %p111 = scmp.eq.s32.totalorder %s12, 0
    %p112 = por %p110, %p111
    %p113 = scmp.ne.s32.totalorder %s105, %s107
    %p114 = scmp.eq.s32.totalorder %s17, 1
    %p115 = por %p113, %p114
    %p116 = scmp.ne.s32.totalorder %s107, %s108
    %p117 = scmp.eq.s32.totalorder %s17, 0
    %p118 = por %p116, %p117
    %p119 = scmp.ne.s32.totalorder %s107, %s108
    %p120 = scmp.eq.s32.totalorder %s18, 1
    %p121 = por %p119, %p120
    %p123 = scmp.ne.s32.totalorder %s108, %s122
    %p124 = scmp.eq.s32.totalorder %s18, 0
    %p125 = por %p123, %p124
    %s126 = ssub.s32 %s20, %s27
    %p127 = scmp.eq.s32.totalorder %s126, 0
    %s129 = sadd.s32 %s128, 1
    %s130 = scalar_select %p127, %s128, %s129
    %p133 = pneg %p127
    %p134 = scmp.eq.s32.totalorder %s12, 1
    %p135 = por %p133, %p134
    %p136 = scmp.ne.s32.totalorder %s128, %s131
    %p137 = scmp.eq.s32.totalorder %s12, 0
    %p138 = por %p136, %p137
    %p139 = scmp.ne.s32.totalorder %s128, %s131
    %p140 = scmp.eq.s32.totalorder %s17, 1
    %p141 = por %p139, %p140
    %p142 = scmp.ne.s32.totalorder %s131, %s132
    %p143 = scmp.eq.s32.totalorder %s17, 0
    %p144 = por %p142, %p143
    %p145 = scmp.ne.s32.totalorder %s131, %s132
    %p146 = scmp.eq.s32.totalorder %s18, 1
    %p147 = por %p145, %p146
    %p149 = scmp.ne.s32.totalorder %s132, %s148
    %p150 = scmp.eq.s32.totalorder %s18, 0
    %p151 = por %p149, %p150
    %s152 = ssub.s32 %s20, %s27
    %p153 = scmp.eq.s32.totalorder %s152, 0
    %s155 = sadd.s32 %s154, 1
    %s156 = scalar_select %p153, %s154, %s155
    %p159 = pneg %p153
    %p160 = scmp.eq.s32.totalorder %s12, 1
    %p161 = por %p159, %p160
    %p162 = scmp.ne.s32.totalorder %s154, %s157
    %p163 = scmp.eq.s32.totalorder %s12, 0
    %p164 = por %p162, %p163
    %p165 = scmp.ne.s32.totalorder %s154, %s157
    %p166 = scmp.eq.s32.totalorder %s17, 1
    %p167 = por %p165, %p166
    %p168 = scmp.ne.s32.totalorder %s157, %s158
    %p169 = scmp.eq.s32.totalorder %s17, 0
    %p170 = por %p168, %p169
    %p171 = scmp.ne.s32.totalorder %s157, %s158
    %p172 = scmp.eq.s32.totalorder %s18, 1
    %p173 = por %p171, %p172
    %p175 = scmp.ne.s32.totalorder %s158, %s174
    %p176 = scmp.eq.s32.totalorder %s18, 0
    %p177 = por %p175, %p176
    %s178 = ssub.s32 %s19, %s31
    %s179 = ssub.s32 %s20, %s27
    %s180 = sor.u32 %s178, %s179
    %p181 = scmp.eq.s32.totalorder %s180, 0
    %s183 = sadd.s32 %s182, 1
    %s184 = scalar_select %p181, %s182, %s183
    %p187 = pneg %p181
    %p188 = scmp.eq.s32.totalorder %s12, 1
    %p189 = por %p187, %p188
    %p190 = scmp.ne.s32.totalorder %s182, %s185
    %p191 = scmp.eq.s32.totalorder %s12, 0
    %p192 = por %p190, %p191
    %p193 = scmp.ne.s32.totalorder %s182, %s185
    %p194 = scmp.eq.s32.totalorder %s17, 1
    %p195 = por %p193, %p194
    %p196 = scmp.ne.s32.totalorder %s185, %s186
    %p197 = scmp.eq.s32.totalorder %s17, 0
    %p198 = por %p196, %p197
    %p199 = scmp.ne.s32.totalorder %s185, %s186
    %p200 = scmp.eq.s32.totalorder %s18, 1
    %p201 = por %p199, %p200
    %p203 = scmp.ne.s32.totalorder %s186, %s202
    %p204 = scmp.eq.s32.totalorder %s18, 0
    %p205 = por %p203, %p204
    %p206 = scmp.le.s32.totalorder 1, %s12
    %p207 = scmp.lt.s32.totalorder %s12, 3
    %p208 = pnand %p206, %p207
    %p209 = pneg %p208
    // Predicated region
    $region9: #{transformerfusion_forward.42} parent=5 // pred_check
      _
    $region10: #{transformerfusion_forward.42} parent=5 // pred_check_branch
      %211 = sbr.rel (%p208) target = $region12
    $region11: #{transformerfusion_forward.42} parent=5 // pred_region
      %s212 = ssub.s32 %s12, 1
      // Predicated region
      $region13: #{transformerfusion_forward.42} parent=11 // pred_check
        %p213 = pneg %p76
      $region14: #{transformerfusion_forward.42} parent=11 // pred_check_branch
        %215 = sbr.rel (%p213) target = $region16
      $region15: #{transformerfusion_forward.42} parent=11 // pred_region
        %s216 = smul.u32 4, %s22
        %p217 = scmp.lt.s32.totalorder %s216, 3
        %s218 = scalar_select %p217, %s216, 3
        %s219 = smul.addr %s218, 4
        %s220 = scalar_lea.vmem %s1, %s219
        %s221 = smul.u32 4, %s22
      $region16: #{transformerfusion_forward.42} parent=11 // pred_fallthru
        _
      // Predicated region
      $region17: #{transformerfusion_forward.42} parent=11 // pred_check
        %p222 = pneg %p97
      $region18: #{transformerfusion_forward.42} parent=11 // pred_check_branch
        %224 = sbr.rel (%p222) target = $region20
      $region19: #{transformerfusion_forward.42} parent=11 // pred_region
        _
      $region20: #{transformerfusion_forward.42} parent=11 // pred_fallthru
        _
      // Predicated region
      $region21: #{transformerfusion_forward.42} parent=11 // pred_check
        %p225 = pneg %p118
      $region22: #{transformerfusion_forward.42} parent=11 // pred_check_branch
        %227 = sbr.rel (%p225) target = $region24
      $region23: #{transformerfusion_forward.42} parent=11 // pred_region
        _
      $region24: #{transformerfusion_forward.42} parent=11 // pred_fallthru
        _
      // Predicated region
      $region25: #{transformerfusion_forward.42} parent=11 // pred_check
        %p228 = pneg %p144
      $region26: #{transformerfusion_forward.42} parent=11 // pred_check_branch
        %230 = sbr.rel (%p228) target = $region28
      $region27: #{transformerfusion_forward.42} parent=11 // pred_region
        %s231 = smul.u32 4, %s22
        %p232 = scmp.lt.s32.totalorder %s231, 3
        %s233 = scalar_select %p232, %s231, 3
        %s234 = scalar_lea.vmem %s4, %s233
        %s235 = smul.u32 4, %s22
      $region28: #{transformerfusion_forward.42} parent=11 // pred_fallthru
        _
      // Predicated region
      $region29: #{transformerfusion_forward.42} parent=11 // pred_check
        %p236 = pneg %p170
      $region30: #{transformerfusion_forward.42} parent=11 // pred_check_branch
        %238 = sbr.rel (%p236) target = $region32
      $region31: #{transformerfusion_forward.42} parent=11 // pred_region
        %s239 = smul.u32 4, %s22
        %p240 = scmp.lt.s32.totalorder %s239, 3
        %s241 = scalar_select %p240, %s239, 3
        %s242 = scalar_lea.vmem %s5, %s241
        %s243 = smul.u32 4, %s22
      $region32: #{transformerfusion_forward.42} parent=11 // pred_fallthru
        _
    $region12: #{transformerfusion_forward.42} parent=5 // pred_fallthru
      _
    %p244 = scmp.lt.s32.totalorder %s12, 2
    // Predicated region
    $region33: #{transformerfusion_forward.42} parent=5 // pred_check
      %p245 = pneg %p244
    $region34: #{transformerfusion_forward.42} parent=5 // pred_check_branch
      %247 = sbr.rel (%p245) target = $region36
    $region35: #{transformerfusion_forward.42} parent=5 // pred_region
      // Predicated region
      $region37: #{transformerfusion_forward.42} parent=35 // pred_check
        %p248 = pneg %p44
      $region38: #{transformerfusion_forward.42} parent=35 // pred_check_branch
        %250 = sbr.rel (%p248) target = $region40
      $region39: #{transformerfusion_forward.42} parent=35 // pred_region
        %s251 = smul.u32 8, %s19
        %p252 = scmp.lt.s32.totalorder %s251, 15
        %s253 = scalar_select %p252, %s251, 15
        %s254 = smul.addr %s253, 2
        %s255 = smul.addr %s254, 8
        %s256 = scalar_lea.vmem %s0, %s255
        %s257 = smul.u32 8, %s19
      $region40: #{transformerfusion_forward.42} parent=35 // pred_fallthru
        _
    $region36: #{transformerfusion_forward.42} parent=5 // pred_fallthru
      _
    %p258 = scmp.le.s32.totalorder 1, %s12
    %p259 = scmp.lt.s32.totalorder %s12, 3
    %p260 = pnand %p258, %p259
    %p261 = pneg %p260
    // Predicated region
    $region41: #{transformerfusion_forward.42} parent=5 // pred_check
      _
    $region42: #{transformerfusion_forward.42} parent=5 // pred_check_branch
      %263 = sbr.rel (%p260) target = $region44
    $region43: #{transformerfusion_forward.42} parent=5 // pred_region
      %s264 = ssub.s32 %s12, 1
      %s265 = smul.u32 8, %s21
      %p266 = scmp.lt.s32.totalorder %s265, 15
      %s267 = scalar_select %p266, %s265, 15
      %s268 = smul.addr %s267, 2
      %s269 = smul.addr %s268, 8
      %s270 = scalar_lea.vmem %s0, %s269
      %p271 = pneg %p50
      %p272 = pneg %p47
      %s273 = smul.u32 4, %s22
      %p274 = scmp.lt.s32.totalorder %s273, 3
      %s275 = scalar_select %p274, %s273, 3
      %s276 = smul.addr %s275, 4
      %s277 = scalar_lea.vmem %s1, %s276
      %p278 = pneg %p76
      %p279 = pneg %p73
      %p280 = pneg %p97
      %p281 = pneg %p94
      %p282 = pneg %p118
      %p283 = pneg %p115
      %s284 = smul.u32 4, %s22
      %p285 = scmp.lt.s32.totalorder %s284, 3
      %s286 = scalar_select %p285, %s284, 3
      %s287 = scalar_lea.vmem %s4, %s286
      %p288 = pneg %p144
      %p289 = pneg %p141
      %s290 = smul.u32 4, %s22
      %p291 = scmp.lt.s32.totalorder %s290, 3
      %s292 = scalar_select %p291, %s290, 3
      %s293 = scalar_lea.vmem %s5, %s292
      %p294 = pneg %p170
      %p295 = pneg %p167
      %p296 = pneg %p198
      %p297 = pneg %p195
      %s298 = smul.u32 8, %s21
      %s299 = smul.u32 4, %s22
      %p300 = scmp.lt.s32.totalorder %s298, 15
      %s301 = scalar_select %p300, %s298, 15
      %p302 = scmp.lt.s32.totalorder %s299, 3
      %s303 = scalar_select %p302, %s299, 3
      %s304 = smul.addr %s301, 4
      %s305 = sadd.s32 %s303, %s304
      %s306 = smul.addr %s305, 4
      %s307 = scalar_lea.vmem %s6, %s306
      %s308 = smul.u32 8, %s21
      %p309 = scmp.lt.s32.totalorder %s308, 15
      %s310 = scalar_select %p309, %s308, 15
      %s311 = smul.addr %s310, 2
      %s312 = smul.addr %s311, 8
      %s313 = scalar_lea.vmem %s0, %s312
      %s314 = smul.u32 8, %s21
      %s315 = smul.u32 4, %s22
      %p316 = scmp.lt.s32.totalorder %s315, 3
      %s317 = scalar_select %p316, %s315, 3
      %s318 = smul.addr %s317, 4
      %s319 = scalar_lea.vmem %s1, %s318
      %s320 = smul.u32 4, %s22
      %s321 = smul.u32 4, %s22
      %p322 = scmp.lt.s32.totalorder %s321, 3
      %s323 = scalar_select %p322, %s321, 3
      %s324 = scalar_lea.vmem %s4, %s323
      %s325 = smul.u32 4, %s22
      %s326 = smul.u32 4, %s22
      %p327 = scmp.lt.s32.totalorder %s326, 3
      %s328 = scalar_select %p327, %s326, 3
      %s329 = scalar_lea.vmem %s5, %s328
      %s330 = smul.u32 4, %s22
      %s331 = smul.u32 8, %s21
      %s332 = smul.u32 4, %s22
      %p333 = scmp.lt.s32.totalorder %s331, 15
      %s334 = scalar_select %p333, %s331, 15
      %p335 = scmp.lt.s32.totalorder %s332, 3
      %s336 = scalar_select %p335, %s332, 3
      %s337 = smul.addr %s334, 4
      %s338 = sadd.s32 %s336, %s337
      %s339 = smul.addr %s338, 4
      %s340 = scalar_lea.vmem %s6, %s339
      %s341 = smul.u32 8, %s21
      %s342 = smul.u32 4, %s22
      %v344 = vld [vmem:[%s313] sm:$0xff]
      %v345 = vld [vmem:[%s313 + $0x8] sm:$0xff]
      %v346 = vld [vmem:[%s313 + $0x10] sm:$0xff]
      %v347 = vld [vmem:[%s313 + $0x18] sm:$0xff]
      %v348 = vld [vmem:[%s313 + $0x20] sm:$0xff]
      %v349 = vld [vmem:[%s313 + $0x28] sm:$0xff]
      %v350 = vld [vmem:[%s313 + $0x30] sm:$0xff]
      %v351 = vld [vmem:[%s313 + $0x38] sm:$0xff]
      %v352 = vld [vmem:[%s313 + $0x40] sm:$0xff]
      %v353 = vld [vmem:[%s313 + $0x48] sm:$0xff]
      %v354 = vld [vmem:[%s313 + $0x50] sm:$0xff]
      %v355 = vld [vmem:[%s313 + $0x58] sm:$0xff]
      %v356 = vld [vmem:[%s313 + $0x60] sm:$0xff]
      %v357 = vld [vmem:[%s313 + $0x68] sm:$0xff]
      %v358 = vld [vmem:[%s313 + $0x70] sm:$0xff]
      %v359 = vld [vmem:[%s313 + $0x78] sm:$0xff]
      %vm360 = vcmask 261120
      %v361 = vsel %vm360, %v345, 0.0
      %v362 = vadd.f32 %v344, %v361
      %363 = vadd.xlane.f32.xlu0 %v362
      %v364 = vpop.xlane.xlu0 %363
      %v365 = vsel %vm360, %v347, 0.0
      %v366 = vadd.f32 %v346, %v365
      %367 = vadd.xlane.f32.xlu0 %v366
      %v368 = vpop.xlane.xlu0 %367
      %v369 = vsel %vm360, %v349, 0.0
      %v370 = vadd.f32 %v348, %v369
      %371 = vadd.xlane.f32.xlu0 %v370
      %v372 = vpop.xlane.xlu0 %371
      %v373 = vsel %vm360, %v351, 0.0
      %v374 = vadd.f32 %v350, %v373
      %375 = vadd.xlane.f32.xlu0 %v374
      %v376 = vpop.xlane.xlu0 %375
      %v377 = vsel %vm360, %v353, 0.0
      %v378 = vadd.f32 %v352, %v377
      %379 = vadd.xlane.f32.xlu0 %v378
      %v380 = vpop.xlane.xlu0 %379
      %v381 = vsel %vm360, %v355, 0.0
      %v382 = vadd.f32 %v354, %v381
      %383 = vadd.xlane.f32.xlu0 %v382
      %v384 = vpop.xlane.xlu0 %383
      %v385 = vsel %vm360, %v357, 0.0
      %v386 = vadd.f32 %v356, %v385
      %387 = vadd.xlane.f32.xlu0 %v386
      %v388 = vpop.xlane.xlu0 %387
      %v389 = vsel %vm360, %v359, 0.0
      %v390 = vadd.f32 %v358, %v389
      %391 = vadd.xlane.f32.xlu0 %v390
      %v392 = vpop.xlane.xlu0 %391
      %v393 = vrcp.pop 160.0
      %v394 = vmul.f32 %v364, %v393
      %v395 = vmul.f32 %v368, %v393
      %v396 = vmul.f32 %v372, %v393
      %v397 = vmul.f32 %v376, %v393
      %v398 = vmul.f32 %v380, %v393
      %v399 = vmul.f32 %v384, %v393
      %v400 = vmul.f32 %v388, %v393
      %v401 = vmul.f32 %v392, %v393
      %v402 = vsub.f32 %v344, %v394
      %v403 = vsub.f32 %v345, %v394
      %v404 = vsub.f32 %v346, %v395
      %v405 = vsub.f32 %v347, %v395
      %v406 = vsub.f32 %v348, %v396
      %v407 = vsub.f32 %v349, %v396
      %v408 = vsub.f32 %v350, %v397
      %v409 = vsub.f32 %v351, %v397
      %v410 = vsub.f32 %v352, %v398
      %v411 = vsub.f32 %v353, %v398
      %v412 = vsub.f32 %v354, %v399
      %v413 = vsub.f32 %v355, %v399
      %v414 = vsub.f32 %v356, %v400
      %v415 = vsub.f32 %v357, %v400
      %v416 = vsub.f32 %v358, %v401
      %v417 = vsub.f32 %v359, %v401
      %v418 = vmul.f32 %v402, %v402
      %v419 = vmul.f32 %v403, %v403
      %v420 = vmul.f32 %v404, %v404
      %v421 = vmul.f32 %v405, %v405
      %v422 = vmul.f32 %v406, %v406
      %v423 = vmul.f32 %v407, %v407
      %v424 = vmul.f32 %v408, %v408
      %v425 = vmul.f32 %v409, %v409
      %v426 = vmul.f32 %v410, %v410
      %v427 = vmul.f32 %v411, %v411
      %v428 = vmul.f32 %v412, %v412
      %v429 = vmul.f32 %v413, %v413
      %v430 = vmul.f32 %v414, %v414
      %v431 = vmul.f32 %v415, %v415
      %v432 = vmul.f32 %v416, %v416
      %v433 = vmul.f32 %v417, %v417
      %v434 = vsel %vm360, %v419, 0.0
      %v435 = vadd.f32 %v418, %v434
      %436 = vadd.xlane.f32.xlu0 %v435
      %v437 = vpop.xlane.xlu0 %436
      %v438 = vsel %vm360, %v421, 0.0
      %v439 = vadd.f32 %v420, %v438
      %440 = vadd.xlane.f32.xlu0 %v439
      %v441 = vpop.xlane.xlu0 %440
      %v442 = vsel %vm360, %v423, 0.0
      %v443 = vadd.f32 %v422, %v442
      %444 = vadd.xlane.f32.xlu0 %v443
      %v445 = vpop.xlane.xlu0 %444
      %v446 = vsel %vm360, %v425, 0.0
      %v447 = vadd.f32 %v424, %v446
      %448 = vadd.xlane.f32.xlu0 %v447
      %v449 = vpop.xlane.xlu0 %448
      %v450 = vsel %vm360, %v427, 0.0
      %v451 = vadd.f32 %v426, %v450
      %452 = vadd.xlane.f32.xlu0 %v451
      %v453 = vpop.xlane.xlu0 %452
      %v454 = vsel %vm360, %v429, 0.0
      %v455 = vadd.f32 %v428, %v454
      %456 = vadd.xlane.f32.xlu0 %v455
      %v457 = vpop.xlane.xlu0 %456
      %v458 = vsel %vm360, %v431, 0.0
      %v459 = vadd.f32 %v430, %v458
      %460 = vadd.xlane.f32.xlu0 %v459
      %v461 = vpop.xlane.xlu0 %460
      %v462 = vsel %vm360, %v433, 0.0
      %v463 = vadd.f32 %v432, %v462
      %464 = vadd.xlane.f32.xlu0 %v463
      %v465 = vpop.xlane.xlu0 %464
      %v466 = vmul.f32 %v437, %v393
      %v467 = vmul.f32 %v441, %v393
      %v468 = vmul.f32 %v445, %v393
      %v469 = vmul.f32 %v449, %v393
      %v470 = vmul.f32 %v453, %v393
      %v471 = vmul.f32 %v457, %v393
      %v472 = vmul.f32 %v461, %v393
      %v473 = vmul.f32 %v465, %v393
      %v474 = vadd.f32 %v466, 1e-05
      %v475 = vadd.f32 %v467, 1e-05
      %v476 = vadd.f32 %v468, 1e-05
      %v477 = vadd.f32 %v469, 1e-05
      %v478 = vadd.f32 %v470, 1e-05
      %v479 = vadd.f32 %v471, 1e-05
      %v480 = vadd.f32 %v472, 1e-05
      %v481 = vadd.f32 %v473, 1e-05
      %v482 = vrsqrt.pop %v474
      %v483 = vrsqrt.pop %v475
      %v484 = vrsqrt.pop %v476
      %v485 = vrsqrt.pop %v477
      %v486 = vrsqrt.pop %v478
      %v487 = vrsqrt.pop %v479
      %v488 = vrsqrt.pop %v480
      %v489 = vrsqrt.pop %v481
      %v490 = vmul.f32 %v402, %v482
      %v491 = vmul.f32 %v403, %v482
      %v492 = vmul.f32 %v404, %v483
      %v493 = vmul.f32 %v405, %v483
      %v494 = vmul.f32 %v406, %v484
      %v495 = vmul.f32 %v407, %v484
      %v496 = vmul.f32 %v408, %v485
      %v497 = vmul.f32 %v409, %v485
      %v498 = vmul.f32 %v410, %v486
      %v499 = vmul.f32 %v411, %v486
      %v500 = vmul.f32 %v412, %v487
      %v501 = vmul.f32 %v413, %v487
      %v502 = vmul.f32 %v414, %v488
      %v503 = vmul.f32 %v415, %v488
      %v504 = vmul.f32 %v416, %v489
      %v505 = vmul.f32 %v417, %v489
      %v506 = vld [vmem:[%s2] sm:$0x3]
      %v508 = vlaneseq
      %v509 = vshrl.u32 %v508, 7
      %v510 = vsub.s32 0, %v509
      %v511 = vrot.slane %v506, %v510
      %v512 = vlaneseq
      %v513 = vshrl.u32 %v512, 7
      %v514 = vsub.s32 1, %v513
      %v515 = vrot.slane %v506, %v514
      %v518 = vmul.f32 %v490, %v511
      %v519 = vmul.f32 %v491, %v515
      %v520 = vmul.f32 %v492, %v511
      %v521 = vmul.f32 %v493, %v515
      %v522 = vmul.f32 %v494, %v511
      %v523 = vmul.f32 %v495, %v515
      %v524 = vmul.f32 %v496, %v511
      %v525 = vmul.f32 %v497, %v515
      %v526 = vmul.f32 %v498, %v511
      %v527 = vmul.f32 %v499, %v515
      %v528 = vmul.f32 %v500, %v511
      %v529 = vmul.f32 %v501, %v515
      %v530 = vmul.f32 %v502, %v511
      %v531 = vmul.f32 %v503, %v515
      %v532 = vmul.f32 %v504, %v511
      %v533 = vmul.f32 %v505, %v515
      %v534 = vld [vmem:[%s3] sm:$0x3]
      %v536 = vlaneseq
      %v537 = vshrl.u32 %v536, 7
      %v538 = vsub.s32 0, %v537
      %v539 = vrot.slane %v534, %v538
      %v540 = vlaneseq
      %v541 = vshrl.u32 %v540, 7
      %v542 = vsub.s32 1, %v541
      %v543 = vrot.slane %v534, %v542
      %v546 = vadd.f32 %v518, %v539
      %v547 = vadd.f32 %v519, %v543
      %v548 = vadd.f32 %v520, %v539
      %v549 = vadd.f32 %v521, %v543
      %v550 = vadd.f32 %v522, %v539
      %v551 = vadd.f32 %v523, %v543
      %v552 = vadd.f32 %v524, %v539
      %v553 = vadd.f32 %v525, %v543
      %v554 = vadd.f32 %v526, %v539
      %v555 = vadd.f32 %v527, %v543
      %v556 = vadd.f32 %v528, %v539
      %v557 = vadd.f32 %v529, %v543
      %v558 = vadd.f32 %v530, %v539
      %v559 = vadd.f32 %v531, %v543
      %v560 = vadd.f32 %v532, %v539
      %v561 = vadd.f32 %v533, %v543
      %v562 = vpack.c.bf16 %v548, %v546
      %v563 = vpack.c.bf16 %v549, %v547
      %v564 = vpack.c.bf16 %v552, %v550
      %v565 = vpack.c.bf16 %v553, %v551
      %v566 = vpack.c.bf16 %v556, %v554
      %v567 = vpack.c.bf16 %v557, %v555
      %v568 = vpack.c.bf16 %v560, %v558
      %v569 = vpack.c.bf16 %v561, %v559
      %v570 = vld [vmem:[%s319] sm:$0xff]
      %v571 = vld [vmem:[%s319 + $0x8] sm:$0xff]
      %v572 = vld [vmem:[%s319 + $0x10] sm:$0xff]
      %v573 = vld [vmem:[%s319 + $0x18] sm:$0xff]
      %v574 = vld [vmem:[%s319 + $0x20] sm:$0xff]
      %v575 = vld [vmem:[%s319 + $0x28] sm:$0xff]
      %v576 = vld [vmem:[%s319 + $0x30] sm:$0xff]
      %v577 = vld [vmem:[%s319 + $0x38] sm:$0xff]
      %v578 = vld [vmem:[%s319 + $0x40] sm:$0xff]
      %v579 = vld [vmem:[%s319 + $0x48] sm:$0xff]
      %v580 = vld [vmem:[%s319 + $0x50] sm:$0xff]
      %v581 = vld [vmem:[%s319 + $0x58] sm:$0xff]
      %v582 = vld [vmem:[%s319 + $0x60] sm:$0xff]
      %v583 = vld [vmem:[%s319 + $0x68] sm:$0xff]
      %v584 = vld [vmem:[%s319 + $0x70] sm:$0xff]
      %v585 = vld [vmem:[%s319 + $0x78] sm:$0xff]
      %v586 = vld [vmem:[%s319 + $0x80] sm:$0xff]
      %v587 = vld [vmem:[%s319 + $0x88] sm:$0xff]
      %v588 = vld [vmem:[%s319 + $0x90] sm:$0xff]
      %v589 = vld [vmem:[%s319 + $0x98] sm:$0xff]
      %v590 = vld [vmem:[%s319 + $0xa0] sm:$0xff]
      %v591 = vld [vmem:[%s319 + $0xa8] sm:$0xff]
      %v592 = vld [vmem:[%s319 + $0xb0] sm:$0xff]
      %v593 = vld [vmem:[%s319 + $0xb8] sm:$0xff]
      %v594 = vld [vmem:[%s319 + $0xc0] sm:$0xff]
      %v595 = vld [vmem:[%s319 + $0xc8] sm:$0xff]
      %v596 = vld [vmem:[%s319 + $0xd0] sm:$0xff]
      %v597 = vld [vmem:[%s319 + $0xd8] sm:$0xff]
      %v598 = vld [vmem:[%s319 + $0xe0] sm:$0xff]
      %v599 = vld [vmem:[%s319 + $0xe8] sm:$0xff]
      %v600 = vld [vmem:[%s319 + $0xf0] sm:$0xff]
      %v601 = vld [vmem:[%s319 + $0xf8] sm:$0xff]
      %v602 = vld [vmem:[%s319 + $0x100] sm:$0xff]
      %v603 = vld [vmem:[%s319 + $0x108] sm:$0xff]
      %v604 = vld [vmem:[%s319 + $0x110] sm:$0xff]
      %v605 = vld [vmem:[%s319 + $0x118] sm:$0xff]
      %v606 = vld [vmem:[%s319 + $0x120] sm:$0xff]
      %v607 = vld [vmem:[%s319 + $0x128] sm:$0xff]
      %v608 = vld [vmem:[%s319 + $0x130] sm:$0xff]
      %v609 = vld [vmem:[%s319 + $0x138] sm:$0xff]
      %v650 = vunpack.c.l.b16 %v570
      %v651 = vunpack.c.h.b16 %v570
      %v652 = vunpack.c.l.b16 %v571
      %v653 = vunpack.c.h.b16 %v571
      %v654 = vunpack.c.l.b16 %v572
      %v655 = vunpack.c.h.b16 %v572
      %v656 = vunpack.c.l.b16 %v573
      %v657 = vunpack.c.h.b16 %v573
      %v658 = vunpack.c.l.b16 %v574
      %v659 = vunpack.c.h.b16 %v574
      %v660 = vunpack.c.l.b16 %v575
      %v661 = vunpack.c.h.b16 %v575
      %v662 = vunpack.c.l.b16 %v576
      %v663 = vunpack.c.h.b16 %v576
      %v664 = vunpack.c.l.b16 %v577
      %v665 = vunpack.c.h.b16 %v577
      %v666 = vunpack.c.l.b16 %v578
      %v667 = vunpack.c.h.b16 %v578
      %v668 = vunpack.c.l.b16 %v579
      %v669 = vunpack.c.h.b16 %v579
      %v670 = vunpack.c.l.b16 %v580
      %v671 = vunpack.c.h.b16 %v580
      %v672 = vunpack.c.l.b16 %v581
      %v673 = vunpack.c.h.b16 %v581
      %v674 = vunpack.c.l.b16 %v582
      %v675 = vunpack.c.h.b16 %v582
      %v676 = vunpack.c.l.b16 %v583
      %v677 = vunpack.c.h.b16 %v583
      %v678 = vunpack.c.l.b16 %v584
      %v679 = vunpack.c.h.b16 %v584
      %v680 = vunpack.c.l.b16 %v585
      %v681 = vunpack.c.h.b16 %v585
      %v682 = vunpack.c.l.b16 %v586
      %v683 = vunpack.c.h.b16 %v586
      %v684 = vunpack.c.l.b16 %v587
      %v685 = vunpack.c.h.b16 %v587
      %v686 = vunpack.c.l.b16 %v588
      %v687 = vunpack.c.h.b16 %v588
      %v688 = vunpack.c.l.b16 %v589
      %v689 = vunpack.c.h.b16 %v589
      %v690 = vunpack.c.l.b16 %v590
      %v691 = vunpack.c.h.b16 %v590
      %v692 = vunpack.c.l.b16 %v591
      %v693 = vunpack.c.h.b16 %v591
      %v694 = vunpack.c.l.b16 %v592
      %v695 = vunpack.c.h.b16 %v592
      %v696 = vunpack.c.l.b16 %v593
      %v697 = vunpack.c.h.b16 %v593
      %v698 = vunpack.c.l.b16 %v594
      %v699 = vunpack.c.h.b16 %v594
      %v700 = vunpack.c.l.b16 %v595
      %v701 = vunpack.c.h.b16 %v595
      %v702 = vunpack.c.l.b16 %v596
      %v703 = vunpack.c.h.b16 %v596
      %v704 = vunpack.c.l.b16 %v597
      %v705 = vunpack.c.h.b16 %v597
      %v706 = vunpack.c.l.b16 %v598
      %v707 = vunpack.c.h.b16 %v598
      %v708 = vunpack.c.l.b16 %v599
      %v709 = vunpack.c.h.b16 %v599
      %v710 = vunpack.c.l.b16 %v600
      %v711 = vunpack.c.h.b16 %v600
      %v712 = vunpack.c.l.b16 %v601
      %v713 = vunpack.c.h.b16 %v601
      %v714 = vunpack.c.l.b16 %v602
      %v715 = vunpack.c.h.b16 %v602
      %v716 = vunpack.c.l.b16 %v603
      %v717 = vunpack.c.h.b16 %v603
      %v718 = vunpack.c.l.b16 %v604
      %v719 = vunpack.c.h.b16 %v604
      %v720 = vunpack.c.l.b16 %v605
      %v721 = vunpack.c.h.b16 %v605
      %v722 = vunpack.c.l.b16 %v606
      %v723 = vunpack.c.h.b16 %v606
      %v724 = vunpack.c.l.b16 %v607
      %v725 = vunpack.c.h.b16 %v607
      %v726 = vunpack.c.l.b16 %v608
      %v727 = vunpack.c.h.b16 %v608
      %v728 = vunpack.c.l.b16 %v609
      %v729 = vunpack.c.h.b16 %v609
      %v730 = vpack.c.b16 %v654, %v650
      %v731 = vpack.c.b16 %v655, %v651
      %v732 = vpack.c.b16 %v656, %v652
      %v733 = vpack.c.b16 %v657, %v653
      %v734 = vpack.c.b16 %v662, %v658
      %v735 = vpack.c.b16 %v663, %v659
      %v736 = vpack.c.b16 %v664, %v660
      %v737 = vpack.c.b16 %v665, %v661
      %v738 = vpack.c.b16 %v670, %v666
      %v739 = vpack.c.b16 %v671, %v667
      %v740 = vpack.c.b16 %v672, %v668
      %v741 = vpack.c.b16 %v673, %v669
      %v742 = vpack.c.b16 %v678, %v674
      %v743 = vpack.c.b16 %v679, %v675
      %v744 = vpack.c.b16 %v680, %v676
      %v745 = vpack.c.b16 %v681, %v677
      %v746 = vpack.c.b16 %v686, %v682
      %v747 = vpack.c.b16 %v687, %v683
      %v748 = vpack.c.b16 %v688, %v684
      %v749 = vpack.c.b16 %v689, %v685
      %v750 = vpack.c.b16 %v694, %v690
      %v751 = vpack.c.b16 %v695, %v691
      %v752 = vpack.c.b16 %v696, %v692
      %v753 = vpack.c.b16 %v697, %v693
      %v754 = vpack.c.b16 %v702, %v698
      %v755 = vpack.c.b16 %v703, %v699
      %v756 = vpack.c.b16 %v704, %v700
      %v757 = vpack.c.b16 %v705, %v701
      %v758 = vpack.c.b16 %v710, %v706
      %v759 = vpack.c.b16 %v711, %v707
      %v760 = vpack.c.b16 %v712, %v708
      %v761 = vpack.c.b16 %v713, %v709
      %v762 = vpack.c.b16 %v718, %v714
      %v763 = vpack.c.b16 %v719, %v715
      %v764 = vpack.c.b16 %v720, %v716
      %v765 = vpack.c.b16 %v721, %v717
      %v766 = vpack.c.b16 %v726, %v722
      %v767 = vpack.c.b16 %v727, %v723
      %v768 = vpack.c.b16 %v728, %v724
      %v769 = vpack.c.b16 %v729, %v725
      %v811 = vsel %vm360, %v563, 0
      %v814 = vsel %vm360, %v565, 0
      %v817 = vsel %vm360, %v567, 0
      %v820 = vsel %vm360, %v569, 0
      %822 = vmatprep.subr.bf16.mxu0 %v731
      %823 = vmatpush1.bf16.msra.mxu0 %v730
      %824 = vmatprep.subr.bf16.mxu0 %v735
      %825 = vmatpush1.bf16.msra.mxu0 %v734
      %826 = vmatprep.subr.bf16.mxu0 %v739
      %827 = vmatpush1.bf16.msra.mxu0 %v738
      %828 = vmatprep.subr.bf16.mxu0 %v743
      %829 = vmatpush1.bf16.msra.mxu0 %v742
      %830 = vmatprep.subr.bf16.mxu0 %v747
      %831 = vmatpush1.bf16.msra.mxu0 %v746
      %832 = vmatprep.subr.bf16.mxu0 %v751
      %833 = vmatpush1.bf16.msra.mxu0 %v750
      %834 = vmatprep.subr.bf16.mxu0 %v755
      %835 = vmatpush1.bf16.msra.mxu0 %v754
      %836 = vmatprep.subr.bf16.mxu0 %v759
      %837 = vmatpush1.bf16.msra.mxu0 %v758
      %838 = vmatprep.subr.bf16.mxu0 %v763
      %839 = vmatpush1.bf16.msra.mxu0 %v762
      %840 = vmatprep.subr.bf16.mxu0 %v767
      %841 = vmatpush1.bf16.msra.mxu0 %v766
      %842 = vmatprep.subr.bf16.mxu0 0
      %843 = vmatpush1.bf16.msra.mxu0 0
      %844 = vmatprep.subr.bf16.mxu0 0
      %845 = vmatpush1.bf16.msra.mxu0 0
      %846 = vmatprep.subr.bf16.mxu0 0
      %847 = vmatpush1.bf16.msra.mxu0 0
      %848 = vmatprep.subr.bf16.mxu0 0
      %849 = vmatpush1.bf16.msra.mxu0 0
      %850 = vmatprep.subr.bf16.mxu0 0
      %851 = vmatpush1.bf16.msra.mxu0 0
      %852 = vmatprep.subr.bf16.mxu0 0
      %853 = vmatpush1.bf16.msra.mxu0 0
      %854 = vmatprep.mubr.bf16.mxu0 %v811
      %855 = vmatmul.mubr.bf16.gmra.mrb[0].mxu0 %v562
      %v856 = vpop.f32.mrb[0].mxu0
      %v857 = vadd.f32 0.0, %v856
      %v858 = vpop.f32.mrb[0].mxu0
      %v859 = vadd.f32 0.0, %v858
      %v860 = vpop.f32.mrb[0].mxu0
      %v861 = vadd.f32 0.0, %v860
      %v862 = vpop.f32.mrb[0].mxu0
      %v863 = vadd.f32 0.0, %v862
      %864 = vmatprep.mubr.bf16.mxu0 %v814
      %865 = vmatmul.mubr.bf16.gmra.mrb[0].mxu0 %v564
      %v866 = vpop.f32.mrb[0].mxu0
      %v867 = vadd.f32 0.0, %v866
      %v868 = vpop.f32.mrb[0].mxu0
      %v869 = vadd.f32 0.0, %v868
      %v870 = vpop.f32.mrb[0].mxu0
      %v871 = vadd.f32 0.0, %v870
      %v872 = vpop.f32.mrb[0].mxu0
      %v873 = vadd.f32 0.0, %v872
      %874 = vmatprep.mubr.bf16.mxu0 %v817
      %875 = vmatmul.mubr.bf16.gmra.mrb[0].mxu0 %v566
      %v876 = vpop.f32.mrb[0].mxu0
      %v877 = vadd.f32 0.0, %v876
      %v878 = vpop.f32.mrb[0].mxu0
      %v879 = vadd.f32 0.0, %v878
      %v880 = vpop.f32.mrb[0].mxu0
      %v881 = vadd.f32 0.0, %v880
      %v882 = vpop.f32.mrb[0].mxu0
      %v883 = vadd.f32 0.0, %v882
      %884 = vmatprep.mubr.bf16.mxu0 %v820
      %885 = vmatmul.mubr.bf16.gmra.mrb[0].mxu0 %v568
      %v886 = vpop.f32.mrb[0].mxu0
      %v887 = vadd.f32 0.0, %v886
      %v888 = vpop.f32.mrb[0].mxu0
      %v889 = vadd.f32 0.0, %v888
      %v890 = vpop.f32.mrb[0].mxu0
      %v891 = vadd.f32 0.0, %v890
      %v892 = vpop.f32.mrb[0].mxu0
      %v893 = vadd.f32 0.0, %v892
      %894 = vdwg.mxu0
      %895 = vmatprep.subr.bf16.mxu0 %v733
      %896 = vmatpush1.bf16.msra.mxu0 %v732
      %897 = vmatprep.subr.bf16.mxu0 %v737
      %898 = vmatpush1.bf16.msra.mxu0 %v736
      %899 = vmatprep.subr.bf16.mxu0 %v741
      %900 = vmatpush1.bf16.msra.mxu0 %v740
      %901 = vmatprep.subr.bf16.mxu0 %v745
      %902 = vmatpush1.bf16.msra.mxu0 %v744
      %903 = vmatprep.subr.bf16.mxu0 %v749
      %904 = vmatpush1.bf16.msra.mxu0 %v748
      %905 = vmatprep.subr.bf16.mxu0 %v753
      %906 = vmatpush1.bf16.msra.mxu0 %v752
      %907 = vmatprep.subr.bf16.mxu0 %v757
      %908 = vmatpush1.bf16.msra.mxu0 %v756
      %909 = vmatprep.subr.bf16.mxu0 %v761
      %910 = vmatpush1.bf16.msra.mxu0 %v760
      %911 = vmatprep.subr.bf16.mxu0 %v765
      %912 = vmatpush1.bf16.msra.mxu0 %v764
      %913 = vmatprep.subr.bf16.mxu0 %v769
      %914 = vmatpush1.bf16.msra.mxu0 %v768
      %915 = vmatprep.subr.bf16.mxu0 0
      %916 = vmatpush1.bf16.msra.mxu0 0
      %917 = vmatprep.subr.bf16.mxu0 0
      %918 = vmatpush1.bf16.msra.mxu0 0
      %919 = vmatprep.subr.bf16.mxu0 0
      %920 = vmatpush1.bf16.msra.mxu0 0
      %921 = vmatprep.subr.bf16.mxu0 0
      %922 = vmatpush1.bf16.msra.mxu0 0
      %923 = vmatprep.subr.bf16.mxu0 0
      %924 = vmatpush1.bf16.msra.mxu0 0
      %925 = vmatprep.subr.bf16.mxu0 0
      %926 = vmatpush1.bf16.msra.mxu0 0
      %927 = vmatprep.mubr.bf16.mxu0 %v811
      %928 = vmatmul.mubr.bf16.gmra.mrb[0].mxu0 %v562
      %v929 = vpop.f32.mrb[0].mxu0
      %v930 = vadd.f32 0.0, %v929
      %v931 = vpop.f32.mrb[0].mxu0
      %v932 = vadd.f32 0.0, %v931
      %v933 = vpop.f32.mrb[0].mxu0
      %v934 = vadd.f32 0.0, %v933
      %v935 = vpop.f32.mrb[0].mxu0
      %v936 = vadd.f32 0.0, %v935
      %937 = vmatprep.mubr.bf16.mxu0 %v814
      %938 = vmatmul.mubr.bf16.gmra.mrb[0].mxu0 %v564
      %v939 = vpop.f32.mrb[0].mxu0
      %v940 = vadd.f32 0.0, %v939
      %v941 = vpop.f32.mrb[0].mxu0
      %v942 = vadd.f32 0.0, %v941
      %v943 = vpop.f32.mrb[0].mxu0
      %v944 = vadd.f32 0.0, %v943
      %v945 = vpop.f32.mrb[0].mxu0
      %v946 = vadd.f32 0.0, %v945
      %947 = vmatprep.mubr.bf16.mxu0 %v817
      %948 = vmatmul.mubr.bf16.gmra.mrb[0].mxu0 %v566
      %v949 = vpop.f32.mrb[0].mxu0
      %v950 = vadd.f32 0.0, %v949
      %v951 = vpop.f32.mrb[0].mxu0
      %v952 = vadd.f32 0.0, %v951
      %v953 = vpop.f32.mrb[0].mxu0
      %v954 = vadd.f32 0.0, %v953
      %v955 = vpop.f32.mrb[0].mxu0
      %v956 = vadd.f32 0.0, %v955
      %957 = vmatprep.mubr.bf16.mxu0 %v820
      %958 = vmatmul.mubr.bf16.gmra.mrb[0].mxu0 %v568
      %v959 = vpop.f32.mrb[0].mxu0
      %v960 = vadd.f32 0.0, %v959
      %v961 = vpop.f32.mrb[0].mxu0
      %v962 = vadd.f32 0.0, %v961
      %v963 = vpop.f32.mrb[0].mxu0
      %v964 = vadd.f32 0.0, %v963
      %v965 = vpop.f32.mrb[0].mxu0
      %v966 = vadd.f32 0.0, %v965
      %967 = vdwg.mxu0
      %v968 = vld [vmem:[%s324] sm:$0xf]
      %v970 = vlaneseq
      %v971 = vshrl.u32 %v970, 7
      %v972 = vsub.s32 0, %v971
      %v973 = vrot.slane %v968, %v972
      %v974 = vlaneseq
      %v975 = vshrl.u32 %v974, 7
      %v976 = vsub.s32 1, %v975
      %v977 = vrot.slane %v968, %v976
      %v978 = vlaneseq
      %v979 = vshrl.u32 %v978, 7
      %v980 = vsub.s32 2, %v979
      %v981 = vrot.slane %v968, %v980
      %v982 = vlaneseq
      %v983 = vshrl.u32 %v982, 7
      %v984 = vsub.s32 3, %v983
      %v985 = vrot.slane %v968, %v984
      %v990 = vmul.f32 %v857, %v973
      %v991 = vmul.f32 %v859, %v977
      %v992 = vmul.f32 %v930, %v981
      %v993 = vmul.f32 %v932, %v985
      %v994 = vmul.f32 %v861, %v973
      %v995 = vmul.f32 %v863, %v977
      %v996 = vmul.f32 %v934, %v981
      %v997 = vmul.f32 %v936, %v985
      %v998 = vmul.f32 %v867, %v973
      %v999 = vmul.f32 %v869, %v977
      %v1000 = vmul.f32 %v940, %v981
      %v1001 = vmul.f32 %v942, %v985
      %v1002 = vmul.f32 %v871, %v973
      %v1003 = vmul.f32 %v873, %v977
      %v1004 = vmul.f32 %v944, %v981
      %v1005 = vmul.f32 %v946, %v985
      %v1006 = vmul.f32 %v877, %v973
      %v1007 = vmul.f32 %v879, %v977
      %v1008 = vmul.f32 %v950, %v981
      %v1009 = vmul.f32 %v952, %v985
      %v1010 = vmul.f32 %v881, %v973
      %v1011 = vmul.f32 %v883, %v977
      %v1012 = vmul.f32 %v954, %v981
      %v1013 = vmul.f32 %v956, %v985
      %v1014 = vmul.f32 %v887, %v973
      %v1015 = vmul.f32 %v889, %v977
      %v1016 = vmul.f32 %v960, %v981
      %v1017 = vmul.f32 %v962, %v985
      %v1018 = vmul.f32 %v891, %v973
      %v1019 = vmul.f32 %v893, %v977
      %v1020 = vmul.f32 %v964, %v981
      %v1021 = vmul.f32 %v966, %v985
      %v1022 = vld [vmem:[%s329] sm:$0xf]
      %v1024 = vlaneseq
      %v1025 = vshrl.u32 %v1024, 7
      %v1026 = vsub.s32 0, %v1025
      %v1027 = vrot.slane %v1022, %v1026
      %v1028 = vlaneseq
      %v1029 = vshrl.u32 %v1028, 7
      %v1030 = vsub.s32 1, %v1029
      %v1031 = vrot.slane %v1022, %v1030
      %v1032 = vlaneseq
      %v1033 = vshrl.u32 %v1032, 7
      %v1034 = vsub.s32 2, %v1033
      %v1035 = vrot.slane %v1022, %v1034
      %v1036 = vlaneseq
      %v1037 = vshrl.u32 %v1036, 7
      %v1038 = vsub.s32 3, %v1037
      %v1039 = vrot.slane %v1022, %v1038
      %v1044 = vadd.f32 %v990, %v1027
      %v1045 = vadd.f32 %v991, %v1031
      %v1046 = vadd.f32 %v992, %v1035
      %v1047 = vadd.f32 %v993, %v1039
      %v1048 = vadd.f32 %v994, %v1027
      %v1049 = vadd.f32 %v995, %v1031
      %v1050 = vadd.f32 %v996, %v1035
      %v1051 = vadd.f32 %v997, %v1039
      %v1052 = vadd.f32 %v998, %v1027
      %v1053 = vadd.f32 %v999, %v1031
      %v1054 = vadd.f32 %v1000, %v1035
      %v1055 = vadd.f32 %v1001, %v1039
      %v1056 = vadd.f32 %v1002, %v1027
      %v1057 = vadd.f32 %v1003, %v1031
      %v1058 = vadd.f32 %v1004, %v1035
      %v1059 = vadd.f32 %v1005, %v1039
      %v1060 = vadd.f32 %v1006, %v1027
      %v1061 = vadd.f32 %v1007, %v1031
      %v1062 = vadd.f32 %v1008, %v1035
      %v1063 = vadd.f32 %v1009, %v1039
      %v1064 = vadd.f32 %v1010, %v1027
      %v1065 = vadd.f32 %v1011, %v1031
      %v1066 = vadd.f32 %v1012, %v1035
      %v1067 = vadd.f32 %v1013, %v1039
      %v1068 = vadd.f32 %v1014, %v1027
      %v1069 = vadd.f32 %v1015, %v1031
      %v1070 = vadd.f32 %v1016, %v1035
      %v1071 = vadd.f32 %v1017, %v1039
      %v1072 = vadd.f32 %v1018, %v1027
      %v1073 = vadd.f32 %v1019, %v1031
      %v1074 = vadd.f32 %v1020, %v1035
      %v1075 = vadd.f32 %v1021, %v1039
      %v1076 = vpack.c.bf16 %v1048, %v1044
      %v1077 = vpack.c.bf16 %v1049, %v1045
      %v1078 = vpack.c.bf16 %v1050, %v1046
      %v1079 = vpack.c.bf16 %v1051, %v1047
      %v1080 = vpack.c.bf16 %v1056, %v1052
      %v1081 = vpack.c.bf16 %v1057, %v1053
      %v1082 = vpack.c.bf16 %v1058, %v1054
      %v1083 = vpack.c.bf16 %v1059, %v1055
      %v1084 = vpack.c.bf16 %v1064, %v1060
      %v1085 = vpack.c.bf16 %v1065, %v1061
      %v1086 = vpack.c.bf16 %v1066, %v1062
      %v1087 = vpack.c.bf16 %v1067, %v1063
      %v1088 = vpack.c.bf16 %v1072, %v1068
      %v1089 = vpack.c.bf16 %v1073, %v1069
      %v1090 = vpack.c.bf16 %v1074, %v1070
      %v1091 = vpack.c.bf16 %v1075, %v1071
      %v1108 = vunpack.c.l.b16 %v1076
      %v1109 = vunpack.c.l.b16 %v1077
      %v1110 = vunpack.c.l.b16 %v1078
      %v1111 = vunpack.c.l.b16 %v1079
      %v1112 = vunpack.c.h.b16 %v1076
      %v1113 = vunpack.c.h.b16 %v1077
      %v1114 = vunpack.c.h.b16 %v1078
      %v1115 = vunpack.c.h.b16 %v1079
      %v1116 = vunpack.c.l.b16 %v1080
      %v1117 = vunpack.c.l.b16 %v1081
      %v1118 = vunpack.c.l.b16 %v1082
      %v1119 = vunpack.c.l.b16 %v1083
      %v1120 = vunpack.c.h.b16 %v1080
      %v1121 = vunpack.c.h.b16 %v1081
      %v1122 = vunpack.c.h.b16 %v1082
      %v1123 = vunpack.c.h.b16 %v1083
      %v1124 = vunpack.c.l.b16 %v1084
      %v1125 = vunpack.c.l.b16 %v1085
      %v1126 = vunpack.c.l.b16 %v1086
      %v1127 = vunpack.c.l.b16 %v1087
      %v1128 = vunpack.c.h.b16 %v1084
      %v1129 = vunpack.c.h.b16 %v1085
      %v1130 = vunpack.c.h.b16 %v1086
      %v1131 = vunpack.c.h.b16 %v1087
      %v1132 = vunpack.c.l.b16 %v1088
      %v1133 = vunpack.c.l.b16 %v1089
      %v1134 = vunpack.c.l.b16 %v1090
      %v1135 = vunpack.c.l.b16 %v1091
      %v1136 = vunpack.c.h.b16 %v1088
      %v1137 = vunpack.c.h.b16 %v1089
      %v1138 = vunpack.c.h.b16 %v1090
      %v1139 = vunpack.c.h.b16 %v1091
      %v1140 = vpack.c.b16 %v1109, %v1108
      %v1141 = vpack.c.b16 %v1111, %v1110
      %v1142 = vpack.c.b16 %v1113, %v1112
      %v1143 = vpack.c.b16 %v1115, %v1114
      %v1144 = vpack.c.b16 %v1117, %v1116
      %v1145 = vpack.c.b16 %v1119, %v1118
      %v1146 = vpack.c.b16 %v1121, %v1120
      %v1147 = vpack.c.b16 %v1123, %v1122
      %v1148 = vpack.c.b16 %v1125, %v1124
      %v1149 = vpack.c.b16 %v1127, %v1126
      %v1150 = vpack.c.b16 %v1129, %v1128
      %v1151 = vpack.c.b16 %v1131, %v1130
      %v1152 = vpack.c.b16 %v1133, %v1132
      %v1153 = vpack.c.b16 %v1135, %v1134
      %v1154 = vpack.c.b16 %v1137, %v1136
      %v1155 = vpack.c.b16 %v1139, %v1138
      %1172 = vst [vmem:[%s340] sm:$0xff] %v1140
      %vm1173 = vcmask 1043456
      %vm1174 = vcmask 785412
      %vm1175 = vmor %vm1174, %vm1173
      %1176 = vst.msk [vmem:[%s340 + $0x8] sm:$0xff] %vm1175, %v1141
      %1177 = vst [vmem:[%s340 + $0x10] sm:$0xff] %v1142
      %1178 = vst.msk [vmem:[%s340 + $0x18] sm:$0xff] %vm1175, %v1143
      %1179 = vst [vmem:[%s340 + $0x20] sm:$0xff] %v1144
      %1180 = vst.msk [vmem:[%s340 + $0x28] sm:$0xff] %vm1175, %v1145
      %1181 = vst [vmem:[%s340 + $0x30] sm:$0xff] %v1146
      %1182 = vst.msk [vmem:[%s340 + $0x38] sm:$0xff] %vm1175, %v1147
      %1183 = vst [vmem:[%s340 + $0x40] sm:$0xff] %v1148
      %1184 = vst.msk [vmem:[%s340 + $0x48] sm:$0xff] %vm1175, %v1149
      %1185 = vst [vmem:[%s340 + $0x50] sm:$0xff] %v1150
      %1186 = vst.msk [vmem:[%s340 + $0x58] sm:$0xff] %vm1175, %v1151
      %1187 = vst [vmem:[%s340 + $0x60] sm:$0xff] %v1152
      %1188 = vst.msk [vmem:[%s340 + $0x68] sm:$0xff] %vm1175, %v1153
      %1189 = vst [vmem:[%s340 + $0x70] sm:$0xff] %v1154
      %1190 = vst.msk [vmem:[%s340 + $0x78] sm:$0xff] %vm1175, %v1155
      %s1191 = smul.u32 8, %s21
      %s1192 = smul.u32 4, %s22
      %p1193 = scmp.lt.s32.totalorder %s1191, 15
      %s1194 = scalar_select %p1193, %s1191, 15
      %p1195 = scmp.lt.s32.totalorder %s1192, 3
      %s1196 = scalar_select %p1195, %s1192, 3
      %s1197 = smul.addr %s1194, 4
      %s1198 = sadd.s32 %s1196, %s1197
      %s1199 = smul.addr %s1198, 4
      %s1200 = scalar_lea.vmem %s6, %s1199
      // Predicated region
      $region45: #{transformerfusion_forward.42} parent=43 // pred_check
        %p1201 = pneg %p195
      $region46: #{transformerfusion_forward.42} parent=43 // pred_check_branch
        %1203 = sbr.rel (%p1201) target = $region48
      $region47: #{transformerfusion_forward.42} parent=43 // pred_region
        %s1204 = smul.u32 8, %s21
        %s1205 = smul.u32 4, %s22
      $region48: #{transformerfusion_forward.42} parent=43 // pred_fallthru
        _
    $region44: #{transformerfusion_forward.42} parent=5 // pred_fallthru
      _
    %p1206 = scmp.le.s32.totalorder 2, %s12
    // Predicated region
    $region49: #{transformerfusion_forward.42} parent=5 // pred_check
      %p1207 = pneg %p1206
    $region50: #{transformerfusion_forward.42} parent=5 // pred_check_branch
      %1209 = sbr.rel (%p1207) target = $region52
    $region51: #{transformerfusion_forward.42} parent=5 // pred_region
      %s1210 = ssub.s32 %s12, 2
      // Predicated region
      $region53: #{transformerfusion_forward.42} parent=51 // pred_check
        %p1211 = pneg %p201
      $region54: #{transformerfusion_forward.42} parent=51 // pred_check_branch
        %1213 = sbr.rel (%p1211) target = $region56
      $region55: #{transformerfusion_forward.42} parent=51 // pred_region
        %s1214 = smul.u32 8, %s23
        %s1215 = smul.u32 4, %s24
        %p1216 = scmp.lt.s32.totalorder %s1214, 15
        %s1217 = scalar_select %p1216, %s1214, 15
        %p1218 = scmp.lt.s32.totalorder %s1215, 3
        %s1219 = scalar_select %p1218, %s1215, 3
        %s1220 = smul.addr %s1217, 4
        %s1221 = sadd.s32 %s1219, %s1220
        %s1222 = smul.addr %s1221, 4
        %s1223 = scalar_lea.vmem %s6, %s1222
      $region56: #{transformerfusion_forward.42} parent=51 // pred_fallthru
        _
    $region52: #{transformerfusion_forward.42} parent=5 // pred_fallthru
      _
  $region6: #{transformerfusion_forward.42} parent=0 // loop_footer
    %s16 = sadd.s32 1, %s12
  $region7: #{transformerfusion_forward.42} parent=0 // loop_footer_branch
    %11 = sbr.rel target = $region3
  $region8: #{transformerfusion_forward.42} parent=0 // loop_exit
    _

// kernel: transformerfusion_forward.44
$region0: #{transformerfusion_forward.44}
  #allocation0 [shape = 'u32[]', space=smem, size = 0x4, offset = 0x4, fixed_abs, tag = 'smem constant byte address 0x4 - core index']
  #allocation1 [shape = 'u32[144,128]{1,0:T(1,128)}', space=vmem, size = 0x12000, scoped, tag = 'internal scratch']
  #allocation2 [shape = 'f32[64,160]{1,0:T(8,128)}', space=vmem, size = 0x10000, scoped, tag = 'scratch operand']
  %s0 = inlined_call_operand.vmem [shape: bf16[128,160], index: 0, kind: input, shape index: {}]
  %s1 = inlined_call_operand.vmem [shape: bf16[160,160], index: 1, kind: input, shape index: {}]
  %s2 = inlined_call_operand.vmem [shape: f32[1,160], index: 2, kind: input, shape index: {}]
  %s3 = inlined_call_operand.vmem [shape: f32[1,160], index: 3, kind: input, shape index: {}]
  %s4 = inlined_call_operand.vmem [shape: f32[128,160], index: 4, kind: output, shape index: {}]
  %s5 = sld [smem:[#allocation0]]
  $region57: #{transformerfusion_forward.44} parent=0
    _
  %s7 = ssub.s32 1, %s5
  %s8 = scalar_select 0, %s7, %s5
  loop: start=0, step=1, limit=4
  $region2: #{transformerfusion_forward.44} parent=0 // loop_pre_header
    _
  $region3: #{transformerfusion_forward.44} parent=0 // loop_header
    %s10 = sphi 0, %s14
    %p11 = scmp.ge.s32.totalorder %s10, 4
    %s17 = sphi 0, %s36
    %s18 = sphi 0, %s32
    %s19 = sphi 0, %s28
    %s20 = sphi 0, %s17
    %s21 = sphi 0, %s18
    %s22 = sphi 0, %s19
    %s23 = sphi 0, %s20
    %s24 = sphi 0, %s21
    %s25 = sphi 0, %s22
    %s41 = sphi 0, %s43
    %s44 = sphi 0, %s41
    %s45 = sphi 0, %s44
    %s61 = sphi 0, %s45
    %s69 = sphi 0, %s71
    %s72 = sphi 0, %s69
    %s73 = sphi 0, %s72
    %s89 = sphi 0, %s73
    %s95 = sphi 0, %s97
    %s98 = sphi 0, %s95
    %s99 = sphi 0, %s98
    %s115 = sphi 0, %s99
    %s121 = sphi 0, %s123
    %s124 = sphi 0, %s121
    %s125 = sphi 0, %s124
    %s141 = sphi 0, %s125
    %s149 = sphi 0, %s151
    %s152 = sphi 0, %s149
    %s153 = sphi 0, %s152
    %s169 = sphi 0, %s153
  $region4: #{transformerfusion_forward.44} parent=0 // loop_header_branch
    %13 = sbr.rel (%p11) target = $region8
  $region5: #{transformerfusion_forward.44} parent=0 // loop_body
    %s15 = ssub.s32 %s10, 1
    %s16 = ssub.s32 %s10, 2
    %s26 = sadd.s32 1, %s19
    %p27 = scmp.ge.s32.totalorder %s26, 1
    %s28 = scalar_select %p27, 0, %s26
    %s29 = sadd.s32 1, %s18
    %s30 = scalar_select %p27, %s29, %s18
    %p31 = scmp.ge.s32.totalorder %s30, 1
    %s32 = scalar_select %p31, 0, %s30
    %s33 = sadd.s32 1, %s17
    %s34 = scalar_select %p31, %s33, %s17
    %p35 = scmp.ge.s32.totalorder %s34, 2
    %s36 = scalar_select %p35, 0, %s34
    %s37 = ssub.s32 %s17, %s36
    %s38 = ssub.s32 %s19, %s28
    %s39 = sor.u32 %s37, %s38
    %p40 = scmp.eq.s32.totalorder %s39, 0
    %s42 = sadd.s32 %s41, 1
    %s43 = scalar_select %p40, %s41, %s42
    %p46 = pneg %p40
    %p47 = scmp.eq.s32.totalorder %s10, 1
    %p48 = por %p46, %p47
    %p49 = scmp.ne.s32.totalorder %s41, %s44
    %p50 = scmp.eq.s32.totalorder %s10, 0
    %p51 = por %p49, %p50
    %p52 = scmp.ne.s32.totalorder %s41, %s44
    %p53 = scmp.eq.s32.totalorder %s15, 1
    %p54 = por %p52, %p53
    %p55 = scmp.ne.s32.totalorder %s44, %s45
    %p56 = scmp.eq.s32.totalorder %s15, 0
    %p57 = por %p55, %p56
    %p58 = scmp.ne.s32.totalorder %s44, %s45
    %p59 = scmp.eq.s32.totalorder %s16, 1
    %p60 = por %p58, %p59
    %p62 = scmp.ne.s32.totalorder %s45, %s61
    %p63 = scmp.eq.s32.totalorder %s16, 0
    %p64 = por %p62, %p63
    %s65 = ssub.s32 %s19, %s28
    %s66 = ssub.s32 %s18, %s32
    %s67 = sor.u32 %s65, %s66
    %p68 = scmp.eq.s32.totalorder %s67, 0
    %s70 = sadd.s32 %s69, 1
    %s71 = scalar_select %p68, %s69, %s70
    %p74 = pneg %p68
    %p75 = scmp.eq.s32.totalorder %s10, 1
    %p76 = por %p74, %p75
    %p77 = scmp.ne.s32.totalorder %s69, %s72
    %p78 = scmp.eq.s32.totalorder %s10, 0
    %p79 = por %p77, %p78
    %p80 = scmp.ne.s32.totalorder %s69, %s72
    %p81 = scmp.eq.s32.totalorder %s15, 1
    %p82 = por %p80, %p81
    %p83 = scmp.ne.s32.totalorder %s72, %s73
    %p84 = scmp.eq.s32.totalorder %s15, 0
    %p85 = por %p83, %p84
    %p86 = scmp.ne.s32.totalorder %s72, %s73
    %p87 = scmp.eq.s32.totalorder %s16, 1
    %p88 = por %p86, %p87
    %p90 = scmp.ne.s32.totalorder %s73, %s89
    %p91 = scmp.eq.s32.totalorder %s16, 0
    %p92 = por %p90, %p91
    %s93 = ssub.s32 %s18, %s32
    %p94 = scmp.eq.s32.totalorder %s93, 0
    %s96 = sadd.s32 %s95, 1
    %s97 = scalar_select %p94, %s95, %s96
    %p100 = pneg %p94
    %p101 = scmp.eq.s32.totalorder %s10, 1
    %p102 = por %p100, %p101
    %p103 = scmp.ne.s32.totalorder %s95, %s98
    %p104 = scmp.eq.s32.totalorder %s10, 0
    %p105 = por %p103, %p104
    %p106 = scmp.ne.s32.totalorder %s95, %s98
    %p107 = scmp.eq.s32.totalorder %s15, 1
    %p108 = por %p106, %p107
    %p109 = scmp.ne.s32.totalorder %s98, %s99
    %p110 = scmp.eq.s32.totalorder %s15, 0
    %p111 = por %p109, %p110
    %p112 = scmp.ne.s32.totalorder %s98, %s99
    %p113 = scmp.eq.s32.totalorder %s16, 1
    %p114 = por %p112, %p113
    %p116 = scmp.ne.s32.totalorder %s99, %s115
    %p117 = scmp.eq.s32.totalorder %s16, 0
    %p118 = por %p116, %p117
    %s119 = ssub.s32 %s18, %s32
    %p120 = scmp.eq.s32.totalorder %s119, 0
    %s122 = sadd.s32 %s121, 1
    %s123 = scalar_select %p120, %s121, %s122
    %p126 = pneg %p120
    %p127 = scmp.eq.s32.totalorder %s10, 1
    %p128 = por %p126, %p127
    %p129 = scmp.ne.s32.totalorder %s121, %s124
    %p130 = scmp.eq.s32.totalorder %s10, 0
    %p131 = por %p129, %p130
    %p132 = scmp.ne.s32.totalorder %s121, %s124
    %p133 = scmp.eq.s32.totalorder %s15, 1
    %p134 = por %p132, %p133
    %p135 = scmp.ne.s32.totalorder %s124, %s125
    %p136 = scmp.eq.s32.totalorder %s15, 0
    %p137 = por %p135, %p136
    %p138 = scmp.ne.s32.totalorder %s124, %s125
    %p139 = scmp.eq.s32.totalorder %s16, 1
    %p140 = por %p138, %p139
    %p142 = scmp.ne.s32.totalorder %s125, %s141
    %p143 = scmp.eq.s32.totalorder %s16, 0
    %p144 = por %p142, %p143
    %s145 = ssub.s32 %s17, %s36
    %s146 = ssub.s32 %s18, %s32
    %s147 = sor.u32 %s145, %s146
    %p148 = scmp.eq.s32.totalorder %s147, 0
    %s150 = sadd.s32 %s149, 1
    %s151 = scalar_select %p148, %s149, %s150
    %p154 = pneg %p148
    %p155 = scmp.eq.s32.totalorder %s10, 1
    %p156 = por %p154, %p155
    %p157 = scmp.ne.s32.totalorder %s149, %s152
    %p158 = scmp.eq.s32.totalorder %s10, 0
    %p159 = por %p157, %p158
    %p160 = scmp.ne.s32.totalorder %s149, %s152
    %p161 = scmp.eq.s32.totalorder %s15, 1
    %p162 = por %p160, %p161
    %p163 = scmp.ne.s32.totalorder %s152, %s153
    %p164 = scmp.eq.s32.totalorder %s15, 0
    %p165 = por %p163, %p164
    %p166 = scmp.ne.s32.totalorder %s152, %s153
    %p167 = scmp.eq.s32.totalorder %s16, 1
    %p168 = por %p166, %p167
    %p170 = scmp.ne.s32.totalorder %s153, %s169
    %p171 = scmp.eq.s32.totalorder %s16, 0
    %p172 = por %p170, %p171
    %p173 = scmp.le.s32.totalorder 1, %s10
    %p174 = scmp.lt.s32.totalorder %s10, 3
    %p175 = pnand %p173, %p174
    %p176 = pneg %p175
    // Predicated region
    $region9: #{transformerfusion_forward.44} parent=5 // pred_check
      _
    $region10: #{transformerfusion_forward.44} parent=5 // pred_check_branch
      %178 = sbr.rel (%p175) target = $region12
    $region11: #{transformerfusion_forward.44} parent=5 // pred_region
      %s179 = ssub.s32 %s10, 1
      // Predicated region
      $region13: #{transformerfusion_forward.44} parent=11 // pred_check
        %p180 = pneg %p85
      $region14: #{transformerfusion_forward.44} parent=11 // pred_check_branch
        %182 = sbr.rel (%p180) target = $region16
      $region15: #{transformerfusion_forward.44} parent=11 // pred_region
        %s183 = smul.u32 20, %s22
        %s184 = smul.u32 2, %s21
        %p185 = scmp.lt.s32.totalorder %s183, 19
        %s186 = scalar_select %p185, %s183, 19
        %p187 = scmp.lt.s32.totalorder %s184, 1
        %s188 = scalar_select %p187, %s184, 1
        %s189 = smul.addr %s186, 2
        %s190 = sadd.s32 %s188, %s189
        %s191 = smul.addr %s190, 4
        %s192 = scalar_lea.vmem %s1, %s191
        %s193 = smul.u32 20, %s22
        %s194 = smul.u32 2, %s21
      $region16: #{transformerfusion_forward.44} parent=11 // pred_fallthru
        _
      // Predicated region
      $region17: #{transformerfusion_forward.44} parent=11 // pred_check
        %p195 = pneg %p111
      $region18: #{transformerfusion_forward.44} parent=11 // pred_check_branch
        %197 = sbr.rel (%p195) target = $region20
      $region19: #{transformerfusion_forward.44} parent=11 // pred_region
        %s198 = smul.u32 2, %s21
        %p199 = scmp.lt.s32.totalorder %s198, 1
        %s200 = scalar_select %p199, %s198, 1
        %s201 = scalar_lea.vmem %s2, %s200
        %s202 = smul.u32 2, %s21
      $region20: #{transformerfusion_forward.44} parent=11 // pred_fallthru
        _
      // Predicated region
      $region21: #{transformerfusion_forward.44} parent=11 // pred_check
        %p203 = pneg %p137
      $region22: #{transformerfusion_forward.44} parent=11 // pred_check_branch
        %205 = sbr.rel (%p203) target = $region24
      $region23: #{transformerfusion_forward.44} parent=11 // pred_region
        %s206 = smul.u32 2, %s21
        %p207 = scmp.lt.s32.totalorder %s206, 1
        %s208 = scalar_select %p207, %s206, 1
        %s209 = scalar_lea.vmem %s3, %s208
        %s210 = smul.u32 2, %s21
      $region24: #{transformerfusion_forward.44} parent=11 // pred_fallthru
        _
    $region12: #{transformerfusion_forward.44} parent=5 // pred_fallthru
      _
    %p211 = scmp.lt.s32.totalorder %s10, 2
    // Predicated region
    $region25: #{transformerfusion_forward.44} parent=5 // pred_check
      %p212 = pneg %p211
    $region26: #{transformerfusion_forward.44} parent=5 // pred_check_branch
      %214 = sbr.rel (%p212) target = $region28
    $region27: #{transformerfusion_forward.44} parent=5 // pred_region
      // Predicated region
      $region29: #{transformerfusion_forward.44} parent=27 // pred_check
        %p215 = pneg %p51
      $region30: #{transformerfusion_forward.44} parent=27 // pred_check_branch
        %217 = sbr.rel (%p215) target = $region32
      $region31: #{transformerfusion_forward.44} parent=27 // pred_region
        %s218 = smul.u32 8, %s17
        %s219 = smul.u32 2, %s19
        %p220 = scmp.lt.s32.totalorder %s218, 15
        %s221 = scalar_select %p220, %s218, 15
        %p222 = scmp.lt.s32.totalorder %s219, 1
        %s223 = scalar_select %p222, %s219, 1
        %s224 = smul.addr %s221, 2
        %s225 = sadd.s32 %s223, %s224
        %s226 = smul.addr %s225, 4
        %s227 = scalar_lea.vmem %s0, %s226
        %s228 = smul.u32 8, %s17
        %s229 = smul.u32 2, %s19
      $region32: #{transformerfusion_forward.44} parent=27 // pred_fallthru
        _
    $region28: #{transformerfusion_forward.44} parent=5 // pred_fallthru
      _
    %p230 = scmp.le.s32.totalorder 1, %s10
    %p231 = scmp.lt.s32.totalorder %s10, 3
    %p232 = pnand %p230, %p231
    %p233 = pneg %p232
    // Predicated region
    $region33: #{transformerfusion_forward.44} parent=5 // pred_check
      _
    $region34: #{transformerfusion_forward.44} parent=5 // pred_check_branch
      %235 = sbr.rel (%p232) target = $region36
    $region35: #{transformerfusion_forward.44} parent=5 // pred_region
      %s236 = ssub.s32 %s10, 1
      %s237 = smul.u32 8, %s20
      %s238 = smul.u32 2, %s22
      %p239 = scmp.lt.s32.totalorder %s237, 15
      %s240 = scalar_select %p239, %s237, 15
      %p241 = scmp.lt.s32.totalorder %s238, 1
      %s242 = scalar_select %p241, %s238, 1
      %s243 = smul.addr %s240, 2
      %s244 = sadd.s32 %s242, %s243
      %s245 = smul.addr %s244, 4
      %s246 = scalar_lea.vmem %s0, %s245
      %p247 = pneg %p57
      %p248 = pneg %p54
      %s249 = smul.u32 20, %s22
      %s250 = smul.u32 2, %s21
      %p251 = scmp.lt.s32.totalorder %s249, 19
      %s252 = scalar_select %p251, %s249, 19
      %p253 = scmp.lt.s32.totalorder %s250, 1
      %s254 = scalar_select %p253, %s250, 1
      %s255 = smul.addr %s252, 2
      %s256 = sadd.s32 %s254, %s255
      %s257 = smul.addr %s256, 4
      %s258 = scalar_lea.vmem %s1, %s257
      %p259 = pneg %p85
      %p260 = pneg %p82
      %s261 = smul.u32 2, %s21
      %p262 = scmp.lt.s32.totalorder %s261, 1
      %s263 = scalar_select %p262, %s261, 1
      %s264 = scalar_lea.vmem %s2, %s263
      %p265 = pneg %p111
      %p266 = pneg %p108
      %s267 = smul.u32 2, %s21
      %p268 = scmp.lt.s32.totalorder %s267, 1
      %s269 = scalar_select %p268, %s267, 1
      %s270 = scalar_lea.vmem %s3, %s269
      %p271 = pneg %p137
      %p272 = pneg %p134
      %p273 = pneg %p165
      %p274 = pneg %p162
      %s275 = smul.u32 8, %s20
      %s276 = smul.u32 2, %s21
      %p277 = scmp.lt.s32.totalorder %s275, 15
      %s278 = scalar_select %p277, %s275, 15
      %p279 = scmp.lt.s32.totalorder %s276, 1
      %s280 = scalar_select %p279, %s276, 1
      %s281 = smul.addr %s278, 2
      %s282 = sadd.s32 %s280, %s281
      %s283 = smul.addr %s282, 8
      %s284 = scalar_lea.vmem %s4, %s283
      %s285 = smul.u32 8, %s20
      %s286 = smul.u32 2, %s22
      %p287 = scmp.lt.s32.totalorder %s285, 15
      %s288 = scalar_select %p287, %s285, 15
      %p289 = scmp.lt.s32.totalorder %s286, 1
      %s290 = scalar_select %p289, %s286, 1
      %s291 = smul.addr %s288, 2
      %s292 = sadd.s32 %s290, %s291
      %s293 = smul.addr %s292, 4
      %s294 = scalar_lea.vmem %s0, %s293
      %s295 = smul.u32 8, %s20
      %s296 = smul.u32 2, %s22
      %s297 = smul.u32 20, %s22
      %s298 = smul.u32 2, %s21
      %p299 = scmp.lt.s32.totalorder %s297, 19
      %s300 = scalar_select %p299, %s297, 19
      %p301 = scmp.lt.s32.totalorder %s298, 1
      %s302 = scalar_select %p301, %s298, 1
      %s303 = smul.addr %s300, 2
      %s304 = sadd.s32 %s302, %s303
      %s305 = smul.addr %s304, 4
      %s306 = scalar_lea.vmem %s1, %s305
      %s307 = smul.u32 20, %s22
      %s308 = smul.u32 2, %s21
      %s309 = smul.u32 2, %s21
      %p310 = scmp.lt.s32.totalorder %s309, 1
      %s311 = scalar_select %p310, %s309, 1
      %s312 = scalar_lea.vmem %s2, %s311
      %s313 = smul.u32 2, %s21
      %s314 = smul.u32 2, %s21
      %p315 = scmp.lt.s32.totalorder %s314, 1
      %s316 = scalar_select %p315, %s314, 1
      %s317 = scalar_lea.vmem %s3, %s316
      %s318 = smul.u32 2, %s21
      %s319 = smul.u32 8, %s20
      %s320 = smul.u32 2, %s21
      %p321 = scmp.lt.s32.totalorder %s319, 15
      %s322 = scalar_select %p321, %s319, 15
      %p323 = scmp.lt.s32.totalorder %s320, 1
      %s324 = scalar_select %p323, %s320, 1
      %s325 = smul.addr %s322, 2
      %s326 = sadd.s32 %s324, %s325
      %s327 = smul.addr %s326, 8
      %s328 = scalar_lea.vmem %s4, %s327
      %s329 = smul.u32 8, %s20
      %s330 = smul.u32 2, %s21
      %p332 = scmp.eq.s32.totalorder %s22, 0
      // Predicated region
      $region37: #{transformerfusion_forward.44} parent=35 // pred_check
        %p333 = pneg %p332
      $region38: #{transformerfusion_forward.44} parent=35 // pred_check_branch
        %335 = sbr.rel (%p333) target = $region40
      $region39: #{transformerfusion_forward.44} parent=35 // pred_region
        %336 = vst [vmem:[#allocation2] sm:$0xff] 0.0
        %vm337 = vcmask 261120
        %338 = vst.msk [vmem:[#allocation2 + $0x8] sm:$0xff] %vm337, 0.0
        %339 = vst [vmem:[#allocation2 + $0x10] sm:$0xff] 0.0
        %340 = vst.msk [vmem:[#allocation2 + $0x18] sm:$0xff] %vm337, 0.0
        %341 = vst [vmem:[#allocation2 + $0x20] sm:$0xff] 0.0
        %342 = vst.msk [vmem:[#allocation2 + $0x28] sm:$0xff] %vm337, 0.0
        %343 = vst [vmem:[#allocation2 + $0x30] sm:$0xff] 0.0
        %344 = vst.msk [vmem:[#allocation2 + $0x38] sm:$0xff] %vm337, 0.0
        %345 = vst [vmem:[#allocation2 + $0x40] sm:$0xff] 0.0
        %346 = vst.msk [vmem:[#allocation2 + $0x48] sm:$0xff] %vm337, 0.0
        %347 = vst [vmem:[#allocation2 + $0x50] sm:$0xff] 0.0
        %348 = vst.msk [vmem:[#allocation2 + $0x58] sm:$0xff] %vm337, 0.0
        %349 = vst [vmem:[#allocation2 + $0x60] sm:$0xff] 0.0
        %350 = vst.msk [vmem:[#allocation2 + $0x68] sm:$0xff] %vm337, 0.0
        %351 = vst [vmem:[#allocation2 + $0x70] sm:$0xff] 0.0
        %352 = vst.msk [vmem:[#allocation2 + $0x78] sm:$0xff] %vm337, 0.0
      $region40: #{transformerfusion_forward.44} parent=35 // pred_fallthru
        _
      %v353 = vld [vmem:[#allocation2] sm:$0xff]
      %v354 = vld [vmem:[#allocation2 + $0x8] sm:$0xff]
      %v355 = vld [vmem:[#allocation2 + $0x10] sm:$0xff]
      %v356 = vld [vmem:[#allocation2 + $0x18] sm:$0xff]
      %v357 = vld [vmem:[#allocation2 + $0x20] sm:$0xff]
      %v358 = vld [vmem:[#allocation2 + $0x28] sm:$0xff]
      %v359 = vld [vmem:[#allocation2 + $0x30] sm:$0xff]
      %v360 = vld [vmem:[#allocation2 + $0x38] sm:$0xff]
      %v361 = vld [vmem:[#allocation2 + $0x40] sm:$0xff]
      %v362 = vld [vmem:[#allocation2 + $0x48] sm:$0xff]
      %v363 = vld [vmem:[#allocation2 + $0x50] sm:$0xff]
      %v364 = vld [vmem:[#allocation2 + $0x58] sm:$0xff]
      %v365 = vld [vmem:[#allocation2 + $0x60] sm:$0xff]
      %v366 = vld [vmem:[#allocation2 + $0x68] sm:$0xff]
      %v367 = vld [vmem:[#allocation2 + $0x70] sm:$0xff]
      %v368 = vld [vmem:[#allocation2 + $0x78] sm:$0xff]
      %v369 = vld [vmem:[%s294] sm:$0xff]
      %v370 = vld [vmem:[%s294 + $0x8] sm:$0xff]
      %v371 = vld [vmem:[%s294 + $0x10] sm:$0xff]
      %v372 = vld [vmem:[%s294 + $0x18] sm:$0xff]
      %v373 = vld [vmem:[%s294 + $0x20] sm:$0xff]
      %v374 = vld [vmem:[%s294 + $0x28] sm:$0xff]
      %v375 = vld [vmem:[%s294 + $0x30] sm:$0xff]
      %v376 = vld [vmem:[%s294 + $0x38] sm:$0xff]
      %v377 = vld [vmem:[%s306] sm:$0xff]
      %v378 = vld [vmem:[%s306 + $0x8] sm:$0xff]
      %v379 = vld [vmem:[%s306 + $0x10] sm:$0xff]
      %v380 = vld [vmem:[%s306 + $0x18] sm:$0xff]
      %v381 = vld [vmem:[%s306 + $0x20] sm:$0xff]
      %v382 = vld [vmem:[%s306 + $0x28] sm:$0xff]
      %v383 = vld [vmem:[%s306 + $0x30] sm:$0xff]
      %v384 = vld [vmem:[%s306 + $0x38] sm:$0xff]
      %v385 = vld [vmem:[%s306 + $0x40] sm:$0xff]
      %v386 = vld [vmem:[%s306 + $0x48] sm:$0xff]
      %v387 = vld [vmem:[%s306 + $0x50] sm:$0xff]
      %v388 = vld [vmem:[%s306 + $0x58] sm:$0xff]
      %v389 = vld [vmem:[%s306 + $0x60] sm:$0xff]
      %v390 = vld [vmem:[%s306 + $0x68] sm:$0xff]
      %v391 = vld [vmem:[%s306 + $0x70] sm:$0xff]
      %v392 = vld [vmem:[%s306 + $0x78] sm:$0xff]
      %v393 = vld [vmem:[%s306 + $0x80] sm:$0xff]
      %v394 = vld [vmem:[%s306 + $0x88] sm:$0xff]
      %v395 = vld [vmem:[%s306 + $0x90] sm:$0xff]
      %v396 = vld [vmem:[%s306 + $0x98] sm:$0xff]
      %v405 = vunpack.c.l.b16 %v369
      %v406 = vunpack.c.h.b16 %v369
      %v407 = vunpack.c.l.b16 %v370
      %v408 = vunpack.c.h.b16 %v370
      %v409 = vunpack.c.l.b16 %v371
      %v410 = vunpack.c.h.b16 %v371
      %v411 = vunpack.c.l.b16 %v372
      %v412 = vunpack.c.h.b16 %v372
      %v413 = vunpack.c.l.b16 %v373
      %v414 = vunpack.c.h.b16 %v373
      %v415 = vunpack.c.l.b16 %v374
      %v416 = vunpack.c.h.b16 %v374
      %v417 = vunpack.c.l.b16 %v375
      %v418 = vunpack.c.h.b16 %v375
      %v419 = vunpack.c.l.b16 %v376
      %v420 = vunpack.c.h.b16 %v376
      %v421 = vpack.c.b16 %v407, %v405
      %v422 = vpack.c.b16 %v408, %v406
      %v423 = vpack.c.b16 %v411, %v409
      %v424 = vpack.c.b16 %v412, %v410
      %v425 = vpack.c.b16 %v415, %v413
      %v426 = vpack.c.b16 %v416, %v414
      %v427 = vpack.c.b16 %v419, %v417
      %v428 = vpack.c.b16 %v420, %v418
      %v453 = vunpack.c.l.b16 %v377
      %v454 = vunpack.c.h.b16 %v377
      %v455 = vunpack.c.l.b16 %v378
      %v456 = vunpack.c.h.b16 %v378
      %v457 = vunpack.c.l.b16 %v379
      %v458 = vunpack.c.h.b16 %v379
      %v459 = vunpack.c.l.b16 %v380
      %v460 = vunpack.c.h.b16 %v380
      %v461 = vunpack.c.l.b16 %v381
      %v462 = vunpack.c.h.b16 %v381
      %v463 = vunpack.c.l.b16 %v382
      %v464 = vunpack.c.h.b16 %v382
      %v465 = vunpack.c.l.b16 %v383
      %v466 = vunpack.c.h.b16 %v383
      %v467 = vunpack.c.l.b16 %v384
      %v468 = vunpack.c.h.b16 %v384
      %v469 = vunpack.c.l.b16 %v385
      %v470 = vunpack.c.h.b16 %v385
      %v471 = vunpack.c.l.b16 %v386
      %v472 = vunpack.c.h.b16 %v386
      %v473 = vunpack.c.l.b16 %v387
      %v474 = vunpack.c.h.b16 %v387
      %v475 = vunpack.c.l.b16 %v388
      %v476 = vunpack.c.h.b16 %v388
      %v477 = vunpack.c.l.b16 %v389
      %v478 = vunpack.c.h.b16 %v389
      %v479 = vunpack.c.l.b16 %v390
      %v480 = vunpack.c.h.b16 %v390
      %v481 = vunpack.c.l.b16 %v391
      %v482 = vunpack.c.h.b16 %v391
      %v483 = vunpack.c.l.b16 %v392
      %v484 = vunpack.c.h.b16 %v392
      %v485 = vunpack.c.l.b16 %v393
      %v486 = vunpack.c.h.b16 %v393
      %v487 = vunpack.c.l.b16 %v394
      %v488 = vunpack.c.h.b16 %v394
      %v489 = vunpack.c.l.b16 %v395
      %v490 = vunpack.c.h.b16 %v395
      %v491 = vunpack.c.l.b16 %v396
      %v492 = vunpack.c.h.b16 %v396
      %v493 = vpack.c.b16 %v455, %v453
      %v494 = vpack.c.b16 %v456, %v454
      %v495 = vpack.c.b16 %v459, %v457
      %v496 = vpack.c.b16 %v460, %v458
      %v497 = vpack.c.b16 %v463, %v461
      %v498 = vpack.c.b16 %v464, %v462
      %v499 = vpack.c.b16 %v467, %v465
      %v500 = vpack.c.b16 %v468, %v466
      %v501 = vpack.c.b16 %v471, %v469
      %v502 = vpack.c.b16 %v472, %v470
      %v503 = vpack.c.b16 %v475, %v473
      %v504 = vpack.c.b16 %v476, %v474
      %v505 = vpack.c.b16 %v479, %v477
      %v506 = vpack.c.b16 %v480, %v478
      %v507 = vpack.c.b16 %v483, %v481
      %v508 = vpack.c.b16 %v484, %v482
      %v509 = vpack.c.b16 %v487, %v485
      %v510 = vpack.c.b16 %v488, %v486
      %v511 = vpack.c.b16 %v491, %v489
      %v512 = vpack.c.b16 %v492, %v490
      %vm533 = vcmask 261120
      %v535 = vsel %vm533, %v422, 0
      %v538 = vsel %vm533, %v424, 0
      %v541 = vsel %vm533, %v426, 0
      %v544 = vsel %vm533, %v428, 0
      %546 = vmatprep.subr.bf16.mxu0 %v494
      %547 = vmatpush1.bf16.msra.mxu0 %v493
      %548 = vmatprep.subr.bf16.mxu0 %v496
      %549 = vmatpush1.bf16.msra.mxu0 %v495
      %550 = vmatprep.subr.bf16.mxu0 %v498
      %551 = vmatpush1.bf16.msra.mxu0 %v497
      %552 = vmatprep.subr.bf16.mxu0 %v500
      %553 = vmatpush1.bf16.msra.mxu0 %v499
      %554 = vmatprep.subr.bf16.mxu0 %v502
      %555 = vmatpush1.bf16.msra.mxu0 %v501
      %556 = vmatprep.subr.bf16.mxu0 %v504
      %557 = vmatpush1.bf16.msra.mxu0 %v503
      %558 = vmatprep.subr.bf16.mxu0 %v506
      %559 = vmatpush1.bf16.msra.mxu0 %v505
      %560 = vmatprep.subr.bf16.mxu0 %v508
      %561 = vmatpush1.bf16.msra.mxu0 %v507
      %562 = vmatprep.subr.bf16.mxu0 %v510
      %563 = vmatpush1.bf16.msra.mxu0 %v509
      %564 = vmatprep.subr.bf16.mxu0 %v512
      %565 = vmatpush1.bf16.msra.mxu0 %v511
      %566 = vmatprep.subr.bf16.mxu0 0
      %567 = vmatpush1.bf16.msra.mxu0 0
      %568 = vmatprep.subr.bf16.mxu0 0
      %569 = vmatpush1.bf16.msra.mxu0 0
      %570 = vmatprep.subr.bf16.mxu0 0
      %571 = vmatpush1.bf16.msra.mxu0 0
      %572 = vmatprep.subr.bf16.mxu0 0
      %573 = vmatpush1.bf16.msra.mxu0 0
      %574 = vmatprep.subr.bf16.mxu0 0
      %575 = vmatpush1.bf16.msra.mxu0 0
      %576 = vmatprep.subr.bf16.mxu0 0
      %577 = vmatpush1.bf16.msra.mxu0 0
      %578 = vmatprep.mubr.bf16.mxu0 %v535
      %579 = vmatmul.mubr.bf16.gmra.mrb[0].mxu0 %v421
      %v580 = vpop.f32.mrb[0].mxu0
      %v581 = vadd.f32 0.0, %v580
      %v582 = vpop.f32.mrb[0].mxu0
      %v583 = vadd.f32 0.0, %v582
      %v584 = vpop.f32.mrb[0].mxu0
      %v585 = vadd.f32 0.0, %v584
      %v586 = vpop.f32.mrb[0].mxu0
      %v587 = vadd.f32 0.0, %v586
      %588 = vmatprep.mubr.bf16.mxu0 %v538
      %589 = vmatmul.mubr.bf16.gmra.mrb[0].mxu0 %v423
      %v590 = vpop.f32.mrb[0].mxu0
      %v591 = vadd.f32 0.0, %v590
      %v592 = vpop.f32.mrb[0].mxu0
      %v593 = vadd.f32 0.0, %v592
      %v594 = vpop.f32.mrb[0].mxu0
      %v595 = vadd.f32 0.0, %v594
      %v596 = vpop.f32.mrb[0].mxu0
      %v597 = vadd.f32 0.0, %v596
      %598 = vmatprep.mubr.bf16.mxu0 %v541
      %599 = vmatmul.mubr.bf16.gmra.mrb[0].mxu0 %v425
      %v600 = vpop.f32.mrb[0].mxu0
      %v601 = vadd.f32 0.0, %v600
      %v602 = vpop.f32.mrb[0].mxu0
      %v603 = vadd.f32 0.0, %v602
      %v604 = vpop.f32.mrb[0].mxu0
      %v605 = vadd.f32 0.0, %v604
      %v606 = vpop.f32.mrb[0].mxu0
      %v607 = vadd.f32 0.0, %v606
      %608 = vmatprep.mubr.bf16.mxu0 %v544
      %609 = vmatmul.mubr.bf16.gmra.mrb[0].mxu0 %v427
      %v610 = vpop.f32.mrb[0].mxu0
      %v611 = vadd.f32 0.0, %v610
      %v612 = vpop.f32.mrb[0].mxu0
      %v613 = vadd.f32 0.0, %v612
      %v614 = vpop.f32.mrb[0].mxu0
      %v615 = vadd.f32 0.0, %v614
      %v616 = vpop.f32.mrb[0].mxu0
      %v617 = vadd.f32 0.0, %v616
      %618 = vdwg.mxu0
      %v619 = vadd.f32 %v353, %v581
      %v620 = vadd.f32 %v354, %v583
      %v621 = vadd.f32 %v355, %v585
      %v622 = vadd.f32 %v356, %v587
      %v623 = vadd.f32 %v357, %v591
      %v624 = vadd.f32 %v358, %v593
      %v625 = vadd.f32 %v359, %v595
      %v626 = vadd.f32 %v360, %v597
      %v627 = vadd.f32 %v361, %v601
      %v628 = vadd.f32 %v362, %v603
      %v629 = vadd.f32 %v363, %v605
      %v630 = vadd.f32 %v364, %v607
      %v631 = vadd.f32 %v365, %v611
      %v632 = vadd.f32 %v366, %v613
      %v633 = vadd.f32 %v367, %v615
      %v634 = vadd.f32 %v368, %v617
      %635 = vst [vmem:[#allocation2] sm:$0xff] %v619
      %636 = vst.msk [vmem:[#allocation2 + $0x8] sm:$0xff] %vm533, %v620
      %637 = vst [vmem:[#allocation2 + $0x10] sm:$0xff] %v621
      %638 = vst.msk [vmem:[#allocation2 + $0x18] sm:$0xff] %vm533, %v622
      %639 = vst [vmem:[#allocation2 + $0x20] sm:$0xff] %v623
      %640 = vst.msk [vmem:[#allocation2 + $0x28] sm:$0xff] %vm533, %v624
      %641 = vst [vmem:[#allocation2 + $0x30] sm:$0xff] %v625
      %642 = vst.msk [vmem:[#allocation2 + $0x38] sm:$0xff] %vm533, %v626
      %643 = vst [vmem:[#allocation2 + $0x40] sm:$0xff] %v627
      %644 = vst.msk [vmem:[#allocation2 + $0x48] sm:$0xff] %vm533, %v628
      %645 = vst [vmem:[#allocation2 + $0x50] sm:$0xff] %v629
      %646 = vst.msk [vmem:[#allocation2 + $0x58] sm:$0xff] %vm533, %v630
      %647 = vst [vmem:[#allocation2 + $0x60] sm:$0xff] %v631
      %648 = vst.msk [vmem:[#allocation2 + $0x68] sm:$0xff] %vm533, %v632
      %649 = vst [vmem:[#allocation2 + $0x70] sm:$0xff] %v633
      %650 = vst.msk [vmem:[#allocation2 + $0x78] sm:$0xff] %vm533, %v634
      // Predicated region
      $region41: #{transformerfusion_forward.44} parent=35 // pred_check
        %p651 = pneg %p332
      $region42: #{transformerfusion_forward.44} parent=35 // pred_check_branch
        %653 = sbr.rel (%p651) target = $region44
      $region43: #{transformerfusion_forward.44} parent=35 // pred_region
        %v654 = vld [vmem:[#allocation2] sm:$0xff]
        %v655 = vld [vmem:[#allocation2 + $0x8] sm:$0xff]
        %v656 = vld [vmem:[#allocation2 + $0x10] sm:$0xff]
        %v657 = vld [vmem:[#allocation2 + $0x18] sm:$0xff]
        %v658 = vld [vmem:[#allocation2 + $0x20] sm:$0xff]
        %v659 = vld [vmem:[#allocation2 + $0x28] sm:$0xff]
        %v660 = vld [vmem:[#allocation2 + $0x30] sm:$0xff]
        %v661 = vld [vmem:[#allocation2 + $0x38] sm:$0xff]
        %v662 = vld [vmem:[#allocation2 + $0x40] sm:$0xff]
        %v663 = vld [vmem:[#allocation2 + $0x48] sm:$0xff]
        %v664 = vld [vmem:[#allocation2 + $0x50] sm:$0xff]
        %v665 = vld [vmem:[#allocation2 + $0x58] sm:$0xff]
        %v666 = vld [vmem:[#allocation2 + $0x60] sm:$0xff]
        %v667 = vld [vmem:[#allocation2 + $0x68] sm:$0xff]
        %v668 = vld [vmem:[#allocation2 + $0x70] sm:$0xff]
        %v669 = vld [vmem:[#allocation2 + $0x78] sm:$0xff]
        %v670 = vld [vmem:[%s312] sm:$0x3]
        %v672 = vlaneseq
        %v673 = vshrl.u32 %v672, 7
        %v674 = vsub.s32 0, %v673
        %v675 = vrot.slane %v670, %v674
        %v676 = vlaneseq
        %v677 = vshrl.u32 %v676, 7
        %v678 = vsub.s32 1, %v677
        %v679 = vrot.slane %v670, %v678
        %v682 = vmul.f32 %v654, %v675
        %v683 = vmul.f32 %v655, %v679
        %v684 = vmul.f32 %v656, %v675
        %v685 = vmul.f32 %v657, %v679
        %v686 = vmul.f32 %v658, %v675
        %v687 = vmul.f32 %v659, %v679
        %v688 = vmul.f32 %v660, %v675
        %v689 = vmul.f32 %v661, %v679
        %v690 = vmul.f32 %v662, %v675
        %v691 = vmul.f32 %v663, %v679
        %v692 = vmul.f32 %v664, %v675
        %v693 = vmul.f32 %v665, %v679
        %v694 = vmul.f32 %v666, %v675
        %v695 = vmul.f32 %v667, %v679
        %v696 = vmul.f32 %v668, %v675
        %v697 = vmul.f32 %v669, %v679
        %v698 = vld [vmem:[%s317] sm:$0x3]
        %v700 = vlaneseq
        %v701 = vshrl.u32 %v700, 7
        %v702 = vsub.s32 0, %v701
        %v703 = vrot.slane %v698, %v702
        %v704 = vlaneseq
        %v705 = vshrl.u32 %v704, 7
        %v706 = vsub.s32 1, %v705
        %v707 = vrot.slane %v698, %v706
        %v710 = vadd.f32 %v682, %v703
        %v711 = vadd.f32 %v683, %v707
        %v712 = vadd.f32 %v684, %v703
        %v713 = vadd.f32 %v685, %v707
        %v714 = vadd.f32 %v686, %v703
        %v715 = vadd.f32 %v687, %v707
        %v716 = vadd.f32 %v688, %v703
        %v717 = vadd.f32 %v689, %v707
        %v718 = vadd.f32 %v690, %v703
        %v719 = vadd.f32 %v691, %v707
        %v720 = vadd.f32 %v692, %v703
        %v721 = vadd.f32 %v693, %v707
        %v722 = vadd.f32 %v694, %v703
        %v723 = vadd.f32 %v695, %v707
        %v724 = vadd.f32 %v696, %v703
        %v725 = vadd.f32 %v697, %v707
        %726 = vst [vmem:[%s328] sm:$0xff] %v710
        %727 = vst.msk [vmem:[%s328 + $0x8] sm:$0xff] %vm533, %v711
        %728 = vst [vmem:[%s328 + $0x10] sm:$0xff] %v712
        %729 = vst.msk [vmem:[%s328 + $0x18] sm:$0xff] %vm533, %v713
        %730 = vst [vmem:[%s328 + $0x20] sm:$0xff] %v714
        %731 = vst.msk [vmem:[%s328 + $0x28] sm:$0xff] %vm533, %v715
        %732 = vst [vmem:[%s328 + $0x30] sm:$0xff] %v716
        %733 = vst.msk [vmem:[%s328 + $0x38] sm:$0xff] %vm533, %v717
        %734 = vst [vmem:[%s328 + $0x40] sm:$0xff] %v718
        %735 = vst.msk [vmem:[%s328 + $0x48] sm:$0xff] %vm533, %v719
        %736 = vst [vmem:[%s328 + $0x50] sm:$0xff] %v720
        %737 = vst.msk [vmem:[%s328 + $0x58] sm:$0xff] %vm533, %v721
        %738 = vst [vmem:[%s328 + $0x60] sm:$0xff] %v722
        %739 = vst.msk [vmem:[%s328 + $0x68] sm:$0xff] %vm533, %v723
        %740 = vst [vmem:[%s328 + $0x70] sm:$0xff] %v724
        %741 = vst.msk [vmem:[%s328 + $0x78] sm:$0xff] %vm533, %v725
      $region44: #{transformerfusion_forward.44} parent=35 // pred_fallthru
        _
      %s742 = smul.u32 8, %s20
      %s743 = smul.u32 2, %s21
      %p744 = scmp.lt.s32.totalorder %s742, 15
      %s745 = scalar_select %p744, %s742, 15
      %p746 = scmp.lt.s32.totalorder %s743, 1
      %s747 = scalar_select %p746, %s743, 1
      %s748 = smul.addr %s745, 2
      %s749 = sadd.s32 %s747, %s748
      %s750 = smul.addr %s749, 8
      %s751 = scalar_lea.vmem %s4, %s750
      // Predicated region
      $region45: #{transformerfusion_forward.44} parent=35 // pred_check
        %p752 = pneg %p162
      $region46: #{transformerfusion_forward.44} parent=35 // pred_check_branch
        %754 = sbr.rel (%p752) target = $region48
      $region47: #{transformerfusion_forward.44} parent=35 // pred_region
        %s755 = smul.u32 8, %s20
        %s756 = smul.u32 2, %s21
      $region48: #{transformerfusion_forward.44} parent=35 // pred_fallthru
        _
    $region36: #{transformerfusion_forward.44} parent=5 // pred_fallthru
      _
    %p757 = scmp.le.s32.totalorder 2, %s10
    // Predicated region
    $region49: #{transformerfusion_forward.44} parent=5 // pred_check
      %p758 = pneg %p757
    $region50: #{transformerfusion_forward.44} parent=5 // pred_check_branch
      %760 = sbr.rel (%p758) target = $region52
    $region51: #{transformerfusion_forward.44} parent=5 // pred_region
      %s761 = ssub.s32 %s10, 2
      // Predicated region
      $region53: #{transformerfusion_forward.44} parent=51 // pred_check
        %p762 = pneg %p168
      $region54: #{transformerfusion_forward.44} parent=51 // pred_check_branch
        %764 = sbr.rel (%p762) target = $region56
      $region55: #{transformerfusion_forward.44} parent=51 // pred_region
        %s765 = smul.u32 8, %s23
        %s766 = smul.u32 2, %s24
        %p767 = scmp.lt.s32.totalorder %s765, 15
        %s768 = scalar_select %p767, %s765, 15
        %p769 = scmp.lt.s32.totalorder %s766, 1
        %s770 = scalar_select %p769, %s766, 1
        %s771 = smul.addr %s768, 2
        %s772 = sadd.s32 %s770, %s771
        %s773 = smul.addr %s772, 8
        %s774 = scalar_lea.vmem %s4, %s773
      $region56: #{transformerfusion_forward.44} parent=51 // pred_fallthru
        _
    $region52: #{transformerfusion_forward.44} parent=5 // pred_fallthru
      _
  $region6: #{transformerfusion_forward.44} parent=0 // loop_footer
    %s14 = sadd.s32 1, %s10
  $region7: #{transformerfusion_forward.44} parent=0 // loop_footer_branch
    %9 = sbr.rel target = $region3
  $region8: #{transformerfusion_forward.44} parent=0 // loop_exit
    _

// kernel: transformerfusion_forward.45
$region0: #{transformerfusion_forward.45}
  #allocation0 [shape = 'u32[]', space=smem, size = 0x4, offset = 0x4, fixed_abs, tag = 'smem constant byte address 0x4 - core index']
  #allocation1 [shape = 'u32[144,128]{1,0:T(1,128)}', space=vmem, size = 0x12000, scoped, tag = 'internal scratch']
  %s0 = inlined_call_operand.vmem [shape: f32[128,160], index: 0, kind: input, shape index: {}]
  %s1 = inlined_call_operand.vmem [shape: bf16[160,1024], index: 1, kind: input, shape index: {}]
  %s2 = inlined_call_operand.vmem [shape: f32[1,160], index: 2, kind: input, shape index: {}]
  %s3 = inlined_call_operand.vmem [shape: f32[1,160], index: 3, kind: input, shape index: {}]
  %s4 = inlined_call_operand.vmem [shape: f32[1,1024], index: 4, kind: input, shape index: {}]
  %s5 = inlined_call_operand.vmem [shape: f32[1,1024], index: 5, kind: input, shape index: {}]
  %s6 = inlined_call_operand.vmem [shape: bf16[128,1024], index: 6, kind: output, shape index: {}]
  %s7 = sld [smem:[#allocation0]]
  $region129: #{transformerfusion_forward.45} parent=0
    _
  %s9 = ssub.s32 1, %s7
  %s10 = scalar_select 0, %s9, %s7
  $region1: #{transformerfusion_forward.45} parent=0
    #allocation2 [shape = 'u8[163840]{0}', space=vmem, size = 0x28000, scoped, tag = 'input window, operand 1']
    #allocation3 [shape = 'u8[131072]{0}', space=vmem, size = 0x20000, scoped, tag = 'output window, operand 0']
    loop: start=0, step=1, limit=6
    $region2: #{transformerfusion_forward.45} parent=1 // loop_pre_header
      _
    $region3: #{transformerfusion_forward.45} parent=1 // loop_header
      %s12 = sphi 0, %s16
      %p13 = scmp.ge.s32.totalorder %s12, 6
      %s19 = sphi 0, %s31
      %s20 = sphi 0, %s27
      %s21 = sphi 0, %s19
      %s22 = sphi 0, %s20
      %s23 = sphi 0, %s21
      %s24 = sphi 0, %s22
      %s34 = sphi 0, %s36
      %s37 = sphi 0, %s34
      %s38 = sphi 0, %s37
      %s54 = sphi 0, %s38
      %s60 = sphi 0, %s62
      %s63 = sphi 0, %s60
      %s64 = sphi 0, %s63
      %s80 = sphi 0, %s64
      %s84 = sphi 0, %s84
      %s86 = sphi 0, %s84
      %s87 = sphi 0, %s86
      %s101 = sphi 0, %s87
      %s105 = sphi 0, %s105
      %s107 = sphi 0, %s105
      %s108 = sphi 0, %s107
      %s122 = sphi 0, %s108
      %s128 = sphi 0, %s130
      %s131 = sphi 0, %s128
      %s132 = sphi 0, %s131
      %s148 = sphi 0, %s132
      %s154 = sphi 0, %s156
      %s157 = sphi 0, %s154
      %s158 = sphi 0, %s157
      %s174 = sphi 0, %s158
      %s182 = sphi 0, %s184
      %s185 = sphi 0, %s182
      %s186 = sphi 0, %s185
      %s202 = sphi 0, %s186
    $region4: #{transformerfusion_forward.45} parent=1 // loop_header_branch
      %15 = sbr.rel (%p13) target = $region8
    $region5: #{transformerfusion_forward.45} parent=1 // loop_body
      %s17 = ssub.s32 %s12, 1
      %s18 = ssub.s32 %s12, 2
      %s25 = sadd.s32 1, %s20
      %p26 = scmp.ge.s32.totalorder %s25, 4
      %s27 = scalar_select %p26, 0, %s25
      %s28 = sadd.s32 1, %s19
      %s29 = scalar_select %p26, %s28, %s19
      %p30 = scmp.ge.s32.totalorder %s29, 1
      %s31 = scalar_select %p30, 0, %s29
      %s32 = ssub.s32 %s19, %s31
      %p33 = scmp.eq.s32.totalorder %s32, 0
      %s35 = sadd.s32 %s34, 1
      %s36 = scalar_select %p33, %s34, %s35
      %p39 = pneg %p33
      %p40 = scmp.eq.s32.totalorder %s12, 3
      %p41 = por %p39, %p40
      %p42 = scmp.ne.s32.totalorder %s34, %s37
      %p43 = scmp.eq.s32.totalorder %s12, 0
      %p44 = por %p42, %p43
      %p45 = scmp.ne.s32.totalorder %s34, %s37
      %p46 = scmp.eq.s32.totalorder %s17, 3
      %p47 = por %p45, %p46
      %p48 = scmp.ne.s32.totalorder %s37, %s38
      %p49 = scmp.eq.s32.totalorder %s17, 0
      %p50 = por %p48, %p49
      %p51 = scmp.ne.s32.totalorder %s37, %s38
      %p52 = scmp.eq.s32.totalorder %s18, 3
      %p53 = por %p51, %p52
      %p55 = scmp.ne.s32.totalorder %s38, %s54
      %p56 = scmp.eq.s32.totalorder %s18, 0
      %p57 = por %p55, %p56
      %s58 = ssub.s32 %s20, %s27
      %p59 = scmp.eq.s32.totalorder %s58, 0
      %s61 = sadd.s32 %s60, 1
      %s62 = scalar_select %p59, %s60, %s61
      %p65 = pneg %p59
      %p66 = scmp.eq.s32.totalorder %s12, 3
      %p67 = por %p65, %p66
      %p68 = scmp.ne.s32.totalorder %s60, %s63
      %p69 = scmp.eq.s32.totalorder %s12, 0
      %p70 = por %p68, %p69
      %p71 = scmp.ne.s32.totalorder %s60, %s63
      %p72 = scmp.eq.s32.totalorder %s17, 3
      %p73 = por %p71, %p72
      %p74 = scmp.ne.s32.totalorder %s63, %s64
      %p75 = scmp.eq.s32.totalorder %s17, 0
      %p76 = por %p74, %p75
      %p77 = scmp.ne.s32.totalorder %s63, %s64
      %p78 = scmp.eq.s32.totalorder %s18, 3
      %p79 = por %p77, %p78
      %p81 = scmp.ne.s32.totalorder %s64, %s80
      %p82 = scmp.eq.s32.totalorder %s18, 0
      %p83 = por %p81, %p82
      %s85 = sadd.s32 %s84, 1
      %p88 = scmp.eq.s32.totalorder %s12, 3
      %p89 = scmp.ne.s32.totalorder %s84, %s86
      %p90 = scmp.eq.s32.totalorder %s12, 0
      %p91 = por %p89, %p90
      %p92 = scmp.ne.s32.totalorder %s84, %s86
      %p93 = scmp.eq.s32.totalorder %s17, 3
      %p94 = por %p92, %p93
      %p95 = scmp.ne.s32.totalorder %s86, %s87
      %p96 = scmp.eq.s32.totalorder %s17, 0
      %p97 = por %p95, %p96
      %p98 = scmp.ne.s32.totalorder %s86, %s87
      %p99 = scmp.eq.s32.totalorder %s18, 3
      %p100 = por %p98, %p99
      %p102 = scmp.ne.s32.totalorder %s87, %s101
      %p103 = scmp.eq.s32.totalorder %s18, 0
      %p104 = por %p102, %p103
      %s106 = sadd.s32 %s105, 1
      %p109 = scmp.eq.s32.totalorder %s12, 3
      %p110 = scmp.ne.s32.totalorder %s105, %s107
      %p111 = scmp.eq.s32.totalorder %s12, 0
      %p112 = por %p110, %p111
      %p113 = scmp.ne.s32.totalorder %s105, %s107
      %p114 = scmp.eq.s32.totalorder %s17, 3
      %p115 = por %p113, %p114
      %p116 = scmp.ne.s32.totalorder %s107, %s108
      %p117 = scmp.eq.s32.totalorder %s17, 0
      %p118 = por %p116, %p117
      %p119 = scmp.ne.s32.totalorder %s107, %s108
      %p120 = scmp.eq.s32.totalorder %s18, 3
      %p121 = por %p119, %p120
      %p123 = scmp.ne.s32.totalorder %s108, %s122
      %p124 = scmp.eq.s32.totalorder %s18, 0
      %p125 = por %p123, %p124
      %s126 = ssub.s32 %s20, %s27
      %p127 = scmp.eq.s32.totalorder %s126, 0
      %s129 = sadd.s32 %s128, 1
      %s130 = scalar_select %p127, %s128, %s129
      %p133 = pneg %p127
      %p134 = scmp.eq.s32.totalorder %s12, 3
      %p135 = por %p133, %p134
      %p136 = scmp.ne.s32.totalorder %s128, %s131
      %p137 = scmp.eq.s32.totalorder %s12, 0
      %p138 = por %p136, %p137
      %p139 = scmp.ne.s32.totalorder %s128, %s131
      %p140 = scmp.eq.s32.totalorder %s17, 3
      %p141 = por %p139, %p140
      %p142 = scmp.ne.s32.totalorder %s131, %s132
      %p143 = scmp.eq.s32.totalorder %s17, 0
      %p144 = por %p142, %p143
      %p145 = scmp.ne.s32.totalorder %s131, %s132
      %p146 = scmp.eq.s32.totalorder %s18, 3
      %p147 = por %p145, %p146
      %p149 = scmp.ne.s32.totalorder %s132, %s148
      %p150 = scmp.eq.s32.totalorder %s18, 0
      %p151 = por %p149, %p150
      %s152 = ssub.s32 %s20, %s27
      %p153 = scmp.eq.s32.totalorder %s152, 0
      %s155 = sadd.s32 %s154, 1
      %s156 = scalar_select %p153, %s154, %s155
      %p159 = pneg %p153
      %p160 = scmp.eq.s32.totalorder %s12, 3
      %p161 = por %p159, %p160
      %p162 = scmp.ne.s32.totalorder %s154, %s157
      %p163 = scmp.eq.s32.totalorder %s12, 0
      %p164 = por %p162, %p163
      %p165 = scmp.ne.s32.totalorder %s154, %s157
      %p166 = scmp.eq.s32.totalorder %s17, 3
      %p167 = por %p165, %p166
      %p168 = scmp.ne.s32.totalorder %s157, %s158
      %p169 = scmp.eq.s32.totalorder %s17, 0
      %p170 = por %p168, %p169
      %p171 = scmp.ne.s32.totalorder %s157, %s158
      %p172 = scmp.eq.s32.totalorder %s18, 3
      %p173 = por %p171, %p172
      %p175 = scmp.ne.s32.totalorder %s158, %s174
      %p176 = scmp.eq.s32.totalorder %s18, 0
      %p177 = por %p175, %p176
      %s178 = ssub.s32 %s19, %s31
      %s179 = ssub.s32 %s20, %s27
      %s180 = sor.u32 %s178, %s179
      %p181 = scmp.eq.s32.totalorder %s180, 0
      %s183 = sadd.s32 %s182, 1
      %s184 = scalar_select %p181, %s182, %s183
      %p187 = pneg %p181
      %p188 = scmp.eq.s32.totalorder %s12, 3
      %p189 = por %p187, %p188
      %p190 = scmp.ne.s32.totalorder %s182, %s185
      %p191 = scmp.eq.s32.totalorder %s12, 0
      %p192 = por %p190, %p191
      %p193 = scmp.ne.s32.totalorder %s182, %s185
      %p194 = scmp.eq.s32.totalorder %s17, 3
      %p195 = por %p193, %p194
      %p196 = scmp.ne.s32.totalorder %s185, %s186
      %p197 = scmp.eq.s32.totalorder %s17, 0
      %p198 = por %p196, %p197
      %p199 = scmp.ne.s32.totalorder %s185, %s186
      %p200 = scmp.eq.s32.totalorder %s18, 3
      %p201 = por %p199, %p200
      %p203 = scmp.ne.s32.totalorder %s186, %s202
      %p204 = scmp.eq.s32.totalorder %s18, 0
      %p205 = por %p203, %p204
      %p206 = scmp.le.s32.totalorder 1, %s12
      %p207 = scmp.lt.s32.totalorder %s12, 5
      %p208 = pnand %p206, %p207
      %p209 = pneg %p208
      // Predicated region
      $region9: #{transformerfusion_forward.45} parent=5 // pred_check
        _
      $region10: #{transformerfusion_forward.45} parent=5 // pred_check_branch
        %211 = sbr.rel (%p208) target = $region12
      $region11: #{transformerfusion_forward.45} parent=5 // pred_region
        %s212 = ssub.s32 %s12, 1
        // Predicated region
        $region13: #{transformerfusion_forward.45} parent=11 // pred_check
          %p213 = pneg %p50
        $region14: #{transformerfusion_forward.45} parent=11 // pred_check_branch
          %215 = sbr.rel (%p213) target = $region16
        $region15: #{transformerfusion_forward.45} parent=11 // pred_region
          %s216 = smul.u32 16, %s21
          %p217 = scmp.lt.s32.totalorder %s216, 15
          %s218 = scalar_select %p217, %s216, 15
          %s219 = smul.addr %s218, 2
          %s220 = smul.addr %s219, 8
          %s221 = scalar_lea.vmem %s0, %s220
          %s222 = smul.u32 16, %s21
        $region16: #{transformerfusion_forward.45} parent=11 // pred_fallthru
          _
        // Predicated region
        $region17: #{transformerfusion_forward.45} parent=11 // pred_check
          %p223 = pneg %p97
        $region18: #{transformerfusion_forward.45} parent=11 // pred_check_branch
          %225 = sbr.rel (%p223) target = $region20
        $region19: #{transformerfusion_forward.45} parent=11 // pred_region
          _
        $region20: #{transformerfusion_forward.45} parent=11 // pred_fallthru
          _
        // Predicated region
        $region21: #{transformerfusion_forward.45} parent=11 // pred_check
          %p226 = pneg %p118
        $region22: #{transformerfusion_forward.45} parent=11 // pred_check_branch
          %228 = sbr.rel (%p226) target = $region24
        $region23: #{transformerfusion_forward.45} parent=11 // pred_region
          _
        $region24: #{transformerfusion_forward.45} parent=11 // pred_fallthru
          _
      $region12: #{transformerfusion_forward.45} parent=5 // pred_fallthru
        _
      %p229 = scmp.lt.s32.totalorder %s12, 4
      // Predicated region
      $region25: #{transformerfusion_forward.45} parent=5 // pred_check
        %p230 = pneg %p229
      $region26: #{transformerfusion_forward.45} parent=5 // pred_check_branch
        %232 = sbr.rel (%p230) target = $region28
      $region27: #{transformerfusion_forward.45} parent=5 // pred_region
        // Predicated region
        $region29: #{transformerfusion_forward.45} parent=27 // pred_check
          %p233 = pneg %p70
        $region30: #{transformerfusion_forward.45} parent=27 // pred_check_branch
          %235 = sbr.rel (%p233) target = $region32
        $region31: #{transformerfusion_forward.45} parent=27 // pred_region
          %s236 = sand.u32 %s60, 1
          %s237 = sand.u32 %s60, 1
          %s238 = smul.addr %s237, 160
          %s239 = scalar_lea.vmem [#allocation2], %s238
          %s240 = smul.u32 2, %s20
          %s241 = smul.addr %s240, 4
          %s242 = scalar_lea.vmem %s1, %s241
          // Predicated region
          $region33: #{transformerfusion_forward.45} parent=31 // pred_check
            _
          $region34: #{transformerfusion_forward.45} parent=31 // pred_check_branch
            %244 = sbr.rel (0) target = $region36
          $region35: #{transformerfusion_forward.45} parent=31 // pred_region
            // Predicated region
            $region37: #{transformerfusion_forward.45} parent=35 // pred_check
              _
            $region38: #{transformerfusion_forward.45} parent=35 // pred_check_branch
              %246 = sbr.rel (0) target = $region40
            $region39: #{transformerfusion_forward.45} parent=35 // pred_region
              // Predicated region
              $region52: #{transformerfusion_forward.45} parent=39 // pred_check
                _
              $region53: #{transformerfusion_forward.45} parent=39 // pred_check_branch
                %299 = sbr.rel (0) target = $region55
              $region54: #{transformerfusion_forward.45} parent=39 // pred_region
                loop: start=0, step=1, limit=1
                $region56: #{transformerfusion_forward.45} parent=54 // loop_pre_header
                  _
                $region57: #{transformerfusion_forward.45} parent=54 // loop_header
                  %s301 = sphi 0, %s305
                  %p302 = scmp.ge.s32.totalorder %s301, 1
                  %s306 = sphi %s242, %s242
                  %s307 = sphi %s239, %s239
                $region58: #{transformerfusion_forward.45} parent=54 // loop_header_branch
                  %304 = sbr.rel (%p302) target = $region62
                $region59: #{transformerfusion_forward.45} parent=54 // loop_body
                  %v308 = vld [vmem:[%s306] sm:$0xff]
                  %309 = vst [vmem:[%s307] sm:$0xff] %v308
                  %v310 = vld [vmem:[%s306 + $0x20] sm:$0xff]
                  %311 = vst [vmem:[%s307 + $0x8] sm:$0xff] %v310
                  %v312 = vld [vmem:[%s306 + $0x40] sm:$0xff]
                  %313 = vst [vmem:[%s307 + $0x10] sm:$0xff] %v312
                  %v314 = vld [vmem:[%s306 + $0x60] sm:$0xff]
                  %315 = vst [vmem:[%s307 + $0x18] sm:$0xff] %v314
                  %v316 = vld [vmem:[%s306 + $0x80] sm:$0xff]
                  %317 = vst [vmem:[%s307 + $0x20] sm:$0xff] %v316
                  %v318 = vld [vmem:[%s306 + $0xa0] sm:$0xff]
                  %319 = vst [vmem:[%s307 + $0x28] sm:$0xff] %v318
                  %v320 = vld [vmem:[%s306 + $0xc0] sm:$0xff]
                  %321 = vst [vmem:[%s307 + $0x30] sm:$0xff] %v320
                  %v322 = vld [vmem:[%s306 + $0xe0] sm:$0xff]
                  %323 = vst [vmem:[%s307 + $0x38] sm:$0xff] %v322
                  %v324 = vld [vmem:[%s306 + $0x100] sm:$0xff]
                  %325 = vst [vmem:[%s307 + $0x40] sm:$0xff] %v324
                  %v326 = vld [vmem:[%s306 + $0x120] sm:$0xff]
                  %327 = vst [vmem:[%s307 + $0x48] sm:$0xff] %v326
                  %v328 = vld [vmem:[%s306 + $0x140] sm:$0xff]
                  %329 = vst [vmem:[%s307 + $0x50] sm:$0xff] %v328
                  %v330 = vld [vmem:[%s306 + $0x160] sm:$0xff]
                  %331 = vst [vmem:[%s307 + $0x58] sm:$0xff] %v330
                  %v332 = vld [vmem:[%s306 + $0x180] sm:$0xff]
                  %333 = vst [vmem:[%s307 + $0x60] sm:$0xff] %v332
                  %v334 = vld [vmem:[%s306 + $0x1a0] sm:$0xff]
                  %335 = vst [vmem:[%s307 + $0x68] sm:$0xff] %v334
                  %v336 = vld [vmem:[%s306 + $0x1c0] sm:$0xff]
                  %337 = vst [vmem:[%s307 + $0x70] sm:$0xff] %v336
                  %v338 = vld [vmem:[%s306 + $0x1e0] sm:$0xff]
                  %339 = vst [vmem:[%s307 + $0x78] sm:$0xff] %v338
                  %v340 = vld [vmem:[%s306 + $0x200] sm:$0xff]
                  %341 = vst [vmem:[%s307 + $0x80] sm:$0xff] %v340
                  %v342 = vld [vmem:[%s306 + $0x220] sm:$0xff]
                  %343 = vst [vmem:[%s307 + $0x88] sm:$0xff] %v342
                  %v344 = vld [vmem:[%s306 + $0x240] sm:$0xff]
                  %345 = vst [vmem:[%s307 + $0x90] sm:$0xff] %v344
                  %v346 = vld [vmem:[%s306 + $0x260] sm:$0xff]
                  %347 = vst [vmem:[%s307 + $0x98] sm:$0xff] %v346
                $region60: #{transformerfusion_forward.45} parent=54 // loop_footer
                  %s305 = sadd.s32 1, %s301
                $region61: #{transformerfusion_forward.45} parent=54 // loop_footer_branch
                  %300 = sbr.rel target = $region57
                $region62: #{transformerfusion_forward.45} parent=54 // loop_exit
                  _
              $region55: #{transformerfusion_forward.45} parent=39 // pred_fallthru
                _
              // Predicated region
              $region63: #{transformerfusion_forward.45} parent=39 // pred_check
                _
              $region64: #{transformerfusion_forward.45} parent=39 // pred_check_branch
                %349 = sbr.rel target = $region66
              $region65: #{transformerfusion_forward.45} parent=39 // pred_region
                _
              $region66: #{transformerfusion_forward.45} parent=39 // pred_fallthru
                _
            $region40: #{transformerfusion_forward.45} parent=35 // pred_fallthru
              _
            // Predicated region
            $region41: #{transformerfusion_forward.45} parent=35 // pred_check
              _
            $region42: #{transformerfusion_forward.45} parent=35 // pred_check_branch
              %248 = sbr.rel target = $region44
            $region43: #{transformerfusion_forward.45} parent=35 // pred_region
              loop: start=0, step=1, limit=1
              $region45: #{transformerfusion_forward.45} parent=43 // loop_pre_header
                _
              $region46: #{transformerfusion_forward.45} parent=43 // loop_header
                %s251 = sphi 0, %s255
                %p252 = scmp.ge.s32.totalorder %s251, 1
                %s256 = sphi %s242, %s242
                %s257 = sphi %s239, %s239
              $region47: #{transformerfusion_forward.45} parent=43 // loop_header_branch
                %254 = sbr.rel (%p252) target = $region51
              $region48: #{transformerfusion_forward.45} parent=43 // loop_body
                %v258 = vld [vmem:[%s256] sm:$0xff]
                %259 = vst [vmem:[%s257] sm:$0xff] %v258
                %v260 = vld [vmem:[%s256 + $0x20] sm:$0xff]
                %261 = vst [vmem:[%s257 + $0x8] sm:$0xff] %v260
                %v262 = vld [vmem:[%s256 + $0x40] sm:$0xff]
                %263 = vst [vmem:[%s257 + $0x10] sm:$0xff] %v262
                %v264 = vld [vmem:[%s256 + $0x60] sm:$0xff]
                %265 = vst [vmem:[%s257 + $0x18] sm:$0xff] %v264
                %v266 = vld [vmem:[%s256 + $0x80] sm:$0xff]
                %267 = vst [vmem:[%s257 + $0x20] sm:$0xff] %v266
                %v268 = vld [vmem:[%s256 + $0xa0] sm:$0xff]
                %269 = vst [vmem:[%s257 + $0x28] sm:$0xff] %v268
                %v270 = vld [vmem:[%s256 + $0xc0] sm:$0xff]
                %271 = vst [vmem:[%s257 + $0x30] sm:$0xff] %v270
                %v272 = vld [vmem:[%s256 + $0xe0] sm:$0xff]
                %273 = vst [vmem:[%s257 + $0x38] sm:$0xff] %v272
                %v274 = vld [vmem:[%s256 + $0x100] sm:$0xff]
                %275 = vst [vmem:[%s257 + $0x40] sm:$0xff] %v274
                %v276 = vld [vmem:[%s256 + $0x120] sm:$0xff]
                %277 = vst [vmem:[%s257 + $0x48] sm:$0xff] %v276
                %v278 = vld [vmem:[%s256 + $0x140] sm:$0xff]
                %279 = vst [vmem:[%s257 + $0x50] sm:$0xff] %v278
                %v280 = vld [vmem:[%s256 + $0x160] sm:$0xff]
                %281 = vst [vmem:[%s257 + $0x58] sm:$0xff] %v280
                %v282 = vld [vmem:[%s256 + $0x180] sm:$0xff]
                %283 = vst [vmem:[%s257 + $0x60] sm:$0xff] %v282
                %v284 = vld [vmem:[%s256 + $0x1a0] sm:$0xff]
                %285 = vst [vmem:[%s257 + $0x68] sm:$0xff] %v284
                %v286 = vld [vmem:[%s256 + $0x1c0] sm:$0xff]
                %287 = vst [vmem:[%s257 + $0x70] sm:$0xff] %v286
                %v288 = vld [vmem:[%s256 + $0x1e0] sm:$0xff]
                %289 = vst [vmem:[%s257 + $0x78] sm:$0xff] %v288
                %v290 = vld [vmem:[%s256 + $0x200] sm:$0xff]
                %291 = vst [vmem:[%s257 + $0x80] sm:$0xff] %v290
                %v292 = vld [vmem:[%s256 + $0x220] sm:$0xff]
                %293 = vst [vmem:[%s257 + $0x88] sm:$0xff] %v292
                %v294 = vld [vmem:[%s256 + $0x240] sm:$0xff]
                %295 = vst [vmem:[%s257 + $0x90] sm:$0xff] %v294
                %v296 = vld [vmem:[%s256 + $0x260] sm:$0xff]
                %297 = vst [vmem:[%s257 + $0x98] sm:$0xff] %v296
              $region49: #{transformerfusion_forward.45} parent=43 // loop_footer
                %s255 = sadd.s32 1, %s251
              $region50: #{transformerfusion_forward.45} parent=43 // loop_footer_branch
                %250 = sbr.rel target = $region46
              $region51: #{transformerfusion_forward.45} parent=43 // loop_exit
                _
            $region44: #{transformerfusion_forward.45} parent=35 // pred_fallthru
              _
          $region36: #{transformerfusion_forward.45} parent=31 // pred_fallthru
            _
          %350 = vnop
        $region32: #{transformerfusion_forward.45} parent=27 // pred_fallthru
          _
        // Predicated region
        $region67: #{transformerfusion_forward.45} parent=27 // pred_check
          %p351 = pneg %p138
        $region68: #{transformerfusion_forward.45} parent=27 // pred_check_branch
          %353 = sbr.rel (%p351) target = $region70
        $region69: #{transformerfusion_forward.45} parent=27 // pred_region
          %s354 = smul.u32 2, %s20
          %p355 = scmp.lt.s32.totalorder %s354, 7
          %s356 = scalar_select %p355, %s354, 7
          %s357 = scalar_lea.vmem %s4, %s356
          %s358 = smul.u32 2, %s20
        $region70: #{transformerfusion_forward.45} parent=27 // pred_fallthru
          _
        // Predicated region
        $region71: #{transformerfusion_forward.45} parent=27 // pred_check
          %p359 = pneg %p164
        $region72: #{transformerfusion_forward.45} parent=27 // pred_check_branch
          %361 = sbr.rel (%p359) target = $region74
        $region73: #{transformerfusion_forward.45} parent=27 // pred_region
          %s362 = smul.u32 2, %s20
          %p363 = scmp.lt.s32.totalorder %s362, 7
          %s364 = scalar_select %p363, %s362, 7
          %s365 = scalar_lea.vmem %s5, %s364
          %s366 = smul.u32 2, %s20
        $region74: #{transformerfusion_forward.45} parent=27 // pred_fallthru
          _
      $region28: #{transformerfusion_forward.45} parent=5 // pred_fallthru
        _
      %p367 = scmp.le.s32.totalorder 1, %s12
      %p368 = scmp.lt.s32.totalorder %s12, 5
      %p369 = pnand %p367, %p368
      %p370 = pneg %p369
      // Predicated region
      $region75: #{transformerfusion_forward.45} parent=5 // pred_check
        _
      $region76: #{transformerfusion_forward.45} parent=5 // pred_check_branch
        %372 = sbr.rel (%p369) target = $region78
      $region77: #{transformerfusion_forward.45} parent=5 // pred_region
        %s373 = ssub.s32 %s12, 1
        %s374 = sand.u32 %s63, 1
        %s375 = sand.u32 %s63, 1
        %s376 = smul.addr %s375, 160
        %s377 = scalar_lea.vmem [#allocation2], %s376
        // Predicated region
        $region79: #{transformerfusion_forward.45} parent=77 // pred_check
          %p378 = pneg %p76
        $region80: #{transformerfusion_forward.45} parent=77 // pred_check_branch
          %380 = sbr.rel (%p378) target = $region82
        $region81: #{transformerfusion_forward.45} parent=77 // pred_region
          _
        $region82: #{transformerfusion_forward.45} parent=77 // pred_fallthru
          _
        %s381 = smul.u32 16, %s21
        %p382 = scmp.lt.s32.totalorder %s381, 15
        %s383 = scalar_select %p382, %s381, 15
        %s384 = smul.addr %s383, 2
        %s385 = smul.addr %s384, 8
        %s386 = scalar_lea.vmem %s0, %s385
        %p387 = pneg %p50
        %p388 = pneg %p47
        %s389 = sand.u32 %s63, 1
        %s390 = sand.u32 %s63, 1
        %s391 = smul.addr %s390, 160
        %s392 = scalar_lea.vmem [#allocation2], %s391
        %p393 = pneg %p76
        %p394 = pneg %p73
        %p395 = pneg %p97
        %p396 = pneg %p94
        %p397 = pneg %p118
        %p398 = pneg %p115
        %s399 = smul.u32 2, %s22
        %p400 = scmp.lt.s32.totalorder %s399, 7
        %s401 = scalar_select %p400, %s399, 7
        %s402 = scalar_lea.vmem %s4, %s401
        %p403 = pneg %p144
        %p404 = pneg %p141
        %s405 = smul.u32 2, %s22
        %p406 = scmp.lt.s32.totalorder %s405, 7
        %s407 = scalar_select %p406, %s405, 7
        %s408 = scalar_lea.vmem %s5, %s407
        %p409 = pneg %p170
        %p410 = pneg %p167
        %p411 = pneg %p198
        %p412 = pneg %p195
        %s413 = sand.u32 %s185, 1
        %s414 = sand.u32 %s185, 1
        %s415 = smul.addr %s414, 128
        %s416 = scalar_lea.vmem [#allocation3], %s415
        %s417 = smul.u32 16, %s21
        %p418 = scmp.lt.s32.totalorder %s417, 15
        %s419 = scalar_select %p418, %s417, 15
        %s420 = smul.addr %s419, 2
        %s421 = smul.addr %s420, 8
        %s422 = scalar_lea.vmem %s0, %s421
        %s423 = smul.u32 16, %s21
        %s424 = smul.u32 2, %s22
        %s425 = smul.u32 2, %s22
        %p426 = scmp.lt.s32.totalorder %s425, 7
        %s427 = scalar_select %p426, %s425, 7
        %s428 = scalar_lea.vmem %s4, %s427
        %s429 = smul.u32 2, %s22
        %s430 = smul.u32 2, %s22
        %p431 = scmp.lt.s32.totalorder %s430, 7
        %s432 = scalar_select %p431, %s430, 7
        %s433 = scalar_lea.vmem %s5, %s432
        %s434 = smul.u32 2, %s22
        %s435 = smul.u32 16, %s21
        %s436 = smul.u32 2, %s22
        %v438 = vld [vmem:[%s422] sm:$0xff]
        %v439 = vld [vmem:[%s422 + $0x8] sm:$0xff]
        %v440 = vld [vmem:[%s422 + $0x10] sm:$0xff]
        %v441 = vld [vmem:[%s422 + $0x18] sm:$0xff]
        %v442 = vld [vmem:[%s422 + $0x20] sm:$0xff]
        %v443 = vld [vmem:[%s422 + $0x28] sm:$0xff]
        %v444 = vld [vmem:[%s422 + $0x30] sm:$0xff]
        %v445 = vld [vmem:[%s422 + $0x38] sm:$0xff]
        %v446 = vld [vmem:[%s422 + $0x40] sm:$0xff]
        %v447 = vld [vmem:[%s422 + $0x48] sm:$0xff]
        %v448 = vld [vmem:[%s422 + $0x50] sm:$0xff]
        %v449 = vld [vmem:[%s422 + $0x58] sm:$0xff]
        %v450 = vld [vmem:[%s422 + $0x60] sm:$0xff]
        %v451 = vld [vmem:[%s422 + $0x68] sm:$0xff]
        %v452 = vld [vmem:[%s422 + $0x70] sm:$0xff]
        %v453 = vld [vmem:[%s422 + $0x78] sm:$0xff]
        %v454 = vld [vmem:[%s422 + $0x80] sm:$0xff]
        %v455 = vld [vmem:[%s422 + $0x88] sm:$0xff]
        %v456 = vld [vmem:[%s422 + $0x90] sm:$0xff]
        %v457 = vld [vmem:[%s422 + $0x98] sm:$0xff]
        %v458 = vld [vmem:[%s422 + $0xa0] sm:$0xff]
        %v459 = vld [vmem:[%s422 + $0xa8] sm:$0xff]
        %v460 = vld [vmem:[%s422 + $0xb0] sm:$0xff]
        %v461 = vld [vmem:[%s422 + $0xb8] sm:$0xff]
        %v462 = vld [vmem:[%s422 + $0xc0] sm:$0xff]
        %v463 = vld [vmem:[%s422 + $0xc8] sm:$0xff]
        %v464 = vld [vmem:[%s422 + $0xd0] sm:$0xff]
        %v465 = vld [vmem:[%s422 + $0xd8] sm:$0xff]
        %v466 = vld [vmem:[%s422 + $0xe0] sm:$0xff]
        %v467 = vld [vmem:[%s422 + $0xe8] sm:$0xff]
        %v468 = vld [vmem:[%s422 + $0xf0] sm:$0xff]
        %v469 = vld [vmem:[%s422 + $0xf8] sm:$0xff]
        %vm470 = vcmask 261120
        %v471 = vsel %vm470, %v439, 0.0
        %v472 = vadd.f32 %v438, %v471
        %473 = vadd.xlane.f32.xlu0 %v472
        %v474 = vpop.xlane.xlu0 %473
        %v475 = vsel %vm470, %v441, 0.0
        %v476 = vadd.f32 %v440, %v475
        %477 = vadd.xlane.f32.xlu0 %v476
        %v478 = vpop.xlane.xlu0 %477
        %v479 = vsel %vm470, %v443, 0.0
        %v480 = vadd.f32 %v442, %v479
        %481 = vadd.xlane.f32.xlu0 %v480
        %v482 = vpop.xlane.xlu0 %481
        %v483 = vsel %vm470, %v445, 0.0
        %v484 = vadd.f32 %v444, %v483
        %485 = vadd.xlane.f32.xlu0 %v484
        %v486 = vpop.xlane.xlu0 %485
        %v487 = vsel %vm470, %v447, 0.0
        %v488 = vadd.f32 %v446, %v487
        %489 = vadd.xlane.f32.xlu0 %v488
        %v490 = vpop.xlane.xlu0 %489
        %v491 = vsel %vm470, %v449, 0.0
        %v492 = vadd.f32 %v448, %v491
        %493 = vadd.xlane.f32.xlu0 %v492
        %v494 = vpop.xlane.xlu0 %493
        %v495 = vsel %vm470, %v451, 0.0
        %v496 = vadd.f32 %v450, %v495
        %497 = vadd.xlane.f32.xlu0 %v496
        %v498 = vpop.xlane.xlu0 %497
        %v499 = vsel %vm470, %v453, 0.0
        %v500 = vadd.f32 %v452, %v499
        %501 = vadd.xlane.f32.xlu0 %v500
        %v502 = vpop.xlane.xlu0 %501
        %v503 = vsel %vm470, %v455, 0.0
        %v504 = vadd.f32 %v454, %v503
        %505 = vadd.xlane.f32.xlu0 %v504
        %v506 = vpop.xlane.xlu0 %505
        %v507 = vsel %vm470, %v457, 0.0
        %v508 = vadd.f32 %v456, %v507
        %509 = vadd.xlane.f32.xlu0 %v508
        %v510 = vpop.xlane.xlu0 %509
        %v511 = vsel %vm470, %v459, 0.0
        %v512 = vadd.f32 %v458, %v511
        %513 = vadd.xlane.f32.xlu0 %v512
        %v514 = vpop.xlane.xlu0 %513
        %v515 = vsel %vm470, %v461, 0.0
        %v516 = vadd.f32 %v460, %v515
        %517 = vadd.xlane.f32.xlu0 %v516
        %v518 = vpop.xlane.xlu0 %517
        %v519 = vsel %vm470, %v463, 0.0
        %v520 = vadd.f32 %v462, %v519
        %521 = vadd.xlane.f32.xlu0 %v520
        %v522 = vpop.xlane.xlu0 %521
        %v523 = vsel %vm470, %v465, 0.0
        %v524 = vadd.f32 %v464, %v523
        %525 = vadd.xlane.f32.xlu0 %v524
        %v526 = vpop.xlane.xlu0 %525
        %v527 = vsel %vm470, %v467, 0.0
        %v528 = vadd.f32 %v466, %v527
        %529 = vadd.xlane.f32.xlu0 %v528
        %v530 = vpop.xlane.xlu0 %529
        %v531 = vsel %vm470, %v469, 0.0
        %v532 = vadd.f32 %v468, %v531
        %533 = vadd.xlane.f32.xlu0 %v532
        %v534 = vpop.xlane.xlu0 %533
        %v535 = vrcp.pop 160.0
        %v536 = vmul.f32 %v474, %v535
        %v537 = vmul.f32 %v478, %v535
        %v538 = vmul.f32 %v482, %v535
        %v539 = vmul.f32 %v486, %v535
        %v540 = vmul.f32 %v490, %v535
        %v541 = vmul.f32 %v494, %v535
        %v542 = vmul.f32 %v498, %v535
        %v543 = vmul.f32 %v502, %v535
        %v544 = vmul.f32 %v506, %v535
        %v545 = vmul.f32 %v510, %v535
        %v546 = vmul.f32 %v514, %v535
        %v547 = vmul.f32 %v518, %v535
        %v548 = vmul.f32 %v522, %v535
        %v549 = vmul.f32 %v526, %v535
        %v550 = vmul.f32 %v530, %v535
        %v551 = vmul.f32 %v534, %v535
        %v552 = vsub.f32 %v438, %v536
        %v553 = vsub.f32 %v439, %v536
        %v554 = vsub.f32 %v440, %v537
        %v555 = vsub.f32 %v441, %v537
        %v556 = vsub.f32 %v442, %v538
        %v557 = vsub.f32 %v443, %v538
        %v558 = vsub.f32 %v444, %v539
        %v559 = vsub.f32 %v445, %v539
        %v560 = vsub.f32 %v446, %v540
        %v561 = vsub.f32 %v447, %v540
        %v562 = vsub.f32 %v448, %v541
        %v563 = vsub.f32 %v449, %v541
        %v564 = vsub.f32 %v450, %v542
        %v565 = vsub.f32 %v451, %v542
        %v566 = vsub.f32 %v452, %v543
        %v567 = vsub.f32 %v453, %v543
        %v568 = vsub.f32 %v454, %v544
        %v569 = vsub.f32 %v455, %v544
        %v570 = vsub.f32 %v456, %v545
        %v571 = vsub.f32 %v457, %v545
        %v572 = vsub.f32 %v458, %v546
        %v573 = vsub.f32 %v459, %v546
        %v574 = vsub.f32 %v460, %v547
        %v575 = vsub.f32 %v461, %v547
        %v576 = vsub.f32 %v462, %v548
        %v577 = vsub.f32 %v463, %v548
        %v578 = vsub.f32 %v464, %v549
        %v579 = vsub.f32 %v465, %v549
        %v580 = vsub.f32 %v466, %v550
        %v581 = vsub.f32 %v467, %v550
        %v582 = vsub.f32 %v468, %v551
        %v583 = vsub.f32 %v469, %v551
        %v584 = vmul.f32 %v552, %v552
        %v585 = vmul.f32 %v553, %v553
        %v586 = vmul.f32 %v554, %v554
        %v587 = vmul.f32 %v555, %v555
        %v588 = vmul.f32 %v556, %v556
        %v589 = vmul.f32 %v557, %v557
        %v590 = vmul.f32 %v558, %v558
        %v591 = vmul.f32 %v559, %v559
        %v592 = vmul.f32 %v560, %v560
        %v593 = vmul.f32 %v561, %v561
        %v594 = vmul.f32 %v562, %v562
        %v595 = vmul.f32 %v563, %v563
        %v596 = vmul.f32 %v564, %v564
        %v597 = vmul.f32 %v565, %v565
        %v598 = vmul.f32 %v566, %v566
        %v599 = vmul.f32 %v567, %v567
        %v600 = vmul.f32 %v568, %v568
        %v601 = vmul.f32 %v569, %v569
        %v602 = vmul.f32 %v570, %v570
        %v603 = vmul.f32 %v571, %v571
        %v604 = vmul.f32 %v572, %v572
        %v605 = vmul.f32 %v573, %v573
        %v606 = vmul.f32 %v574, %v574
        %v607 = vmul.f32 %v575, %v575
        %v608 = vmul.f32 %v576, %v576
        %v609 = vmul.f32 %v577, %v577
        %v610 = vmul.f32 %v578, %v578
        %v611 = vmul.f32 %v579, %v579
        %v612 = vmul.f32 %v580, %v580
        %v613 = vmul.f32 %v581, %v581
        %v614 = vmul.f32 %v582, %v582
        %v615 = vmul.f32 %v583, %v583
        %v616 = vsel %vm470, %v585, 0.0
        %v617 = vadd.f32 %v584, %v616
        %618 = vadd.xlane.f32.xlu0 %v617
        %v619 = vpop.xlane.xlu0 %618
        %v620 = vsel %vm470, %v587, 0.0
        %v621 = vadd.f32 %v586, %v620
        %622 = vadd.xlane.f32.xlu0 %v621
        %v623 = vpop.xlane.xlu0 %622
        %v624 = vsel %vm470, %v589, 0.0
        %v625 = vadd.f32 %v588, %v624
        %626 = vadd.xlane.f32.xlu0 %v625
        %v627 = vpop.xlane.xlu0 %626
        %v628 = vsel %vm470, %v591, 0.0
        %v629 = vadd.f32 %v590, %v628
        %630 = vadd.xlane.f32.xlu0 %v629
        %v631 = vpop.xlane.xlu0 %630
        %v632 = vsel %vm470, %v593, 0.0
        %v633 = vadd.f32 %v592, %v632
        %634 = vadd.xlane.f32.xlu0 %v633
        %v635 = vpop.xlane.xlu0 %634
        %v636 = vsel %vm470, %v595, 0.0
        %v637 = vadd.f32 %v594, %v636
        %638 = vadd.xlane.f32.xlu0 %v637
        %v639 = vpop.xlane.xlu0 %638
        %v640 = vsel %vm470, %v597, 0.0
        %v641 = vadd.f32 %v596, %v640
        %642 = vadd.xlane.f32.xlu0 %v641
        %v643 = vpop.xlane.xlu0 %642
        %v644 = vsel %vm470, %v599, 0.0
        %v645 = vadd.f32 %v598, %v644
        %646 = vadd.xlane.f32.xlu0 %v645
        %v647 = vpop.xlane.xlu0 %646
        %v648 = vsel %vm470, %v601, 0.0
        %v649 = vadd.f32 %v600, %v648
        %650 = vadd.xlane.f32.xlu0 %v649
        %v651 = vpop.xlane.xlu0 %650
        %v652 = vsel %vm470, %v603, 0.0
        %v653 = vadd.f32 %v602, %v652
        %654 = vadd.xlane.f32.xlu0 %v653
        %v655 = vpop.xlane.xlu0 %654
        %v656 = vsel %vm470, %v605, 0.0
        %v657 = vadd.f32 %v604, %v656
        %658 = vadd.xlane.f32.xlu0 %v657
        %v659 = vpop.xlane.xlu0 %658
        %v660 = vsel %vm470, %v607, 0.0
        %v661 = vadd.f32 %v606, %v660
        %662 = vadd.xlane.f32.xlu0 %v661
        %v663 = vpop.xlane.xlu0 %662
        %v664 = vsel %vm470, %v609, 0.0
        %v665 = vadd.f32 %v608, %v664
        %666 = vadd.xlane.f32.xlu0 %v665
        %v667 = vpop.xlane.xlu0 %666
        %v668 = vsel %vm470, %v611, 0.0
        %v669 = vadd.f32 %v610, %v668
        %670 = vadd.xlane.f32.xlu0 %v669
        %v671 = vpop.xlane.xlu0 %670
        %v672 = vsel %vm470, %v613, 0.0
        %v673 = vadd.f32 %v612, %v672
        %674 = vadd.xlane.f32.xlu0 %v673
        %v675 = vpop.xlane.xlu0 %674
        %v676 = vsel %vm470, %v615, 0.0
        %v677 = vadd.f32 %v614, %v676
        %678 = vadd.xlane.f32.xlu0 %v677
        %v679 = vpop.xlane.xlu0 %678
        %v680 = vmul.f32 %v619, %v535
        %v681 = vmul.f32 %v623, %v535
        %v682 = vmul.f32 %v627, %v535
        %v683 = vmul.f32 %v631, %v535
        %v684 = vmul.f32 %v635, %v535
        %v685 = vmul.f32 %v639, %v535
        %v686 = vmul.f32 %v643, %v535
        %v687 = vmul.f32 %v647, %v535
        %v688 = vmul.f32 %v651, %v535
        %v689 = vmul.f32 %v655, %v535
        %v690 = vmul.f32 %v659, %v535
        %v691 = vmul.f32 %v663, %v535
        %v692 = vmul.f32 %v667, %v535
        %v693 = vmul.f32 %v671, %v535
        %v694 = vmul.f32 %v675, %v535
        %v695 = vmul.f32 %v679, %v535
        %v696 = vadd.f32 %v680, 1e-05
        %v697 = vadd.f32 %v681, 1e-05
        %v698 = vadd.f32 %v682, 1e-05
        %v699 = vadd.f32 %v683, 1e-05
        %v700 = vadd.f32 %v684, 1e-05
        %v701 = vadd.f32 %v685, 1e-05
        %v702 = vadd.f32 %v686, 1e-05
        %v703 = vadd.f32 %v687, 1e-05
        %v704 = vadd.f32 %v688, 1e-05
        %v705 = vadd.f32 %v689, 1e-05
        %v706 = vadd.f32 %v690, 1e-05
        %v707 = vadd.f32 %v691, 1e-05
        %v708 = vadd.f32 %v692, 1e-05
        %v709 = vadd.f32 %v693, 1e-05
        %v710 = vadd.f32 %v694, 1e-05
        %v711 = vadd.f32 %v695, 1e-05
        %v712 = vrsqrt.pop %v696
        %v713 = vrsqrt.pop %v697
        %v714 = vrsqrt.pop %v698
        %v715 = vrsqrt.pop %v699
        %v716 = vrsqrt.pop %v700
        %v717 = vrsqrt.pop %v701
        %v718 = vrsqrt.pop %v702
        %v719 = vrsqrt.pop %v703
        %v720 = vrsqrt.pop %v704
        %v721 = vrsqrt.pop %v705
        %v722 = vrsqrt.pop %v706
        %v723 = vrsqrt.pop %v707
        %v724 = vrsqrt.pop %v708
        %v725 = vrsqrt.pop %v709
        %v726 = vrsqrt.pop %v710
        %v727 = vrsqrt.pop %v711
        %v728 = vmul.f32 %v552, %v712
        %v729 = vmul.f32 %v553, %v712
        %v730 = vmul.f32 %v554, %v713
        %v731 = vmul.f32 %v555, %v713
        %v732 = vmul.f32 %v556, %v714
        %v733 = vmul.f32 %v557, %v714
        %v734 = vmul.f32 %v558, %v715
        %v735 = vmul.f32 %v559, %v715
        %v736 = vmul.f32 %v560, %v716
        %v737 = vmul.f32 %v561, %v716
        %v738 = vmul.f32 %v562, %v717
        %v739 = vmul.f32 %v563, %v717
        %v740 = vmul.f32 %v564, %v718
        %v741 = vmul.f32 %v565, %v718
        %v742 = vmul.f32 %v566, %v719
        %v743 = vmul.f32 %v567, %v719
        %v744 = vmul.f32 %v568, %v720
        %v745 = vmul.f32 %v569, %v720
        %v746 = vmul.f32 %v570, %v721
        %v747 = vmul.f32 %v571, %v721
        %v748 = vmul.f32 %v572, %v722
        %v749 = vmul.f32 %v573, %v722
        %v750 = vmul.f32 %v574, %v723
        %v751 = vmul.f32 %v575, %v723
        %v752 = vmul.f32 %v576, %v724
        %v753 = vmul.f32 %v577, %v724
        %v754 = vmul.f32 %v578, %v725
        %v755 = vmul.f32 %v579, %v725
        %v756 = vmul.f32 %v580, %v726
        %v757 = vmul.f32 %v581, %v726
        %v758 = vmul.f32 %v582, %v727
        %v759 = vmul.f32 %v583, %v727
        %v760 = vld [vmem:[%s2] sm:$0x3]
        %v762 = vlaneseq
        %v763 = vshrl.u32 %v762, 7
        %v764 = vsub.s32 0, %v763
        %v765 = vrot.slane %v760, %v764
        %v766 = vlaneseq
        %v767 = vshrl.u32 %v766, 7
        %v768 = vsub.s32 1, %v767
        %v769 = vrot.slane %v760, %v768
        %v772 = vmul.f32 %v728, %v765
        %v773 = vmul.f32 %v729, %v769
        %v774 = vmul.f32 %v730, %v765
        %v775 = vmul.f32 %v731, %v769
        %v776 = vmul.f32 %v732, %v765
        %v777 = vmul.f32 %v733, %v769
        %v778 = vmul.f32 %v734, %v765
        %v779 = vmul.f32 %v735, %v769
        %v780 = vmul.f32 %v736, %v765
        %v781 = vmul.f32 %v737, %v769
        %v782 = vmul.f32 %v738, %v765
        %v783 = vmul.f32 %v739, %v769
        %v784 = vmul.f32 %v740, %v765
        %v785 = vmul.f32 %v741, %v769
        %v786 = vmul.f32 %v742, %v765
        %v787 = vmul.f32 %v743, %v769
        %v788 = vmul.f32 %v744, %v765
        %v789 = vmul.f32 %v745, %v769
        %v790 = vmul.f32 %v746, %v765
        %v791 = vmul.f32 %v747, %v769
        %v792 = vmul.f32 %v748, %v765
        %v793 = vmul.f32 %v749, %v769
        %v794 = vmul.f32 %v750, %v765
        %v795 = vmul.f32 %v751, %v769
        %v796 = vmul.f32 %v752, %v765
        %v797 = vmul.f32 %v753, %v769
        %v798 = vmul.f32 %v754, %v765
        %v799 = vmul.f32 %v755, %v769
        %v800 = vmul.f32 %v756, %v765
        %v801 = vmul.f32 %v757, %v769
        %v802 = vmul.f32 %v758, %v765
        %v803 = vmul.f32 %v759, %v769
        %v804 = vld [vmem:[%s3] sm:$0x3]
        %v806 = vlaneseq
        %v807 = vshrl.u32 %v806, 7
        %v808 = vsub.s32 0, %v807
        %v809 = vrot.slane %v804, %v808
        %v810 = vlaneseq
        %v811 = vshrl.u32 %v810, 7
        %v812 = vsub.s32 1, %v811
        %v813 = vrot.slane %v804, %v812
        %v816 = vadd.f32 %v772, %v809
        %v817 = vadd.f32 %v773, %v813
        %v818 = vadd.f32 %v774, %v809
        %v819 = vadd.f32 %v775, %v813
        %v820 = vadd.f32 %v776, %v809
        %v821 = vadd.f32 %v777, %v813
        %v822 = vadd.f32 %v778, %v809
        %v823 = vadd.f32 %v779, %v813
        %v824 = vadd.f32 %v780, %v809
        %v825 = vadd.f32 %v781, %v813
        %v826 = vadd.f32 %v782, %v809
        %v827 = vadd.f32 %v783, %v813
        %v828 = vadd.f32 %v784, %v809
        %v829 = vadd.f32 %v785, %v813
        %v830 = vadd.f32 %v786, %v809
        %v831 = vadd.f32 %v787, %v813
        %v832 = vadd.f32 %v788, %v809
        %v833 = vadd.f32 %v789, %v813
        %v834 = vadd.f32 %v790, %v809
        %v835 = vadd.f32 %v791, %v813
        %v836 = vadd.f32 %v792, %v809
        %v837 = vadd.f32 %v793, %v813
        %v838 = vadd.f32 %v794, %v809
        %v839 = vadd.f32 %v795, %v813
        %v840 = vadd.f32 %v796, %v809
        %v841 = vadd.f32 %v797, %v813
        %v842 = vadd.f32 %v798, %v809
        %v843 = vadd.f32 %v799, %v813
        %v844 = vadd.f32 %v800, %v809
        %v845 = vadd.f32 %v801, %v813
        %v846 = vadd.f32 %v802, %v809
        %v847 = vadd.f32 %v803, %v813
        %v848 = vpack.c.bf16 %v818, %v816
        %v849 = vpack.c.bf16 %v819, %v817
        %v850 = vpack.c.bf16 %v822, %v820
        %v851 = vpack.c.bf16 %v823, %v821
        %v852 = vpack.c.bf16 %v826, %v824
        %v853 = vpack.c.bf16 %v827, %v825
        %v854 = vpack.c.bf16 %v830, %v828
        %v855 = vpack.c.bf16 %v831, %v829
        %v856 = vpack.c.bf16 %v834, %v832
        %v857 = vpack.c.bf16 %v835, %v833
        %v858 = vpack.c.bf16 %v838, %v836
        %v859 = vpack.c.bf16 %v839, %v837
        %v860 = vpack.c.bf16 %v842, %v840
        %v861 = vpack.c.bf16 %v843, %v841
        %v862 = vpack.c.bf16 %v846, %v844
        %v863 = vpack.c.bf16 %v847, %v845
        %v864 = vld [vmem:[%s377] sm:$0xff]
        %v865 = vld [vmem:[%s377 + $0x8] sm:$0xff]
        %v866 = vld [vmem:[%s377 + $0x10] sm:$0xff]
        %v867 = vld [vmem:[%s377 + $0x18] sm:$0xff]
        %v868 = vld [vmem:[%s377 + $0x20] sm:$0xff]
        %v869 = vld [vmem:[%s377 + $0x28] sm:$0xff]
        %v870 = vld [vmem:[%s377 + $0x30] sm:$0xff]
        %v871 = vld [vmem:[%s377 + $0x38] sm:$0xff]
        %v872 = vld [vmem:[%s377 + $0x40] sm:$0xff]
        %v873 = vld [vmem:[%s377 + $0x48] sm:$0xff]
        %v874 = vld [vmem:[%s377 + $0x50] sm:$0xff]
        %v875 = vld [vmem:[%s377 + $0x58] sm:$0xff]
        %v876 = vld [vmem:[%s377 + $0x60] sm:$0xff]
        %v877 = vld [vmem:[%s377 + $0x68] sm:$0xff]
        %v878 = vld [vmem:[%s377 + $0x70] sm:$0xff]
        %v879 = vld [vmem:[%s377 + $0x78] sm:$0xff]
        %v880 = vld [vmem:[%s377 + $0x80] sm:$0xff]
        %v881 = vld [vmem:[%s377 + $0x88] sm:$0xff]
        %v882 = vld [vmem:[%s377 + $0x90] sm:$0xff]
        %v883 = vld [vmem:[%s377 + $0x98] sm:$0xff]
        %v904 = vunpack.c.l.b16 %v864
        %v905 = vunpack.c.h.b16 %v864
        %v906 = vunpack.c.l.b16 %v865
        %v907 = vunpack.c.h.b16 %v865
        %v908 = vunpack.c.l.b16 %v866
        %v909 = vunpack.c.h.b16 %v866
        %v910 = vunpack.c.l.b16 %v867
        %v911 = vunpack.c.h.b16 %v867
        %v912 = vunpack.c.l.b16 %v868
        %v913 = vunpack.c.h.b16 %v868
        %v914 = vunpack.c.l.b16 %v869
        %v915 = vunpack.c.h.b16 %v869
        %v916 = vunpack.c.l.b16 %v870
        %v917 = vunpack.c.h.b16 %v870
        %v918 = vunpack.c.l.b16 %v871
        %v919 = vunpack.c.h.b16 %v871
        %v920 = vunpack.c.l.b16 %v872
        %v921 = vunpack.c.h.b16 %v872
        %v922 = vunpack.c.l.b16 %v873
        %v923 = vunpack.c.h.b16 %v873
        %v924 = vunpack.c.l.b16 %v874
        %v925 = vunpack.c.h.b16 %v874
        %v926 = vunpack.c.l.b16 %v875
        %v927 = vunpack.c.h.b16 %v875
        %v928 = vunpack.c.l.b16 %v876
        %v929 = vunpack.c.h.b16 %v876
        %v930 = vunpack.c.l.b16 %v877
        %v931 = vunpack.c.h.b16 %v877
        %v932 = vunpack.c.l.b16 %v878
        %v933 = vunpack.c.h.b16 %v878
        %v934 = vunpack.c.l.b16 %v879
        %v935 = vunpack.c.h.b16 %v879
        %v936 = vunpack.c.l.b16 %v880
        %v937 = vunpack.c.h.b16 %v880
        %v938 = vunpack.c.l.b16 %v881
        %v939 = vunpack.c.h.b16 %v881
        %v940 = vunpack.c.l.b16 %v882
        %v941 = vunpack.c.h.b16 %v882
        %v942 = vunpack.c.l.b16 %v883
        %v943 = vunpack.c.h.b16 %v883
        %v944 = vpack.c.b16 %v906, %v904
        %v945 = vpack.c.b16 %v907, %v905
        %v946 = vpack.c.b16 %v910, %v908
        %v947 = vpack.c.b16 %v911, %v909
        %v948 = vpack.c.b16 %v914, %v912
        %v949 = vpack.c.b16 %v915, %v913
        %v950 = vpack.c.b16 %v918, %v916
        %v951 = vpack.c.b16 %v919, %v917
        %v952 = vpack.c.b16 %v922, %v920
        %v953 = vpack.c.b16 %v923, %v921
        %v954 = vpack.c.b16 %v926, %v924
        %v955 = vpack.c.b16 %v927, %v925
        %v956 = vpack.c.b16 %v930, %v928
        %v957 = vpack.c.b16 %v931, %v929
        %v958 = vpack.c.b16 %v934, %v932
        %v959 = vpack.c.b16 %v935, %v933
        %v960 = vpack.c.b16 %v938, %v936
        %v961 = vpack.c.b16 %v939, %v937
        %v962 = vpack.c.b16 %v942, %v940
        %v963 = vpack.c.b16 %v943, %v941
        %v985 = vsel %vm470, %v849, 0
        %v988 = vsel %vm470, %v851, 0
        %v991 = vsel %vm470, %v853, 0
        %v994 = vsel %vm470, %v855, 0
        %v997 = vsel %vm470, %v857, 0
        %v1000 = vsel %vm470, %v859, 0
        %v1003 = vsel %vm470, %v861, 0
        %v1006 = vsel %vm470, %v863, 0
        %1008 = vmatprep.subr.bf16.mxu0 %v945
        %1009 = vmatpush1.bf16.msra.mxu0 %v944
        %1010 = vmatprep.subr.bf16.mxu0 %v947
        %1011 = vmatpush1.bf16.msra.mxu0 %v946
        %1012 = vmatprep.subr.bf16.mxu0 %v949
        %1013 = vmatpush1.bf16.msra.mxu0 %v948
        %1014 = vmatprep.subr.bf16.mxu0 %v951
        %1015 = vmatpush1.bf16.msra.mxu0 %v950
        %1016 = vmatprep.subr.bf16.mxu0 %v953
        %1017 = vmatpush1.bf16.msra.mxu0 %v952
        %1018 = vmatprep.subr.bf16.mxu0 %v955
        %1019 = vmatpush1.bf16.msra.mxu0 %v954
        %1020 = vmatprep.subr.bf16.mxu0 %v957
        %1021 = vmatpush1.bf16.msra.mxu0 %v956
        %1022 = vmatprep.subr.bf16.mxu0 %v959
        %1023 = vmatpush1.bf16.msra.mxu0 %v958
        %1024 = vmatprep.subr.bf16.mxu0 %v961
        %1025 = vmatpush1.bf16.msra.mxu0 %v960
        %1026 = vmatprep.subr.bf16.mxu0 %v963
        %1027 = vmatpush1.bf16.msra.mxu0 %v962
        %1028 = vmatprep.subr.bf16.mxu0 0
        %1029 = vmatpush1.bf16.msra.mxu0 0
        %1030 = vmatprep.subr.bf16.mxu0 0
        %1031 = vmatpush1.bf16.msra.mxu0 0
        %1032 = vmatprep.subr.bf16.mxu0 0
        %1033 = vmatpush1.bf16.msra.mxu0 0
        %1034 = vmatprep.subr.bf16.mxu0 0
        %1035 = vmatpush1.bf16.msra.mxu0 0
        %1036 = vmatprep.subr.bf16.mxu0 0
        %1037 = vmatpush1.bf16.msra.mxu0 0
        %1038 = vmatprep.subr.bf16.mxu0 0
        %1039 = vmatpush1.bf16.msra.mxu0 0
        %1040 = vmatprep.mubr.bf16.mxu0 %v985
        %1041 = vmatmul.mubr.bf16.gmra.mrb[0].mxu0 %v848
        %v1042 = vpop.f32.mrb[0].mxu0
        %v1043 = vadd.f32 0.0, %v1042
        %v1044 = vpop.f32.mrb[0].mxu0
        %v1045 = vadd.f32 0.0, %v1044
        %v1046 = vpop.f32.mrb[0].mxu0
        %v1047 = vadd.f32 0.0, %v1046
        %v1048 = vpop.f32.mrb[0].mxu0
        %v1049 = vadd.f32 0.0, %v1048
        %1050 = vmatprep.mubr.bf16.mxu0 %v988
        %1051 = vmatmul.mubr.bf16.gmra.mrb[0].mxu0 %v850
        %v1052 = vpop.f32.mrb[0].mxu0
        %v1053 = vadd.f32 0.0, %v1052
        %v1054 = vpop.f32.mrb[0].mxu0
        %v1055 = vadd.f32 0.0, %v1054
        %v1056 = vpop.f32.mrb[0].mxu0
        %v1057 = vadd.f32 0.0, %v1056
        %v1058 = vpop.f32.mrb[0].mxu0
        %v1059 = vadd.f32 0.0, %v1058
        %1060 = vmatprep.mubr.bf16.mxu0 %v991
        %1061 = vmatmul.mubr.bf16.gmra.mrb[0].mxu0 %v852
        %v1062 = vpop.f32.mrb[0].mxu0
        %v1063 = vadd.f32 0.0, %v1062
        %v1064 = vpop.f32.mrb[0].mxu0
        %v1065 = vadd.f32 0.0, %v1064
        %v1066 = vpop.f32.mrb[0].mxu0
        %v1067 = vadd.f32 0.0, %v1066
        %v1068 = vpop.f32.mrb[0].mxu0
        %v1069 = vadd.f32 0.0, %v1068
        %1070 = vmatprep.mubr.bf16.mxu0 %v994
        %1071 = vmatmul.mubr.bf16.gmra.mrb[0].mxu0 %v854
        %v1072 = vpop.f32.mrb[0].mxu0
        %v1073 = vadd.f32 0.0, %v1072
        %v1074 = vpop.f32.mrb[0].mxu0
        %v1075 = vadd.f32 0.0, %v1074
        %v1076 = vpop.f32.mrb[0].mxu0
        %v1077 = vadd.f32 0.0, %v1076
        %v1078 = vpop.f32.mrb[0].mxu0
        %v1079 = vadd.f32 0.0, %v1078
        %1080 = vmatprep.mubr.bf16.mxu0 %v997
        %1081 = vmatmul.mubr.bf16.gmra.mrb[0].mxu0 %v856
        %v1082 = vpop.f32.mrb[0].mxu0
        %v1083 = vadd.f32 0.0, %v1082
        %v1084 = vpop.f32.mrb[0].mxu0
        %v1085 = vadd.f32 0.0, %v1084
        %v1086 = vpop.f32.mrb[0].mxu0
        %v1087 = vadd.f32 0.0, %v1086
        %v1088 = vpop.f32.mrb[0].mxu0
        %v1089 = vadd.f32 0.0, %v1088
        %1090 = vmatprep.mubr.bf16.mxu0 %v1000
        %1091 = vmatmul.mubr.bf16.gmra.mrb[0].mxu0 %v858
        %v1092 = vpop.f32.mrb[0].mxu0
        %v1093 = vadd.f32 0.0, %v1092
        %v1094 = vpop.f32.mrb[0].mxu0
        %v1095 = vadd.f32 0.0, %v1094
        %v1096 = vpop.f32.mrb[0].mxu0
        %v1097 = vadd.f32 0.0, %v1096
        %v1098 = vpop.f32.mrb[0].mxu0
        %v1099 = vadd.f32 0.0, %v1098
        %1100 = vmatprep.mubr.bf16.mxu0 %v1003
        %1101 = vmatmul.mubr.bf16.gmra.mrb[0].mxu0 %v860
        %v1102 = vpop.f32.mrb[0].mxu0
        %v1103 = vadd.f32 0.0, %v1102
        %v1104 = vpop.f32.mrb[0].mxu0
        %v1105 = vadd.f32 0.0, %v1104
        %v1106 = vpop.f32.mrb[0].mxu0
        %v1107 = vadd.f32 0.0, %v1106
        %v1108 = vpop.f32.mrb[0].mxu0
        %v1109 = vadd.f32 0.0, %v1108
        %1110 = vmatprep.mubr.bf16.mxu0 %v1006
        %1111 = vmatmul.mubr.bf16.gmra.mrb[0].mxu0 %v862
        %v1112 = vpop.f32.mrb[0].mxu0
        %v1113 = vadd.f32 0.0, %v1112
        %v1114 = vpop.f32.mrb[0].mxu0
        %v1115 = vadd.f32 0.0, %v1114
        %v1116 = vpop.f32.mrb[0].mxu0
        %v1117 = vadd.f32 0.0, %v1116
        %v1118 = vpop.f32.mrb[0].mxu0
        %v1119 = vadd.f32 0.0, %v1118
        %1120 = vdwg.mxu0
        %v1121 = vld [vmem:[%s428] sm:$0x3]
        %v1123 = vlaneseq
        %v1124 = vshrl.u32 %v1123, 7
        %v1125 = vsub.s32 0, %v1124
        %v1126 = vrot.slane %v1121, %v1125
        %v1127 = vlaneseq
        %v1128 = vshrl.u32 %v1127, 7
        %v1129 = vsub.s32 1, %v1128
        %v1130 = vrot.slane %v1121, %v1129
        %v1133 = vmul.f32 %v1043, %v1126
        %v1134 = vmul.f32 %v1045, %v1130
        %v1135 = vmul.f32 %v1047, %v1126
        %v1136 = vmul.f32 %v1049, %v1130
        %v1137 = vmul.f32 %v1053, %v1126
        %v1138 = vmul.f32 %v1055, %v1130
        %v1139 = vmul.f32 %v1057, %v1126
        %v1140 = vmul.f32 %v1059, %v1130
        %v1141 = vmul.f32 %v1063, %v1126
        %v1142 = vmul.f32 %v1065, %v1130
        %v1143 = vmul.f32 %v1067, %v1126
        %v1144 = vmul.f32 %v1069, %v1130
        %v1145 = vmul.f32 %v1073, %v1126
        %v1146 = vmul.f32 %v1075, %v1130
        %v1147 = vmul.f32 %v1077, %v1126
        %v1148 = vmul.f32 %v1079, %v1130
        %v1149 = vmul.f32 %v1083, %v1126
        %v1150 = vmul.f32 %v1085, %v1130
        %v1151 = vmul.f32 %v1087, %v1126
        %v1152 = vmul.f32 %v1089, %v1130
        %v1153 = vmul.f32 %v1093, %v1126
        %v1154 = vmul.f32 %v1095, %v1130
        %v1155 = vmul.f32 %v1097, %v1126
        %v1156 = vmul.f32 %v1099, %v1130
        %v1157 = vmul.f32 %v1103, %v1126
        %v1158 = vmul.f32 %v1105, %v1130
        %v1159 = vmul.f32 %v1107, %v1126
        %v1160 = vmul.f32 %v1109, %v1130
        %v1161 = vmul.f32 %v1113, %v1126
        %v1162 = vmul.f32 %v1115, %v1130
        %v1163 = vmul.f32 %v1117, %v1126
        %v1164 = vmul.f32 %v1119, %v1130
        %v1165 = vld [vmem:[%s433] sm:$0x3]
        %v1167 = vlaneseq
        %v1168 = vshrl.u32 %v1167, 7
        %v1169 = vsub.s32 0, %v1168
        %v1170 = vrot.slane %v1165, %v1169
        %v1171 = vlaneseq
        %v1172 = vshrl.u32 %v1171, 7
        %v1173 = vsub.s32 1, %v1172
        %v1174 = vrot.slane %v1165, %v1173
        %v1177 = vadd.f32 %v1133, %v1170
        %v1178 = vadd.f32 %v1134, %v1174
        %v1179 = vadd.f32 %v1135, %v1170
        %v1180 = vadd.f32 %v1136, %v1174
        %v1181 = vadd.f32 %v1137, %v1170
        %v1182 = vadd.f32 %v1138, %v1174
        %v1183 = vadd.f32 %v1139, %v1170
        %v1184 = vadd.f32 %v1140, %v1174
        %v1185 = vadd.f32 %v1141, %v1170
        %v1186 = vadd.f32 %v1142, %v1174
        %v1187 = vadd.f32 %v1143, %v1170
        %v1188 = vadd.f32 %v1144, %v1174
        %v1189 = vadd.f32 %v1145, %v1170
        %v1190 = vadd.f32 %v1146, %v1174
        %v1191 = vadd.f32 %v1147, %v1170
        %v1192 = vadd.f32 %v1148, %v1174
        %v1193 = vadd.f32 %v1149, %v1170
        %v1194 = vadd.f32 %v1150, %v1174
        %v1195 = vadd.f32 %v1151, %v1170
        %v1196 = vadd.f32 %v1152, %v1174
        %v1197 = vadd.f32 %v1153, %v1170
        %v1198 = vadd.f32 %v1154, %v1174
        %v1199 = vadd.f32 %v1155, %v1170
        %v1200 = vadd.f32 %v1156, %v1174
        %v1201 = vadd.f32 %v1157, %v1170
        %v1202 = vadd.f32 %v1158, %v1174
        %v1203 = vadd.f32 %v1159, %v1170
        %v1204 = vadd.f32 %v1160, %v1174
        %v1205 = vadd.f32 %v1161, %v1170
        %v1206 = vadd.f32 %v1162, %v1174
        %v1207 = vadd.f32 %v1163, %v1170
        %v1208 = vadd.f32 %v1164, %v1174
        %v1209 = vpack.c.bf16 %v1179, %v1177
        %v1210 = vpack.c.bf16 %v1180, %v1178
        %v1211 = vpack.c.bf16 %v1183, %v1181
        %v1212 = vpack.c.bf16 %v1184, %v1182
        %v1213 = vpack.c.bf16 %v1187, %v1185
        %v1214 = vpack.c.bf16 %v1188, %v1186
        %v1215 = vpack.c.bf16 %v1191, %v1189
        %v1216 = vpack.c.bf16 %v1192, %v1190
        %v1217 = vpack.c.bf16 %v1195, %v1193
        %v1218 = vpack.c.bf16 %v1196, %v1194
        %v1219 = vpack.c.bf16 %v1199, %v1197
        %v1220 = vpack.c.bf16 %v1200, %v1198
        %v1221 = vpack.c.bf16 %v1203, %v1201
        %v1222 = vpack.c.bf16 %v1204, %v1202
        %v1223 = vpack.c.bf16 %v1207, %v1205
        %v1224 = vpack.c.bf16 %v1208, %v1206
        %v1241 = vunpack.c.l.b16 %v1209
        %v1242 = vunpack.c.l.b16 %v1210
        %v1243 = vunpack.c.h.b16 %v1209
        %v1244 = vunpack.c.h.b16 %v1210
        %v1245 = vunpack.c.l.b16 %v1211
        %v1246 = vunpack.c.l.b16 %v1212
        %v1247 = vunpack.c.h.b16 %v1211
        %v1248 = vunpack.c.h.b16 %v1212
        %v1249 = vunpack.c.l.b16 %v1213
        %v1250 = vunpack.c.l.b16 %v1214
        %v1251 = vunpack.c.h.b16 %v1213
        %v1252 = vunpack.c.h.b16 %v1214
        %v1253 = vunpack.c.l.b16 %v1215
        %v1254 = vunpack.c.l.b16 %v1216
        %v1255 = vunpack.c.h.b16 %v1215
        %v1256 = vunpack.c.h.b16 %v1216
        %v1257 = vunpack.c.l.b16 %v1217
        %v1258 = vunpack.c.l.b16 %v1218
        %v1259 = vunpack.c.h.b16 %v1217
        %v1260 = vunpack.c.h.b16 %v1218
        %v1261 = vunpack.c.l.b16 %v1219
        %v1262 = vunpack.c.l.b16 %v1220
        %v1263 = vunpack.c.h.b16 %v1219
        %v1264 = vunpack.c.h.b16 %v1220
        %v1265 = vunpack.c.l.b16 %v1221
        %v1266 = vunpack.c.l.b16 %v1222
        %v1267 = vunpack.c.h.b16 %v1221
        %v1268 = vunpack.c.h.b16 %v1222
        %v1269 = vunpack.c.l.b16 %v1223
        %v1270 = vunpack.c.l.b16 %v1224
        %v1271 = vunpack.c.h.b16 %v1223
        %v1272 = vunpack.c.h.b16 %v1224
        %v1273 = vpack.c.b16 %v1242, %v1241
        %v1274 = vpack.c.b16 %v1244, %v1243
        %v1275 = vpack.c.b16 %v1246, %v1245
        %v1276 = vpack.c.b16 %v1248, %v1247
        %v1277 = vpack.c.b16 %v1250, %v1249
        %v1278 = vpack.c.b16 %v1252, %v1251
        %v1279 = vpack.c.b16 %v1254, %v1253
        %v1280 = vpack.c.b16 %v1256, %v1255
        %v1281 = vpack.c.b16 %v1258, %v1257
        %v1282 = vpack.c.b16 %v1260, %v1259
        %v1283 = vpack.c.b16 %v1262, %v1261
        %v1284 = vpack.c.b16 %v1264, %v1263
        %v1285 = vpack.c.b16 %v1266, %v1265
        %v1286 = vpack.c.b16 %v1268, %v1267
        %v1287 = vpack.c.b16 %v1270, %v1269
        %v1288 = vpack.c.b16 %v1272, %v1271
        %1305 = vst [vmem:[%s416] sm:$0xff] %v1273
        %1306 = vst [vmem:[%s416 + $0x8] sm:$0xff] %v1274
        %1307 = vst [vmem:[%s416 + $0x10] sm:$0xff] %v1275
        %1308 = vst [vmem:[%s416 + $0x18] sm:$0xff] %v1276
        %1309 = vst [vmem:[%s416 + $0x20] sm:$0xff] %v1277
        %1310 = vst [vmem:[%s416 + $0x28] sm:$0xff] %v1278
        %1311 = vst [vmem:[%s416 + $0x30] sm:$0xff] %v1279
        %1312 = vst [vmem:[%s416 + $0x38] sm:$0xff] %v1280
        %1313 = vst [vmem:[%s416 + $0x40] sm:$0xff] %v1281
        %1314 = vst [vmem:[%s416 + $0x48] sm:$0xff] %v1282
        %1315 = vst [vmem:[%s416 + $0x50] sm:$0xff] %v1283
        %1316 = vst [vmem:[%s416 + $0x58] sm:$0xff] %v1284
        %1317 = vst [vmem:[%s416 + $0x60] sm:$0xff] %v1285
        %1318 = vst [vmem:[%s416 + $0x68] sm:$0xff] %v1286
        %1319 = vst [vmem:[%s416 + $0x70] sm:$0xff] %v1287
        %1320 = vst [vmem:[%s416 + $0x78] sm:$0xff] %v1288
        %s1321 = sand.u32 %s185, 1
        %s1322 = sand.u32 %s185, 1
        %s1323 = smul.addr %s1322, 128
        %s1324 = scalar_lea.vmem [#allocation3], %s1323
        // Predicated region
        $region83: #{transformerfusion_forward.45} parent=77 // pred_check
          %p1325 = pneg %p195
        $region84: #{transformerfusion_forward.45} parent=77 // pred_check_branch
          %1327 = sbr.rel (%p1325) target = $region86
        $region85: #{transformerfusion_forward.45} parent=77 // pred_region
          %s1328 = smul.u32 16, %s21
          %s1329 = smul.u32 2, %s22
          %s1330 = smul.addr %s1328, 8
          %s1331 = sadd.s32 %s1329, %s1330
          %s1332 = smul.addr %s1331, 4
          %s1333 = scalar_lea.vmem %s6, %s1332
          // Predicated region
          $region87: #{transformerfusion_forward.45} parent=85 // pred_check
            _
          $region88: #{transformerfusion_forward.45} parent=85 // pred_check_branch
            %1335 = sbr.rel (0) target = $region90
          $region89: #{transformerfusion_forward.45} parent=85 // pred_region
            // Predicated region
            $region91: #{transformerfusion_forward.45} parent=89 // pred_check
              _
            $region92: #{transformerfusion_forward.45} parent=89 // pred_check_branch
              %1337 = sbr.rel (0) target = $region94
            $region93: #{transformerfusion_forward.45} parent=89 // pred_region
              // Predicated region
              $region106: #{transformerfusion_forward.45} parent=93 // pred_check
                _
              $region107: #{transformerfusion_forward.45} parent=93 // pred_check_branch
                %1382 = sbr.rel (0) target = $region109
              $region108: #{transformerfusion_forward.45} parent=93 // pred_region
                loop: start=0, step=1, limit=1
                $region110: #{transformerfusion_forward.45} parent=108 // loop_pre_header
                  _
                $region111: #{transformerfusion_forward.45} parent=108 // loop_header
                  %s1384 = sphi 0, %s1388
                  %p1385 = scmp.ge.s32.totalorder %s1384, 1
                  %s1389 = sphi %s1324, %s1324
                  %s1390 = sphi %s1333, %s1333
                $region112: #{transformerfusion_forward.45} parent=108 // loop_header_branch
                  %1387 = sbr.rel (%p1385) target = $region116
                $region113: #{transformerfusion_forward.45} parent=108 // loop_body
                  %v1391 = vld [vmem:[%s1389] sm:$0xff]
                  %1392 = vst [vmem:[%s1390] sm:$0xff] %v1391
                  %v1393 = vld [vmem:[%s1389 + $0x8] sm:$0xff]
                  %1394 = vst [vmem:[%s1390 + $0x20] sm:$0xff] %v1393
                  %v1395 = vld [vmem:[%s1389 + $0x10] sm:$0xff]
                  %1396 = vst [vmem:[%s1390 + $0x40] sm:$0xff] %v1395
                  %v1397 = vld [vmem:[%s1389 + $0x18] sm:$0xff]
                  %1398 = vst [vmem:[%s1390 + $0x60] sm:$0xff] %v1397
                  %v1399 = vld [vmem:[%s1389 + $0x20] sm:$0xff]
                  %1400 = vst [vmem:[%s1390 + $0x80] sm:$0xff] %v1399
                  %v1401 = vld [vmem:[%s1389 + $0x28] sm:$0xff]
                  %1402 = vst [vmem:[%s1390 + $0xa0] sm:$0xff] %v1401
                  %v1403 = vld [vmem:[%s1389 + $0x30] sm:$0xff]
                  %1404 = vst [vmem:[%s1390 + $0xc0] sm:$0xff] %v1403
                  %v1405 = vld [vmem:[%s1389 + $0x38] sm:$0xff]
                  %1406 = vst [vmem:[%s1390 + $0xe0] sm:$0xff] %v1405
                  %v1407 = vld [vmem:[%s1389 + $0x40] sm:$0xff]
                  %1408 = vst [vmem:[%s1390 + $0x100] sm:$0xff] %v1407
                  %v1409 = vld [vmem:[%s1389 + $0x48] sm:$0xff]
                  %1410 = vst [vmem:[%s1390 + $0x120] sm:$0xff] %v1409
                  %v1411 = vld [vmem:[%s1389 + $0x50] sm:$0xff]
                  %1412 = vst [vmem:[%s1390 + $0x140] sm:$0xff] %v1411
                  %v1413 = vld [vmem:[%s1389 + $0x58] sm:$0xff]
                  %1414 = vst [vmem:[%s1390 + $0x160] sm:$0xff] %v1413
                  %v1415 = vld [vmem:[%s1389 + $0x60] sm:$0xff]
                  %1416 = vst [vmem:[%s1390 + $0x180] sm:$0xff] %v1415
                  %v1417 = vld [vmem:[%s1389 + $0x68] sm:$0xff]
                  %1418 = vst [vmem:[%s1390 + $0x1a0] sm:$0xff] %v1417
                  %v1419 = vld [vmem:[%s1389 + $0x70] sm:$0xff]
                  %1420 = vst [vmem:[%s1390 + $0x1c0] sm:$0xff] %v1419
                  %v1421 = vld [vmem:[%s1389 + $0x78] sm:$0xff]
                  %1422 = vst [vmem:[%s1390 + $0x1e0] sm:$0xff] %v1421
                $region114: #{transformerfusion_forward.45} parent=108 // loop_footer
                  %s1388 = sadd.s32 1, %s1384
                $region115: #{transformerfusion_forward.45} parent=108 // loop_footer_branch
                  %1383 = sbr.rel target = $region111
                $region116: #{transformerfusion_forward.45} parent=108 // loop_exit
                  _
              $region109: #{transformerfusion_forward.45} parent=93 // pred_fallthru
                _
              // Predicated region
              $region117: #{transformerfusion_forward.45} parent=93 // pred_check
                _
              $region118: #{transformerfusion_forward.45} parent=93 // pred_check_branch
                %1424 = sbr.rel target = $region120
              $region119: #{transformerfusion_forward.45} parent=93 // pred_region
                _
              $region120: #{transformerfusion_forward.45} parent=93 // pred_fallthru
                _
            $region94: #{transformerfusion_forward.45} parent=89 // pred_fallthru
              _
            // Predicated region
            $region95: #{transformerfusion_forward.45} parent=89 // pred_check
              _
            $region96: #{transformerfusion_forward.45} parent=89 // pred_check_branch
              %1339 = sbr.rel target = $region98
            $region97: #{transformerfusion_forward.45} parent=89 // pred_region
              loop: start=0, step=1, limit=1
              $region99: #{transformerfusion_forward.45} parent=97 // loop_pre_header
                _
              $region100: #{transformerfusion_forward.45} parent=97 // loop_header
                %s1342 = sphi 0, %s1346
                %p1343 = scmp.ge.s32.totalorder %s1342, 1
                %s1347 = sphi %s1324, %s1324
                %s1348 = sphi %s1333, %s1333
              $region101: #{transformerfusion_forward.45} parent=97 // loop_header_branch
                %1345 = sbr.rel (%p1343) target = $region105
              $region102: #{transformerfusion_forward.45} parent=97 // loop_body
                %v1349 = vld [vmem:[%s1347] sm:$0xff]
                %1350 = vst [vmem:[%s1348] sm:$0xff] %v1349
                %v1351 = vld [vmem:[%s1347 + $0x8] sm:$0xff]
                %1352 = vst [vmem:[%s1348 + $0x20] sm:$0xff] %v1351
                %v1353 = vld [vmem:[%s1347 + $0x10] sm:$0xff]
                %1354 = vst [vmem:[%s1348 + $0x40] sm:$0xff] %v1353
                %v1355 = vld [vmem:[%s1347 + $0x18] sm:$0xff]
                %1356 = vst [vmem:[%s1348 + $0x60] sm:$0xff] %v1355
                %v1357 = vld [vmem:[%s1347 + $0x20] sm:$0xff]
                %1358 = vst [vmem:[%s1348 + $0x80] sm:$0xff] %v1357
                %v1359 = vld [vmem:[%s1347 + $0x28] sm:$0xff]
                %1360 = vst [vmem:[%s1348 + $0xa0] sm:$0xff] %v1359
                %v1361 = vld [vmem:[%s1347 + $0x30] sm:$0xff]
                %1362 = vst [vmem:[%s1348 + $0xc0] sm:$0xff] %v1361
                %v1363 = vld [vmem:[%s1347 + $0x38] sm:$0xff]
                %1364 = vst [vmem:[%s1348 + $0xe0] sm:$0xff] %v1363
                %v1365 = vld [vmem:[%s1347 + $0x40] sm:$0xff]
                %1366 = vst [vmem:[%s1348 + $0x100] sm:$0xff] %v1365
                %v1367 = vld [vmem:[%s1347 + $0x48] sm:$0xff]
                %1368 = vst [vmem:[%s1348 + $0x120] sm:$0xff] %v1367
                %v1369 = vld [vmem:[%s1347 + $0x50] sm:$0xff]
                %1370 = vst [vmem:[%s1348 + $0x140] sm:$0xff] %v1369
                %v1371 = vld [vmem:[%s1347 + $0x58] sm:$0xff]
                %1372 = vst [vmem:[%s1348 + $0x160] sm:$0xff] %v1371
                %v1373 = vld [vmem:[%s1347 + $0x60] sm:$0xff]
                %1374 = vst [vmem:[%s1348 + $0x180] sm:$0xff] %v1373
                %v1375 = vld [vmem:[%s1347 + $0x68] sm:$0xff]
                %1376 = vst [vmem:[%s1348 + $0x1a0] sm:$0xff] %v1375
                %v1377 = vld [vmem:[%s1347 + $0x70] sm:$0xff]
                %1378 = vst [vmem:[%s1348 + $0x1c0] sm:$0xff] %v1377
                %v1379 = vld [vmem:[%s1347 + $0x78] sm:$0xff]
                %1380 = vst [vmem:[%s1348 + $0x1e0] sm:$0xff] %v1379
              $region103: #{transformerfusion_forward.45} parent=97 // loop_footer
                %s1346 = sadd.s32 1, %s1342
              $region104: #{transformerfusion_forward.45} parent=97 // loop_footer_branch
                %1341 = sbr.rel target = $region100
              $region105: #{transformerfusion_forward.45} parent=97 // loop_exit
                _
            $region98: #{transformerfusion_forward.45} parent=89 // pred_fallthru
              _
          $region90: #{transformerfusion_forward.45} parent=85 // pred_fallthru
            _
          %1425 = vnop
        $region86: #{transformerfusion_forward.45} parent=77 // pred_fallthru
          _
      $region78: #{transformerfusion_forward.45} parent=5 // pred_fallthru
        _
      %p1426 = scmp.le.s32.totalorder 2, %s12
      // Predicated region
      $region121: #{transformerfusion_forward.45} parent=5 // pred_check
        %p1427 = pneg %p1426
      $region122: #{transformerfusion_forward.45} parent=5 // pred_check_branch
        %1429 = sbr.rel (%p1427) target = $region124
      $region123: #{transformerfusion_forward.45} parent=5 // pred_region
        %s1430 = ssub.s32 %s12, 2
        // Predicated region
        $region125: #{transformerfusion_forward.45} parent=123 // pred_check
          %p1431 = pneg %p201
        $region126: #{transformerfusion_forward.45} parent=123 // pred_check_branch
          %1433 = sbr.rel (%p1431) target = $region128
        $region127: #{transformerfusion_forward.45} parent=123 // pred_region
          %s1434 = sand.u32 %s186, 1
          %s1435 = sand.u32 %s186, 1
          %s1436 = smul.addr %s1435, 128
          %s1437 = scalar_lea.vmem [#allocation3], %s1436
        $region128: #{transformerfusion_forward.45} parent=123 // pred_fallthru
          _
      $region124: #{transformerfusion_forward.45} parent=5 // pred_fallthru
        _
    $region6: #{transformerfusion_forward.45} parent=1 // loop_footer
      %s16 = sadd.s32 1, %s12
    $region7: #{transformerfusion_forward.45} parent=1 // loop_footer_branch
      %11 = sbr.rel target = $region3
    $region8: #{transformerfusion_forward.45} parent=1 // loop_exit
      _

// kernel: transformerfusion_forward.43
$region0: #{transformerfusion_forward.43}
  #allocation0 [shape = 'u32[]', space=smem, size = 0x4, offset = 0x4, fixed_abs, tag = 'smem constant byte address 0x4 - core index']
  #allocation1 [shape = 'u32[144,128]{1,0:T(1,128)}', space=vmem, size = 0x12000, scoped, tag = 'internal scratch']
  %s0 = inlined_call_operand.vmem [shape: bf16[2,10,64,16], index: 0, kind: input, shape index: {}]
  %s1 = inlined_call_operand.vmem [shape: bf16[2,10,64,16], index: 1, kind: input, shape index: {}]
  %s2 = inlined_call_operand.vmem [shape: bf16[2,10,64,16], index: 2, kind: input, shape index: {}]
  %s3 = inlined_call_operand.vmem [shape: bf16[2,10,64,16], index: 3, kind: output, shape index: {}]
  %s4 = sld [smem:[#allocation0]]
  $region45: #{transformerfusion_forward.43} parent=0
    _
  %s6 = ssub.s32 1, %s4
  %s7 = scalar_select 0, %s6, %s4
  loop: start=0, step=1, limit=4
  $region2: #{transformerfusion_forward.43} parent=0 // loop_pre_header
    _
  $region3: #{transformerfusion_forward.43} parent=0 // loop_header
    %s9 = sphi 0, %s13
    %p10 = scmp.ge.s32.totalorder %s9, 4
    %s19 = sphi 0, %s21
    %s22 = sphi 0, %s19
    %s23 = sphi 0, %s22
    %s39 = sphi 0, %s23
    %s45 = sphi 0, %s47
    %s48 = sphi 0, %s45
    %s49 = sphi 0, %s48
    %s65 = sphi 0, %s49
    %s71 = sphi 0, %s73
    %s74 = sphi 0, %s71
    %s75 = sphi 0, %s74
    %s91 = sphi 0, %s75
    %s97 = sphi 0, %s99
    %s100 = sphi 0, %s97
    %s101 = sphi 0, %s100
    %s117 = sphi 0, %s101
  $region4: #{transformerfusion_forward.43} parent=0 // loop_header_branch
    %12 = sbr.rel (%p10) target = $region8
  $region5: #{transformerfusion_forward.43} parent=0 // loop_body
    %s14 = ssub.s32 %s9, 1
    %s15 = ssub.s32 %s9, 2
    %s16 = sadd.s32 %s9, 1
    %s17 = ssub.s32 %s9, %s16
    %p18 = scmp.eq.s32.totalorder %s17, 0
    %s20 = sadd.s32 %s19, 1
    %s21 = scalar_select %p18, %s19, %s20
    %p24 = pneg %p18
    %p25 = scmp.eq.s32.totalorder %s9, 1
    %p26 = por %p24, %p25
    %p27 = scmp.ne.s32.totalorder %s19, %s22
    %p28 = scmp.eq.s32.totalorder %s9, 0
    %p29 = por %p27, %p28
    %p30 = scmp.ne.s32.totalorder %s19, %s22
    %p31 = scmp.eq.s32.totalorder %s14, 1
    %p32 = por %p30, %p31
    %p33 = scmp.ne.s32.totalorder %s22, %s23
    %p34 = scmp.eq.s32.totalorder %s14, 0
    %p35 = por %p33, %p34
    %p36 = scmp.ne.s32.totalorder %s22, %s23
    %p37 = scmp.eq.s32.totalorder %s15, 1
    %p38 = por %p36, %p37
    %p40 = scmp.ne.s32.totalorder %s23, %s39
    %p41 = scmp.eq.s32.totalorder %s15, 0
    %p42 = por %p40, %p41
    %s43 = ssub.s32 %s9, %s16
    %p44 = scmp.eq.s32.totalorder %s43, 0
    %s46 = sadd.s32 %s45, 1
    %s47 = scalar_select %p44, %s45, %s46
    %p50 = pneg %p44
    %p51 = scmp.eq.s32.totalorder %s9, 1
    %p52 = por %p50, %p51
    %p53 = scmp.ne.s32.totalorder %s45, %s48
    %p54 = scmp.eq.s32.totalorder %s9, 0
    %p55 = por %p53, %p54
    %p56 = scmp.ne.s32.totalorder %s45, %s48
    %p57 = scmp.eq.s32.totalorder %s14, 1
    %p58 = por %p56, %p57
    %p59 = scmp.ne.s32.totalorder %s48, %s49
    %p60 = scmp.eq.s32.totalorder %s14, 0
    %p61 = por %p59, %p60
    %p62 = scmp.ne.s32.totalorder %s48, %s49
    %p63 = scmp.eq.s32.totalorder %s15, 1
    %p64 = por %p62, %p63
    %p66 = scmp.ne.s32.totalorder %s49, %s65
    %p67 = scmp.eq.s32.totalorder %s15, 0
    %p68 = por %p66, %p67
    %s69 = ssub.s32 %s9, %s16
    %p70 = scmp.eq.s32.totalorder %s69, 0
    %s72 = sadd.s32 %s71, 1
    %s73 = scalar_select %p70, %s71, %s72
    %p76 = pneg %p70
    %p77 = scmp.eq.s32.totalorder %s9, 1
    %p78 = por %p76, %p77
    %p79 = scmp.ne.s32.totalorder %s71, %s74
    %p80 = scmp.eq.s32.totalorder %s9, 0
    %p81 = por %p79, %p80
    %p82 = scmp.ne.s32.totalorder %s71, %s74
    %p83 = scmp.eq.s32.totalorder %s14, 1
    %p84 = por %p82, %p83
    %p85 = scmp.ne.s32.totalorder %s74, %s75
    %p86 = scmp.eq.s32.totalorder %s14, 0
    %p87 = por %p85, %p86
    %p88 = scmp.ne.s32.totalorder %s74, %s75
    %p89 = scmp.eq.s32.totalorder %s15, 1
    %p90 = por %p88, %p89
    %p92 = scmp.ne.s32.totalorder %s75, %s91
    %p93 = scmp.eq.s32.totalorder %s15, 0
    %p94 = por %p92, %p93
    %s95 = ssub.s32 %s9, %s16
    %p96 = scmp.eq.s32.totalorder %s95, 0
    %s98 = sadd.s32 %s97, 1
    %s99 = scalar_select %p96, %s97, %s98
    %p102 = pneg %p96
    %p103 = scmp.eq.s32.totalorder %s9, 1
    %p104 = por %p102, %p103
    %p105 = scmp.ne.s32.totalorder %s97, %s100
    %p106 = scmp.eq.s32.totalorder %s9, 0
    %p107 = por %p105, %p106
    %p108 = scmp.ne.s32.totalorder %s97, %s100
    %p109 = scmp.eq.s32.totalorder %s14, 1
    %p110 = por %p108, %p109
    %p111 = scmp.ne.s32.totalorder %s100, %s101
    %p112 = scmp.eq.s32.totalorder %s14, 0
    %p113 = por %p111, %p112
    %p114 = scmp.ne.s32.totalorder %s100, %s101
    %p115 = scmp.eq.s32.totalorder %s15, 1
    %p116 = por %p114, %p115
    %p118 = scmp.ne.s32.totalorder %s101, %s117
    %p119 = scmp.eq.s32.totalorder %s15, 0
    %p120 = por %p118, %p119
    %p121 = scmp.le.s32.totalorder 1, %s9
    %p122 = scmp.lt.s32.totalorder %s9, 3
    %p123 = pnand %p121, %p122
    %p124 = pneg %p123
    // Predicated region
    $region9: #{transformerfusion_forward.43} parent=5 // pred_check
      _
    $region10: #{transformerfusion_forward.43} parent=5 // pred_check_branch
      %126 = sbr.rel (%p123) target = $region12
    $region11: #{transformerfusion_forward.43} parent=5 // pred_region
      %s127 = ssub.s32 %s9, 1
    $region12: #{transformerfusion_forward.43} parent=5 // pred_fallthru
      _
    %p128 = scmp.lt.s32.totalorder %s9, 2
    // Predicated region
    $region13: #{transformerfusion_forward.43} parent=5 // pred_check
      %p129 = pneg %p128
    $region14: #{transformerfusion_forward.43} parent=5 // pred_check_branch
      %131 = sbr.rel (%p129) target = $region16
    $region15: #{transformerfusion_forward.43} parent=5 // pred_region
      // Predicated region
      $region17: #{transformerfusion_forward.43} parent=15 // pred_check
        %p132 = pneg %p29
      $region18: #{transformerfusion_forward.43} parent=15 // pred_check_branch
        %134 = sbr.rel (%p132) target = $region20
      $region19: #{transformerfusion_forward.43} parent=15 // pred_region
        %p135 = scmp.lt.s32.totalorder %s9, 1
        %s136 = scalar_select %p135, %s9, 1
        %s137 = smul.addr %s136, 80
        %s138 = smul.addr %s137, 4
        %s139 = scalar_lea.vmem %s0, %s138
      $region20: #{transformerfusion_forward.43} parent=15 // pred_fallthru
        _
      // Predicated region
      $region21: #{transformerfusion_forward.43} parent=15 // pred_check
        %p140 = pneg %p55
      $region22: #{transformerfusion_forward.43} parent=15 // pred_check_branch
        %142 = sbr.rel (%p140) target = $region24
      $region23: #{transformerfusion_forward.43} parent=15 // pred_region
        %p143 = scmp.lt.s32.totalorder %s9, 1
        %s144 = scalar_select %p143, %s9, 1
        %s145 = smul.addr %s144, 80
        %s146 = smul.addr %s145, 4
        %s147 = scalar_lea.vmem %s1, %s146
      $region24: #{transformerfusion_forward.43} parent=15 // pred_fallthru
        _
      // Predicated region
      $region25: #{transformerfusion_forward.43} parent=15 // pred_check
        %p148 = pneg %p81
      $region26: #{transformerfusion_forward.43} parent=15 // pred_check_branch
        %150 = sbr.rel (%p148) target = $region28
      $region27: #{transformerfusion_forward.43} parent=15 // pred_region
        %p151 = scmp.lt.s32.totalorder %s9, 1
        %s152 = scalar_select %p151, %s9, 1
        %s153 = smul.addr %s152, 80
        %s154 = smul.addr %s153, 4
        %s155 = scalar_lea.vmem %s2, %s154
      $region28: #{transformerfusion_forward.43} parent=15 // pred_fallthru
        _
    $region16: #{transformerfusion_forward.43} parent=5 // pred_fallthru
      _
    %p156 = scmp.le.s32.totalorder 1, %s9
    %p157 = scmp.lt.s32.totalorder %s9, 3
    %p158 = pnand %p156, %p157
    %p159 = pneg %p158
    // Predicated region
    $region29: #{transformerfusion_forward.43} parent=5 // pred_check
      _
    $region30: #{transformerfusion_forward.43} parent=5 // pred_check_branch
      %161 = sbr.rel (%p158) target = $region32
    $region31: #{transformerfusion_forward.43} parent=5 // pred_region
      %s162 = ssub.s32 %s9, 1
      %p163 = scmp.lt.s32.totalorder %s14, 1
      %s164 = scalar_select %p163, %s14, 1
      %s165 = smul.addr %s164, 80
      %s166 = smul.addr %s165, 4
      %s167 = scalar_lea.vmem %s0, %s166
      %p168 = pneg %p35
      %p169 = pneg %p32
      %p170 = scmp.lt.s32.totalorder %s14, 1
      %s171 = scalar_select %p170, %s14, 1
      %s172 = smul.addr %s171, 80
      %s173 = smul.addr %s172, 4
      %s174 = scalar_lea.vmem %s1, %s173
      %p175 = pneg %p61
      %p176 = pneg %p58
      %p177 = scmp.lt.s32.totalorder %s14, 1
      %s178 = scalar_select %p177, %s14, 1
      %s179 = smul.addr %s178, 80
      %s180 = smul.addr %s179, 4
      %s181 = scalar_lea.vmem %s2, %s180
      %p182 = pneg %p87
      %p183 = pneg %p84
      %p184 = pneg %p113
      %p185 = pneg %p110
      %p186 = scmp.lt.s32.totalorder %s14, 1
      %s187 = scalar_select %p186, %s14, 1
      %s188 = smul.addr %s187, 80
      %s189 = smul.addr %s188, 4
      %s190 = scalar_lea.vmem %s3, %s189
      %p191 = scmp.lt.s32.totalorder %s14, 1
      %s192 = scalar_select %p191, %s14, 1
      %s193 = smul.addr %s192, 80
      %s194 = smul.addr %s193, 4
      %s195 = scalar_lea.vmem %s0, %s194
      %p196 = scmp.lt.s32.totalorder %s14, 1
      %s197 = scalar_select %p196, %s14, 1
      %s198 = smul.addr %s197, 80
      %s199 = smul.addr %s198, 4
      %s200 = scalar_lea.vmem %s1, %s199
      %p201 = scmp.lt.s32.totalorder %s14, 1
      %s202 = scalar_select %p201, %s14, 1
      %s203 = smul.addr %s202, 80
      %s204 = smul.addr %s203, 4
      %s205 = scalar_lea.vmem %s2, %s204
      %p206 = scmp.lt.s32.totalorder %s14, 1
      %s207 = scalar_select %p206, %s14, 1
      %s208 = smul.addr %s207, 80
      %s209 = smul.addr %s208, 4
      %s210 = scalar_lea.vmem %s3, %s209
      %v212 = vld [vmem:[%s195] sm:$0xf]
      %v213 = vld [vmem:[%s195 + $0x4] sm:$0xf]
      %v214 = vld [vmem:[%s195 + $0x8] sm:$0xf]
      %v215 = vld [vmem:[%s195 + $0xc] sm:$0xf]
      %v216 = vld [vmem:[%s195 + $0x10] sm:$0xf]
      %v217 = vld [vmem:[%s195 + $0x14] sm:$0xf]
      %v218 = vld [vmem:[%s195 + $0x18] sm:$0xf]
      %v219 = vld [vmem:[%s195 + $0x1c] sm:$0xf]
      %v220 = vld [vmem:[%s195 + $0x20] sm:$0xf]
      %v221 = vld [vmem:[%s195 + $0x24] sm:$0xf]
      %v222 = vld [vmem:[%s195 + $0x28] sm:$0xf]
      %v223 = vld [vmem:[%s195 + $0x2c] sm:$0xf]
      %v224 = vld [vmem:[%s195 + $0x30] sm:$0xf]
      %v225 = vld [vmem:[%s195 + $0x34] sm:$0xf]
      %v226 = vld [vmem:[%s195 + $0x38] sm:$0xf]
      %v227 = vld [vmem:[%s195 + $0x3c] sm:$0xf]
      %v228 = vld [vmem:[%s195 + $0x40] sm:$0xf]
      %v229 = vld [vmem:[%s195 + $0x44] sm:$0xf]
      %v230 = vld [vmem:[%s195 + $0x48] sm:$0xf]
      %v231 = vld [vmem:[%s195 + $0x4c] sm:$0xf]
      %v232 = vld [vmem:[%s195 + $0x50] sm:$0xf]
      %v233 = vld [vmem:[%s195 + $0x54] sm:$0xf]
      %v234 = vld [vmem:[%s195 + $0x58] sm:$0xf]
      %v235 = vld [vmem:[%s195 + $0x5c] sm:$0xf]
      %v236 = vld [vmem:[%s195 + $0x60] sm:$0xf]
      %v237 = vld [vmem:[%s195 + $0x64] sm:$0xf]
      %v238 = vld [vmem:[%s195 + $0x68] sm:$0xf]
      %v239 = vld [vmem:[%s195 + $0x6c] sm:$0xf]
      %v240 = vld [vmem:[%s195 + $0x70] sm:$0xf]
      %v241 = vld [vmem:[%s195 + $0x74] sm:$0xf]
      %v242 = vld [vmem:[%s195 + $0x78] sm:$0xf]
      %v243 = vld [vmem:[%s195 + $0x7c] sm:$0xf]
      %v244 = vld [vmem:[%s195 + $0x80] sm:$0xf]
      %v245 = vld [vmem:[%s195 + $0x84] sm:$0xf]
      %v246 = vld [vmem:[%s195 + $0x88] sm:$0xf]
      %v247 = vld [vmem:[%s195 + $0x8c] sm:$0xf]
      %v248 = vld [vmem:[%s195 + $0x90] sm:$0xf]
      %v249 = vld [vmem:[%s195 + $0x94] sm:$0xf]
      %v250 = vld [vmem:[%s195 + $0x98] sm:$0xf]
      %v251 = vld [vmem:[%s195 + $0x9c] sm:$0xf]
      %v252 = vld [vmem:[%s195 + $0xa0] sm:$0xf]
      %v253 = vld [vmem:[%s195 + $0xa4] sm:$0xf]
      %v254 = vld [vmem:[%s195 + $0xa8] sm:$0xf]
      %v255 = vld [vmem:[%s195 + $0xac] sm:$0xf]
      %v256 = vld [vmem:[%s195 + $0xb0] sm:$0xf]
      %v257 = vld [vmem:[%s195 + $0xb4] sm:$0xf]
      %v258 = vld [vmem:[%s195 + $0xb8] sm:$0xf]
      %v259 = vld [vmem:[%s195 + $0xbc] sm:$0xf]
      %v260 = vld [vmem:[%s195 + $0xc0] sm:$0xf]
      %v261 = vld [vmem:[%s195 + $0xc4] sm:$0xf]
      %v262 = vld [vmem:[%s195 + $0xc8] sm:$0xf]
      %v263 = vld [vmem:[%s195 + $0xcc] sm:$0xf]
      %v264 = vld [vmem:[%s195 + $0xd0] sm:$0xf]
      %v265 = vld [vmem:[%s195 + $0xd4] sm:$0xf]
      %v266 = vld [vmem:[%s195 + $0xd8] sm:$0xf]
      %v267 = vld [vmem:[%s195 + $0xdc] sm:$0xf]
      %v268 = vld [vmem:[%s195 + $0xe0] sm:$0xf]
      %v269 = vld [vmem:[%s195 + $0xe4] sm:$0xf]
      %v270 = vld [vmem:[%s195 + $0xe8] sm:$0xf]
      %v271 = vld [vmem:[%s195 + $0xec] sm:$0xf]
      %v272 = vld [vmem:[%s195 + $0xf0] sm:$0xf]
      %v273 = vld [vmem:[%s195 + $0xf4] sm:$0xf]
      %v274 = vld [vmem:[%s195 + $0xf8] sm:$0xf]
      %v275 = vld [vmem:[%s195 + $0xfc] sm:$0xf]
      %v276 = vld [vmem:[%s195 + $0x100] sm:$0xf]
      %v277 = vld [vmem:[%s195 + $0x104] sm:$0xf]
      %v278 = vld [vmem:[%s195 + $0x108] sm:$0xf]
      %v279 = vld [vmem:[%s195 + $0x10c] sm:$0xf]
      %v280 = vld [vmem:[%s195 + $0x110] sm:$0xf]
      %v281 = vld [vmem:[%s195 + $0x114] sm:$0xf]
      %v282 = vld [vmem:[%s195 + $0x118] sm:$0xf]
      %v283 = vld [vmem:[%s195 + $0x11c] sm:$0xf]
      %v284 = vld [vmem:[%s195 + $0x120] sm:$0xf]
      %v285 = vld [vmem:[%s195 + $0x124] sm:$0xf]
      %v286 = vld [vmem:[%s195 + $0x128] sm:$0xf]
      %v287 = vld [vmem:[%s195 + $0x12c] sm:$0xf]
      %v288 = vld [vmem:[%s195 + $0x130] sm:$0xf]
      %v289 = vld [vmem:[%s195 + $0x134] sm:$0xf]
      %v290 = vld [vmem:[%s195 + $0x138] sm:$0xf]
      %v291 = vld [vmem:[%s195 + $0x13c] sm:$0xf]
      %v292 = vld [vmem:[%s200] sm:$0xf]
      %v293 = vld [vmem:[%s200 + $0x4] sm:$0xf]
      %v294 = vld [vmem:[%s200 + $0x8] sm:$0xf]
      %v295 = vld [vmem:[%s200 + $0xc] sm:$0xf]
      %v296 = vld [vmem:[%s200 + $0x10] sm:$0xf]
      %v297 = vld [vmem:[%s200 + $0x14] sm:$0xf]
      %v298 = vld [vmem:[%s200 + $0x18] sm:$0xf]
      %v299 = vld [vmem:[%s200 + $0x1c] sm:$0xf]
      %v300 = vld [vmem:[%s200 + $0x20] sm:$0xf]
      %v301 = vld [vmem:[%s200 + $0x24] sm:$0xf]
      %v302 = vld [vmem:[%s200 + $0x28] sm:$0xf]
      %v303 = vld [vmem:[%s200 + $0x2c] sm:$0xf]
      %v304 = vld [vmem:[%s200 + $0x30] sm:$0xf]
      %v305 = vld [vmem:[%s200 + $0x34] sm:$0xf]
      %v306 = vld [vmem:[%s200 + $0x38] sm:$0xf]
      %v307 = vld [vmem:[%s200 + $0x3c] sm:$0xf]
      %v308 = vld [vmem:[%s200 + $0x40] sm:$0xf]
      %v309 = vld [vmem:[%s200 + $0x44] sm:$0xf]
      %v310 = vld [vmem:[%s200 + $0x48] sm:$0xf]
      %v311 = vld [vmem:[%s200 + $0x4c] sm:$0xf]
      %v312 = vld [vmem:[%s200 + $0x50] sm:$0xf]
      %v313 = vld [vmem:[%s200 + $0x54] sm:$0xf]
      %v314 = vld [vmem:[%s200 + $0x58] sm:$0xf]
      %v315 = vld [vmem:[%s200 + $0x5c] sm:$0xf]
      %v316 = vld [vmem:[%s200 + $0x60] sm:$0xf]
      %v317 = vld [vmem:[%s200 + $0x64] sm:$0xf]
      %v318 = vld [vmem:[%s200 + $0x68] sm:$0xf]
      %v319 = vld [vmem:[%s200 + $0x6c] sm:$0xf]
      %v320 = vld [vmem:[%s200 + $0x70] sm:$0xf]
      %v321 = vld [vmem:[%s200 + $0x74] sm:$0xf]
      %v322 = vld [vmem:[%s200 + $0x78] sm:$0xf]
      %v323 = vld [vmem:[%s200 + $0x7c] sm:$0xf]
      %v324 = vld [vmem:[%s200 + $0x80] sm:$0xf]
      %v325 = vld [vmem:[%s200 + $0x84] sm:$0xf]
      %v326 = vld [vmem:[%s200 + $0x88] sm:$0xf]
      %v327 = vld [vmem:[%s200 + $0x8c] sm:$0xf]
      %v328 = vld [vmem:[%s200 + $0x90] sm:$0xf]
      %v329 = vld [vmem:[%s200 + $0x94] sm:$0xf]
      %v330 = vld [vmem:[%s200 + $0x98] sm:$0xf]
      %v331 = vld [vmem:[%s200 + $0x9c] sm:$0xf]
      %v332 = vld [vmem:[%s200 + $0xa0] sm:$0xf]
      %v333 = vld [vmem:[%s200 + $0xa4] sm:$0xf]
      %v334 = vld [vmem:[%s200 + $0xa8] sm:$0xf]
      %v335 = vld [vmem:[%s200 + $0xac] sm:$0xf]
      %v336 = vld [vmem:[%s200 + $0xb0] sm:$0xf]
      %v337 = vld [vmem:[%s200 + $0xb4] sm:$0xf]
      %v338 = vld [vmem:[%s200 + $0xb8] sm:$0xf]
      %v339 = vld [vmem:[%s200 + $0xbc] sm:$0xf]
      %v340 = vld [vmem:[%s200 + $0xc0] sm:$0xf]
      %v341 = vld [vmem:[%s200 + $0xc4] sm:$0xf]
      %v342 = vld [vmem:[%s200 + $0xc8] sm:$0xf]
      %v343 = vld [vmem:[%s200 + $0xcc] sm:$0xf]
      %v344 = vld [vmem:[%s200 + $0xd0] sm:$0xf]
      %v345 = vld [vmem:[%s200 + $0xd4] sm:$0xf]
      %v346 = vld [vmem:[%s200 + $0xd8] sm:$0xf]
      %v347 = vld [vmem:[%s200 + $0xdc] sm:$0xf]
      %v348 = vld [vmem:[%s200 + $0xe0] sm:$0xf]
      %v349 = vld [vmem:[%s200 + $0xe4] sm:$0xf]
      %v350 = vld [vmem:[%s200 + $0xe8] sm:$0xf]
      %v351 = vld [vmem:[%s200 + $0xec] sm:$0xf]
      %v352 = vld [vmem:[%s200 + $0xf0] sm:$0xf]
      %v353 = vld [vmem:[%s200 + $0xf4] sm:$0xf]
      %v354 = vld [vmem:[%s200 + $0xf8] sm:$0xf]
      %v355 = vld [vmem:[%s200 + $0xfc] sm:$0xf]
      %v356 = vld [vmem:[%s200 + $0x100] sm:$0xf]
      %v357 = vld [vmem:[%s200 + $0x104] sm:$0xf]
      %v358 = vld [vmem:[%s200 + $0x108] sm:$0xf]
      %v359 = vld [vmem:[%s200 + $0x10c] sm:$0xf]
      %v360 = vld [vmem:[%s200 + $0x110] sm:$0xf]
      %v361 = vld [vmem:[%s200 + $0x114] sm:$0xf]
      %v362 = vld [vmem:[%s200 + $0x118] sm:$0xf]
      %v363 = vld [vmem:[%s200 + $0x11c] sm:$0xf]
      %v364 = vld [vmem:[%s200 + $0x120] sm:$0xf]
      %v365 = vld [vmem:[%s200 + $0x124] sm:$0xf]
      %v366 = vld [vmem:[%s200 + $0x128] sm:$0xf]
      %v367 = vld [vmem:[%s200 + $0x12c] sm:$0xf]
      %v368 = vld [vmem:[%s200 + $0x130] sm:$0xf]
      %v369 = vld [vmem:[%s200 + $0x134] sm:$0xf]
      %v370 = vld [vmem:[%s200 + $0x138] sm:$0xf]
      %v371 = vld [vmem:[%s200 + $0x13c] sm:$0xf]
      %v372 = vld [vmem:[%s205] sm:$0xf]
      %v373 = vld [vmem:[%s205 + $0x4] sm:$0xf]
      %v374 = vld [vmem:[%s205 + $0x8] sm:$0xf]
      %v375 = vld [vmem:[%s205 + $0xc] sm:$0xf]
      %v376 = vld [vmem:[%s205 + $0x10] sm:$0xf]
      %v377 = vld [vmem:[%s205 + $0x14] sm:$0xf]
      %v378 = vld [vmem:[%s205 + $0x18] sm:$0xf]
      %v379 = vld [vmem:[%s205 + $0x1c] sm:$0xf]
      %v380 = vld [vmem:[%s205 + $0x20] sm:$0xf]
      %v381 = vld [vmem:[%s205 + $0x24] sm:$0xf]
      %v382 = vld [vmem:[%s205 + $0x28] sm:$0xf]
      %v383 = vld [vmem:[%s205 + $0x2c] sm:$0xf]
      %v384 = vld [vmem:[%s205 + $0x30] sm:$0xf]
      %v385 = vld [vmem:[%s205 + $0x34] sm:$0xf]
      %v386 = vld [vmem:[%s205 + $0x38] sm:$0xf]
      %v387 = vld [vmem:[%s205 + $0x3c] sm:$0xf]
      %v388 = vld [vmem:[%s205 + $0x40] sm:$0xf]
      %v389 = vld [vmem:[%s205 + $0x44] sm:$0xf]
      %v390 = vld [vmem:[%s205 + $0x48] sm:$0xf]
      %v391 = vld [vmem:[%s205 + $0x4c] sm:$0xf]
      %v392 = vld [vmem:[%s205 + $0x50] sm:$0xf]
      %v393 = vld [vmem:[%s205 + $0x54] sm:$0xf]
      %v394 = vld [vmem:[%s205 + $0x58] sm:$0xf]
      %v395 = vld [vmem:[%s205 + $0x5c] sm:$0xf]
      %v396 = vld [vmem:[%s205 + $0x60] sm:$0xf]
      %v397 = vld [vmem:[%s205 + $0x64] sm:$0xf]
      %v398 = vld [vmem:[%s205 + $0x68] sm:$0xf]
      %v399 = vld [vmem:[%s205 + $0x6c] sm:$0xf]
      %v400 = vld [vmem:[%s205 + $0x70] sm:$0xf]
      %v401 = vld [vmem:[%s205 + $0x74] sm:$0xf]
      %v402 = vld [vmem:[%s205 + $0x78] sm:$0xf]
      %v403 = vld [vmem:[%s205 + $0x7c] sm:$0xf]
      %v404 = vld [vmem:[%s205 + $0x80] sm:$0xf]
      %v405 = vld [vmem:[%s205 + $0x84] sm:$0xf]
      %v406 = vld [vmem:[%s205 + $0x88] sm:$0xf]
      %v407 = vld [vmem:[%s205 + $0x8c] sm:$0xf]
      %v408 = vld [vmem:[%s205 + $0x90] sm:$0xf]
      %v409 = vld [vmem:[%s205 + $0x94] sm:$0xf]
      %v410 = vld [vmem:[%s205 + $0x98] sm:$0xf]
      %v411 = vld [vmem:[%s205 + $0x9c] sm:$0xf]
      %v412 = vld [vmem:[%s205 + $0xa0] sm:$0xf]
      %v413 = vld [vmem:[%s205 + $0xa4] sm:$0xf]
      %v414 = vld [vmem:[%s205 + $0xa8] sm:$0xf]
      %v415 = vld [vmem:[%s205 + $0xac] sm:$0xf]
      %v416 = vld [vmem:[%s205 + $0xb0] sm:$0xf]
      %v417 = vld [vmem:[%s205 + $0xb4] sm:$0xf]
      %v418 = vld [vmem:[%s205 + $0xb8] sm:$0xf]
      %v419 = vld [vmem:[%s205 + $0xbc] sm:$0xf]
      %v420 = vld [vmem:[%s205 + $0xc0] sm:$0xf]
      %v421 = vld [vmem:[%s205 + $0xc4] sm:$0xf]
      %v422 = vld [vmem:[%s205 + $0xc8] sm:$0xf]
      %v423 = vld [vmem:[%s205 + $0xcc] sm:$0xf]
      %v424 = vld [vmem:[%s205 + $0xd0] sm:$0xf]
      %v425 = vld [vmem:[%s205 + $0xd4] sm:$0xf]
      %v426 = vld [vmem:[%s205 + $0xd8] sm:$0xf]
      %v427 = vld [vmem:[%s205 + $0xdc] sm:$0xf]
      %v428 = vld [vmem:[%s205 + $0xe0] sm:$0xf]
      %v429 = vld [vmem:[%s205 + $0xe4] sm:$0xf]
      %v430 = vld [vmem:[%s205 + $0xe8] sm:$0xf]
      %v431 = vld [vmem:[%s205 + $0xec] sm:$0xf]
      %v432 = vld [vmem:[%s205 + $0xf0] sm:$0xf]
      %v433 = vld [vmem:[%s205 + $0xf4] sm:$0xf]
      %v434 = vld [vmem:[%s205 + $0xf8] sm:$0xf]
      %v435 = vld [vmem:[%s205 + $0xfc] sm:$0xf]
      %v436 = vld [vmem:[%s205 + $0x100] sm:$0xf]
      %v437 = vld [vmem:[%s205 + $0x104] sm:$0xf]
      %v438 = vld [vmem:[%s205 + $0x108] sm:$0xf]
      %v439 = vld [vmem:[%s205 + $0x10c] sm:$0xf]
      %v440 = vld [vmem:[%s205 + $0x110] sm:$0xf]
      %v441 = vld [vmem:[%s205 + $0x114] sm:$0xf]
      %v442 = vld [vmem:[%s205 + $0x118] sm:$0xf]
      %v443 = vld [vmem:[%s205 + $0x11c] sm:$0xf]
      %v444 = vld [vmem:[%s205 + $0x120] sm:$0xf]
      %v445 = vld [vmem:[%s205 + $0x124] sm:$0xf]
      %v446 = vld [vmem:[%s205 + $0x128] sm:$0xf]
      %v447 = vld [vmem:[%s205 + $0x12c] sm:$0xf]
      %v448 = vld [vmem:[%s205 + $0x130] sm:$0xf]
      %v449 = vld [vmem:[%s205 + $0x134] sm:$0xf]
      %v450 = vld [vmem:[%s205 + $0x138] sm:$0xf]
      %v451 = vld [vmem:[%s205 + $0x13c] sm:$0xf]
      %v460 = vunpack.c.l.b16 %v212
      %v461 = vunpack.c.l.b16 %v213
      %v462 = vunpack.c.l.b16 %v214
      %v463 = vunpack.c.l.b16 %v215
      %v464 = vunpack.c.l.b16 %v216
      %v465 = vunpack.c.l.b16 %v217
      %v466 = vunpack.c.l.b16 %v218
      %v467 = vunpack.c.l.b16 %v219
      %v468 = vpack.c.b16 %v461, %v460
      %v469 = vpack.c.b16 %v463, %v462
      %v470 = vpack.c.b16 %v465, %v464
      %v471 = vpack.c.b16 %v467, %v466
      %v480 = vunpack.c.l.b16 %v292
      %v481 = vunpack.c.l.b16 %v293
      %v482 = vunpack.c.l.b16 %v294
      %v483 = vunpack.c.l.b16 %v295
      %v484 = vunpack.c.l.b16 %v296
      %v485 = vunpack.c.l.b16 %v297
      %v486 = vunpack.c.l.b16 %v298
      %v487 = vunpack.c.l.b16 %v299
      %v488 = vpack.c.b16 %v481, %v480
      %v489 = vpack.c.b16 %v483, %v482
      %v490 = vpack.c.b16 %v485, %v484
      %v491 = vpack.c.b16 %v487, %v486
      %vm492 = vcmask 130048
      %v494 = vsel %vm492, %v468, 0
      %v497 = vsel %vm492, %v469, 0
      %v500 = vsel %vm492, %v470, 0
      %v503 = vsel %vm492, %v471, 0
      %v506 = vsel %vm492, %v488, 0
      %v509 = vsel %vm492, %v489, 0
      %v512 = vsel %vm492, %v490, 0
      %v515 = vsel %vm492, %v491, 0
      %517 = vmatprep.subr.bf16.mxu0 0
      %518 = vmatpush1.bf16.xpose.msra.mxu0 %v506
      %519 = vmatprep.subr.bf16.mxu0 0
      %520 = vmatpush1.bf16.xpose.msra.mxu0 %v509
      %521 = vmatprep.subr.bf16.mxu0 0
      %522 = vmatpush1.bf16.xpose.msra.mxu0 %v512
      %523 = vmatprep.subr.bf16.mxu0 0
      %524 = vmatpush1.bf16.xpose.msra.mxu0 %v515
      %525 = vmatprep.subr.bf16.mxu0 0
      %526 = vmatpush1.bf16.xpose.msra.mxu0 0
      %527 = vmatprep.subr.bf16.mxu0 0
      %528 = vmatpush1.bf16.xpose.msra.mxu0 0
      %529 = vmatprep.subr.bf16.mxu0 0
      %530 = vmatpush1.bf16.xpose.msra.mxu0 0
      %531 = vmatprep.subr.bf16.mxu0 0
      %532 = vmatpush1.bf16.xpose.msra.mxu0 0
      %533 = vmatprep.subr.bf16.mxu0 0
      %534 = vmatpush1.bf16.xpose.msra.mxu0 0
      %535 = vmatprep.subr.bf16.mxu0 0
      %536 = vmatpush1.bf16.xpose.msra.mxu0 0
      %537 = vmatprep.subr.bf16.mxu0 0
      %538 = vmatpush1.bf16.xpose.msra.mxu0 0
      %539 = vmatprep.subr.bf16.mxu0 0
      %540 = vmatpush1.bf16.xpose.msra.mxu0 0
      %541 = vmatprep.subr.bf16.mxu0 0
      %542 = vmatpush1.bf16.xpose.msra.mxu0 0
      %543 = vmatprep.subr.bf16.mxu0 0
      %544 = vmatpush1.bf16.xpose.msra.mxu0 0
      %545 = vmatprep.subr.bf16.mxu0 0
      %546 = vmatpush1.bf16.xpose.msra.mxu0 0
      %547 = vmatprep.subr.bf16.mxu0 0
      %548 = vmatpush1.bf16.xpose.msra.mxu0 0
      %549 = vmatprep.mubr.bf16.mxu0 0
      %550 = vmatmul.mubr.bf16.gmra.mrb[0].mxu0 %v494
      %v551 = vpop.f32.mrb[0].mxu0
      %v552 = vadd.f32 0.0, %v551
      %v553 = vpop.f32.mrb[0].mxu0
      %v554 = vpop.f32.mrb[0].mxu0
      %v555 = vadd.f32 0.0, %v554
      %v556 = vpop.f32.mrb[0].mxu0
      %557 = vmatprep.mubr.bf16.mxu0 0
      %558 = vmatmul.mubr.bf16.gmra.mrb[0].mxu0 %v497
      %v559 = vpop.f32.mrb[0].mxu0
      %v560 = vadd.f32 0.0, %v559
      %v561 = vpop.f32.mrb[0].mxu0
      %v562 = vpop.f32.mrb[0].mxu0
      %v563 = vadd.f32 0.0, %v562
      %v564 = vpop.f32.mrb[0].mxu0
      %565 = vmatprep.mubr.bf16.mxu0 0
      %566 = vmatmul.mubr.bf16.gmra.mrb[0].mxu0 %v500
      %v567 = vpop.f32.mrb[0].mxu0
      %v568 = vadd.f32 0.0, %v567
      %v569 = vpop.f32.mrb[0].mxu0
      %v570 = vpop.f32.mrb[0].mxu0
      %v571 = vadd.f32 0.0, %v570
      %v572 = vpop.f32.mrb[0].mxu0
      %573 = vmatprep.mubr.bf16.mxu0 0
      %574 = vmatmul.mubr.bf16.gmra.mrb[0].mxu0 %v503
      %v575 = vpop.f32.mrb[0].mxu0
      %v576 = vadd.f32 0.0, %v575
      %v577 = vpop.f32.mrb[0].mxu0
      %v578 = vpop.f32.mrb[0].mxu0
      %v579 = vadd.f32 0.0, %v578
      %v580 = vpop.f32.mrb[0].mxu0
      %581 = vdwg.mxu0
      %v590 = vunpack.c.l.b16 %v220
      %v591 = vunpack.c.l.b16 %v221
      %v592 = vunpack.c.l.b16 %v222
      %v593 = vunpack.c.l.b16 %v223
      %v594 = vunpack.c.l.b16 %v224
      %v595 = vunpack.c.l.b16 %v225
      %v596 = vunpack.c.l.b16 %v226
      %v597 = vunpack.c.l.b16 %v227
      %v598 = vpack.c.b16 %v591, %v590
      %v599 = vpack.c.b16 %v593, %v592
      %v600 = vpack.c.b16 %v595, %v594
      %v601 = vpack.c.b16 %v597, %v596
      %v610 = vunpack.c.l.b16 %v300
      %v611 = vunpack.c.l.b16 %v301
      %v612 = vunpack.c.l.b16 %v302
      %v613 = vunpack.c.l.b16 %v303
      %v614 = vunpack.c.l.b16 %v304
      %v615 = vunpack.c.l.b16 %v305
      %v616 = vunpack.c.l.b16 %v306
      %v617 = vunpack.c.l.b16 %v307
      %v618 = vpack.c.b16 %v611, %v610
      %v619 = vpack.c.b16 %v613, %v612
      %v620 = vpack.c.b16 %v615, %v614
      %v621 = vpack.c.b16 %v617, %v616
      %v623 = vsel %vm492, %v598, 0
      %v626 = vsel %vm492, %v599, 0
      %v629 = vsel %vm492, %v600, 0
      %v632 = vsel %vm492, %v601, 0
      %v635 = vsel %vm492, %v618, 0
      %v638 = vsel %vm492, %v619, 0
      %v641 = vsel %vm492, %v620, 0
      %v644 = vsel %vm492, %v621, 0
      %646 = vmatprep.subr.bf16.mxu0 0
      %647 = vmatpush1.bf16.xpose.msra.mxu0 %v635
      %648 = vmatprep.subr.bf16.mxu0 0
      %649 = vmatpush1.bf16.xpose.msra.mxu0 %v638
      %650 = vmatprep.subr.bf16.mxu0 0
      %651 = vmatpush1.bf16.xpose.msra.mxu0 %v641
      %652 = vmatprep.subr.bf16.mxu0 0
      %653 = vmatpush1.bf16.xpose.msra.mxu0 %v644
      %654 = vmatprep.subr.bf16.mxu0 0
      %655 = vmatpush1.bf16.xpose.msra.mxu0 0
      %656 = vmatprep.subr.bf16.mxu0 0
      %657 = vmatpush1.bf16.xpose.msra.mxu0 0
      %658 = vmatprep.subr.bf16.mxu0 0
      %659 = vmatpush1.bf16.xpose.msra.mxu0 0
      %660 = vmatprep.subr.bf16.mxu0 0
      %661 = vmatpush1.bf16.xpose.msra.mxu0 0
      %662 = vmatprep.subr.bf16.mxu0 0
      %663 = vmatpush1.bf16.xpose.msra.mxu0 0
      %664 = vmatprep.subr.bf16.mxu0 0
      %665 = vmatpush1.bf16.xpose.msra.mxu0 0
      %666 = vmatprep.subr.bf16.mxu0 0
      %667 = vmatpush1.bf16.xpose.msra.mxu0 0
      %668 = vmatprep.subr.bf16.mxu0 0
      %669 = vmatpush1.bf16.xpose.msra.mxu0 0
      %670 = vmatprep.subr.bf16.mxu0 0
      %671 = vmatpush1.bf16.xpose.msra.mxu0 0
      %672 = vmatprep.subr.bf16.mxu0 0
      %673 = vmatpush1.bf16.xpose.msra.mxu0 0
      %674 = vmatprep.subr.bf16.mxu0 0
      %675 = vmatpush1.bf16.xpose.msra.mxu0 0
      %676 = vmatprep.subr.bf16.mxu0 0
      %677 = vmatpush1.bf16.xpose.msra.mxu0 0
      %678 = vmatprep.mubr.bf16.mxu0 0
      %679 = vmatmul.mubr.bf16.gmra.mrb[0].mxu0 %v623
      %v680 = vpop.f32.mrb[0].mxu0
      %v681 = vadd.f32 0.0, %v680
      %v682 = vpop.f32.mrb[0].mxu0
      %v683 = vpop.f32.mrb[0].mxu0
      %v684 = vadd.f32 0.0, %v683
      %v685 = vpop.f32.mrb[0].mxu0
      %686 = vmatprep.mubr.bf16.mxu0 0
      %687 = vmatmul.mubr.bf16.gmra.mrb[0].mxu0 %v626
      %v688 = vpop.f32.mrb[0].mxu0
      %v689 = vadd.f32 0.0, %v688
      %v690 = vpop.f32.mrb[0].mxu0
      %v691 = vpop.f32.mrb[0].mxu0
      %v692 = vadd.f32 0.0, %v691
      %v693 = vpop.f32.mrb[0].mxu0
      %694 = vmatprep.mubr.bf16.mxu0 0
      %695 = vmatmul.mubr.bf16.gmra.mrb[0].mxu0 %v629
      %v696 = vpop.f32.mrb[0].mxu0
      %v697 = vadd.f32 0.0, %v696
      %v698 = vpop.f32.mrb[0].mxu0
      %v699 = vpop.f32.mrb[0].mxu0
      %v700 = vadd.f32 0.0, %v699
      %v701 = vpop.f32.mrb[0].mxu0
      %702 = vmatprep.mubr.bf16.mxu0 0
      %703 = vmatmul.mubr.bf16.gmra.mrb[0].mxu0 %v632
      %v704 = vpop.f32.mrb[0].mxu0
      %v705 = vadd.f32 0.0, %v704
      %v706 = vpop.f32.mrb[0].mxu0
      %v707 = vpop.f32.mrb[0].mxu0
      %v708 = vadd.f32 0.0, %v707
      %v709 = vpop.f32.mrb[0].mxu0
      %710 = vdwg.mxu0
      %v719 = vunpack.c.l.b16 %v228
      %v720 = vunpack.c.l.b16 %v229
      %v721 = vunpack.c.l.b16 %v230
      %v722 = vunpack.c.l.b16 %v231
      %v723 = vunpack.c.l.b16 %v232
      %v724 = vunpack.c.l.b16 %v233
      %v725 = vunpack.c.l.b16 %v234
      %v726 = vunpack.c.l.b16 %v235
      %v727 = vpack.c.b16 %v720, %v719
      %v728 = vpack.c.b16 %v722, %v721
      %v729 = vpack.c.b16 %v724, %v723
      %v730 = vpack.c.b16 %v726, %v725
      %v739 = vunpack.c.l.b16 %v308
      %v740 = vunpack.c.l.b16 %v309
      %v741 = vunpack.c.l.b16 %v310
      %v742 = vunpack.c.l.b16 %v311
      %v743 = vunpack.c.l.b16 %v312
      %v744 = vunpack.c.l.b16 %v313
      %v745 = vunpack.c.l.b16 %v314
      %v746 = vunpack.c.l.b16 %v315
      %v747 = vpack.c.b16 %v740, %v739
      %v748 = vpack.c.b16 %v742, %v741
      %v749 = vpack.c.b16 %v744, %v743
      %v750 = vpack.c.b16 %v746, %v745
      %v752 = vsel %vm492, %v727, 0
      %v755 = vsel %vm492, %v728, 0
      %v758 = vsel %vm492, %v729, 0
      %v761 = vsel %vm492, %v730, 0
      %v764 = vsel %vm492, %v747, 0
      %v767 = vsel %vm492, %v748, 0
      %v770 = vsel %vm492, %v749, 0
      %v773 = vsel %vm492, %v750, 0
      %775 = vmatprep.subr.bf16.mxu0 0
      %776 = vmatpush1.bf16.xpose.msra.mxu0 %v764
      %777 = vmatprep.subr.bf16.mxu0 0
      %778 = vmatpush1.bf16.xpose.msra.mxu0 %v767
      %779 = vmatprep.subr.bf16.mxu0 0
      %780 = vmatpush1.bf16.xpose.msra.mxu0 %v770
      %781 = vmatprep.subr.bf16.mxu0 0
      %782 = vmatpush1.bf16.xpose.msra.mxu0 %v773
      %783 = vmatprep.subr.bf16.mxu0 0
      %784 = vmatpush1.bf16.xpose.msra.mxu0 0
      %785 = vmatprep.subr.bf16.mxu0 0
      %786 = vmatpush1.bf16.xpose.msra.mxu0 0
      %787 = vmatprep.subr.bf16.mxu0 0
      %788 = vmatpush1.bf16.xpose.msra.mxu0 0
      %789 = vmatprep.subr.bf16.mxu0 0
      %790 = vmatpush1.bf16.xpose.msra.mxu0 0
      %791 = vmatprep.subr.bf16.mxu0 0
      %792 = vmatpush1.bf16.xpose.msra.mxu0 0
      %793 = vmatprep.subr.bf16.mxu0 0
      %794 = vmatpush1.bf16.xpose.msra.mxu0 0
      %795 = vmatprep.subr.bf16.mxu0 0
      %796 = vmatpush1.bf16.xpose.msra.mxu0 0
      %797 = vmatprep.subr.bf16.mxu0 0
      %798 = vmatpush1.bf16.xpose.msra.mxu0 0
      %799 = vmatprep.subr.bf16.mxu0 0
      %800 = vmatpush1.bf16.xpose.msra.mxu0 0
      %801 = vmatprep.subr.bf16.mxu0 0
      %802 = vmatpush1.bf16.xpose.msra.mxu0 0
      %803 = vmatprep.subr.bf16.mxu0 0
      %804 = vmatpush1.bf16.xpose.msra.mxu0 0
      %805 = vmatprep.subr.bf16.mxu0 0
      %806 = vmatpush1.bf16.xpose.msra.mxu0 0
      %807 = vmatprep.mubr.bf16.mxu0 0
      %808 = vmatmul.mubr.bf16.gmra.mrb[0].mxu0 %v752
      %v809 = vpop.f32.mrb[0].mxu0
      %v810 = vadd.f32 0.0, %v809
      %v811 = vpop.f32.mrb[0].mxu0
      %v812 = vpop.f32.mrb[0].mxu0
      %v813 = vadd.f32 0.0, %v812
      %v814 = vpop.f32.mrb[0].mxu0
      %815 = vmatprep.mubr.bf16.mxu0 0
      %816 = vmatmul.mubr.bf16.gmra.mrb[0].mxu0 %v755
      %v817 = vpop.f32.mrb[0].mxu0
      %v818 = vadd.f32 0.0, %v817
      %v819 = vpop.f32.mrb[0].mxu0
      %v820 = vpop.f32.mrb[0].mxu0
      %v821 = vadd.f32 0.0, %v820
      %v822 = vpop.f32.mrb[0].mxu0
      %823 = vmatprep.mubr.bf16.mxu0 0
      %824 = vmatmul.mubr.bf16.gmra.mrb[0].mxu0 %v758
      %v825 = vpop.f32.mrb[0].mxu0
      %v826 = vadd.f32 0.0, %v825
      %v827 = vpop.f32.mrb[0].mxu0
      %v828 = vpop.f32.mrb[0].mxu0
      %v829 = vadd.f32 0.0, %v828
      %v830 = vpop.f32.mrb[0].mxu0
      %831 = vmatprep.mubr.bf16.mxu0 0
      %832 = vmatmul.mubr.bf16.gmra.mrb[0].mxu0 %v761
      %v833 = vpop.f32.mrb[0].mxu0
      %v834 = vadd.f32 0.0, %v833
      %v835 = vpop.f32.mrb[0].mxu0
      %v836 = vpop.f32.mrb[0].mxu0
      %v837 = vadd.f32 0.0, %v836
      %v838 = vpop.f32.mrb[0].mxu0
      %839 = vdwg.mxu0
      %v848 = vunpack.c.l.b16 %v236
      %v849 = vunpack.c.l.b16 %v237
      %v850 = vunpack.c.l.b16 %v238
      %v851 = vunpack.c.l.b16 %v239
      %v852 = vunpack.c.l.b16 %v240
      %v853 = vunpack.c.l.b16 %v241
      %v854 = vunpack.c.l.b16 %v242
      %v855 = vunpack.c.l.b16 %v243
      %v856 = vpack.c.b16 %v849, %v848
      %v857 = vpack.c.b16 %v851, %v850
      %v858 = vpack.c.b16 %v853, %v852
      %v859 = vpack.c.b16 %v855, %v854
      %v868 = vunpack.c.l.b16 %v316
      %v869 = vunpack.c.l.b16 %v317
      %v870 = vunpack.c.l.b16 %v318
      %v871 = vunpack.c.l.b16 %v319
      %v872 = vunpack.c.l.b16 %v320
      %v873 = vunpack.c.l.b16 %v321
      %v874 = vunpack.c.l.b16 %v322
      %v875 = vunpack.c.l.b16 %v323
      %v876 = vpack.c.b16 %v869, %v868
      %v877 = vpack.c.b16 %v871, %v870
      %v878 = vpack.c.b16 %v873, %v872
      %v879 = vpack.c.b16 %v875, %v874
      %v881 = vsel %vm492, %v856, 0
      %v884 = vsel %vm492, %v857, 0
      %v887 = vsel %vm492, %v858, 0
      %v890 = vsel %vm492, %v859, 0
      %v893 = vsel %vm492, %v876, 0
      %v896 = vsel %vm492, %v877, 0
      %v899 = vsel %vm492, %v878, 0
      %v902 = vsel %vm492, %v879, 0
      %904 = vmatprep.subr.bf16.mxu0 0
      %905 = vmatpush1.bf16.xpose.msra.mxu0 %v893
      %906 = vmatprep.subr.bf16.mxu0 0
      %907 = vmatpush1.bf16.xpose.msra.mxu0 %v896
      %908 = vmatprep.subr.bf16.mxu0 0
      %909 = vmatpush1.bf16.xpose.msra.mxu0 %v899
      %910 = vmatprep.subr.bf16.mxu0 0
      %911 = vmatpush1.bf16.xpose.msra.mxu0 %v902
      %912 = vmatprep.subr.bf16.mxu0 0
      %913 = vmatpush1.bf16.xpose.msra.mxu0 0
      %914 = vmatprep.subr.bf16.mxu0 0
      %915 = vmatpush1.bf16.xpose.msra.mxu0 0
      %916 = vmatprep.subr.bf16.mxu0 0
      %917 = vmatpush1.bf16.xpose.msra.mxu0 0
      %918 = vmatprep.subr.bf16.mxu0 0
      %919 = vmatpush1.bf16.xpose.msra.mxu0 0
      %920 = vmatprep.subr.bf16.mxu0 0
      %921 = vmatpush1.bf16.xpose.msra.mxu0 0
      %922 = vmatprep.subr.bf16.mxu0 0
      %923 = vmatpush1.bf16.xpose.msra.mxu0 0
      %924 = vmatprep.subr.bf16.mxu0 0
      %925 = vmatpush1.bf16.xpose.msra.mxu0 0
      %926 = vmatprep.subr.bf16.mxu0 0
      %927 = vmatpush1.bf16.xpose.msra.mxu0 0
      %928 = vmatprep.subr.bf16.mxu0 0
      %929 = vmatpush1.bf16.xpose.msra.mxu0 0
      %930 = vmatprep.subr.bf16.mxu0 0
      %931 = vmatpush1.bf16.xpose.msra.mxu0 0
      %932 = vmatprep.subr.bf16.mxu0 0
      %933 = vmatpush1.bf16.xpose.msra.mxu0 0
      %934 = vmatprep.subr.bf16.mxu0 0
      %935 = vmatpush1.bf16.xpose.msra.mxu0 0
      %936 = vmatprep.mubr.bf16.mxu0 0
      %937 = vmatmul.mubr.bf16.gmra.mrb[0].mxu0 %v881
      %v938 = vpop.f32.mrb[0].mxu0
      %v939 = vadd.f32 0.0, %v938
      %v940 = vpop.f32.mrb[0].mxu0
      %v941 = vpop.f32.mrb[0].mxu0
      %v942 = vadd.f32 0.0, %v941
      %v943 = vpop.f32.mrb[0].mxu0
      %944 = vmatprep.mubr.bf16.mxu0 0
      %945 = vmatmul.mubr.bf16.gmra.mrb[0].mxu0 %v884
      %v946 = vpop.f32.mrb[0].mxu0
      %v947 = vadd.f32 0.0, %v946
      %v948 = vpop.f32.mrb[0].mxu0
      %v949 = vpop.f32.mrb[0].mxu0
      %v950 = vadd.f32 0.0, %v949
      %v951 = vpop.f32.mrb[0].mxu0
      %952 = vmatprep.mubr.bf16.mxu0 0
      %953 = vmatmul.mubr.bf16.gmra.mrb[0].mxu0 %v887
      %v954 = vpop.f32.mrb[0].mxu0
      %v955 = vadd.f32 0.0, %v954
      %v956 = vpop.f32.mrb[0].mxu0
      %v957 = vpop.f32.mrb[0].mxu0
      %v958 = vadd.f32 0.0, %v957
      %v959 = vpop.f32.mrb[0].mxu0
      %960 = vmatprep.mubr.bf16.mxu0 0
      %961 = vmatmul.mubr.bf16.gmra.mrb[0].mxu0 %v890
      %v962 = vpop.f32.mrb[0].mxu0
      %v963 = vadd.f32 0.0, %v962
      %v964 = vpop.f32.mrb[0].mxu0
      %v965 = vpop.f32.mrb[0].mxu0
      %v966 = vadd.f32 0.0, %v965
      %v967 = vpop.f32.mrb[0].mxu0
      %968 = vdwg.mxu0
      %v977 = vunpack.c.l.b16 %v244
      %v978 = vunpack.c.l.b16 %v245
      %v979 = vunpack.c.l.b16 %v246
      %v980 = vunpack.c.l.b16 %v247
      %v981 = vunpack.c.l.b16 %v248
      %v982 = vunpack.c.l.b16 %v249
      %v983 = vunpack.c.l.b16 %v250
      %v984 = vunpack.c.l.b16 %v251
      %v985 = vpack.c.b16 %v978, %v977
      %v986 = vpack.c.b16 %v980, %v979
      %v987 = vpack.c.b16 %v982, %v981
      %v988 = vpack.c.b16 %v984, %v983
      %v997 = vunpack.c.l.b16 %v324
      %v998 = vunpack.c.l.b16 %v325
      %v999 = vunpack.c.l.b16 %v326
      %v1000 = vunpack.c.l.b16 %v327
      %v1001 = vunpack.c.l.b16 %v328
      %v1002 = vunpack.c.l.b16 %v329
      %v1003 = vunpack.c.l.b16 %v330
      %v1004 = vunpack.c.l.b16 %v331
      %v1005 = vpack.c.b16 %v998, %v997
      %v1006 = vpack.c.b16 %v1000, %v999
      %v1007 = vpack.c.b16 %v1002, %v1001
      %v1008 = vpack.c.b16 %v1004, %v1003
      %v1010 = vsel %vm492, %v985, 0
      %v1013 = vsel %vm492, %v986, 0
      %v1016 = vsel %vm492, %v987, 0
      %v1019 = vsel %vm492, %v988, 0
      %v1022 = vsel %vm492, %v1005, 0
      %v1025 = vsel %vm492, %v1006, 0
      %v1028 = vsel %vm492, %v1007, 0
      %v1031 = vsel %vm492, %v1008, 0
      %1033 = vmatprep.subr.bf16.mxu0 0
      %1034 = vmatpush1.bf16.xpose.msra.mxu0 %v1022
      %1035 = vmatprep.subr.bf16.mxu0 0
      %1036 = vmatpush1.bf16.xpose.msra.mxu0 %v1025
      %1037 = vmatprep.subr.bf16.mxu0 0
      %1038 = vmatpush1.bf16.xpose.msra.mxu0 %v1028
      %1039 = vmatprep.subr.bf16.mxu0 0
      %1040 = vmatpush1.bf16.xpose.msra.mxu0 %v1031
      %1041 = vmatprep.subr.bf16.mxu0 0
      %1042 = vmatpush1.bf16.xpose.msra.mxu0 0
      %1043 = vmatprep.subr.bf16.mxu0 0
      %1044 = vmatpush1.bf16.xpose.msra.mxu0 0
      %1045 = vmatprep.subr.bf16.mxu0 0
      %1046 = vmatpush1.bf16.xpose.msra.mxu0 0
      %1047 = vmatprep.subr.bf16.mxu0 0
      %1048 = vmatpush1.bf16.xpose.msra.mxu0 0
      %1049 = vmatprep.subr.bf16.mxu0 0
      %1050 = vmatpush1.bf16.xpose.msra.mxu0 0
      %1051 = vmatprep.subr.bf16.mxu0 0
      %1052 = vmatpush1.bf16.xpose.msra.mxu0 0
      %1053 = vmatprep.subr.bf16.mxu0 0
      %1054 = vmatpush1.bf16.xpose.msra.mxu0 0
      %1055 = vmatprep.subr.bf16.mxu0 0
      %1056 = vmatpush1.bf16.xpose.msra.mxu0 0
      %1057 = vmatprep.subr.bf16.mxu0 0
      %1058 = vmatpush1.bf16.xpose.msra.mxu0 0
      %1059 = vmatprep.subr.bf16.mxu0 0
      %1060 = vmatpush1.bf16.xpose.msra.mxu0 0
      %1061 = vmatprep.subr.bf16.mxu0 0
      %1062 = vmatpush1.bf16.xpose.msra.mxu0 0
      %1063 = vmatprep.subr.bf16.mxu0 0
      %1064 = vmatpush1.bf16.xpose.msra.mxu0 0
      %1065 = vmatprep.mubr.bf16.mxu0 0
      %1066 = vmatmul.mubr.bf16.gmra.mrb[0].mxu0 %v1010
      %v1067 = vpop.f32.mrb[0].mxu0
      %v1068 = vadd.f32 0.0, %v1067
      %v1069 = vpop.f32.mrb[0].mxu0
      %v1070 = vpop.f32.mrb[0].mxu0
      %v1071 = vadd.f32 0.0, %v1070
      %v1072 = vpop.f32.mrb[0].mxu0
      %1073 = vmatprep.mubr.bf16.mxu0 0
      %1074 = vmatmul.mubr.bf16.gmra.mrb[0].mxu0 %v1013
      %v1075 = vpop.f32.mrb[0].mxu0
      %v1076 = vadd.f32 0.0, %v1075
      %v1077 = vpop.f32.mrb[0].mxu0
      %v1078 = vpop.f32.mrb[0].mxu0
      %v1079 = vadd.f32 0.0, %v1078
      %v1080 = vpop.f32.mrb[0].mxu0
      %1081 = vmatprep.mubr.bf16.mxu0 0
      %1082 = vmatmul.mubr.bf16.gmra.mrb[0].mxu0 %v1016
      %v1083 = vpop.f32.mrb[0].mxu0
      %v1084 = vadd.f32 0.0, %v1083
      %v1085 = vpop.f32.mrb[0].mxu0
      %v1086 = vpop.f32.mrb[0].mxu0
      %v1087 = vadd.f32 0.0, %v1086
      %v1088 = vpop.f32.mrb[0].mxu0
      %1089 = vmatprep.mubr.bf16.mxu0 0
      %1090 = vmatmul.mubr.bf16.gmra.mrb[0].mxu0 %v1019
      %v1091 = vpop.f32.mrb[0].mxu0
      %v1092 = vadd.f32 0.0, %v1091
      %v1093 = vpop.f32.mrb[0].mxu0
      %v1094 = vpop.f32.mrb[0].mxu0
      %v1095 = vadd.f32 0.0, %v1094
      %v1096 = vpop.f32.mrb[0].mxu0
      %1097 = vdwg.mxu0
      %v1106 = vunpack.c.l.b16 %v252
      %v1107 = vunpack.c.l.b16 %v253
      %v1108 = vunpack.c.l.b16 %v254
      %v1109 = vunpack.c.l.b16 %v255
      %v1110 = vunpack.c.l.b16 %v256
      %v1111 = vunpack.c.l.b16 %v257
      %v1112 = vunpack.c.l.b16 %v258
      %v1113 = vunpack.c.l.b16 %v259
      %v1114 = vpack.c.b16 %v1107, %v1106
      %v1115 = vpack.c.b16 %v1109, %v1108
      %v1116 = vpack.c.b16 %v1111, %v1110
      %v1117 = vpack.c.b16 %v1113, %v1112
      %v1126 = vunpack.c.l.b16 %v332
      %v1127 = vunpack.c.l.b16 %v333
      %v1128 = vunpack.c.l.b16 %v334
      %v1129 = vunpack.c.l.b16 %v335
      %v1130 = vunpack.c.l.b16 %v336
      %v1131 = vunpack.c.l.b16 %v337
      %v1132 = vunpack.c.l.b16 %v338
      %v1133 = vunpack.c.l.b16 %v339
      %v1134 = vpack.c.b16 %v1127, %v1126
      %v1135 = vpack.c.b16 %v1129, %v1128
      %v1136 = vpack.c.b16 %v1131, %v1130
      %v1137 = vpack.c.b16 %v1133, %v1132
      %v1139 = vsel %vm492, %v1114, 0
      %v1142 = vsel %vm492, %v1115, 0
      %v1145 = vsel %vm492, %v1116, 0
      %v1148 = vsel %vm492, %v1117, 0
      %v1151 = vsel %vm492, %v1134, 0
      %v1154 = vsel %vm492, %v1135, 0
      %v1157 = vsel %vm492, %v1136, 0
      %v1160 = vsel %vm492, %v1137, 0
      %1162 = vmatprep.subr.bf16.mxu0 0
      %1163 = vmatpush1.bf16.xpose.msra.mxu0 %v1151
      %1164 = vmatprep.subr.bf16.mxu0 0
      %1165 = vmatpush1.bf16.xpose.msra.mxu0 %v1154
      %1166 = vmatprep.subr.bf16.mxu0 0
      %1167 = vmatpush1.bf16.xpose.msra.mxu0 %v1157
      %1168 = vmatprep.subr.bf16.mxu0 0
      %1169 = vmatpush1.bf16.xpose.msra.mxu0 %v1160
      %1170 = vmatprep.subr.bf16.mxu0 0
      %1171 = vmatpush1.bf16.xpose.msra.mxu0 0
      %1172 = vmatprep.subr.bf16.mxu0 0
      %1173 = vmatpush1.bf16.xpose.msra.mxu0 0
      %1174 = vmatprep.subr.bf16.mxu0 0
      %1175 = vmatpush1.bf16.xpose.msra.mxu0 0
      %1176 = vmatprep.subr.bf16.mxu0 0
      %1177 = vmatpush1.bf16.xpose.msra.mxu0 0
      %1178 = vmatprep.subr.bf16.mxu0 0
      %1179 = vmatpush1.bf16.xpose.msra.mxu0 0
      %1180 = vmatprep.subr.bf16.mxu0 0
      %1181 = vmatpush1.bf16.xpose.msra.mxu0 0
      %1182 = vmatprep.subr.bf16.mxu0 0
      %1183 = vmatpush1.bf16.xpose.msra.mxu0 0
      %1184 = vmatprep.subr.bf16.mxu0 0
      %1185 = vmatpush1.bf16.xpose.msra.mxu0 0
      %1186 = vmatprep.subr.bf16.mxu0 0
      %1187 = vmatpush1.bf16.xpose.msra.mxu0 0
      %1188 = vmatprep.subr.bf16.mxu0 0
      %1189 = vmatpush1.bf16.xpose.msra.mxu0 0
      %1190 = vmatprep.subr.bf16.mxu0 0
      %1191 = vmatpush1.bf16.xpose.msra.mxu0 0
      %1192 = vmatprep.subr.bf16.mxu0 0
      %1193 = vmatpush1.bf16.xpose.msra.mxu0 0
      %1194 = vmatprep.mubr.bf16.mxu0 0
      %1195 = vmatmul.mubr.bf16.gmra.mrb[0].mxu0 %v1139
      %v1196 = vpop.f32.mrb[0].mxu0
      %v1197 = vadd.f32 0.0, %v1196
      %v1198 = vpop.f32.mrb[0].mxu0
      %v1199 = vpop.f32.mrb[0].mxu0
      %v1200 = vadd.f32 0.0, %v1199
      %v1201 = vpop.f32.mrb[0].mxu0
      %1202 = vmatprep.mubr.bf16.mxu0 0
      %1203 = vmatmul.mubr.bf16.gmra.mrb[0].mxu0 %v1142
      %v1204 = vpop.f32.mrb[0].mxu0
      %v1205 = vadd.f32 0.0, %v1204
      %v1206 = vpop.f32.mrb[0].mxu0
      %v1207 = vpop.f32.mrb[0].mxu0
      %v1208 = vadd.f32 0.0, %v1207
      %v1209 = vpop.f32.mrb[0].mxu0
      %1210 = vmatprep.mubr.bf16.mxu0 0
      %1211 = vmatmul.mubr.bf16.gmra.mrb[0].mxu0 %v1145
      %v1212 = vpop.f32.mrb[0].mxu0
      %v1213 = vadd.f32 0.0, %v1212
      %v1214 = vpop.f32.mrb[0].mxu0
      %v1215 = vpop.f32.mrb[0].mxu0
      %v1216 = vadd.f32 0.0, %v1215
      %v1217 = vpop.f32.mrb[0].mxu0
      %1218 = vmatprep.mubr.bf16.mxu0 0
      %1219 = vmatmul.mubr.bf16.gmra.mrb[0].mxu0 %v1148
      %v1220 = vpop.f32.mrb[0].mxu0
      %v1221 = vadd.f32 0.0, %v1220
      %v1222 = vpop.f32.mrb[0].mxu0
      %v1223 = vpop.f32.mrb[0].mxu0
      %v1224 = vadd.f32 0.0, %v1223
      %v1225 = vpop.f32.mrb[0].mxu0
      %1226 = vdwg.mxu0
      %v1235 = vunpack.c.l.b16 %v260
      %v1236 = vunpack.c.l.b16 %v261
      %v1237 = vunpack.c.l.b16 %v262
      %v1238 = vunpack.c.l.b16 %v263
      %v1239 = vunpack.c.l.b16 %v264
      %v1240 = vunpack.c.l.b16 %v265
      %v1241 = vunpack.c.l.b16 %v266
      %v1242 = vunpack.c.l.b16 %v267
      %v1243 = vpack.c.b16 %v1236, %v1235
      %v1244 = vpack.c.b16 %v1238, %v1237
      %v1245 = vpack.c.b16 %v1240, %v1239
      %v1246 = vpack.c.b16 %v1242, %v1241
      %v1255 = vunpack.c.l.b16 %v340
      %v1256 = vunpack.c.l.b16 %v341
      %v1257 = vunpack.c.l.b16 %v342
      %v1258 = vunpack.c.l.b16 %v343
      %v1259 = vunpack.c.l.b16 %v344
      %v1260 = vunpack.c.l.b16 %v345
      %v1261 = vunpack.c.l.b16 %v346
      %v1262 = vunpack.c.l.b16 %v347
      %v1263 = vpack.c.b16 %v1256, %v1255
      %v1264 = vpack.c.b16 %v1258, %v1257
      %v1265 = vpack.c.b16 %v1260, %v1259
      %v1266 = vpack.c.b16 %v1262, %v1261
      %v1268 = vsel %vm492, %v1243, 0
      %v1271 = vsel %vm492, %v1244, 0
      %v1274 = vsel %vm492, %v1245, 0
      %v1277 = vsel %vm492, %v1246, 0
      %v1280 = vsel %vm492, %v1263, 0
      %v1283 = vsel %vm492, %v1264, 0
      %v1286 = vsel %vm492, %v1265, 0
      %v1289 = vsel %vm492, %v1266, 0
      %1291 = vmatprep.subr.bf16.mxu0 0
      %1292 = vmatpush1.bf16.xpose.msra.mxu0 %v1280
      %1293 = vmatprep.subr.bf16.mxu0 0
      %1294 = vmatpush1.bf16.xpose.msra.mxu0 %v1283
      %1295 = vmatprep.subr.bf16.mxu0 0
      %1296 = vmatpush1.bf16.xpose.msra.mxu0 %v1286
      %1297 = vmatprep.subr.bf16.mxu0 0
      %1298 = vmatpush1.bf16.xpose.msra.mxu0 %v1289
      %1299 = vmatprep.subr.bf16.mxu0 0
      %1300 = vmatpush1.bf16.xpose.msra.mxu0 0
      %1301 = vmatprep.subr.bf16.mxu0 0
      %1302 = vmatpush1.bf16.xpose.msra.mxu0 0
      %1303 = vmatprep.subr.bf16.mxu0 0
      %1304 = vmatpush1.bf16.xpose.msra.mxu0 0
      %1305 = vmatprep.subr.bf16.mxu0 0
      %1306 = vmatpush1.bf16.xpose.msra.mxu0 0
      %1307 = vmatprep.subr.bf16.mxu0 0
      %1308 = vmatpush1.bf16.xpose.msra.mxu0 0
      %1309 = vmatprep.subr.bf16.mxu0 0
      %1310 = vmatpush1.bf16.xpose.msra.mxu0 0
      %1311 = vmatprep.subr.bf16.mxu0 0
      %1312 = vmatpush1.bf16.xpose.msra.mxu0 0
      %1313 = vmatprep.subr.bf16.mxu0 0
      %1314 = vmatpush1.bf16.xpose.msra.mxu0 0
      %1315 = vmatprep.subr.bf16.mxu0 0
      %1316 = vmatpush1.bf16.xpose.msra.mxu0 0
      %1317 = vmatprep.subr.bf16.mxu0 0
      %1318 = vmatpush1.bf16.xpose.msra.mxu0 0
      %1319 = vmatprep.subr.bf16.mxu0 0
      %1320 = vmatpush1.bf16.xpose.msra.mxu0 0
      %1321 = vmatprep.subr.bf16.mxu0 0
      %1322 = vmatpush1.bf16.xpose.msra.mxu0 0
      %1323 = vmatprep.mubr.bf16.mxu0 0
      %1324 = vmatmul.mubr.bf16.gmra.mrb[0].mxu0 %v1268
      %v1325 = vpop.f32.mrb[0].mxu0
      %v1326 = vadd.f32 0.0, %v1325
      %v1327 = vpop.f32.mrb[0].mxu0
      %v1328 = vpop.f32.mrb[0].mxu0
      %v1329 = vadd.f32 0.0, %v1328
      %v1330 = vpop.f32.mrb[0].mxu0
      %1331 = vmatprep.mubr.bf16.mxu0 0
      %1332 = vmatmul.mubr.bf16.gmra.mrb[0].mxu0 %v1271
      %v1333 = vpop.f32.mrb[0].mxu0
      %v1334 = vadd.f32 0.0, %v1333
      %v1335 = vpop.f32.mrb[0].mxu0
      %v1336 = vpop.f32.mrb[0].mxu0
      %v1337 = vadd.f32 0.0, %v1336
      %v1338 = vpop.f32.mrb[0].mxu0
      %1339 = vmatprep.mubr.bf16.mxu0 0
      %1340 = vmatmul.mubr.bf16.gmra.mrb[0].mxu0 %v1274
      %v1341 = vpop.f32.mrb[0].mxu0
      %v1342 = vadd.f32 0.0, %v1341
      %v1343 = vpop.f32.mrb[0].mxu0
      %v1344 = vpop.f32.mrb[0].mxu0
      %v1345 = vadd.f32 0.0, %v1344
      %v1346 = vpop.f32.mrb[0].mxu0
      %1347 = vmatprep.mubr.bf16.mxu0 0
      %1348 = vmatmul.mubr.bf16.gmra.mrb[0].mxu0 %v1277
      %v1349 = vpop.f32.mrb[0].mxu0
      %v1350 = vadd.f32 0.0, %v1349
      %v1351 = vpop.f32.mrb[0].mxu0
      %v1352 = vpop.f32.mrb[0].mxu0
      %v1353 = vadd.f32 0.0, %v1352
      %v1354 = vpop.f32.mrb[0].mxu0
      %1355 = vdwg.mxu0
      %v1364 = vunpack.c.l.b16 %v268
      %v1365 = vunpack.c.l.b16 %v269
      %v1366 = vunpack.c.l.b16 %v270
      %v1367 = vunpack.c.l.b16 %v271
      %v1368 = vunpack.c.l.b16 %v272
      %v1369 = vunpack.c.l.b16 %v273
      %v1370 = vunpack.c.l.b16 %v274
      %v1371 = vunpack.c.l.b16 %v275
      %v1372 = vpack.c.b16 %v1365, %v1364
      %v1373 = vpack.c.b16 %v1367, %v1366
      %v1374 = vpack.c.b16 %v1369, %v1368
      %v1375 = vpack.c.b16 %v1371, %v1370
      %v1384 = vunpack.c.l.b16 %v348
      %v1385 = vunpack.c.l.b16 %v349
      %v1386 = vunpack.c.l.b16 %v350
      %v1387 = vunpack.c.l.b16 %v351
      %v1388 = vunpack.c.l.b16 %v352
      %v1389 = vunpack.c.l.b16 %v353
      %v1390 = vunpack.c.l.b16 %v354
      %v1391 = vunpack.c.l.b16 %v355
      %v1392 = vpack.c.b16 %v1385, %v1384
      %v1393 = vpack.c.b16 %v1387, %v1386
      %v1394 = vpack.c.b16 %v1389, %v1388
      %v1395 = vpack.c.b16 %v1391, %v1390
      %v1397 = vsel %vm492, %v1372, 0
      %v1400 = vsel %vm492, %v1373, 0
      %v1403 = vsel %vm492, %v1374, 0
      %v1406 = vsel %vm492, %v1375, 0
      %v1409 = vsel %vm492, %v1392, 0
      %v1412 = vsel %vm492, %v1393, 0
      %v1415 = vsel %vm492, %v1394, 0
      %v1418 = vsel %vm492, %v1395, 0
      %1420 = vmatprep.subr.bf16.mxu0 0
      %1421 = vmatpush1.bf16.xpose.msra.mxu0 %v1409
      %1422 = vmatprep.subr.bf16.mxu0 0
      %1423 = vmatpush1.bf16.xpose.msra.mxu0 %v1412
      %1424 = vmatprep.subr.bf16.mxu0 0
      %1425 = vmatpush1.bf16.xpose.msra.mxu0 %v1415
      %1426 = vmatprep.subr.bf16.mxu0 0
      %1427 = vmatpush1.bf16.xpose.msra.mxu0 %v1418
      %1428 = vmatprep.subr.bf16.mxu0 0
      %1429 = vmatpush1.bf16.xpose.msra.mxu0 0
      %1430 = vmatprep.subr.bf16.mxu0 0
      %1431 = vmatpush1.bf16.xpose.msra.mxu0 0
      %1432 = vmatprep.subr.bf16.mxu0 0
      %1433 = vmatpush1.bf16.xpose.msra.mxu0 0
      %1434 = vmatprep.subr.bf16.mxu0 0
      %1435 = vmatpush1.bf16.xpose.msra.mxu0 0
      %1436 = vmatprep.subr.bf16.mxu0 0
      %1437 = vmatpush1.bf16.xpose.msra.mxu0 0
      %1438 = vmatprep.subr.bf16.mxu0 0
      %1439 = vmatpush1.bf16.xpose.msra.mxu0 0
      %1440 = vmatprep.subr.bf16.mxu0 0
      %1441 = vmatpush1.bf16.xpose.msra.mxu0 0
      %1442 = vmatprep.subr.bf16.mxu0 0
      %1443 = vmatpush1.bf16.xpose.msra.mxu0 0
      %1444 = vmatprep.subr.bf16.mxu0 0
      %1445 = vmatpush1.bf16.xpose.msra.mxu0 0
      %1446 = vmatprep.subr.bf16.mxu0 0
      %1447 = vmatpush1.bf16.xpose.msra.mxu0 0
      %1448 = vmatprep.subr.bf16.mxu0 0
      %1449 = vmatpush1.bf16.xpose.msra.mxu0 0
      %1450 = vmatprep.subr.bf16.mxu0 0
      %1451 = vmatpush1.bf16.xpose.msra.mxu0 0
      %1452 = vmatprep.mubr.bf16.mxu0 0
      %1453 = vmatmul.mubr.bf16.gmra.mrb[0].mxu0 %v1397
      %v1454 = vpop.f32.mrb[0].mxu0
      %v1455 = vadd.f32 0.0, %v1454
      %v1456 = vpop.f32.mrb[0].mxu0
      %v1457 = vpop.f32.mrb[0].mxu0
      %v1458 = vadd.f32 0.0, %v1457
      %v1459 = vpop.f32.mrb[0].mxu0
      %1460 = vmatprep.mubr.bf16.mxu0 0
      %1461 = vmatmul.mubr.bf16.gmra.mrb[0].mxu0 %v1400
      %v1462 = vpop.f32.mrb[0].mxu0
      %v1463 = vadd.f32 0.0, %v1462
      %v1464 = vpop.f32.mrb[0].mxu0
      %v1465 = vpop.f32.mrb[0].mxu0
      %v1466 = vadd.f32 0.0, %v1465
      %v1467 = vpop.f32.mrb[0].mxu0
      %1468 = vmatprep.mubr.bf16.mxu0 0
      %1469 = vmatmul.mubr.bf16.gmra.mrb[0].mxu0 %v1403
      %v1470 = vpop.f32.mrb[0].mxu0
      %v1471 = vadd.f32 0.0, %v1470
      %v1472 = vpop.f32.mrb[0].mxu0
      %v1473 = vpop.f32.mrb[0].mxu0
      %v1474 = vadd.f32 0.0, %v1473
      %v1475 = vpop.f32.mrb[0].mxu0
      %1476 = vmatprep.mubr.bf16.mxu0 0
      %1477 = vmatmul.mubr.bf16.gmra.mrb[0].mxu0 %v1406
      %v1478 = vpop.f32.mrb[0].mxu0
      %v1479 = vadd.f32 0.0, %v1478
      %v1480 = vpop.f32.mrb[0].mxu0
      %v1481 = vpop.f32.mrb[0].mxu0
      %v1482 = vadd.f32 0.0, %v1481
      %v1483 = vpop.f32.mrb[0].mxu0
      %1484 = vdwg.mxu0
      %v1493 = vunpack.c.l.b16 %v276
      %v1494 = vunpack.c.l.b16 %v277
      %v1495 = vunpack.c.l.b16 %v278
      %v1496 = vunpack.c.l.b16 %v279
      %v1497 = vunpack.c.l.b16 %v280
      %v1498 = vunpack.c.l.b16 %v281
      %v1499 = vunpack.c.l.b16 %v282
      %v1500 = vunpack.c.l.b16 %v283
      %v1501 = vpack.c.b16 %v1494, %v1493
      %v1502 = vpack.c.b16 %v1496, %v1495
      %v1503 = vpack.c.b16 %v1498, %v1497
      %v1504 = vpack.c.b16 %v1500, %v1499
      %v1513 = vunpack.c.l.b16 %v356
      %v1514 = vunpack.c.l.b16 %v357
      %v1515 = vunpack.c.l.b16 %v358
      %v1516 = vunpack.c.l.b16 %v359
      %v1517 = vunpack.c.l.b16 %v360
      %v1518 = vunpack.c.l.b16 %v361
      %v1519 = vunpack.c.l.b16 %v362
      %v1520 = vunpack.c.l.b16 %v363
      %v1521 = vpack.c.b16 %v1514, %v1513
      %v1522 = vpack.c.b16 %v1516, %v1515
      %v1523 = vpack.c.b16 %v1518, %v1517
      %v1524 = vpack.c.b16 %v1520, %v1519
      %v1526 = vsel %vm492, %v1501, 0
      %v1529 = vsel %vm492, %v1502, 0
      %v1532 = vsel %vm492, %v1503, 0
      %v1535 = vsel %vm492, %v1504, 0
      %v1538 = vsel %vm492, %v1521, 0
      %v1541 = vsel %vm492, %v1522, 0
      %v1544 = vsel %vm492, %v1523, 0
      %v1547 = vsel %vm492, %v1524, 0
      %1549 = vmatprep.subr.bf16.mxu0 0
      %1550 = vmatpush1.bf16.xpose.msra.mxu0 %v1538
      %1551 = vmatprep.subr.bf16.mxu0 0
      %1552 = vmatpush1.bf16.xpose.msra.mxu0 %v1541
      %1553 = vmatprep.subr.bf16.mxu0 0
      %1554 = vmatpush1.bf16.xpose.msra.mxu0 %v1544
      %1555 = vmatprep.subr.bf16.mxu0 0
      %1556 = vmatpush1.bf16.xpose.msra.mxu0 %v1547
      %1557 = vmatprep.subr.bf16.mxu0 0
      %1558 = vmatpush1.bf16.xpose.msra.mxu0 0
      %1559 = vmatprep.subr.bf16.mxu0 0
      %1560 = vmatpush1.bf16.xpose.msra.mxu0 0
      %1561 = vmatprep.subr.bf16.mxu0 0
      %1562 = vmatpush1.bf16.xpose.msra.mxu0 0
      %1563 = vmatprep.subr.bf16.mxu0 0
      %1564 = vmatpush1.bf16.xpose.msra.mxu0 0
      %1565 = vmatprep.subr.bf16.mxu0 0
      %1566 = vmatpush1.bf16.xpose.msra.mxu0 0
      %1567 = vmatprep.subr.bf16.mxu0 0
      %1568 = vmatpush1.bf16.xpose.msra.mxu0 0
      %1569 = vmatprep.subr.bf16.mxu0 0
      %1570 = vmatpush1.bf16.xpose.msra.mxu0 0
      %1571 = vmatprep.subr.bf16.mxu0 0
      %1572 = vmatpush1.bf16.xpose.msra.mxu0 0
      %1573 = vmatprep.subr.bf16.mxu0 0
      %1574 = vmatpush1.bf16.xpose.msra.mxu0 0
      %1575 = vmatprep.subr.bf16.mxu0 0
      %1576 = vmatpush1.bf16.xpose.msra.mxu0 0
      %1577 = vmatprep.subr.bf16.mxu0 0
      %1578 = vmatpush1.bf16.xpose.msra.mxu0 0
      %1579 = vmatprep.subr.bf16.mxu0 0
      %1580 = vmatpush1.bf16.xpose.msra.mxu0 0
      %1581 = vmatprep.mubr.bf16.mxu0 0
      %1582 = vmatmul.mubr.bf16.gmra.mrb[0].mxu0 %v1526
      %v1583 = vpop.f32.mrb[0].mxu0
      %v1584 = vadd.f32 0.0, %v1583
      %v1585 = vpop.f32.mrb[0].mxu0
      %v1586 = vpop.f32.mrb[0].mxu0
      %v1587 = vadd.f32 0.0, %v1586
      %v1588 = vpop.f32.mrb[0].mxu0
      %1589 = vmatprep.mubr.bf16.mxu0 0
      %1590 = vmatmul.mubr.bf16.gmra.mrb[0].mxu0 %v1529
      %v1591 = vpop.f32.mrb[0].mxu0
      %v1592 = vadd.f32 0.0, %v1591
      %v1593 = vpop.f32.mrb[0].mxu0
      %v1594 = vpop.f32.mrb[0].mxu0
      %v1595 = vadd.f32 0.0, %v1594
      %v1596 = vpop.f32.mrb[0].mxu0
      %1597 = vmatprep.mubr.bf16.mxu0 0
      %1598 = vmatmul.mubr.bf16.gmra.mrb[0].mxu0 %v1532
      %v1599 = vpop.f32.mrb[0].mxu0
      %v1600 = vadd.f32 0.0, %v1599
      %v1601 = vpop.f32.mrb[0].mxu0
      %v1602 = vpop.f32.mrb[0].mxu0
      %v1603 = vadd.f32 0.0, %v1602
      %v1604 = vpop.f32.mrb[0].mxu0
      %1605 = vmatprep.mubr.bf16.mxu0 0
      %1606 = vmatmul.mubr.bf16.gmra.mrb[0].mxu0 %v1535
      %v1607 = vpop.f32.mrb[0].mxu0
      %v1608 = vadd.f32 0.0, %v1607
      %v1609 = vpop.f32.mrb[0].mxu0
      %v1610 = vpop.f32.mrb[0].mxu0
      %v1611 = vadd.f32 0.0, %v1610
      %v1612 = vpop.f32.mrb[0].mxu0
      %1613 = vdwg.mxu0
      %v1622 = vunpack.c.l.b16 %v284
      %v1623 = vunpack.c.l.b16 %v285
      %v1624 = vunpack.c.l.b16 %v286
      %v1625 = vunpack.c.l.b16 %v287
      %v1626 = vunpack.c.l.b16 %v288
      %v1627 = vunpack.c.l.b16 %v289
      %v1628 = vunpack.c.l.b16 %v290
      %v1629 = vunpack.c.l.b16 %v291
      %v1630 = vpack.c.b16 %v1623, %v1622
      %v1631 = vpack.c.b16 %v1625, %v1624
      %v1632 = vpack.c.b16 %v1627, %v1626
      %v1633 = vpack.c.b16 %v1629, %v1628
      %v1642 = vunpack.c.l.b16 %v364
      %v1643 = vunpack.c.l.b16 %v365
      %v1644 = vunpack.c.l.b16 %v366
      %v1645 = vunpack.c.l.b16 %v367
      %v1646 = vunpack.c.l.b16 %v368
      %v1647 = vunpack.c.l.b16 %v369
      %v1648 = vunpack.c.l.b16 %v370
      %v1649 = vunpack.c.l.b16 %v371
      %v1650 = vpack.c.b16 %v1643, %v1642
      %v1651 = vpack.c.b16 %v1645, %v1644
      %v1652 = vpack.c.b16 %v1647, %v1646
      %v1653 = vpack.c.b16 %v1649, %v1648
      %v1655 = vsel %vm492, %v1630, 0
      %v1658 = vsel %vm492, %v1631, 0
      %v1661 = vsel %vm492, %v1632, 0
      %v1664 = vsel %vm492, %v1633, 0
      %v1667 = vsel %vm492, %v1650, 0
      %v1670 = vsel %vm492, %v1651, 0
      %v1673 = vsel %vm492, %v1652, 0
      %v1676 = vsel %vm492, %v1653, 0
      %1678 = vmatprep.subr.bf16.mxu0 0
      %1679 = vmatpush1.bf16.xpose.msra.mxu0 %v1667
      %1680 = vmatprep.subr.bf16.mxu0 0
      %1681 = vmatpush1.bf16.xpose.msra.mxu0 %v1670
      %1682 = vmatprep.subr.bf16.mxu0 0
      %1683 = vmatpush1.bf16.xpose.msra.mxu0 %v1673
      %1684 = vmatprep.subr.bf16.mxu0 0
      %1685 = vmatpush1.bf16.xpose.msra.mxu0 %v1676
      %1686 = vmatprep.subr.bf16.mxu0 0
      %1687 = vmatpush1.bf16.xpose.msra.mxu0 0
      %1688 = vmatprep.subr.bf16.mxu0 0
      %1689 = vmatpush1.bf16.xpose.msra.mxu0 0
      %1690 = vmatprep.subr.bf16.mxu0 0
      %1691 = vmatpush1.bf16.xpose.msra.mxu0 0
      %1692 = vmatprep.subr.bf16.mxu0 0
      %1693 = vmatpush1.bf16.xpose.msra.mxu0 0
      %1694 = vmatprep.subr.bf16.mxu0 0
      %1695 = vmatpush1.bf16.xpose.msra.mxu0 0
      %1696 = vmatprep.subr.bf16.mxu0 0
      %1697 = vmatpush1.bf16.xpose.msra.mxu0 0
      %1698 = vmatprep.subr.bf16.mxu0 0
      %1699 = vmatpush1.bf16.xpose.msra.mxu0 0
      %1700 = vmatprep.subr.bf16.mxu0 0
      %1701 = vmatpush1.bf16.xpose.msra.mxu0 0
      %1702 = vmatprep.subr.bf16.mxu0 0
      %1703 = vmatpush1.bf16.xpose.msra.mxu0 0
      %1704 = vmatprep.subr.bf16.mxu0 0
      %1705 = vmatpush1.bf16.xpose.msra.mxu0 0
      %1706 = vmatprep.subr.bf16.mxu0 0
      %1707 = vmatpush1.bf16.xpose.msra.mxu0 0
      %1708 = vmatprep.subr.bf16.mxu0 0
      %1709 = vmatpush1.bf16.xpose.msra.mxu0 0
      %1710 = vmatprep.mubr.bf16.mxu0 0
      %1711 = vmatmul.mubr.bf16.gmra.mrb[0].mxu0 %v1655
      %v1712 = vpop.f32.mrb[0].mxu0
      %v1713 = vadd.f32 0.0, %v1712
      %v1714 = vpop.f32.mrb[0].mxu0
      %v1715 = vpop.f32.mrb[0].mxu0
      %v1716 = vadd.f32 0.0, %v1715
      %v1717 = vpop.f32.mrb[0].mxu0
      %1718 = vmatprep.mubr.bf16.mxu0 0
      %1719 = vmatmul.mubr.bf16.gmra.mrb[0].mxu0 %v1658
      %v1720 = vpop.f32.mrb[0].mxu0
      %v1721 = vadd.f32 0.0, %v1720
      %v1722 = vpop.f32.mrb[0].mxu0
      %v1723 = vpop.f32.mrb[0].mxu0
      %v1724 = vadd.f32 0.0, %v1723
      %v1725 = vpop.f32.mrb[0].mxu0
      %1726 = vmatprep.mubr.bf16.mxu0 0
      %1727 = vmatmul.mubr.bf16.gmra.mrb[0].mxu0 %v1661
      %v1728 = vpop.f32.mrb[0].mxu0
      %v1729 = vadd.f32 0.0, %v1728
      %v1730 = vpop.f32.mrb[0].mxu0
      %v1731 = vpop.f32.mrb[0].mxu0
      %v1732 = vadd.f32 0.0, %v1731
      %v1733 = vpop.f32.mrb[0].mxu0
      %1734 = vmatprep.mubr.bf16.mxu0 0
      %1735 = vmatmul.mubr.bf16.gmra.mrb[0].mxu0 %v1664
      %v1736 = vpop.f32.mrb[0].mxu0
      %v1737 = vadd.f32 0.0, %v1736
      %v1738 = vpop.f32.mrb[0].mxu0
      %v1739 = vpop.f32.mrb[0].mxu0
      %v1740 = vadd.f32 0.0, %v1739
      %v1741 = vpop.f32.mrb[0].mxu0
      %1742 = vdwg.mxu0
      %vm1743 = vcmask 523264
      %v1744 = vsel %vm1743, %v552, -inf
      %1745 = vmax.xlane.f32.xlu0 %v1744
      %v1746 = vpop.xlane.xlu0 %1745
      %v1747 = vsel %vm1743, %v555, -inf
      %1748 = vmax.xlane.f32.xlu0 %v1747
      %v1749 = vpop.xlane.xlu0 %1748
      %v1750 = vsel %vm1743, %v560, -inf
      %1751 = vmax.xlane.f32.xlu0 %v1750
      %v1752 = vpop.xlane.xlu0 %1751
      %v1753 = vsel %vm1743, %v563, -inf
      %1754 = vmax.xlane.f32.xlu0 %v1753
      %v1755 = vpop.xlane.xlu0 %1754
      %v1756 = vsel %vm1743, %v568, -inf
      %1757 = vmax.xlane.f32.xlu0 %v1756
      %v1758 = vpop.xlane.xlu0 %1757
      %v1759 = vsel %vm1743, %v571, -inf
      %1760 = vmax.xlane.f32.xlu0 %v1759
      %v1761 = vpop.xlane.xlu0 %1760
      %v1762 = vsel %vm1743, %v576, -inf
      %1763 = vmax.xlane.f32.xlu0 %v1762
      %v1764 = vpop.xlane.xlu0 %1763
      %v1765 = vsel %vm1743, %v579, -inf
      %1766 = vmax.xlane.f32.xlu0 %v1765
      %v1767 = vpop.xlane.xlu0 %1766
      %v1768 = vsel %vm1743, %v681, -inf
      %1769 = vmax.xlane.f32.xlu0 %v1768
      %v1770 = vpop.xlane.xlu0 %1769
      %v1771 = vsel %vm1743, %v684, -inf
      %1772 = vmax.xlane.f32.xlu0 %v1771
      %v1773 = vpop.xlane.xlu0 %1772
      %v1774 = vsel %vm1743, %v689, -inf
      %1775 = vmax.xlane.f32.xlu0 %v1774
      %v1776 = vpop.xlane.xlu0 %1775
      %v1777 = vsel %vm1743, %v692, -inf
      %1778 = vmax.xlane.f32.xlu0 %v1777
      %v1779 = vpop.xlane.xlu0 %1778
      %v1780 = vsel %vm1743, %v697, -inf
      %1781 = vmax.xlane.f32.xlu0 %v1780
      %v1782 = vpop.xlane.xlu0 %1781
      %v1783 = vsel %vm1743, %v700, -inf
      %1784 = vmax.xlane.f32.xlu0 %v1783
      %v1785 = vpop.xlane.xlu0 %1784
      %v1786 = vsel %vm1743, %v705, -inf
      %1787 = vmax.xlane.f32.xlu0 %v1786
      %v1788 = vpop.xlane.xlu0 %1787
      %v1789 = vsel %vm1743, %v708, -inf
      %1790 = vmax.xlane.f32.xlu0 %v1789
      %v1791 = vpop.xlane.xlu0 %1790
      %v1792 = vsel %vm1743, %v810, -inf
      %1793 = vmax.xlane.f32.xlu0 %v1792
      %v1794 = vpop.xlane.xlu0 %1793
      %v1795 = vsel %vm1743, %v813, -inf
      %1796 = vmax.xlane.f32.xlu0 %v1795
      %v1797 = vpop.xlane.xlu0 %1796
      %v1798 = vsel %vm1743, %v818, -inf
      %1799 = vmax.xlane.f32.xlu0 %v1798
      %v1800 = vpop.xlane.xlu0 %1799
      %v1801 = vsel %vm1743, %v821, -inf
      %1802 = vmax.xlane.f32.xlu0 %v1801
      %v1803 = vpop.xlane.xlu0 %1802
      %v1804 = vsel %vm1743, %v826, -inf
      %1805 = vmax.xlane.f32.xlu0 %v1804
      %v1806 = vpop.xlane.xlu0 %1805
      %v1807 = vsel %vm1743, %v829, -inf
      %1808 = vmax.xlane.f32.xlu0 %v1807
      %v1809 = vpop.xlane.xlu0 %1808
      %v1810 = vsel %vm1743, %v834, -inf
      %1811 = vmax.xlane.f32.xlu0 %v1810
      %v1812 = vpop.xlane.xlu0 %1811
      %v1813 = vsel %vm1743, %v837, -inf
      %1814 = vmax.xlane.f32.xlu0 %v1813
      %v1815 = vpop.xlane.xlu0 %1814
      %v1816 = vsel %vm1743, %v939, -inf
      %1817 = vmax.xlane.f32.xlu0 %v1816
      %v1818 = vpop.xlane.xlu0 %1817
      %v1819 = vsel %vm1743, %v942, -inf
      %1820 = vmax.xlane.f32.xlu0 %v1819
      %v1821 = vpop.xlane.xlu0 %1820
      %v1822 = vsel %vm1743, %v947, -inf
      %1823 = vmax.xlane.f32.xlu0 %v1822
      %v1824 = vpop.xlane.xlu0 %1823
      %v1825 = vsel %vm1743, %v950, -inf
      %1826 = vmax.xlane.f32.xlu0 %v1825
      %v1827 = vpop.xlane.xlu0 %1826
      %v1828 = vsel %vm1743, %v955, -inf
      %1829 = vmax.xlane.f32.xlu0 %v1828
      %v1830 = vpop.xlane.xlu0 %1829
      %v1831 = vsel %vm1743, %v958, -inf
      %1832 = vmax.xlane.f32.xlu0 %v1831
      %v1833 = vpop.xlane.xlu0 %1832
      %v1834 = vsel %vm1743, %v963, -inf
      %1835 = vmax.xlane.f32.xlu0 %v1834
      %v1836 = vpop.xlane.xlu0 %1835
      %v1837 = vsel %vm1743, %v966, -inf
      %1838 = vmax.xlane.f32.xlu0 %v1837
      %v1839 = vpop.xlane.xlu0 %1838
      %v1840 = vsel %vm1743, %v1068, -inf
      %1841 = vmax.xlane.f32.xlu0 %v1840
      %v1842 = vpop.xlane.xlu0 %1841
      %v1843 = vsel %vm1743, %v1071, -inf
      %1844 = vmax.xlane.f32.xlu0 %v1843
      %v1845 = vpop.xlane.xlu0 %1844
      %v1846 = vsel %vm1743, %v1076, -inf
      %1847 = vmax.xlane.f32.xlu0 %v1846
      %v1848 = vpop.xlane.xlu0 %1847
      %v1849 = vsel %vm1743, %v1079, -inf
      %1850 = vmax.xlane.f32.xlu0 %v1849
      %v1851 = vpop.xlane.xlu0 %1850
      %v1852 = vsel %vm1743, %v1084, -inf
      %1853 = vmax.xlane.f32.xlu0 %v1852
      %v1854 = vpop.xlane.xlu0 %1853
      %v1855 = vsel %vm1743, %v1087, -inf
      %1856 = vmax.xlane.f32.xlu0 %v1855
      %v1857 = vpop.xlane.xlu0 %1856
      %v1858 = vsel %vm1743, %v1092, -inf
      %1859 = vmax.xlane.f32.xlu0 %v1858
      %v1860 = vpop.xlane.xlu0 %1859
      %v1861 = vsel %vm1743, %v1095, -inf
      %1862 = vmax.xlane.f32.xlu0 %v1861
      %v1863 = vpop.xlane.xlu0 %1862
      %v1864 = vsel %vm1743, %v1197, -inf
      %1865 = vmax.xlane.f32.xlu0 %v1864
      %v1866 = vpop.xlane.xlu0 %1865
      %v1867 = vsel %vm1743, %v1200, -inf
      %1868 = vmax.xlane.f32.xlu0 %v1867
      %v1869 = vpop.xlane.xlu0 %1868
      %v1870 = vsel %vm1743, %v1205, -inf
      %1871 = vmax.xlane.f32.xlu0 %v1870
      %v1872 = vpop.xlane.xlu0 %1871
      %v1873 = vsel %vm1743, %v1208, -inf
      %1874 = vmax.xlane.f32.xlu0 %v1873
      %v1875 = vpop.xlane.xlu0 %1874
      %v1876 = vsel %vm1743, %v1213, -inf
      %1877 = vmax.xlane.f32.xlu0 %v1876
      %v1878 = vpop.xlane.xlu0 %1877
      %v1879 = vsel %vm1743, %v1216, -inf
      %1880 = vmax.xlane.f32.xlu0 %v1879
      %v1881 = vpop.xlane.xlu0 %1880
      %v1882 = vsel %vm1743, %v1221, -inf
      %1883 = vmax.xlane.f32.xlu0 %v1882
      %v1884 = vpop.xlane.xlu0 %1883
      %v1885 = vsel %vm1743, %v1224, -inf
      %1886 = vmax.xlane.f32.xlu0 %v1885
      %v1887 = vpop.xlane.xlu0 %1886
      %v1888 = vsel %vm1743, %v1326, -inf
      %1889 = vmax.xlane.f32.xlu0 %v1888
      %v1890 = vpop.xlane.xlu0 %1889
      %v1891 = vsel %vm1743, %v1329, -inf
      %1892 = vmax.xlane.f32.xlu0 %v1891
      %v1893 = vpop.xlane.xlu0 %1892
      %v1894 = vsel %vm1743, %v1334, -inf
      %1895 = vmax.xlane.f32.xlu0 %v1894
      %v1896 = vpop.xlane.xlu0 %1895
      %v1897 = vsel %vm1743, %v1337, -inf
      %1898 = vmax.xlane.f32.xlu0 %v1897
      %v1899 = vpop.xlane.xlu0 %1898
      %v1900 = vsel %vm1743, %v1342, -inf
      %1901 = vmax.xlane.f32.xlu0 %v1900
      %v1902 = vpop.xlane.xlu0 %1901
      %v1903 = vsel %vm1743, %v1345, -inf
      %1904 = vmax.xlane.f32.xlu0 %v1903
      %v1905 = vpop.xlane.xlu0 %1904
      %v1906 = vsel %vm1743, %v1350, -inf
      %1907 = vmax.xlane.f32.xlu0 %v1906
      %v1908 = vpop.xlane.xlu0 %1907
      %v1909 = vsel %vm1743, %v1353, -inf
      %1910 = vmax.xlane.f32.xlu0 %v1909
      %v1911 = vpop.xlane.xlu0 %1910
      %v1912 = vsel %vm1743, %v1455, -inf
      %1913 = vmax.xlane.f32.xlu0 %v1912
      %v1914 = vpop.xlane.xlu0 %1913
      %v1915 = vsel %vm1743, %v1458, -inf
      %1916 = vmax.xlane.f32.xlu0 %v1915
      %v1917 = vpop.xlane.xlu0 %1916
      %v1918 = vsel %vm1743, %v1463, -inf
      %1919 = vmax.xlane.f32.xlu0 %v1918
      %v1920 = vpop.xlane.xlu0 %1919
      %v1921 = vsel %vm1743, %v1466, -inf
      %1922 = vmax.xlane.f32.xlu0 %v1921
      %v1923 = vpop.xlane.xlu0 %1922
      %v1924 = vsel %vm1743, %v1471, -inf
      %1925 = vmax.xlane.f32.xlu0 %v1924
      %v1926 = vpop.xlane.xlu0 %1925
      %v1927 = vsel %vm1743, %v1474, -inf
      %1928 = vmax.xlane.f32.xlu0 %v1927
      %v1929 = vpop.xlane.xlu0 %1928
      %v1930 = vsel %vm1743, %v1479, -inf
      %1931 = vmax.xlane.f32.xlu0 %v1930
      %v1932 = vpop.xlane.xlu0 %1931
      %v1933 = vsel %vm1743, %v1482, -inf
      %1934 = vmax.xlane.f32.xlu0 %v1933
      %v1935 = vpop.xlane.xlu0 %1934
      %v1936 = vsel %vm1743, %v1584, -inf
      %1937 = vmax.xlane.f32.xlu0 %v1936
      %v1938 = vpop.xlane.xlu0 %1937
      %v1939 = vsel %vm1743, %v1587, -inf
      %1940 = vmax.xlane.f32.xlu0 %v1939
      %v1941 = vpop.xlane.xlu0 %1940
      %v1942 = vsel %vm1743, %v1592, -inf
      %1943 = vmax.xlane.f32.xlu0 %v1942
      %v1944 = vpop.xlane.xlu0 %1943
      %v1945 = vsel %vm1743, %v1595, -inf
      %1946 = vmax.xlane.f32.xlu0 %v1945
      %v1947 = vpop.xlane.xlu0 %1946
      %v1948 = vsel %vm1743, %v1600, -inf
      %1949 = vmax.xlane.f32.xlu0 %v1948
      %v1950 = vpop.xlane.xlu0 %1949
      %v1951 = vsel %vm1743, %v1603, -inf
      %1952 = vmax.xlane.f32.xlu0 %v1951
      %v1953 = vpop.xlane.xlu0 %1952
      %v1954 = vsel %vm1743, %v1608, -inf
      %1955 = vmax.xlane.f32.xlu0 %v1954
      %v1956 = vpop.xlane.xlu0 %1955
      %v1957 = vsel %vm1743, %v1611, -inf
      %1958 = vmax.xlane.f32.xlu0 %v1957
      %v1959 = vpop.xlane.xlu0 %1958
      %v1960 = vsel %vm1743, %v1713, -inf
      %1961 = vmax.xlane.f32.xlu0 %v1960
      %v1962 = vpop.xlane.xlu0 %1961
      %v1963 = vsel %vm1743, %v1716, -inf
      %1964 = vmax.xlane.f32.xlu0 %v1963
      %v1965 = vpop.xlane.xlu0 %1964
      %v1966 = vsel %vm1743, %v1721, -inf
      %1967 = vmax.xlane.f32.xlu0 %v1966
      %v1968 = vpop.xlane.xlu0 %1967
      %v1969 = vsel %vm1743, %v1724, -inf
      %1970 = vmax.xlane.f32.xlu0 %v1969
      %v1971 = vpop.xlane.xlu0 %1970
      %v1972 = vsel %vm1743, %v1729, -inf
      %1973 = vmax.xlane.f32.xlu0 %v1972
      %v1974 = vpop.xlane.xlu0 %1973
      %v1975 = vsel %vm1743, %v1732, -inf
      %1976 = vmax.xlane.f32.xlu0 %v1975
      %v1977 = vpop.xlane.xlu0 %1976
      %v1978 = vsel %vm1743, %v1737, -inf
      %1979 = vmax.xlane.f32.xlu0 %v1978
      %v1980 = vpop.xlane.xlu0 %1979
      %v1981 = vsel %vm1743, %v1740, -inf
      %1982 = vmax.xlane.f32.xlu0 %v1981
      %v1983 = vpop.xlane.xlu0 %1982
      %v1984 = vsub.f32 %v552, %v1746
      %v1985 = vsub.f32 %v555, %v1749
      %v1986 = vsub.f32 %v560, %v1752
      %v1987 = vsub.f32 %v563, %v1755
      %v1988 = vsub.f32 %v568, %v1758
      %v1989 = vsub.f32 %v571, %v1761
      %v1990 = vsub.f32 %v576, %v1764
      %v1991 = vsub.f32 %v579, %v1767
      %v1992 = vsub.f32 %v681, %v1770
      %v1993 = vsub.f32 %v684, %v1773
      %v1994 = vsub.f32 %v689, %v1776
      %v1995 = vsub.f32 %v692, %v1779
      %v1996 = vsub.f32 %v697, %v1782
      %v1997 = vsub.f32 %v700, %v1785
      %v1998 = vsub.f32 %v705, %v1788
      %v1999 = vsub.f32 %v708, %v1791
      %v2000 = vsub.f32 %v810, %v1794
      %v2001 = vsub.f32 %v813, %v1797
      %v2002 = vsub.f32 %v818, %v1800
      %v2003 = vsub.f32 %v821, %v1803
      %v2004 = vsub.f32 %v826, %v1806
      %v2005 = vsub.f32 %v829, %v1809
      %v2006 = vsub.f32 %v834, %v1812
      %v2007 = vsub.f32 %v837, %v1815
      %v2008 = vsub.f32 %v939, %v1818
      %v2009 = vsub.f32 %v942, %v1821
      %v2010 = vsub.f32 %v947, %v1824
      %v2011 = vsub.f32 %v950, %v1827
      %v2012 = vsub.f32 %v955, %v1830
      %v2013 = vsub.f32 %v958, %v1833
      %v2014 = vsub.f32 %v963, %v1836
      %v2015 = vsub.f32 %v966, %v1839
      %v2016 = vsub.f32 %v1068, %v1842
      %v2017 = vsub.f32 %v1071, %v1845
      %v2018 = vsub.f32 %v1076, %v1848
      %v2019 = vsub.f32 %v1079, %v1851
      %v2020 = vsub.f32 %v1084, %v1854
      %v2021 = vsub.f32 %v1087, %v1857
      %v2022 = vsub.f32 %v1092, %v1860
      %v2023 = vsub.f32 %v1095, %v1863
      %v2024 = vsub.f32 %v1197, %v1866
      %v2025 = vsub.f32 %v1200, %v1869
      %v2026 = vsub.f32 %v1205, %v1872
      %v2027 = vsub.f32 %v1208, %v1875
      %v2028 = vsub.f32 %v1213, %v1878
      %v2029 = vsub.f32 %v1216, %v1881
      %v2030 = vsub.f32 %v1221, %v1884
      %v2031 = vsub.f32 %v1224, %v1887
      %v2032 = vsub.f32 %v1326, %v1890
      %v2033 = vsub.f32 %v1329, %v1893
      %v2034 = vsub.f32 %v1334, %v1896
      %v2035 = vsub.f32 %v1337, %v1899
      %v2036 = vsub.f32 %v1342, %v1902
      %v2037 = vsub.f32 %v1345, %v1905
      %v2038 = vsub.f32 %v1350, %v1908
      %v2039 = vsub.f32 %v1353, %v1911
      %v2040 = vsub.f32 %v1455, %v1914
      %v2041 = vsub.f32 %v1458, %v1917
      %v2042 = vsub.f32 %v1463, %v1920
      %v2043 = vsub.f32 %v1466, %v1923
      %v2044 = vsub.f32 %v1471, %v1926
      %v2045 = vsub.f32 %v1474, %v1929
      %v2046 = vsub.f32 %v1479, %v1932
      %v2047 = vsub.f32 %v1482, %v1935
      %v2048 = vsub.f32 %v1584, %v1938
      %v2049 = vsub.f32 %v1587, %v1941
      %v2050 = vsub.f32 %v1592, %v1944
      %v2051 = vsub.f32 %v1595, %v1947
      %v2052 = vsub.f32 %v1600, %v1950
      %v2053 = vsub.f32 %v1603, %v1953
      %v2054 = vsub.f32 %v1608, %v1956
      %v2055 = vsub.f32 %v1611, %v1959
      %v2056 = vsub.f32 %v1713, %v1962
      %v2057 = vsub.f32 %v1716, %v1965
      %v2058 = vsub.f32 %v1721, %v1968
      %v2059 = vsub.f32 %v1724, %v1971
      %v2060 = vsub.f32 %v1729, %v1974
      %v2061 = vsub.f32 %v1732, %v1977
      %v2062 = vsub.f32 %v1737, %v1980
      %v2063 = vsub.f32 %v1740, %v1983
      %v2064 = vmul.f32 %v1984, 1.442695
      %v2065 = vpow.pop %v2064
      %v2066 = vmul.f32 %v1985, 1.442695
      %v2067 = vpow.pop %v2066
      %v2068 = vmul.f32 %v1986, 1.442695
      %v2069 = vpow.pop %v2068
      %v2070 = vmul.f32 %v1987, 1.442695
      %v2071 = vpow.pop %v2070
      %v2072 = vmul.f32 %v1988, 1.442695
      %v2073 = vpow.pop %v2072
      %v2074 = vmul.f32 %v1989, 1.442695
      %v2075 = vpow.pop %v2074
      %v2076 = vmul.f32 %v1990, 1.442695
      %v2077 = vpow.pop %v2076
      %v2078 = vmul.f32 %v1991, 1.442695
      %v2079 = vpow.pop %v2078
      %v2080 = vmul.f32 %v1992, 1.442695
      %v2081 = vpow.pop %v2080
      %v2082 = vmul.f32 %v1993, 1.442695
      %v2083 = vpow.pop %v2082
      %v2084 = vmul.f32 %v1994, 1.442695
      %v2085 = vpow.pop %v2084
      %v2086 = vmul.f32 %v1995, 1.442695
      %v2087 = vpow.pop %v2086
      %v2088 = vmul.f32 %v1996, 1.442695
      %v2089 = vpow.pop %v2088
      %v2090 = vmul.f32 %v1997, 1.442695
      %v2091 = vpow.pop %v2090
      %v2092 = vmul.f32 %v1998, 1.442695
      %v2093 = vpow.pop %v2092
      %v2094 = vmul.f32 %v1999, 1.442695
      %v2095 = vpow.pop %v2094
      %v2096 = vmul.f32 %v2000, 1.442695
      %v2097 = vpow.pop %v2096
      %v2098 = vmul.f32 %v2001, 1.442695
      %v2099 = vpow.pop %v2098
      %v2100 = vmul.f32 %v2002, 1.442695
      %v2101 = vpow.pop %v2100
      %v2102 = vmul.f32 %v2003, 1.442695
      %v2103 = vpow.pop %v2102
      %v2104 = vmul.f32 %v2004, 1.442695
      %v2105 = vpow.pop %v2104
      %v2106 = vmul.f32 %v2005, 1.442695
      %v2107 = vpow.pop %v2106
      %v2108 = vmul.f32 %v2006, 1.442695
      %v2109 = vpow.pop %v2108
      %v2110 = vmul.f32 %v2007, 1.442695
      %v2111 = vpow.pop %v2110
      %v2112 = vmul.f32 %v2008, 1.442695
      %v2113 = vpow.pop %v2112
      %v2114 = vmul.f32 %v2009, 1.442695
      %v2115 = vpow.pop %v2114
      %v2116 = vmul.f32 %v2010, 1.442695
      %v2117 = vpow.pop %v2116
      %v2118 = vmul.f32 %v2011, 1.442695
      %v2119 = vpow.pop %v2118
      %v2120 = vmul.f32 %v2012, 1.442695
      %v2121 = vpow.pop %v2120
      %v2122 = vmul.f32 %v2013, 1.442695
      %v2123 = vpow.pop %v2122
      %v2124 = vmul.f32 %v2014, 1.442695
      %v2125 = vpow.pop %v2124
      %v2126 = vmul.f32 %v2015, 1.442695
      %v2127 = vpow.pop %v2126
      %v2128 = vmul.f32 %v2016, 1.442695
      %v2129 = vpow.pop %v2128
      %v2130 = vmul.f32 %v2017, 1.442695
      %v2131 = vpow.pop %v2130
      %v2132 = vmul.f32 %v2018, 1.442695
      %v2133 = vpow.pop %v2132
      %v2134 = vmul.f32 %v2019, 1.442695
      %v2135 = vpow.pop %v2134
      %v2136 = vmul.f32 %v2020, 1.442695
      %v2137 = vpow.pop %v2136
      %v2138 = vmul.f32 %v2021, 1.442695
      %v2139 = vpow.pop %v2138
      %v2140 = vmul.f32 %v2022, 1.442695
      %v2141 = vpow.pop %v2140
      %v2142 = vmul.f32 %v2023, 1.442695
      %v2143 = vpow.pop %v2142
      %v2144 = vmul.f32 %v2024, 1.442695
      %v2145 = vpow.pop %v2144
      %v2146 = vmul.f32 %v2025, 1.442695
      %v2147 = vpow.pop %v2146
      %v2148 = vmul.f32 %v2026, 1.442695
      %v2149 = vpow.pop %v2148
      %v2150 = vmul.f32 %v2027, 1.442695
      %v2151 = vpow.pop %v2150
      %v2152 = vmul.f32 %v2028, 1.442695
      %v2153 = vpow.pop %v2152
      %v2154 = vmul.f32 %v2029, 1.442695
      %v2155 = vpow.pop %v2154
      %v2156 = vmul.f32 %v2030, 1.442695
      %v2157 = vpow.pop %v2156
      %v2158 = vmul.f32 %v2031, 1.442695
      %v2159 = vpow.pop %v2158
      %v2160 = vmul.f32 %v2032, 1.442695
      %v2161 = vpow.pop %v2160
      %v2162 = vmul.f32 %v2033, 1.442695
      %v2163 = vpow.pop %v2162
      %v2164 = vmul.f32 %v2034, 1.442695
      %v2165 = vpow.pop %v2164
      %v2166 = vmul.f32 %v2035, 1.442695
      %v2167 = vpow.pop %v2166
      %v2168 = vmul.f32 %v2036, 1.442695
      %v2169 = vpow.pop %v2168
      %v2170 = vmul.f32 %v2037, 1.442695
      %v2171 = vpow.pop %v2170
      %v2172 = vmul.f32 %v2038, 1.442695
      %v2173 = vpow.pop %v2172
      %v2174 = vmul.f32 %v2039, 1.442695
      %v2175 = vpow.pop %v2174
      %v2176 = vmul.f32 %v2040, 1.442695
      %v2177 = vpow.pop %v2176
      %v2178 = vmul.f32 %v2041, 1.442695
      %v2179 = vpow.pop %v2178
      %v2180 = vmul.f32 %v2042, 1.442695
      %v2181 = vpow.pop %v2180
      %v2182 = vmul.f32 %v2043, 1.442695
      %v2183 = vpow.pop %v2182
      %v2184 = vmul.f32 %v2044, 1.442695
      %v2185 = vpow.pop %v2184
      %v2186 = vmul.f32 %v2045, 1.442695
      %v2187 = vpow.pop %v2186
      %v2188 = vmul.f32 %v2046, 1.442695
      %v2189 = vpow.pop %v2188
      %v2190 = vmul.f32 %v2047, 1.442695
      %v2191 = vpow.pop %v2190
      %v2192 = vmul.f32 %v2048, 1.442695
      %v2193 = vpow.pop %v2192
      %v2194 = vmul.f32 %v2049, 1.442695
      %v2195 = vpow.pop %v2194
      %v2196 = vmul.f32 %v2050, 1.442695
      %v2197 = vpow.pop %v2196
      %v2198 = vmul.f32 %v2051, 1.442695
      %v2199 = vpow.pop %v2198
      %v2200 = vmul.f32 %v2052, 1.442695
      %v2201 = vpow.pop %v2200
      %v2202 = vmul.f32 %v2053, 1.442695
      %v2203 = vpow.pop %v2202
      %v2204 = vmul.f32 %v2054, 1.442695
      %v2205 = vpow.pop %v2204
      %v2206 = vmul.f32 %v2055, 1.442695
      %v2207 = vpow.pop %v2206
      %v2208 = vmul.f32 %v2056, 1.442695
      %v2209 = vpow.pop %v2208
      %v2210 = vmul.f32 %v2057, 1.442695
      %v2211 = vpow.pop %v2210
      %v2212 = vmul.f32 %v2058, 1.442695
      %v2213 = vpow.pop %v2212
      %v2214 = vmul.f32 %v2059, 1.442695
      %v2215 = vpow.pop %v2214
      %v2216 = vmul.f32 %v2060, 1.442695
      %v2217 = vpow.pop %v2216
      %v2218 = vmul.f32 %v2061, 1.442695
      %v2219 = vpow.pop %v2218
      %v2220 = vmul.f32 %v2062, 1.442695
      %v2221 = vpow.pop %v2220
      %v2222 = vmul.f32 %v2063, 1.442695
      %v2223 = vpow.pop %v2222
      %v2224 = vsel %vm1743, %v2065, 0.0
      %2225 = vadd.xlane.f32.xlu0 %v2224
      %v2226 = vpop.xlane.xlu0 %2225
      %v2227 = vsel %vm1743, %v2067, 0.0
      %2228 = vadd.xlane.f32.xlu0 %v2227
      %v2229 = vpop.xlane.xlu0 %2228
      %v2230 = vsel %vm1743, %v2069, 0.0
      %2231 = vadd.xlane.f32.xlu0 %v2230
      %v2232 = vpop.xlane.xlu0 %2231
      %v2233 = vsel %vm1743, %v2071, 0.0
      %2234 = vadd.xlane.f32.xlu0 %v2233
      %v2235 = vpop.xlane.xlu0 %2234
      %v2236 = vsel %vm1743, %v2073, 0.0
      %2237 = vadd.xlane.f32.xlu0 %v2236
      %v2238 = vpop.xlane.xlu0 %2237
      %v2239 = vsel %vm1743, %v2075, 0.0
      %2240 = vadd.xlane.f32.xlu0 %v2239
      %v2241 = vpop.xlane.xlu0 %2240
      %v2242 = vsel %vm1743, %v2077, 0.0
      %2243 = vadd.xlane.f32.xlu0 %v2242
      %v2244 = vpop.xlane.xlu0 %2243
      %v2245 = vsel %vm1743, %v2079, 0.0
      %2246 = vadd.xlane.f32.xlu0 %v2245
      %v2247 = vpop.xlane.xlu0 %2246
      %v2248 = vsel %vm1743, %v2081, 0.0
      %2249 = vadd.xlane.f32.xlu0 %v2248
      %v2250 = vpop.xlane.xlu0 %2249
      %v2251 = vsel %vm1743, %v2083, 0.0
      %2252 = vadd.xlane.f32.xlu0 %v2251
      %v2253 = vpop.xlane.xlu0 %2252
      %v2254 = vsel %vm1743, %v2085, 0.0
      %2255 = vadd.xlane.f32.xlu0 %v2254
      %v2256 = vpop.xlane.xlu0 %2255
      %v2257 = vsel %vm1743, %v2087, 0.0
      %2258 = vadd.xlane.f32.xlu0 %v2257
      %v2259 = vpop.xlane.xlu0 %2258
      %v2260 = vsel %vm1743, %v2089, 0.0
      %2261 = vadd.xlane.f32.xlu0 %v2260
      %v2262 = vpop.xlane.xlu0 %2261
      %v2263 = vsel %vm1743, %v2091, 0.0
      %2264 = vadd.xlane.f32.xlu0 %v2263
      %v2265 = vpop.xlane.xlu0 %2264
      %v2266 = vsel %vm1743, %v2093, 0.0
      %2267 = vadd.xlane.f32.xlu0 %v2266
      %v2268 = vpop.xlane.xlu0 %2267
      %v2269 = vsel %vm1743, %v2095, 0.0
      %2270 = vadd.xlane.f32.xlu0 %v2269
      %v2271 = vpop.xlane.xlu0 %2270
      %v2272 = vsel %vm1743, %v2097, 0.0
      %2273 = vadd.xlane.f32.xlu0 %v2272
      %v2274 = vpop.xlane.xlu0 %2273
      %v2275 = vsel %vm1743, %v2099, 0.0
      %2276 = vadd.xlane.f32.xlu0 %v2275
      %v2277 = vpop.xlane.xlu0 %2276
      %v2278 = vsel %vm1743, %v2101, 0.0
      %2279 = vadd.xlane.f32.xlu0 %v2278
      %v2280 = vpop.xlane.xlu0 %2279
      %v2281 = vsel %vm1743, %v2103, 0.0
      %2282 = vadd.xlane.f32.xlu0 %v2281
      %v2283 = vpop.xlane.xlu0 %2282
      %v2284 = vsel %vm1743, %v2105, 0.0
      %2285 = vadd.xlane.f32.xlu0 %v2284
      %v2286 = vpop.xlane.xlu0 %2285
      %v2287 = vsel %vm1743, %v2107, 0.0
      %2288 = vadd.xlane.f32.xlu0 %v2287
      %v2289 = vpop.xlane.xlu0 %2288
      %v2290 = vsel %vm1743, %v2109, 0.0
      %2291 = vadd.xlane.f32.xlu0 %v2290
      %v2292 = vpop.xlane.xlu0 %2291
      %v2293 = vsel %vm1743, %v2111, 0.0
      %2294 = vadd.xlane.f32.xlu0 %v2293
      %v2295 = vpop.xlane.xlu0 %2294
      %v2296 = vsel %vm1743, %v2113, 0.0
      %2297 = vadd.xlane.f32.xlu0 %v2296
      %v2298 = vpop.xlane.xlu0 %2297
      %v2299 = vsel %vm1743, %v2115, 0.0
      %2300 = vadd.xlane.f32.xlu0 %v2299
      %v2301 = vpop.xlane.xlu0 %2300
      %v2302 = vsel %vm1743, %v2117, 0.0
      %2303 = vadd.xlane.f32.xlu0 %v2302
      %v2304 = vpop.xlane.xlu0 %2303
      %v2305 = vsel %vm1743, %v2119, 0.0
      %2306 = vadd.xlane.f32.xlu0 %v2305
      %v2307 = vpop.xlane.xlu0 %2306
      %v2308 = vsel %vm1743, %v2121, 0.0
      %2309 = vadd.xlane.f32.xlu0 %v2308
      %v2310 = vpop.xlane.xlu0 %2309
      %v2311 = vsel %vm1743, %v2123, 0.0
      %2312 = vadd.xlane.f32.xlu0 %v2311
      %v2313 = vpop.xlane.xlu0 %2312
      %v2314 = vsel %vm1743, %v2125, 0.0
      %2315 = vadd.xlane.f32.xlu0 %v2314
      %v2316 = vpop.xlane.xlu0 %2315
      %v2317 = vsel %vm1743, %v2127, 0.0
      %2318 = vadd.xlane.f32.xlu0 %v2317
      %v2319 = vpop.xlane.xlu0 %2318
      %v2320 = vsel %vm1743, %v2129, 0.0
      %2321 = vadd.xlane.f32.xlu0 %v2320
      %v2322 = vpop.xlane.xlu0 %2321
      %v2323 = vsel %vm1743, %v2131, 0.0
      %2324 = vadd.xlane.f32.xlu0 %v2323
      %v2325 = vpop.xlane.xlu0 %2324
      %v2326 = vsel %vm1743, %v2133, 0.0
      %2327 = vadd.xlane.f32.xlu0 %v2326
      %v2328 = vpop.xlane.xlu0 %2327
      %v2329 = vsel %vm1743, %v2135, 0.0
      %2330 = vadd.xlane.f32.xlu0 %v2329
      %v2331 = vpop.xlane.xlu0 %2330
      %v2332 = vsel %vm1743, %v2137, 0.0
      %2333 = vadd.xlane.f32.xlu0 %v2332
      %v2334 = vpop.xlane.xlu0 %2333
      %v2335 = vsel %vm1743, %v2139, 0.0
      %2336 = vadd.xlane.f32.xlu0 %v2335
      %v2337 = vpop.xlane.xlu0 %2336
      %v2338 = vsel %vm1743, %v2141, 0.0
      %2339 = vadd.xlane.f32.xlu0 %v2338
      %v2340 = vpop.xlane.xlu0 %2339
      %v2341 = vsel %vm1743, %v2143, 0.0
      %2342 = vadd.xlane.f32.xlu0 %v2341
      %v2343 = vpop.xlane.xlu0 %2342
      %v2344 = vsel %vm1743, %v2145, 0.0
      %2345 = vadd.xlane.f32.xlu0 %v2344
      %v2346 = vpop.xlane.xlu0 %2345
      %v2347 = vsel %vm1743, %v2147, 0.0
      %2348 = vadd.xlane.f32.xlu0 %v2347
      %v2349 = vpop.xlane.xlu0 %2348
      %v2350 = vsel %vm1743, %v2149, 0.0
      %2351 = vadd.xlane.f32.xlu0 %v2350
      %v2352 = vpop.xlane.xlu0 %2351
      %v2353 = vsel %vm1743, %v2151, 0.0
      %2354 = vadd.xlane.f32.xlu0 %v2353
      %v2355 = vpop.xlane.xlu0 %2354
      %v2356 = vsel %vm1743, %v2153, 0.0
      %2357 = vadd.xlane.f32.xlu0 %v2356
      %v2358 = vpop.xlane.xlu0 %2357
      %v2359 = vsel %vm1743, %v2155, 0.0
      %2360 = vadd.xlane.f32.xlu0 %v2359
      %v2361 = vpop.xlane.xlu0 %2360
      %v2362 = vsel %vm1743, %v2157, 0.0
      %2363 = vadd.xlane.f32.xlu0 %v2362
      %v2364 = vpop.xlane.xlu0 %2363
      %v2365 = vsel %vm1743, %v2159, 0.0
      %2366 = vadd.xlane.f32.xlu0 %v2365
      %v2367 = vpop.xlane.xlu0 %2366
      %v2368 = vsel %vm1743, %v2161, 0.0
      %2369 = vadd.xlane.f32.xlu0 %v2368
      %v2370 = vpop.xlane.xlu0 %2369
      %v2371 = vsel %vm1743, %v2163, 0.0
      %2372 = vadd.xlane.f32.xlu0 %v2371
      %v2373 = vpop.xlane.xlu0 %2372
      %v2374 = vsel %vm1743, %v2165, 0.0
      %2375 = vadd.xlane.f32.xlu0 %v2374
      %v2376 = vpop.xlane.xlu0 %2375
      %v2377 = vsel %vm1743, %v2167, 0.0
      %2378 = vadd.xlane.f32.xlu0 %v2377
      %v2379 = vpop.xlane.xlu0 %2378
      %v2380 = vsel %vm1743, %v2169, 0.0
      %2381 = vadd.xlane.f32.xlu0 %v2380
      %v2382 = vpop.xlane.xlu0 %2381
      %v2383 = vsel %vm1743, %v2171, 0.0
      %2384 = vadd.xlane.f32.xlu0 %v2383
      %v2385 = vpop.xlane.xlu0 %2384
      %v2386 = vsel %vm1743, %v2173, 0.0
      %2387 = vadd.xlane.f32.xlu0 %v2386
      %v2388 = vpop.xlane.xlu0 %2387
      %v2389 = vsel %vm1743, %v2175, 0.0
      %2390 = vadd.xlane.f32.xlu0 %v2389
      %v2391 = vpop.xlane.xlu0 %2390
      %v2392 = vsel %vm1743, %v2177, 0.0
      %2393 = vadd.xlane.f32.xlu0 %v2392
      %v2394 = vpop.xlane.xlu0 %2393
      %v2395 = vsel %vm1743, %v2179, 0.0
      %2396 = vadd.xlane.f32.xlu0 %v2395
      %v2397 = vpop.xlane.xlu0 %2396
      %v2398 = vsel %vm1743, %v2181, 0.0
      %2399 = vadd.xlane.f32.xlu0 %v2398
      %v2400 = vpop.xlane.xlu0 %2399
      %v2401 = vsel %vm1743, %v2183, 0.0
      %2402 = vadd.xlane.f32.xlu0 %v2401
      %v2403 = vpop.xlane.xlu0 %2402
      %v2404 = vsel %vm1743, %v2185, 0.0
      %2405 = vadd.xlane.f32.xlu0 %v2404
      %v2406 = vpop.xlane.xlu0 %2405
      %v2407 = vsel %vm1743, %v2187, 0.0
      %2408 = vadd.xlane.f32.xlu0 %v2407
      %v2409 = vpop.xlane.xlu0 %2408
      %v2410 = vsel %vm1743, %v2189, 0.0
      %2411 = vadd.xlane.f32.xlu0 %v2410
      %v2412 = vpop.xlane.xlu0 %2411
      %v2413 = vsel %vm1743, %v2191, 0.0
      %2414 = vadd.xlane.f32.xlu0 %v2413
      %v2415 = vpop.xlane.xlu0 %2414
      %v2416 = vsel %vm1743, %v2193, 0.0
      %2417 = vadd.xlane.f32.xlu0 %v2416
      %v2418 = vpop.xlane.xlu0 %2417
      %v2419 = vsel %vm1743, %v2195, 0.0
      %2420 = vadd.xlane.f32.xlu0 %v2419
      %v2421 = vpop.xlane.xlu0 %2420
      %v2422 = vsel %vm1743, %v2197, 0.0
      %2423 = vadd.xlane.f32.xlu0 %v2422
      %v2424 = vpop.xlane.xlu0 %2423
      %v2425 = vsel %vm1743, %v2199, 0.0
      %2426 = vadd.xlane.f32.xlu0 %v2425
      %v2427 = vpop.xlane.xlu0 %2426
      %v2428 = vsel %vm1743, %v2201, 0.0
      %2429 = vadd.xlane.f32.xlu0 %v2428
      %v2430 = vpop.xlane.xlu0 %2429
      %v2431 = vsel %vm1743, %v2203, 0.0
      %2432 = vadd.xlane.f32.xlu0 %v2431
      %v2433 = vpop.xlane.xlu0 %2432
      %v2434 = vsel %vm1743, %v2205, 0.0
      %2435 = vadd.xlane.f32.xlu0 %v2434
      %v2436 = vpop.xlane.xlu0 %2435
      %v2437 = vsel %vm1743, %v2207, 0.0
      %2438 = vadd.xlane.f32.xlu0 %v2437
      %v2439 = vpop.xlane.xlu0 %2438
      %v2440 = vsel %vm1743, %v2209, 0.0
      %2441 = vadd.xlane.f32.xlu0 %v2440
      %v2442 = vpop.xlane.xlu0 %2441
      %v2443 = vsel %vm1743, %v2211, 0.0
      %2444 = vadd.xlane.f32.xlu0 %v2443
      %v2445 = vpop.xlane.xlu0 %2444
      %v2446 = vsel %vm1743, %v2213, 0.0
      %2447 = vadd.xlane.f32.xlu0 %v2446
      %v2448 = vpop.xlane.xlu0 %2447
      %v2449 = vsel %vm1743, %v2215, 0.0
      %2450 = vadd.xlane.f32.xlu0 %v2449
      %v2451 = vpop.xlane.xlu0 %2450
      %v2452 = vsel %vm1743, %v2217, 0.0
      %2453 = vadd.xlane.f32.xlu0 %v2452
      %v2454 = vpop.xlane.xlu0 %2453
      %v2455 = vsel %vm1743, %v2219, 0.0
      %2456 = vadd.xlane.f32.xlu0 %v2455
      %v2457 = vpop.xlane.xlu0 %2456
      %v2458 = vsel %vm1743, %v2221, 0.0
      %2459 = vadd.xlane.f32.xlu0 %v2458
      %v2460 = vpop.xlane.xlu0 %2459
      %v2461 = vsel %vm1743, %v2223, 0.0
      %2462 = vadd.xlane.f32.xlu0 %v2461
      %v2463 = vpop.xlane.xlu0 %2462
      %v2464 = vpack.c.bf16 %v2067, %v2065
      %v2465 = vpack.c.bf16 %v2071, %v2069
      %v2466 = vpack.c.bf16 %v2075, %v2073
      %v2467 = vpack.c.bf16 %v2079, %v2077
      %v2468 = vpack.c.bf16 %v2083, %v2081
      %v2469 = vpack.c.bf16 %v2087, %v2085
      %v2470 = vpack.c.bf16 %v2091, %v2089
      %v2471 = vpack.c.bf16 %v2095, %v2093
      %v2472 = vpack.c.bf16 %v2099, %v2097
      %v2473 = vpack.c.bf16 %v2103, %v2101
      %v2474 = vpack.c.bf16 %v2107, %v2105
      %v2475 = vpack.c.bf16 %v2111, %v2109
      %v2476 = vpack.c.bf16 %v2115, %v2113
      %v2477 = vpack.c.bf16 %v2119, %v2117
      %v2478 = vpack.c.bf16 %v2123, %v2121
      %v2479 = vpack.c.bf16 %v2127, %v2125
      %v2480 = vpack.c.bf16 %v2131, %v2129
      %v2481 = vpack.c.bf16 %v2135, %v2133
      %v2482 = vpack.c.bf16 %v2139, %v2137
      %v2483 = vpack.c.bf16 %v2143, %v2141
      %v2484 = vpack.c.bf16 %v2147, %v2145
      %v2485 = vpack.c.bf16 %v2151, %v2149
      %v2486 = vpack.c.bf16 %v2155, %v2153
      %v2487 = vpack.c.bf16 %v2159, %v2157
      %v2488 = vpack.c.bf16 %v2163, %v2161
      %v2489 = vpack.c.bf16 %v2167, %v2165
      %v2490 = vpack.c.bf16 %v2171, %v2169
      %v2491 = vpack.c.bf16 %v2175, %v2173
      %v2492 = vpack.c.bf16 %v2179, %v2177
      %v2493 = vpack.c.bf16 %v2183, %v2181
      %v2494 = vpack.c.bf16 %v2187, %v2185
      %v2495 = vpack.c.bf16 %v2191, %v2189
      %v2496 = vpack.c.bf16 %v2195, %v2193
      %v2497 = vpack.c.bf16 %v2199, %v2197
      %v2498 = vpack.c.bf16 %v2203, %v2201
      %v2499 = vpack.c.bf16 %v2207, %v2205
      %v2500 = vpack.c.bf16 %v2211, %v2209
      %v2501 = vpack.c.bf16 %v2215, %v2213
      %v2502 = vpack.c.bf16 %v2219, %v2217
      %v2503 = vpack.c.bf16 %v2223, %v2221
      %v2512 = vunpack.c.l.b16 %v372
      %v2513 = vunpack.c.l.b16 %v373
      %v2514 = vunpack.c.l.b16 %v374
      %v2515 = vunpack.c.l.b16 %v375
      %v2516 = vunpack.c.l.b16 %v376
      %v2517 = vunpack.c.l.b16 %v377
      %v2518 = vunpack.c.l.b16 %v378
      %v2519 = vunpack.c.l.b16 %v379
      %v2520 = vpack.c.b16 %v2513, %v2512
      %v2521 = vpack.c.b16 %v2515, %v2514
      %v2522 = vpack.c.b16 %v2517, %v2516
      %v2523 = vpack.c.b16 %v2519, %v2518
      %v2529 = vsel %vm1743, %v2464, 0
      %v2532 = vsel %vm1743, %v2465, 0
      %v2535 = vsel %vm1743, %v2466, 0
      %v2538 = vsel %vm1743, %v2467, 0
      %2540 = vmatprep.subr.bf16.mxu0 0
      %2541 = vmatpush1.bf16.msra.mxu0 %v2520
      %2542 = vmatprep.subr.bf16.mxu0 0
      %2543 = vmatpush1.bf16.msra.mxu0 %v2521
      %2544 = vmatprep.subr.bf16.mxu0 0
      %2545 = vmatpush1.bf16.msra.mxu0 %v2522
      %2546 = vmatprep.subr.bf16.mxu0 0
      %2547 = vmatpush1.bf16.msra.mxu0 %v2523
      %2548 = vmatprep.subr.bf16.mxu0 0
      %2549 = vmatpush1.bf16.msra.mxu0 0
      %2550 = vmatprep.subr.bf16.mxu0 0
      %2551 = vmatpush1.bf16.msra.mxu0 0
      %2552 = vmatprep.subr.bf16.mxu0 0
      %2553 = vmatpush1.bf16.msra.mxu0 0
      %2554 = vmatprep.subr.bf16.mxu0 0
      %2555 = vmatpush1.bf16.msra.mxu0 0
      %2556 = vmatprep.subr.bf16.mxu0 0
      %2557 = vmatpush1.bf16.msra.mxu0 0
      %2558 = vmatprep.subr.bf16.mxu0 0
      %2559 = vmatpush1.bf16.msra.mxu0 0
      %2560 = vmatprep.subr.bf16.mxu0 0
      %2561 = vmatpush1.bf16.msra.mxu0 0
      %2562 = vmatprep.subr.bf16.mxu0 0
      %2563 = vmatpush1.bf16.msra.mxu0 0
      %2564 = vmatprep.subr.bf16.mxu0 0
      %2565 = vmatpush1.bf16.msra.mxu0 0
      %2566 = vmatprep.subr.bf16.mxu0 0
      %2567 = vmatpush1.bf16.msra.mxu0 0
      %2568 = vmatprep.subr.bf16.mxu0 0
      %2569 = vmatpush1.bf16.msra.mxu0 0
      %2570 = vmatprep.subr.bf16.mxu0 0
      %2571 = vmatpush1.bf16.msra.mxu0 0
      %2572 = vmatprep.mubr.bf16.mxu0 0
      %2573 = vmatmul.mubr.bf16.gmra.mrb[0].mxu0 %v2529
      %v2574 = vpop.f32.mrb[0].mxu0
      %v2575 = vadd.f32 0.0, %v2574
      %v2576 = vpop.f32.mrb[0].mxu0
      %v2577 = vpop.f32.mrb[0].mxu0
      %v2578 = vadd.f32 0.0, %v2577
      %v2579 = vpop.f32.mrb[0].mxu0
      %2580 = vmatprep.mubr.bf16.mxu0 0
      %2581 = vmatmul.mubr.bf16.gmra.mrb[0].mxu0 %v2532
      %v2582 = vpop.f32.mrb[0].mxu0
      %v2583 = vadd.f32 0.0, %v2582
      %v2584 = vpop.f32.mrb[0].mxu0
      %v2585 = vpop.f32.mrb[0].mxu0
      %v2586 = vadd.f32 0.0, %v2585
      %v2587 = vpop.f32.mrb[0].mxu0
      %2588 = vmatprep.mubr.bf16.mxu0 0
      %2589 = vmatmul.mubr.bf16.gmra.mrb[0].mxu0 %v2535
      %v2590 = vpop.f32.mrb[0].mxu0
      %v2591 = vadd.f32 0.0, %v2590
      %v2592 = vpop.f32.mrb[0].mxu0
      %v2593 = vpop.f32.mrb[0].mxu0
      %v2594 = vadd.f32 0.0, %v2593
      %v2595 = vpop.f32.mrb[0].mxu0
      %2596 = vmatprep.mubr.bf16.mxu0 0
      %2597 = vmatmul.mubr.bf16.gmra.mrb[0].mxu0 %v2538
      %v2598 = vpop.f32.mrb[0].mxu0
      %v2599 = vadd.f32 0.0, %v2598
      %v2600 = vpop.f32.mrb[0].mxu0
      %v2601 = vpop.f32.mrb[0].mxu0
      %v2602 = vadd.f32 0.0, %v2601
      %v2603 = vpop.f32.mrb[0].mxu0
      %2604 = vdwg.mxu0
      %v2613 = vunpack.c.l.b16 %v380
      %v2614 = vunpack.c.l.b16 %v381
      %v2615 = vunpack.c.l.b16 %v382
      %v2616 = vunpack.c.l.b16 %v383
      %v2617 = vunpack.c.l.b16 %v384
      %v2618 = vunpack.c.l.b16 %v385
      %v2619 = vunpack.c.l.b16 %v386
      %v2620 = vunpack.c.l.b16 %v387
      %v2621 = vpack.c.b16 %v2614, %v2613
      %v2622 = vpack.c.b16 %v2616, %v2615
      %v2623 = vpack.c.b16 %v2618, %v2617
      %v2624 = vpack.c.b16 %v2620, %v2619
      %v2630 = vsel %vm1743, %v2468, 0
      %v2633 = vsel %vm1743, %v2469, 0
      %v2636 = vsel %vm1743, %v2470, 0
      %v2639 = vsel %vm1743, %v2471, 0
      %2641 = vmatprep.subr.bf16.mxu0 0
      %2642 = vmatpush1.bf16.msra.mxu0 %v2621
      %2643 = vmatprep.subr.bf16.mxu0 0
      %2644 = vmatpush1.bf16.msra.mxu0 %v2622
      %2645 = vmatprep.subr.bf16.mxu0 0
      %2646 = vmatpush1.bf16.msra.mxu0 %v2623
      %2647 = vmatprep.subr.bf16.mxu0 0
      %2648 = vmatpush1.bf16.msra.mxu0 %v2624
      %2649 = vmatprep.subr.bf16.mxu0 0
      %2650 = vmatpush1.bf16.msra.mxu0 0
      %2651 = vmatprep.subr.bf16.mxu0 0
      %2652 = vmatpush1.bf16.msra.mxu0 0
      %2653 = vmatprep.subr.bf16.mxu0 0
      %2654 = vmatpush1.bf16.msra.mxu0 0
      %2655 = vmatprep.subr.bf16.mxu0 0
      %2656 = vmatpush1.bf16.msra.mxu0 0
      %2657 = vmatprep.subr.bf16.mxu0 0
      %2658 = vmatpush1.bf16.msra.mxu0 0
      %2659 = vmatprep.subr.bf16.mxu0 0
      %2660 = vmatpush1.bf16.msra.mxu0 0
      %2661 = vmatprep.subr.bf16.mxu0 0
      %2662 = vmatpush1.bf16.msra.mxu0 0
      %2663 = vmatprep.subr.bf16.mxu0 0
      %2664 = vmatpush1.bf16.msra.mxu0 0
      %2665 = vmatprep.subr.bf16.mxu0 0
      %2666 = vmatpush1.bf16.msra.mxu0 0
      %2667 = vmatprep.subr.bf16.mxu0 0
      %2668 = vmatpush1.bf16.msra.mxu0 0
      %2669 = vmatprep.subr.bf16.mxu0 0
      %2670 = vmatpush1.bf16.msra.mxu0 0
      %2671 = vmatprep.subr.bf16.mxu0 0
      %2672 = vmatpush1.bf16.msra.mxu0 0
      %2673 = vmatprep.mubr.bf16.mxu0 0
      %2674 = vmatmul.mubr.bf16.gmra.mrb[0].mxu0 %v2630
      %v2675 = vpop.f32.mrb[0].mxu0
      %v2676 = vadd.f32 0.0, %v2675
      %v2677 = vpop.f32.mrb[0].mxu0
      %v2678 = vpop.f32.mrb[0].mxu0
      %v2679 = vadd.f32 0.0, %v2678
      %v2680 = vpop.f32.mrb[0].mxu0
      %2681 = vmatprep.mubr.bf16.mxu0 0
      %2682 = vmatmul.mubr.bf16.gmra.mrb[0].mxu0 %v2633
      %v2683 = vpop.f32.mrb[0].mxu0
      %v2684 = vadd.f32 0.0, %v2683
      %v2685 = vpop.f32.mrb[0].mxu0
      %v2686 = vpop.f32.mrb[0].mxu0
      %v2687 = vadd.f32 0.0, %v2686
      %v2688 = vpop.f32.mrb[0].mxu0
      %2689 = vmatprep.mubr.bf16.mxu0 0
      %2690 = vmatmul.mubr.bf16.gmra.mrb[0].mxu0 %v2636
      %v2691 = vpop.f32.mrb[0].mxu0
      %v2692 = vadd.f32 0.0, %v2691
      %v2693 = vpop.f32.mrb[0].mxu0
      %v2694 = vpop.f32.mrb[0].mxu0
      %v2695 = vadd.f32 0.0, %v2694
      %v2696 = vpop.f32.mrb[0].mxu0
      %2697 = vmatprep.mubr.bf16.mxu0 0
      %2698 = vmatmul.mubr.bf16.gmra.mrb[0].mxu0 %v2639
      %v2699 = vpop.f32.mrb[0].mxu0
      %v2700 = vadd.f32 0.0, %v2699
      %v2701 = vpop.f32.mrb[0].mxu0
      %v2702 = vpop.f32.mrb[0].mxu0
      %v2703 = vadd.f32 0.0, %v2702
      %v2704 = vpop.f32.mrb[0].mxu0
      %2705 = vdwg.mxu0
      %v2714 = vunpack.c.l.b16 %v388
      %v2715 = vunpack.c.l.b16 %v389
      %v2716 = vunpack.c.l.b16 %v390
      %v2717 = vunpack.c.l.b16 %v391
      %v2718 = vunpack.c.l.b16 %v392
      %v2719 = vunpack.c.l.b16 %v393
      %v2720 = vunpack.c.l.b16 %v394
      %v2721 = vunpack.c.l.b16 %v395
      %v2722 = vpack.c.b16 %v2715, %v2714
      %v2723 = vpack.c.b16 %v2717, %v2716
      %v2724 = vpack.c.b16 %v2719, %v2718
      %v2725 = vpack.c.b16 %v2721, %v2720
      %v2731 = vsel %vm1743, %v2472, 0
      %v2734 = vsel %vm1743, %v2473, 0
      %v2737 = vsel %vm1743, %v2474, 0
      %v2740 = vsel %vm1743, %v2475, 0
      %2742 = vmatprep.subr.bf16.mxu0 0
      %2743 = vmatpush1.bf16.msra.mxu0 %v2722
      %2744 = vmatprep.subr.bf16.mxu0 0
      %2745 = vmatpush1.bf16.msra.mxu0 %v2723
      %2746 = vmatprep.subr.bf16.mxu0 0
      %2747 = vmatpush1.bf16.msra.mxu0 %v2724
      %2748 = vmatprep.subr.bf16.mxu0 0
      %2749 = vmatpush1.bf16.msra.mxu0 %v2725
      %2750 = vmatprep.subr.bf16.mxu0 0
      %2751 = vmatpush1.bf16.msra.mxu0 0
      %2752 = vmatprep.subr.bf16.mxu0 0
      %2753 = vmatpush1.bf16.msra.mxu0 0
      %2754 = vmatprep.subr.bf16.mxu0 0
      %2755 = vmatpush1.bf16.msra.mxu0 0
      %2756 = vmatprep.subr.bf16.mxu0 0
      %2757 = vmatpush1.bf16.msra.mxu0 0
      %2758 = vmatprep.subr.bf16.mxu0 0
      %2759 = vmatpush1.bf16.msra.mxu0 0
      %2760 = vmatprep.subr.bf16.mxu0 0
      %2761 = vmatpush1.bf16.msra.mxu0 0
      %2762 = vmatprep.subr.bf16.mxu0 0
      %2763 = vmatpush1.bf16.msra.mxu0 0
      %2764 = vmatprep.subr.bf16.mxu0 0
      %2765 = vmatpush1.bf16.msra.mxu0 0
      %2766 = vmatprep.subr.bf16.mxu0 0
      %2767 = vmatpush1.bf16.msra.mxu0 0
      %2768 = vmatprep.subr.bf16.mxu0 0
      %2769 = vmatpush1.bf16.msra.mxu0 0
      %2770 = vmatprep.subr.bf16.mxu0 0
      %2771 = vmatpush1.bf16.msra.mxu0 0
      %2772 = vmatprep.subr.bf16.mxu0 0
      %2773 = vmatpush1.bf16.msra.mxu0 0
      %2774 = vmatprep.mubr.bf16.mxu0 0
      %2775 = vmatmul.mubr.bf16.gmra.mrb[0].mxu0 %v2731
      %v2776 = vpop.f32.mrb[0].mxu0
      %v2777 = vadd.f32 0.0, %v2776
      %v2778 = vpop.f32.mrb[0].mxu0
      %v2779 = vpop.f32.mrb[0].mxu0
      %v2780 = vadd.f32 0.0, %v2779
      %v2781 = vpop.f32.mrb[0].mxu0
      %2782 = vmatprep.mubr.bf16.mxu0 0
      %2783 = vmatmul.mubr.bf16.gmra.mrb[0].mxu0 %v2734
      %v2784 = vpop.f32.mrb[0].mxu0
      %v2785 = vadd.f32 0.0, %v2784
      %v2786 = vpop.f32.mrb[0].mxu0
      %v2787 = vpop.f32.mrb[0].mxu0
      %v2788 = vadd.f32 0.0, %v2787
      %v2789 = vpop.f32.mrb[0].mxu0
      %2790 = vmatprep.mubr.bf16.mxu0 0
      %2791 = vmatmul.mubr.bf16.gmra.mrb[0].mxu0 %v2737
      %v2792 = vpop.f32.mrb[0].mxu0
      %v2793 = vadd.f32 0.0, %v2792
      %v2794 = vpop.f32.mrb[0].mxu0
      %v2795 = vpop.f32.mrb[0].mxu0
      %v2796 = vadd.f32 0.0, %v2795
      %v2797 = vpop.f32.mrb[0].mxu0
      %2798 = vmatprep.mubr.bf16.mxu0 0
      %2799 = vmatmul.mubr.bf16.gmra.mrb[0].mxu0 %v2740
      %v2800 = vpop.f32.mrb[0].mxu0
      %v2801 = vadd.f32 0.0, %v2800
      %v2802 = vpop.f32.mrb[0].mxu0
      %v2803 = vpop.f32.mrb[0].mxu0
      %v2804 = vadd.f32 0.0, %v2803
      %v2805 = vpop.f32.mrb[0].mxu0
      %2806 = vdwg.mxu0
      %v2815 = vunpack.c.l.b16 %v396
      %v2816 = vunpack.c.l.b16 %v397
      %v2817 = vunpack.c.l.b16 %v398
      %v2818 = vunpack.c.l.b16 %v399
      %v2819 = vunpack.c.l.b16 %v400
      %v2820 = vunpack.c.l.b16 %v401
      %v2821 = vunpack.c.l.b16 %v402
      %v2822 = vunpack.c.l.b16 %v403
      %v2823 = vpack.c.b16 %v2816, %v2815
      %v2824 = vpack.c.b16 %v2818, %v2817
      %v2825 = vpack.c.b16 %v2820, %v2819
      %v2826 = vpack.c.b16 %v2822, %v2821
      %v2832 = vsel %vm1743, %v2476, 0
      %v2835 = vsel %vm1743, %v2477, 0
      %v2838 = vsel %vm1743, %v2478, 0
      %v2841 = vsel %vm1743, %v2479, 0
      %2843 = vmatprep.subr.bf16.mxu0 0
      %2844 = vmatpush1.bf16.msra.mxu0 %v2823
      %2845 = vmatprep.subr.bf16.mxu0 0
      %2846 = vmatpush1.bf16.msra.mxu0 %v2824
      %2847 = vmatprep.subr.bf16.mxu0 0
      %2848 = vmatpush1.bf16.msra.mxu0 %v2825
      %2849 = vmatprep.subr.bf16.mxu0 0
      %2850 = vmatpush1.bf16.msra.mxu0 %v2826
      %2851 = vmatprep.subr.bf16.mxu0 0
      %2852 = vmatpush1.bf16.msra.mxu0 0
      %2853 = vmatprep.subr.bf16.mxu0 0
      %2854 = vmatpush1.bf16.msra.mxu0 0
      %2855 = vmatprep.subr.bf16.mxu0 0
      %2856 = vmatpush1.bf16.msra.mxu0 0
      %2857 = vmatprep.subr.bf16.mxu0 0
      %2858 = vmatpush1.bf16.msra.mxu0 0
      %2859 = vmatprep.subr.bf16.mxu0 0
      %2860 = vmatpush1.bf16.msra.mxu0 0
      %2861 = vmatprep.subr.bf16.mxu0 0
      %2862 = vmatpush1.bf16.msra.mxu0 0
      %2863 = vmatprep.subr.bf16.mxu0 0
      %2864 = vmatpush1.bf16.msra.mxu0 0
      %2865 = vmatprep.subr.bf16.mxu0 0
      %2866 = vmatpush1.bf16.msra.mxu0 0
      %2867 = vmatprep.subr.bf16.mxu0 0
      %2868 = vmatpush1.bf16.msra.mxu0 0
      %2869 = vmatprep.subr.bf16.mxu0 0
      %2870 = vmatpush1.bf16.msra.mxu0 0
      %2871 = vmatprep.subr.bf16.mxu0 0
      %2872 = vmatpush1.bf16.msra.mxu0 0
      %2873 = vmatprep.subr.bf16.mxu0 0
      %2874 = vmatpush1.bf16.msra.mxu0 0
      %2875 = vmatprep.mubr.bf16.mxu0 0
      %2876 = vmatmul.mubr.bf16.gmra.mrb[0].mxu0 %v2832
      %v2877 = vpop.f32.mrb[0].mxu0
      %v2878 = vadd.f32 0.0, %v2877
      %v2879 = vpop.f32.mrb[0].mxu0
      %v2880 = vpop.f32.mrb[0].mxu0
      %v2881 = vadd.f32 0.0, %v2880
      %v2882 = vpop.f32.mrb[0].mxu0
      %2883 = vmatprep.mubr.bf16.mxu0 0
      %2884 = vmatmul.mubr.bf16.gmra.mrb[0].mxu0 %v2835
      %v2885 = vpop.f32.mrb[0].mxu0
      %v2886 = vadd.f32 0.0, %v2885
      %v2887 = vpop.f32.mrb[0].mxu0
      %v2888 = vpop.f32.mrb[0].mxu0
      %v2889 = vadd.f32 0.0, %v2888
      %v2890 = vpop.f32.mrb[0].mxu0
      %2891 = vmatprep.mubr.bf16.mxu0 0
      %2892 = vmatmul.mubr.bf16.gmra.mrb[0].mxu0 %v2838
      %v2893 = vpop.f32.mrb[0].mxu0
      %v2894 = vadd.f32 0.0, %v2893
      %v2895 = vpop.f32.mrb[0].mxu0
      %v2896 = vpop.f32.mrb[0].mxu0
      %v2897 = vadd.f32 0.0, %v2896
      %v2898 = vpop.f32.mrb[0].mxu0
      %2899 = vmatprep.mubr.bf16.mxu0 0
      %2900 = vmatmul.mubr.bf16.gmra.mrb[0].mxu0 %v2841
      %v2901 = vpop.f32.mrb[0].mxu0
      %v2902 = vadd.f32 0.0, %v2901
      %v2903 = vpop.f32.mrb[0].mxu0
      %v2904 = vpop.f32.mrb[0].mxu0
      %v2905 = vadd.f32 0.0, %v2904
      %v2906 = vpop.f32.mrb[0].mxu0
      %2907 = vdwg.mxu0
      %v2916 = vunpack.c.l.b16 %v404
      %v2917 = vunpack.c.l.b16 %v405
      %v2918 = vunpack.c.l.b16 %v406
      %v2919 = vunpack.c.l.b16 %v407
      %v2920 = vunpack.c.l.b16 %v408
      %v2921 = vunpack.c.l.b16 %v409
      %v2922 = vunpack.c.l.b16 %v410
      %v2923 = vunpack.c.l.b16 %v411
      %v2924 = vpack.c.b16 %v2917, %v2916
      %v2925 = vpack.c.b16 %v2919, %v2918
      %v2926 = vpack.c.b16 %v2921, %v2920
      %v2927 = vpack.c.b16 %v2923, %v2922
      %v2933 = vsel %vm1743, %v2480, 0
      %v2936 = vsel %vm1743, %v2481, 0
      %v2939 = vsel %vm1743, %v2482, 0
      %v2942 = vsel %vm1743, %v2483, 0
      %2944 = vmatprep.subr.bf16.mxu0 0
      %2945 = vmatpush1.bf16.msra.mxu0 %v2924
      %2946 = vmatprep.subr.bf16.mxu0 0
      %2947 = vmatpush1.bf16.msra.mxu0 %v2925
      %2948 = vmatprep.subr.bf16.mxu0 0
      %2949 = vmatpush1.bf16.msra.mxu0 %v2926
      %2950 = vmatprep.subr.bf16.mxu0 0
      %2951 = vmatpush1.bf16.msra.mxu0 %v2927
      %2952 = vmatprep.subr.bf16.mxu0 0
      %2953 = vmatpush1.bf16.msra.mxu0 0
      %2954 = vmatprep.subr.bf16.mxu0 0
      %2955 = vmatpush1.bf16.msra.mxu0 0
      %2956 = vmatprep.subr.bf16.mxu0 0
      %2957 = vmatpush1.bf16.msra.mxu0 0
      %2958 = vmatprep.subr.bf16.mxu0 0
      %2959 = vmatpush1.bf16.msra.mxu0 0
      %2960 = vmatprep.subr.bf16.mxu0 0
      %2961 = vmatpush1.bf16.msra.mxu0 0
      %2962 = vmatprep.subr.bf16.mxu0 0
      %2963 = vmatpush1.bf16.msra.mxu0 0
      %2964 = vmatprep.subr.bf16.mxu0 0
      %2965 = vmatpush1.bf16.msra.mxu0 0
      %2966 = vmatprep.subr.bf16.mxu0 0
      %2967 = vmatpush1.bf16.msra.mxu0 0
      %2968 = vmatprep.subr.bf16.mxu0 0
      %2969 = vmatpush1.bf16.msra.mxu0 0
      %2970 = vmatprep.subr.bf16.mxu0 0
      %2971 = vmatpush1.bf16.msra.mxu0 0
      %2972 = vmatprep.subr.bf16.mxu0 0
      %2973 = vmatpush1.bf16.msra.mxu0 0
      %2974 = vmatprep.subr.bf16.mxu0 0
      %2975 = vmatpush1.bf16.msra.mxu0 0
      %2976 = vmatprep.mubr.bf16.mxu0 0
      %2977 = vmatmul.mubr.bf16.gmra.mrb[0].mxu0 %v2933
      %v2978 = vpop.f32.mrb[0].mxu0
      %v2979 = vadd.f32 0.0, %v2978
      %v2980 = vpop.f32.mrb[0].mxu0
      %v2981 = vpop.f32.mrb[0].mxu0
      %v2982 = vadd.f32 0.0, %v2981
      %v2983 = vpop.f32.mrb[0].mxu0
      %2984 = vmatprep.mubr.bf16.mxu0 0
      %2985 = vmatmul.mubr.bf16.gmra.mrb[0].mxu0 %v2936
      %v2986 = vpop.f32.mrb[0].mxu0
      %v2987 = vadd.f32 0.0, %v2986
      %v2988 = vpop.f32.mrb[0].mxu0
      %v2989 = vpop.f32.mrb[0].mxu0
      %v2990 = vadd.f32 0.0, %v2989
      %v2991 = vpop.f32.mrb[0].mxu0
      %2992 = vmatprep.mubr.bf16.mxu0 0
      %2993 = vmatmul.mubr.bf16.gmra.mrb[0].mxu0 %v2939
      %v2994 = vpop.f32.mrb[0].mxu0
      %v2995 = vadd.f32 0.0, %v2994
      %v2996 = vpop.f32.mrb[0].mxu0
      %v2997 = vpop.f32.mrb[0].mxu0
      %v2998 = vadd.f32 0.0, %v2997
      %v2999 = vpop.f32.mrb[0].mxu0
      %3000 = vmatprep.mubr.bf16.mxu0 0
      %3001 = vmatmul.mubr.bf16.gmra.mrb[0].mxu0 %v2942
      %v3002 = vpop.f32.mrb[0].mxu0
      %v3003 = vadd.f32 0.0, %v3002
      %v3004 = vpop.f32.mrb[0].mxu0
      %v3005 = vpop.f32.mrb[0].mxu0
      %v3006 = vadd.f32 0.0, %v3005
      %v3007 = vpop.f32.mrb[0].mxu0
      %3008 = vdwg.mxu0
      %v3017 = vunpack.c.l.b16 %v412
      %v3018 = vunpack.c.l.b16 %v413
      %v3019 = vunpack.c.l.b16 %v414
      %v3020 = vunpack.c.l.b16 %v415
      %v3021 = vunpack.c.l.b16 %v416
      %v3022 = vunpack.c.l.b16 %v417
      %v3023 = vunpack.c.l.b16 %v418
      %v3024 = vunpack.c.l.b16 %v419
      %v3025 = vpack.c.b16 %v3018, %v3017
      %v3026 = vpack.c.b16 %v3020, %v3019
      %v3027 = vpack.c.b16 %v3022, %v3021
      %v3028 = vpack.c.b16 %v3024, %v3023
      %v3034 = vsel %vm1743, %v2484, 0
      %v3037 = vsel %vm1743, %v2485, 0
      %v3040 = vsel %vm1743, %v2486, 0
      %v3043 = vsel %vm1743, %v2487, 0
      %3045 = vmatprep.subr.bf16.mxu0 0
      %3046 = vmatpush1.bf16.msra.mxu0 %v3025
      %3047 = vmatprep.subr.bf16.mxu0 0
      %3048 = vmatpush1.bf16.msra.mxu0 %v3026
      %3049 = vmatprep.subr.bf16.mxu0 0
      %3050 = vmatpush1.bf16.msra.mxu0 %v3027
      %3051 = vmatprep.subr.bf16.mxu0 0
      %3052 = vmatpush1.bf16.msra.mxu0 %v3028
      %3053 = vmatprep.subr.bf16.mxu0 0
      %3054 = vmatpush1.bf16.msra.mxu0 0
      %3055 = vmatprep.subr.bf16.mxu0 0
      %3056 = vmatpush1.bf16.msra.mxu0 0
      %3057 = vmatprep.subr.bf16.mxu0 0
      %3058 = vmatpush1.bf16.msra.mxu0 0
      %3059 = vmatprep.subr.bf16.mxu0 0
      %3060 = vmatpush1.bf16.msra.mxu0 0
      %3061 = vmatprep.subr.bf16.mxu0 0
      %3062 = vmatpush1.bf16.msra.mxu0 0
      %3063 = vmatprep.subr.bf16.mxu0 0
      %3064 = vmatpush1.bf16.msra.mxu0 0
      %3065 = vmatprep.subr.bf16.mxu0 0
      %3066 = vmatpush1.bf16.msra.mxu0 0
      %3067 = vmatprep.subr.bf16.mxu0 0
      %3068 = vmatpush1.bf16.msra.mxu0 0
      %3069 = vmatprep.subr.bf16.mxu0 0
      %3070 = vmatpush1.bf16.msra.mxu0 0
      %3071 = vmatprep.subr.bf16.mxu0 0
      %3072 = vmatpush1.bf16.msra.mxu0 0
      %3073 = vmatprep.subr.bf16.mxu0 0
      %3074 = vmatpush1.bf16.msra.mxu0 0
      %3075 = vmatprep.subr.bf16.mxu0 0
      %3076 = vmatpush1.bf16.msra.mxu0 0
      %3077 = vmatprep.mubr.bf16.mxu0 0
      %3078 = vmatmul.mubr.bf16.gmra.mrb[0].mxu0 %v3034
      %v3079 = vpop.f32.mrb[0].mxu0
      %v3080 = vadd.f32 0.0, %v3079
      %v3081 = vpop.f32.mrb[0].mxu0
      %v3082 = vpop.f32.mrb[0].mxu0
      %v3083 = vadd.f32 0.0, %v3082
      %v3084 = vpop.f32.mrb[0].mxu0
      %3085 = vmatprep.mubr.bf16.mxu0 0
      %3086 = vmatmul.mubr.bf16.gmra.mrb[0].mxu0 %v3037
      %v3087 = vpop.f32.mrb[0].mxu0
      %v3088 = vadd.f32 0.0, %v3087
      %v3089 = vpop.f32.mrb[0].mxu0
      %v3090 = vpop.f32.mrb[0].mxu0
      %v3091 = vadd.f32 0.0, %v3090
      %v3092 = vpop.f32.mrb[0].mxu0
      %3093 = vmatprep.mubr.bf16.mxu0 0
      %3094 = vmatmul.mubr.bf16.gmra.mrb[0].mxu0 %v3040
      %v3095 = vpop.f32.mrb[0].mxu0
      %v3096 = vadd.f32 0.0, %v3095
      %v3097 = vpop.f32.mrb[0].mxu0
      %v3098 = vpop.f32.mrb[0].mxu0
      %v3099 = vadd.f32 0.0, %v3098
      %v3100 = vpop.f32.mrb[0].mxu0
      %3101 = vmatprep.mubr.bf16.mxu0 0
      %3102 = vmatmul.mubr.bf16.gmra.mrb[0].mxu0 %v3043
      %v3103 = vpop.f32.mrb[0].mxu0
      %v3104 = vadd.f32 0.0, %v3103
      %v3105 = vpop.f32.mrb[0].mxu0
      %v3106 = vpop.f32.mrb[0].mxu0
      %v3107 = vadd.f32 0.0, %v3106
      %v3108 = vpop.f32.mrb[0].mxu0
      %3109 = vdwg.mxu0
      %v3118 = vunpack.c.l.b16 %v420
      %v3119 = vunpack.c.l.b16 %v421
      %v3120 = vunpack.c.l.b16 %v422
      %v3121 = vunpack.c.l.b16 %v423
      %v3122 = vunpack.c.l.b16 %v424
      %v3123 = vunpack.c.l.b16 %v425
      %v3124 = vunpack.c.l.b16 %v426
      %v3125 = vunpack.c.l.b16 %v427
      %v3126 = vpack.c.b16 %v3119, %v3118
      %v3127 = vpack.c.b16 %v3121, %v3120
      %v3128 = vpack.c.b16 %v3123, %v3122
      %v3129 = vpack.c.b16 %v3125, %v3124
      %v3135 = vsel %vm1743, %v2488, 0
      %v3138 = vsel %vm1743, %v2489, 0
      %v3141 = vsel %vm1743, %v2490, 0
      %v3144 = vsel %vm1743, %v2491, 0
      %3146 = vmatprep.subr.bf16.mxu0 0
      %3147 = vmatpush1.bf16.msra.mxu0 %v3126
      %3148 = vmatprep.subr.bf16.mxu0 0
      %3149 = vmatpush1.bf16.msra.mxu0 %v3127
      %3150 = vmatprep.subr.bf16.mxu0 0
      %3151 = vmatpush1.bf16.msra.mxu0 %v3128
      %3152 = vmatprep.subr.bf16.mxu0 0
      %3153 = vmatpush1.bf16.msra.mxu0 %v3129
      %3154 = vmatprep.subr.bf16.mxu0 0
      %3155 = vmatpush1.bf16.msra.mxu0 0
      %3156 = vmatprep.subr.bf16.mxu0 0
      %3157 = vmatpush1.bf16.msra.mxu0 0
      %3158 = vmatprep.subr.bf16.mxu0 0
      %3159 = vmatpush1.bf16.msra.mxu0 0
      %3160 = vmatprep.subr.bf16.mxu0 0
      %3161 = vmatpush1.bf16.msra.mxu0 0
      %3162 = vmatprep.subr.bf16.mxu0 0
      %3163 = vmatpush1.bf16.msra.mxu0 0
      %3164 = vmatprep.subr.bf16.mxu0 0
      %3165 = vmatpush1.bf16.msra.mxu0 0
      %3166 = vmatprep.subr.bf16.mxu0 0
      %3167 = vmatpush1.bf16.msra.mxu0 0
      %3168 = vmatprep.subr.bf16.mxu0 0
      %3169 = vmatpush1.bf16.msra.mxu0 0
      %3170 = vmatprep.subr.bf16.mxu0 0
      %3171 = vmatpush1.bf16.msra.mxu0 0
      %3172 = vmatprep.subr.bf16.mxu0 0
      %3173 = vmatpush1.bf16.msra.mxu0 0
      %3174 = vmatprep.subr.bf16.mxu0 0
      %3175 = vmatpush1.bf16.msra.mxu0 0
      %3176 = vmatprep.subr.bf16.mxu0 0
      %3177 = vmatpush1.bf16.msra.mxu0 0
      %3178 = vmatprep.mubr.bf16.mxu0 0
      %3179 = vmatmul.mubr.bf16.gmra.mrb[0].mxu0 %v3135
      %v3180 = vpop.f32.mrb[0].mxu0
      %v3181 = vadd.f32 0.0, %v3180
      %v3182 = vpop.f32.mrb[0].mxu0
      %v3183 = vpop.f32.mrb[0].mxu0
      %v3184 = vadd.f32 0.0, %v3183
      %v3185 = vpop.f32.mrb[0].mxu0
      %3186 = vmatprep.mubr.bf16.mxu0 0
      %3187 = vmatmul.mubr.bf16.gmra.mrb[0].mxu0 %v3138
      %v3188 = vpop.f32.mrb[0].mxu0
      %v3189 = vadd.f32 0.0, %v3188
      %v3190 = vpop.f32.mrb[0].mxu0
      %v3191 = vpop.f32.mrb[0].mxu0
      %v3192 = vadd.f32 0.0, %v3191
      %v3193 = vpop.f32.mrb[0].mxu0
      %3194 = vmatprep.mubr.bf16.mxu0 0
      %3195 = vmatmul.mubr.bf16.gmra.mrb[0].mxu0 %v3141
      %v3196 = vpop.f32.mrb[0].mxu0
      %v3197 = vadd.f32 0.0, %v3196
      %v3198 = vpop.f32.mrb[0].mxu0
      %v3199 = vpop.f32.mrb[0].mxu0
      %v3200 = vadd.f32 0.0, %v3199
      %v3201 = vpop.f32.mrb[0].mxu0
      %3202 = vmatprep.mubr.bf16.mxu0 0
      %3203 = vmatmul.mubr.bf16.gmra.mrb[0].mxu0 %v3144
      %v3204 = vpop.f32.mrb[0].mxu0
      %v3205 = vadd.f32 0.0, %v3204
      %v3206 = vpop.f32.mrb[0].mxu0
      %v3207 = vpop.f32.mrb[0].mxu0
      %v3208 = vadd.f32 0.0, %v3207
      %v3209 = vpop.f32.mrb[0].mxu0
      %3210 = vdwg.mxu0
      %v3219 = vunpack.c.l.b16 %v428
      %v3220 = vunpack.c.l.b16 %v429
      %v3221 = vunpack.c.l.b16 %v430
      %v3222 = vunpack.c.l.b16 %v431
      %v3223 = vunpack.c.l.b16 %v432
      %v3224 = vunpack.c.l.b16 %v433
      %v3225 = vunpack.c.l.b16 %v434
      %v3226 = vunpack.c.l.b16 %v435
      %v3227 = vpack.c.b16 %v3220, %v3219
      %v3228 = vpack.c.b16 %v3222, %v3221
      %v3229 = vpack.c.b16 %v3224, %v3223
      %v3230 = vpack.c.b16 %v3226, %v3225
      %v3236 = vsel %vm1743, %v2492, 0
      %v3239 = vsel %vm1743, %v2493, 0
      %v3242 = vsel %vm1743, %v2494, 0
      %v3245 = vsel %vm1743, %v2495, 0
      %3247 = vmatprep.subr.bf16.mxu0 0
      %3248 = vmatpush1.bf16.msra.mxu0 %v3227
      %3249 = vmatprep.subr.bf16.mxu0 0
      %3250 = vmatpush1.bf16.msra.mxu0 %v3228
      %3251 = vmatprep.subr.bf16.mxu0 0
      %3252 = vmatpush1.bf16.msra.mxu0 %v3229
      %3253 = vmatprep.subr.bf16.mxu0 0
      %3254 = vmatpush1.bf16.msra.mxu0 %v3230
      %3255 = vmatprep.subr.bf16.mxu0 0
      %3256 = vmatpush1.bf16.msra.mxu0 0
      %3257 = vmatprep.subr.bf16.mxu0 0
      %3258 = vmatpush1.bf16.msra.mxu0 0
      %3259 = vmatprep.subr.bf16.mxu0 0
      %3260 = vmatpush1.bf16.msra.mxu0 0
      %3261 = vmatprep.subr.bf16.mxu0 0
      %3262 = vmatpush1.bf16.msra.mxu0 0
      %3263 = vmatprep.subr.bf16.mxu0 0
      %3264 = vmatpush1.bf16.msra.mxu0 0
      %3265 = vmatprep.subr.bf16.mxu0 0
      %3266 = vmatpush1.bf16.msra.mxu0 0
      %3267 = vmatprep.subr.bf16.mxu0 0
      %3268 = vmatpush1.bf16.msra.mxu0 0
      %3269 = vmatprep.subr.bf16.mxu0 0
      %3270 = vmatpush1.bf16.msra.mxu0 0
      %3271 = vmatprep.subr.bf16.mxu0 0
      %3272 = vmatpush1.bf16.msra.mxu0 0
      %3273 = vmatprep.subr.bf16.mxu0 0
      %3274 = vmatpush1.bf16.msra.mxu0 0
      %3275 = vmatprep.subr.bf16.mxu0 0
      %3276 = vmatpush1.bf16.msra.mxu0 0
      %3277 = vmatprep.subr.bf16.mxu0 0
      %3278 = vmatpush1.bf16.msra.mxu0 0
      %3279 = vmatprep.mubr.bf16.mxu0 0
      %3280 = vmatmul.mubr.bf16.gmra.mrb[0].mxu0 %v3236
      %v3281 = vpop.f32.mrb[0].mxu0
      %v3282 = vadd.f32 0.0, %v3281
      %v3283 = vpop.f32.mrb[0].mxu0
      %v3284 = vpop.f32.mrb[0].mxu0
      %v3285 = vadd.f32 0.0, %v3284
      %v3286 = vpop.f32.mrb[0].mxu0
      %3287 = vmatprep.mubr.bf16.mxu0 0
      %3288 = vmatmul.mubr.bf16.gmra.mrb[0].mxu0 %v3239
      %v3289 = vpop.f32.mrb[0].mxu0
      %v3290 = vadd.f32 0.0, %v3289
      %v3291 = vpop.f32.mrb[0].mxu0
      %v3292 = vpop.f32.mrb[0].mxu0
      %v3293 = vadd.f32 0.0, %v3292
      %v3294 = vpop.f32.mrb[0].mxu0
      %3295 = vmatprep.mubr.bf16.mxu0 0
      %3296 = vmatmul.mubr.bf16.gmra.mrb[0].mxu0 %v3242
      %v3297 = vpop.f32.mrb[0].mxu0
      %v3298 = vadd.f32 0.0, %v3297
      %v3299 = vpop.f32.mrb[0].mxu0
      %v3300 = vpop.f32.mrb[0].mxu0
      %v3301 = vadd.f32 0.0, %v3300
      %v3302 = vpop.f32.mrb[0].mxu0
      %3303 = vmatprep.mubr.bf16.mxu0 0
      %3304 = vmatmul.mubr.bf16.gmra.mrb[0].mxu0 %v3245
      %v3305 = vpop.f32.mrb[0].mxu0
      %v3306 = vadd.f32 0.0, %v3305
      %v3307 = vpop.f32.mrb[0].mxu0
      %v3308 = vpop.f32.mrb[0].mxu0
      %v3309 = vadd.f32 0.0, %v3308
      %v3310 = vpop.f32.mrb[0].mxu0
      %3311 = vdwg.mxu0
      %v3320 = vunpack.c.l.b16 %v436
      %v3321 = vunpack.c.l.b16 %v437
      %v3322 = vunpack.c.l.b16 %v438
      %v3323 = vunpack.c.l.b16 %v439
      %v3324 = vunpack.c.l.b16 %v440
      %v3325 = vunpack.c.l.b16 %v441
      %v3326 = vunpack.c.l.b16 %v442
      %v3327 = vunpack.c.l.b16 %v443
      %v3328 = vpack.c.b16 %v3321, %v3320
      %v3329 = vpack.c.b16 %v3323, %v3322
      %v3330 = vpack.c.b16 %v3325, %v3324
      %v3331 = vpack.c.b16 %v3327, %v3326
      %v3337 = vsel %vm1743, %v2496, 0
      %v3340 = vsel %vm1743, %v2497, 0
      %v3343 = vsel %vm1743, %v2498, 0
      %v3346 = vsel %vm1743, %v2499, 0
      %3348 = vmatprep.subr.bf16.mxu0 0
      %3349 = vmatpush1.bf16.msra.mxu0 %v3328
      %3350 = vmatprep.subr.bf16.mxu0 0
      %3351 = vmatpush1.bf16.msra.mxu0 %v3329
      %3352 = vmatprep.subr.bf16.mxu0 0
      %3353 = vmatpush1.bf16.msra.mxu0 %v3330
      %3354 = vmatprep.subr.bf16.mxu0 0
      %3355 = vmatpush1.bf16.msra.mxu0 %v3331
      %3356 = vmatprep.subr.bf16.mxu0 0
      %3357 = vmatpush1.bf16.msra.mxu0 0
      %3358 = vmatprep.subr.bf16.mxu0 0
      %3359 = vmatpush1.bf16.msra.mxu0 0
      %3360 = vmatprep.subr.bf16.mxu0 0
      %3361 = vmatpush1.bf16.msra.mxu0 0
      %3362 = vmatprep.subr.bf16.mxu0 0
      %3363 = vmatpush1.bf16.msra.mxu0 0
      %3364 = vmatprep.subr.bf16.mxu0 0
      %3365 = vmatpush1.bf16.msra.mxu0 0
      %3366 = vmatprep.subr.bf16.mxu0 0
      %3367 = vmatpush1.bf16.msra.mxu0 0
      %3368 = vmatprep.subr.bf16.mxu0 0
      %3369 = vmatpush1.bf16.msra.mxu0 0
      %3370 = vmatprep.subr.bf16.mxu0 0
      %3371 = vmatpush1.bf16.msra.mxu0 0
      %3372 = vmatprep.subr.bf16.mxu0 0
      %3373 = vmatpush1.bf16.msra.mxu0 0
      %3374 = vmatprep.subr.bf16.mxu0 0
      %3375 = vmatpush1.bf16.msra.mxu0 0
      %3376 = vmatprep.subr.bf16.mxu0 0
      %3377 = vmatpush1.bf16.msra.mxu0 0
      %3378 = vmatprep.subr.bf16.mxu0 0
      %3379 = vmatpush1.bf16.msra.mxu0 0
      %3380 = vmatprep.mubr.bf16.mxu0 0
      %3381 = vmatmul.mubr.bf16.gmra.mrb[0].mxu0 %v3337
      %v3382 = vpop.f32.mrb[0].mxu0
      %v3383 = vadd.f32 0.0, %v3382
      %v3384 = vpop.f32.mrb[0].mxu0
      %v3385 = vpop.f32.mrb[0].mxu0
      %v3386 = vadd.f32 0.0, %v3385
      %v3387 = vpop.f32.mrb[0].mxu0
      %3388 = vmatprep.mubr.bf16.mxu0 0
      %3389 = vmatmul.mubr.bf16.gmra.mrb[0].mxu0 %v3340
      %v3390 = vpop.f32.mrb[0].mxu0
      %v3391 = vadd.f32 0.0, %v3390
      %v3392 = vpop.f32.mrb[0].mxu0
      %v3393 = vpop.f32.mrb[0].mxu0
      %v3394 = vadd.f32 0.0, %v3393
      %v3395 = vpop.f32.mrb[0].mxu0
      %3396 = vmatprep.mubr.bf16.mxu0 0
      %3397 = vmatmul.mubr.bf16.gmra.mrb[0].mxu0 %v3343
      %v3398 = vpop.f32.mrb[0].mxu0
      %v3399 = vadd.f32 0.0, %v3398
      %v3400 = vpop.f32.mrb[0].mxu0
      %v3401 = vpop.f32.mrb[0].mxu0
      %v3402 = vadd.f32 0.0, %v3401
      %v3403 = vpop.f32.mrb[0].mxu0
      %3404 = vmatprep.mubr.bf16.mxu0 0
      %3405 = vmatmul.mubr.bf16.gmra.mrb[0].mxu0 %v3346
      %v3406 = vpop.f32.mrb[0].mxu0
      %v3407 = vadd.f32 0.0, %v3406
      %v3408 = vpop.f32.mrb[0].mxu0
      %v3409 = vpop.f32.mrb[0].mxu0
      %v3410 = vadd.f32 0.0, %v3409
      %v3411 = vpop.f32.mrb[0].mxu0
      %3412 = vdwg.mxu0
      %v3421 = vunpack.c.l.b16 %v444
      %v3422 = vunpack.c.l.b16 %v445
      %v3423 = vunpack.c.l.b16 %v446
      %v3424 = vunpack.c.l.b16 %v447
      %v3425 = vunpack.c.l.b16 %v448
      %v3426 = vunpack.c.l.b16 %v449
      %v3427 = vunpack.c.l.b16 %v450
      %v3428 = vunpack.c.l.b16 %v451
      %v3429 = vpack.c.b16 %v3422, %v3421
      %v3430 = vpack.c.b16 %v3424, %v3423
      %v3431 = vpack.c.b16 %v3426, %v3425
      %v3432 = vpack.c.b16 %v3428, %v3427
      %v3438 = vsel %vm1743, %v2500, 0
      %v3441 = vsel %vm1743, %v2501, 0
      %v3444 = vsel %vm1743, %v2502, 0
      %v3447 = vsel %vm1743, %v2503, 0
      %3449 = vmatprep.subr.bf16.mxu0 0
      %3450 = vmatpush1.bf16.msra.mxu0 %v3429
      %3451 = vmatprep.subr.bf16.mxu0 0
      %3452 = vmatpush1.bf16.msra.mxu0 %v3430
      %3453 = vmatprep.subr.bf16.mxu0 0
      %3454 = vmatpush1.bf16.msra.mxu0 %v3431
      %3455 = vmatprep.subr.bf16.mxu0 0
      %3456 = vmatpush1.bf16.msra.mxu0 %v3432
      %3457 = vmatprep.subr.bf16.mxu0 0
      %3458 = vmatpush1.bf16.msra.mxu0 0
      %3459 = vmatprep.subr.bf16.mxu0 0
      %3460 = vmatpush1.bf16.msra.mxu0 0
      %3461 = vmatprep.subr.bf16.mxu0 0
      %3462 = vmatpush1.bf16.msra.mxu0 0
      %3463 = vmatprep.subr.bf16.mxu0 0
      %3464 = vmatpush1.bf16.msra.mxu0 0
      %3465 = vmatprep.subr.bf16.mxu0 0
      %3466 = vmatpush1.bf16.msra.mxu0 0
      %3467 = vmatprep.subr.bf16.mxu0 0
      %3468 = vmatpush1.bf16.msra.mxu0 0
      %3469 = vmatprep.subr.bf16.mxu0 0
      %3470 = vmatpush1.bf16.msra.mxu0 0
      %3471 = vmatprep.subr.bf16.mxu0 0
      %3472 = vmatpush1.bf16.msra.mxu0 0
      %3473 = vmatprep.subr.bf16.mxu0 0
      %3474 = vmatpush1.bf16.msra.mxu0 0
      %3475 = vmatprep.subr.bf16.mxu0 0
      %3476 = vmatpush1.bf16.msra.mxu0 0
      %3477 = vmatprep.subr.bf16.mxu0 0
      %3478 = vmatpush1.bf16.msra.mxu0 0
      %3479 = vmatprep.subr.bf16.mxu0 0
      %3480 = vmatpush1.bf16.msra.mxu0 0
      %3481 = vmatprep.mubr.bf16.mxu0 0
      %3482 = vmatmul.mubr.bf16.gmra.mrb[0].mxu0 %v3438
      %v3483 = vpop.f32.mrb[0].mxu0
      %v3484 = vadd.f32 0.0, %v3483
      %v3485 = vpop.f32.mrb[0].mxu0
      %v3486 = vpop.f32.mrb[0].mxu0
      %v3487 = vadd.f32 0.0, %v3486
      %v3488 = vpop.f32.mrb[0].mxu0
      %3489 = vmatprep.mubr.bf16.mxu0 0
      %3490 = vmatmul.mubr.bf16.gmra.mrb[0].mxu0 %v3441
      %v3491 = vpop.f32.mrb[0].mxu0
      %v3492 = vadd.f32 0.0, %v3491
      %v3493 = vpop.f32.mrb[0].mxu0
      %v3494 = vpop.f32.mrb[0].mxu0
      %v3495 = vadd.f32 0.0, %v3494
      %v3496 = vpop.f32.mrb[0].mxu0
      %3497 = vmatprep.mubr.bf16.mxu0 0
      %3498 = vmatmul.mubr.bf16.gmra.mrb[0].mxu0 %v3444
      %v3499 = vpop.f32.mrb[0].mxu0
      %v3500 = vadd.f32 0.0, %v3499
      %v3501 = vpop.f32.mrb[0].mxu0
      %v3502 = vpop.f32.mrb[0].mxu0
      %v3503 = vadd.f32 0.0, %v3502
      %v3504 = vpop.f32.mrb[0].mxu0
      %3505 = vmatprep.mubr.bf16.mxu0 0
      %3506 = vmatmul.mubr.bf16.gmra.mrb[0].mxu0 %v3447
      %v3507 = vpop.f32.mrb[0].mxu0
      %v3508 = vadd.f32 0.0, %v3507
      %v3509 = vpop.f32.mrb[0].mxu0
      %v3510 = vpop.f32.mrb[0].mxu0
      %v3511 = vadd.f32 0.0, %v3510
      %v3512 = vpop.f32.mrb[0].mxu0
      %3513 = vdwg.mxu0
      %v3514 = vrcp.pop %v2226
      %v3515 = vmul.f32 %v2575, %v3514
      %v3516 = vrcp.pop %v2229
      %v3517 = vmul.f32 %v2578, %v3516
      %v3518 = vrcp.pop %v2232
      %v3519 = vmul.f32 %v2583, %v3518
      %v3520 = vrcp.pop %v2235
      %v3521 = vmul.f32 %v2586, %v3520
      %v3522 = vrcp.pop %v2238
      %v3523 = vmul.f32 %v2591, %v3522
      %v3524 = vrcp.pop %v2241
      %v3525 = vmul.f32 %v2594, %v3524
      %v3526 = vrcp.pop %v2244
      %v3527 = vmul.f32 %v2599, %v3526
      %v3528 = vrcp.pop %v2247
      %v3529 = vmul.f32 %v2602, %v3528
      %v3530 = vrcp.pop %v2250
      %v3531 = vmul.f32 %v2676, %v3530
      %v3532 = vrcp.pop %v2253
      %v3533 = vmul.f32 %v2679, %v3532
      %v3534 = vrcp.pop %v2256
      %v3535 = vmul.f32 %v2684, %v3534
      %v3536 = vrcp.pop %v2259
      %v3537 = vmul.f32 %v2687, %v3536
      %v3538 = vrcp.pop %v2262
      %v3539 = vmul.f32 %v2692, %v3538
      %v3540 = vrcp.pop %v2265
      %v3541 = vmul.f32 %v2695, %v3540
      %v3542 = vrcp.pop %v2268
      %v3543 = vmul.f32 %v2700, %v3542
      %v3544 = vrcp.pop %v2271
      %v3545 = vmul.f32 %v2703, %v3544
      %v3546 = vrcp.pop %v2274
      %v3547 = vmul.f32 %v2777, %v3546
      %v3548 = vrcp.pop %v2277
      %v3549 = vmul.f32 %v2780, %v3548
      %v3550 = vrcp.pop %v2280
      %v3551 = vmul.f32 %v2785, %v3550
      %v3552 = vrcp.pop %v2283
      %v3553 = vmul.f32 %v2788, %v3552
      %v3554 = vrcp.pop %v2286
      %v3555 = vmul.f32 %v2793, %v3554
      %v3556 = vrcp.pop %v2289
      %v3557 = vmul.f32 %v2796, %v3556
      %v3558 = vrcp.pop %v2292
      %v3559 = vmul.f32 %v2801, %v3558
      %v3560 = vrcp.pop %v2295
      %v3561 = vmul.f32 %v2804, %v3560
      %v3562 = vrcp.pop %v2298
      %v3563 = vmul.f32 %v2878, %v3562
      %v3564 = vrcp.pop %v2301
      %v3565 = vmul.f32 %v2881, %v3564
      %v3566 = vrcp.pop %v2304
      %v3567 = vmul.f32 %v2886, %v3566
      %v3568 = vrcp.pop %v2307
      %v3569 = vmul.f32 %v2889, %v3568
      %v3570 = vrcp.pop %v2310
      %v3571 = vmul.f32 %v2894, %v3570
      %v3572 = vrcp.pop %v2313
      %v3573 = vmul.f32 %v2897, %v3572
      %v3574 = vrcp.pop %v2316
      %v3575 = vmul.f32 %v2902, %v3574
      %v3576 = vrcp.pop %v2319
      %v3577 = vmul.f32 %v2905, %v3576
      %v3578 = vrcp.pop %v2322
      %v3579 = vmul.f32 %v2979, %v3578
      %v3580 = vrcp.pop %v2325
      %v3581 = vmul.f32 %v2982, %v3580
      %v3582 = vrcp.pop %v2328
      %v3583 = vmul.f32 %v2987, %v3582
      %v3584 = vrcp.pop %v2331
      %v3585 = vmul.f32 %v2990, %v3584
      %v3586 = vrcp.pop %v2334
      %v3587 = vmul.f32 %v2995, %v3586
      %v3588 = vrcp.pop %v2337
      %v3589 = vmul.f32 %v2998, %v3588
      %v3590 = vrcp.pop %v2340
      %v3591 = vmul.f32 %v3003, %v3590
      %v3592 = vrcp.pop %v2343
      %v3593 = vmul.f32 %v3006, %v3592
      %v3594 = vrcp.pop %v2346
      %v3595 = vmul.f32 %v3080, %v3594
      %v3596 = vrcp.pop %v2349
      %v3597 = vmul.f32 %v3083, %v3596
      %v3598 = vrcp.pop %v2352
      %v3599 = vmul.f32 %v3088, %v3598
      %v3600 = vrcp.pop %v2355
      %v3601 = vmul.f32 %v3091, %v3600
      %v3602 = vrcp.pop %v2358
      %v3603 = vmul.f32 %v3096, %v3602
      %v3604 = vrcp.pop %v2361
      %v3605 = vmul.f32 %v3099, %v3604
      %v3606 = vrcp.pop %v2364
      %v3607 = vmul.f32 %v3104, %v3606
      %v3608 = vrcp.pop %v2367
      %v3609 = vmul.f32 %v3107, %v3608
      %v3610 = vrcp.pop %v2370
      %v3611 = vmul.f32 %v3181, %v3610
      %v3612 = vrcp.pop %v2373
      %v3613 = vmul.f32 %v3184, %v3612
      %v3614 = vrcp.pop %v2376
      %v3615 = vmul.f32 %v3189, %v3614
      %v3616 = vrcp.pop %v2379
      %v3617 = vmul.f32 %v3192, %v3616
      %v3618 = vrcp.pop %v2382
      %v3619 = vmul.f32 %v3197, %v3618
      %v3620 = vrcp.pop %v2385
      %v3621 = vmul.f32 %v3200, %v3620
      %v3622 = vrcp.pop %v2388
      %v3623 = vmul.f32 %v3205, %v3622
      %v3624 = vrcp.pop %v2391
      %v3625 = vmul.f32 %v3208, %v3624
      %v3626 = vrcp.pop %v2394
      %v3627 = vmul.f32 %v3282, %v3626
      %v3628 = vrcp.pop %v2397
      %v3629 = vmul.f32 %v3285, %v3628
      %v3630 = vrcp.pop %v2400
      %v3631 = vmul.f32 %v3290, %v3630
      %v3632 = vrcp.pop %v2403
      %v3633 = vmul.f32 %v3293, %v3632
      %v3634 = vrcp.pop %v2406
      %v3635 = vmul.f32 %v3298, %v3634
      %v3636 = vrcp.pop %v2409
      %v3637 = vmul.f32 %v3301, %v3636
      %v3638 = vrcp.pop %v2412
      %v3639 = vmul.f32 %v3306, %v3638
      %v3640 = vrcp.pop %v2415
      %v3641 = vmul.f32 %v3309, %v3640
      %v3642 = vrcp.pop %v2418
      %v3643 = vmul.f32 %v3383, %v3642
      %v3644 = vrcp.pop %v2421
      %v3645 = vmul.f32 %v3386, %v3644
      %v3646 = vrcp.pop %v2424
      %v3647 = vmul.f32 %v3391, %v3646
      %v3648 = vrcp.pop %v2427
      %v3649 = vmul.f32 %v3394, %v3648
      %v3650 = vrcp.pop %v2430
      %v3651 = vmul.f32 %v3399, %v3650
      %v3652 = vrcp.pop %v2433
      %v3653 = vmul.f32 %v3402, %v3652
      %v3654 = vrcp.pop %v2436
      %v3655 = vmul.f32 %v3407, %v3654
      %v3656 = vrcp.pop %v2439
      %v3657 = vmul.f32 %v3410, %v3656
      %v3658 = vrcp.pop %v2442
      %v3659 = vmul.f32 %v3484, %v3658
      %v3660 = vrcp.pop %v2445
      %v3661 = vmul.f32 %v3487, %v3660
      %v3662 = vrcp.pop %v2448
      %v3663 = vmul.f32 %v3492, %v3662
      %v3664 = vrcp.pop %v2451
      %v3665 = vmul.f32 %v3495, %v3664
      %v3666 = vrcp.pop %v2454
      %v3667 = vmul.f32 %v3500, %v3666
      %v3668 = vrcp.pop %v2457
      %v3669 = vmul.f32 %v3503, %v3668
      %v3670 = vrcp.pop %v2460
      %v3671 = vmul.f32 %v3508, %v3670
      %v3672 = vrcp.pop %v2463
      %v3673 = vmul.f32 %v3511, %v3672
      %v3674 = vpack.c.bf16 %v3517, %v3515
      %v3675 = vpack.c.bf16 %v3521, %v3519
      %v3676 = vpack.c.bf16 %v3525, %v3523
      %v3677 = vpack.c.bf16 %v3529, %v3527
      %v3678 = vpack.c.bf16 %v3533, %v3531
      %v3679 = vpack.c.bf16 %v3537, %v3535
      %v3680 = vpack.c.bf16 %v3541, %v3539
      %v3681 = vpack.c.bf16 %v3545, %v3543
      %v3682 = vpack.c.bf16 %v3549, %v3547
      %v3683 = vpack.c.bf16 %v3553, %v3551
      %v3684 = vpack.c.bf16 %v3557, %v3555
      %v3685 = vpack.c.bf16 %v3561, %v3559
      %v3686 = vpack.c.bf16 %v3565, %v3563
      %v3687 = vpack.c.bf16 %v3569, %v3567
      %v3688 = vpack.c.bf16 %v3573, %v3571
      %v3689 = vpack.c.bf16 %v3577, %v3575
      %v3690 = vpack.c.bf16 %v3581, %v3579
      %v3691 = vpack.c.bf16 %v3585, %v3583
      %v3692 = vpack.c.bf16 %v3589, %v3587
      %v3693 = vpack.c.bf16 %v3593, %v3591
      %v3694 = vpack.c.bf16 %v3597, %v3595
      %v3695 = vpack.c.bf16 %v3601, %v3599
      %v3696 = vpack.c.bf16 %v3605, %v3603
      %v3697 = vpack.c.bf16 %v3609, %v3607
      %v3698 = vpack.c.bf16 %v3613, %v3611
      %v3699 = vpack.c.bf16 %v3617, %v3615
      %v3700 = vpack.c.bf16 %v3621, %v3619
      %v3701 = vpack.c.bf16 %v3625, %v3623
      %v3702 = vpack.c.bf16 %v3629, %v3627
      %v3703 = vpack.c.bf16 %v3633, %v3631
      %v3704 = vpack.c.bf16 %v3637, %v3635
      %v3705 = vpack.c.bf16 %v3641, %v3639
      %v3706 = vpack.c.bf16 %v3645, %v3643
      %v3707 = vpack.c.bf16 %v3649, %v3647
      %v3708 = vpack.c.bf16 %v3653, %v3651
      %v3709 = vpack.c.bf16 %v3657, %v3655
      %v3710 = vpack.c.bf16 %v3661, %v3659
      %v3711 = vpack.c.bf16 %v3665, %v3663
      %v3712 = vpack.c.bf16 %v3669, %v3667
      %v3713 = vpack.c.bf16 %v3673, %v3671
      %v3754 = vunpack.c.l.b16 %v3674
      %v3755 = vunpack.c.h.b16 %v3674
      %v3756 = vunpack.c.l.b16 %v3675
      %v3757 = vunpack.c.h.b16 %v3675
      %v3758 = vunpack.c.l.b16 %v3676
      %v3759 = vunpack.c.h.b16 %v3676
      %v3760 = vunpack.c.l.b16 %v3677
      %v3761 = vunpack.c.h.b16 %v3677
      %v3762 = vunpack.c.l.b16 %v3678
      %v3763 = vunpack.c.h.b16 %v3678
      %v3764 = vunpack.c.l.b16 %v3679
      %v3765 = vunpack.c.h.b16 %v3679
      %v3766 = vunpack.c.l.b16 %v3680
      %v3767 = vunpack.c.h.b16 %v3680
      %v3768 = vunpack.c.l.b16 %v3681
      %v3769 = vunpack.c.h.b16 %v3681
      %v3770 = vunpack.c.l.b16 %v3682
      %v3771 = vunpack.c.h.b16 %v3682
      %v3772 = vunpack.c.l.b16 %v3683
      %v3773 = vunpack.c.h.b16 %v3683
      %v3774 = vunpack.c.l.b16 %v3684
      %v3775 = vunpack.c.h.b16 %v3684
      %v3776 = vunpack.c.l.b16 %v3685
      %v3777 = vunpack.c.h.b16 %v3685
      %v3778 = vunpack.c.l.b16 %v3686
      %v3779 = vunpack.c.h.b16 %v3686
      %v3780 = vunpack.c.l.b16 %v3687
      %v3781 = vunpack.c.h.b16 %v3687
      %v3782 = vunpack.c.l.b16 %v3688
      %v3783 = vunpack.c.h.b16 %v3688
      %v3784 = vunpack.c.l.b16 %v3689
      %v3785 = vunpack.c.h.b16 %v3689
      %v3786 = vunpack.c.l.b16 %v3690
      %v3787 = vunpack.c.h.b16 %v3690
      %v3788 = vunpack.c.l.b16 %v3691
      %v3789 = vunpack.c.h.b16 %v3691
      %v3790 = vunpack.c.l.b16 %v3692
      %v3791 = vunpack.c.h.b16 %v3692
      %v3792 = vunpack.c.l.b16 %v3693
      %v3793 = vunpack.c.h.b16 %v3693
      %v3794 = vunpack.c.l.b16 %v3694
      %v3795 = vunpack.c.h.b16 %v3694
      %v3796 = vunpack.c.l.b16 %v3695
      %v3797 = vunpack.c.h.b16 %v3695
      %v3798 = vunpack.c.l.b16 %v3696
      %v3799 = vunpack.c.h.b16 %v3696
      %v3800 = vunpack.c.l.b16 %v3697
      %v3801 = vunpack.c.h.b16 %v3697
      %v3802 = vunpack.c.l.b16 %v3698
      %v3803 = vunpack.c.h.b16 %v3698
      %v3804 = vunpack.c.l.b16 %v3699
      %v3805 = vunpack.c.h.b16 %v3699
      %v3806 = vunpack.c.l.b16 %v3700
      %v3807 = vunpack.c.h.b16 %v3700
      %v3808 = vunpack.c.l.b16 %v3701
      %v3809 = vunpack.c.h.b16 %v3701
      %v3810 = vunpack.c.l.b16 %v3702
      %v3811 = vunpack.c.h.b16 %v3702
      %v3812 = vunpack.c.l.b16 %v3703
      %v3813 = vunpack.c.h.b16 %v3703
      %v3814 = vunpack.c.l.b16 %v3704
      %v3815 = vunpack.c.h.b16 %v3704
      %v3816 = vunpack.c.l.b16 %v3705
      %v3817 = vunpack.c.h.b16 %v3705
      %v3818 = vunpack.c.l.b16 %v3706
      %v3819 = vunpack.c.h.b16 %v3706
      %v3820 = vunpack.c.l.b16 %v3707
      %v3821 = vunpack.c.h.b16 %v3707
      %v3822 = vunpack.c.l.b16 %v3708
      %v3823 = vunpack.c.h.b16 %v3708
      %v3824 = vunpack.c.l.b16 %v3709
      %v3825 = vunpack.c.h.b16 %v3709
      %v3826 = vunpack.c.l.b16 %v3710
      %v3827 = vunpack.c.h.b16 %v3710
      %v3828 = vunpack.c.l.b16 %v3711
      %v3829 = vunpack.c.h.b16 %v3711
      %v3830 = vunpack.c.l.b16 %v3712
      %v3831 = vunpack.c.h.b16 %v3712
      %v3832 = vunpack.c.l.b16 %v3713
      %v3833 = vunpack.c.h.b16 %v3713
      %v3834 = vpack.c.b16 %v3754, %v3754
      %v3835 = vpack.c.b16 %v3755, %v3755
      %v3836 = vpack.c.b16 %v3756, %v3756
      %v3837 = vpack.c.b16 %v3757, %v3757
      %v3838 = vpack.c.b16 %v3758, %v3758
      %v3839 = vpack.c.b16 %v3759, %v3759
      %v3840 = vpack.c.b16 %v3760, %v3760
      %v3841 = vpack.c.b16 %v3761, %v3761
      %v3842 = vpack.c.b16 %v3762, %v3762
      %v3843 = vpack.c.b16 %v3763, %v3763
      %v3844 = vpack.c.b16 %v3764, %v3764
      %v3845 = vpack.c.b16 %v3765, %v3765
      %v3846 = vpack.c.b16 %v3766, %v3766
      %v3847 = vpack.c.b16 %v3767, %v3767
      %v3848 = vpack.c.b16 %v3768, %v3768
      %v3849 = vpack.c.b16 %v3769, %v3769
      %v3850 = vpack.c.b16 %v3770, %v3770
      %v3851 = vpack.c.b16 %v3771, %v3771
      %v3852 = vpack.c.b16 %v3772, %v3772
      %v3853 = vpack.c.b16 %v3773, %v3773
      %v3854 = vpack.c.b16 %v3774, %v3774
      %v3855 = vpack.c.b16 %v3775, %v3775
      %v3856 = vpack.c.b16 %v3776, %v3776
      %v3857 = vpack.c.b16 %v3777, %v3777
      %v3858 = vpack.c.b16 %v3778, %v3778
      %v3859 = vpack.c.b16 %v3779, %v3779
      %v3860 = vpack.c.b16 %v3780, %v3780
      %v3861 = vpack.c.b16 %v3781, %v3781
      %v3862 = vpack.c.b16 %v3782, %v3782
      %v3863 = vpack.c.b16 %v3783, %v3783
      %v3864 = vpack.c.b16 %v3784, %v3784
      %v3865 = vpack.c.b16 %v3785, %v3785
      %v3866 = vpack.c.b16 %v3786, %v3786
      %v3867 = vpack.c.b16 %v3787, %v3787
      %v3868 = vpack.c.b16 %v3788, %v3788
      %v3869 = vpack.c.b16 %v3789, %v3789
      %v3870 = vpack.c.b16 %v3790, %v3790
      %v3871 = vpack.c.b16 %v3791, %v3791
      %v3872 = vpack.c.b16 %v3792, %v3792
      %v3873 = vpack.c.b16 %v3793, %v3793
      %v3874 = vpack.c.b16 %v3794, %v3794
      %v3875 = vpack.c.b16 %v3795, %v3795
      %v3876 = vpack.c.b16 %v3796, %v3796
      %v3877 = vpack.c.b16 %v3797, %v3797
      %v3878 = vpack.c.b16 %v3798, %v3798
      %v3879 = vpack.c.b16 %v3799, %v3799
      %v3880 = vpack.c.b16 %v3800, %v3800
      %v3881 = vpack.c.b16 %v3801, %v3801
      %v3882 = vpack.c.b16 %v3802, %v3802
      %v3883 = vpack.c.b16 %v3803, %v3803
      %v3884 = vpack.c.b16 %v3804, %v3804
      %v3885 = vpack.c.b16 %v3805, %v3805
      %v3886 = vpack.c.b16 %v3806, %v3806
      %v3887 = vpack.c.b16 %v3807, %v3807
      %v3888 = vpack.c.b16 %v3808, %v3808
      %v3889 = vpack.c.b16 %v3809, %v3809
      %v3890 = vpack.c.b16 %v3810, %v3810
      %v3891 = vpack.c.b16 %v3811, %v3811
      %v3892 = vpack.c.b16 %v3812, %v3812
      %v3893 = vpack.c.b16 %v3813, %v3813
      %v3894 = vpack.c.b16 %v3814, %v3814
      %v3895 = vpack.c.b16 %v3815, %v3815
      %v3896 = vpack.c.b16 %v3816, %v3816
      %v3897 = vpack.c.b16 %v3817, %v3817
      %v3898 = vpack.c.b16 %v3818, %v3818
      %v3899 = vpack.c.b16 %v3819, %v3819
      %v3900 = vpack.c.b16 %v3820, %v3820
      %v3901 = vpack.c.b16 %v3821, %v3821
      %v3902 = vpack.c.b16 %v3822, %v3822
      %v3903 = vpack.c.b16 %v3823, %v3823
      %v3904 = vpack.c.b16 %v3824, %v3824
      %v3905 = vpack.c.b16 %v3825, %v3825
      %v3906 = vpack.c.b16 %v3826, %v3826
      %v3907 = vpack.c.b16 %v3827, %v3827
      %v3908 = vpack.c.b16 %v3828, %v3828
      %v3909 = vpack.c.b16 %v3829, %v3829
      %v3910 = vpack.c.b16 %v3830, %v3830
      %v3911 = vpack.c.b16 %v3831, %v3831
      %v3912 = vpack.c.b16 %v3832, %v3832
      %v3913 = vpack.c.b16 %v3833, %v3833
      %vm3994 = vcmask 125952
      %3995 = vst.msk [vmem:[%s210] sm:$0xf] %vm3994, %v3834
      %3996 = vst.msk [vmem:[%s210 + $0x4] sm:$0xf] %vm3994, %v3835
      %3997 = vst.msk [vmem:[%s210 + $0x8] sm:$0xf] %vm3994, %v3836
      %3998 = vst.msk [vmem:[%s210 + $0xc] sm:$0xf] %vm3994, %v3837
      %3999 = vst.msk [vmem:[%s210 + $0x10] sm:$0xf] %vm3994, %v3838
      %4000 = vst.msk [vmem:[%s210 + $0x14] sm:$0xf] %vm3994, %v3839
      %4001 = vst.msk [vmem:[%s210 + $0x18] sm:$0xf] %vm3994, %v3840
      %4002 = vst.msk [vmem:[%s210 + $0x1c] sm:$0xf] %vm3994, %v3841
      %4003 = vst.msk [vmem:[%s210 + $0x20] sm:$0xf] %vm3994, %v3842
      %4004 = vst.msk [vmem:[%s210 + $0x24] sm:$0xf] %vm3994, %v3843
      %4005 = vst.msk [vmem:[%s210 + $0x28] sm:$0xf] %vm3994, %v3844
      %4006 = vst.msk [vmem:[%s210 + $0x2c] sm:$0xf] %vm3994, %v3845
      %4007 = vst.msk [vmem:[%s210 + $0x30] sm:$0xf] %vm3994, %v3846
      %4008 = vst.msk [vmem:[%s210 + $0x34] sm:$0xf] %vm3994, %v3847
      %4009 = vst.msk [vmem:[%s210 + $0x38] sm:$0xf] %vm3994, %v3848
      %4010 = vst.msk [vmem:[%s210 + $0x3c] sm:$0xf] %vm3994, %v3849
      %4011 = vst.msk [vmem:[%s210 + $0x40] sm:$0xf] %vm3994, %v3850
      %4012 = vst.msk [vmem:[%s210 + $0x44] sm:$0xf] %vm3994, %v3851
      %4013 = vst.msk [vmem:[%s210 + $0x48] sm:$0xf] %vm3994, %v3852
      %4014 = vst.msk [vmem:[%s210 + $0x4c] sm:$0xf] %vm3994, %v3853
      %4015 = vst.msk [vmem:[%s210 + $0x50] sm:$0xf] %vm3994, %v3854
      %4016 = vst.msk [vmem:[%s210 + $0x54] sm:$0xf] %vm3994, %v3855
      %4017 = vst.msk [vmem:[%s210 + $0x58] sm:$0xf] %vm3994, %v3856
      %4018 = vst.msk [vmem:[%s210 + $0x5c] sm:$0xf] %vm3994, %v3857
      %4019 = vst.msk [vmem:[%s210 + $0x60] sm:$0xf] %vm3994, %v3858
      %4020 = vst.msk [vmem:[%s210 + $0x64] sm:$0xf] %vm3994, %v3859
      %4021 = vst.msk [vmem:[%s210 + $0x68] sm:$0xf] %vm3994, %v3860
      %4022 = vst.msk [vmem:[%s210 + $0x6c] sm:$0xf] %vm3994, %v3861
      %4023 = vst.msk [vmem:[%s210 + $0x70] sm:$0xf] %vm3994, %v3862
      %4024 = vst.msk [vmem:[%s210 + $0x74] sm:$0xf] %vm3994, %v3863
      %4025 = vst.msk [vmem:[%s210 + $0x78] sm:$0xf] %vm3994, %v3864
      %4026 = vst.msk [vmem:[%s210 + $0x7c] sm:$0xf] %vm3994, %v3865
      %4027 = vst.msk [vmem:[%s210 + $0x80] sm:$0xf] %vm3994, %v3866
      %4028 = vst.msk [vmem:[%s210 + $0x84] sm:$0xf] %vm3994, %v3867
      %4029 = vst.msk [vmem:[%s210 + $0x88] sm:$0xf] %vm3994, %v3868
      %4030 = vst.msk [vmem:[%s210 + $0x8c] sm:$0xf] %vm3994, %v3869
      %4031 = vst.msk [vmem:[%s210 + $0x90] sm:$0xf] %vm3994, %v3870
      %4032 = vst.msk [vmem:[%s210 + $0x94] sm:$0xf] %vm3994, %v3871
      %4033 = vst.msk [vmem:[%s210 + $0x98] sm:$0xf] %vm3994, %v3872
      %4034 = vst.msk [vmem:[%s210 + $0x9c] sm:$0xf] %vm3994, %v3873
      %4035 = vst.msk [vmem:[%s210 + $0xa0] sm:$0xf] %vm3994, %v3874
      %4036 = vst.msk [vmem:[%s210 + $0xa4] sm:$0xf] %vm3994, %v3875
      %4037 = vst.msk [vmem:[%s210 + $0xa8] sm:$0xf] %vm3994, %v3876
      %4038 = vst.msk [vmem:[%s210 + $0xac] sm:$0xf] %vm3994, %v3877
      %4039 = vst.msk [vmem:[%s210 + $0xb0] sm:$0xf] %vm3994, %v3878
      %4040 = vst.msk [vmem:[%s210 + $0xb4] sm:$0xf] %vm3994, %v3879
      %4041 = vst.msk [vmem:[%s210 + $0xb8] sm:$0xf] %vm3994, %v3880
      %4042 = vst.msk [vmem:[%s210 + $0xbc] sm:$0xf] %vm3994, %v3881
      %4043 = vst.msk [vmem:[%s210 + $0xc0] sm:$0xf] %vm3994, %v3882
      %4044 = vst.msk [vmem:[%s210 + $0xc4] sm:$0xf] %vm3994, %v3883
      %4045 = vst.msk [vmem:[%s210 + $0xc8] sm:$0xf] %vm3994, %v3884
      %4046 = vst.msk [vmem:[%s210 + $0xcc] sm:$0xf] %vm3994, %v3885
      %4047 = vst.msk [vmem:[%s210 + $0xd0] sm:$0xf] %vm3994, %v3886
      %4048 = vst.msk [vmem:[%s210 + $0xd4] sm:$0xf] %vm3994, %v3887
      %4049 = vst.msk [vmem:[%s210 + $0xd8] sm:$0xf] %vm3994, %v3888
      %4050 = vst.msk [vmem:[%s210 + $0xdc] sm:$0xf] %vm3994, %v3889
      %4051 = vst.msk [vmem:[%s210 + $0xe0] sm:$0xf] %vm3994, %v3890
      %4052 = vst.msk [vmem:[%s210 + $0xe4] sm:$0xf] %vm3994, %v3891
      %4053 = vst.msk [vmem:[%s210 + $0xe8] sm:$0xf] %vm3994, %v3892
      %4054 = vst.msk [vmem:[%s210 + $0xec] sm:$0xf] %vm3994, %v3893
      %4055 = vst.msk [vmem:[%s210 + $0xf0] sm:$0xf] %vm3994, %v3894
      %4056 = vst.msk [vmem:[%s210 + $0xf4] sm:$0xf] %vm3994, %v3895
      %4057 = vst.msk [vmem:[%s210 + $0xf8] sm:$0xf] %vm3994, %v3896
      %4058 = vst.msk [vmem:[%s210 + $0xfc] sm:$0xf] %vm3994, %v3897
      %4059 = vst.msk [vmem:[%s210 + $0x100] sm:$0xf] %vm3994, %v3898
      %4060 = vst.msk [vmem:[%s210 + $0x104] sm:$0xf] %vm3994, %v3899
      %4061 = vst.msk [vmem:[%s210 + $0x108] sm:$0xf] %vm3994, %v3900
      %4062 = vst.msk [vmem:[%s210 + $0x10c] sm:$0xf] %vm3994, %v3901
      %4063 = vst.msk [vmem:[%s210 + $0x110] sm:$0xf] %vm3994, %v3902
      %4064 = vst.msk [vmem:[%s210 + $0x114] sm:$0xf] %vm3994, %v3903
      %4065 = vst.msk [vmem:[%s210 + $0x118] sm:$0xf] %vm3994, %v3904
      %4066 = vst.msk [vmem:[%s210 + $0x11c] sm:$0xf] %vm3994, %v3905
      %4067 = vst.msk [vmem:[%s210 + $0x120] sm:$0xf] %vm3994, %v3906
      %4068 = vst.msk [vmem:[%s210 + $0x124] sm:$0xf] %vm3994, %v3907
      %4069 = vst.msk [vmem:[%s210 + $0x128] sm:$0xf] %vm3994, %v3908
      %4070 = vst.msk [vmem:[%s210 + $0x12c] sm:$0xf] %vm3994, %v3909
      %4071 = vst.msk [vmem:[%s210 + $0x130] sm:$0xf] %vm3994, %v3910
      %4072 = vst.msk [vmem:[%s210 + $0x134] sm:$0xf] %vm3994, %v3911
      %4073 = vst.msk [vmem:[%s210 + $0x138] sm:$0xf] %vm3994, %v3912
      %4074 = vst.msk [vmem:[%s210 + $0x13c] sm:$0xf] %vm3994, %v3913
      %p4075 = scmp.lt.s32.totalorder %s14, 1
      %s4076 = scalar_select %p4075, %s14, 1
      %s4077 = smul.addr %s4076, 80
      %s4078 = smul.addr %s4077, 4
      %s4079 = scalar_lea.vmem %s3, %s4078
      // Predicated region
      $region33: #{transformerfusion_forward.43} parent=31 // pred_check
        %p4080 = pneg %p110
      $region34: #{transformerfusion_forward.43} parent=31 // pred_check_branch
        %4082 = sbr.rel (%p4080) target = $region36
      $region35: #{transformerfusion_forward.43} parent=31 // pred_region
        _
      $region36: #{transformerfusion_forward.43} parent=31 // pred_fallthru
        _
    $region32: #{transformerfusion_forward.43} parent=5 // pred_fallthru
      _
    %p4083 = scmp.le.s32.totalorder 2, %s9
    // Predicated region
    $region37: #{transformerfusion_forward.43} parent=5 // pred_check
      %p4084 = pneg %p4083
    $region38: #{transformerfusion_forward.43} parent=5 // pred_check_branch
      %4086 = sbr.rel (%p4084) target = $region40
    $region39: #{transformerfusion_forward.43} parent=5 // pred_region
      %s4087 = ssub.s32 %s9, 2
      // Predicated region
      $region41: #{transformerfusion_forward.43} parent=39 // pred_check
        %p4088 = pneg %p116
      $region42: #{transformerfusion_forward.43} parent=39 // pred_check_branch
        %4090 = sbr.rel (%p4088) target = $region44
      $region43: #{transformerfusion_forward.43} parent=39 // pred_region
        %p4091 = scmp.lt.s32.totalorder %s15, 1
        %s4092 = scalar_select %p4091, %s15, 1
        %s4093 = smul.addr %s4092, 80
        %s4094 = smul.addr %s4093, 4
        %s4095 = scalar_lea.vmem %s3, %s4094
      $region44: #{transformerfusion_forward.43} parent=39 // pred_fallthru
        _
    $region40: #{transformerfusion_forward.43} parent=5 // pred_fallthru
      _
  $region6: #{transformerfusion_forward.43} parent=0 // loop_footer
    %s13 = sadd.s32 1, %s9
  $region7: #{transformerfusion_forward.43} parent=0 // loop_footer_branch
    %8 = sbr.rel target = $region3
  $region8: #{transformerfusion_forward.43} parent=0 // loop_exit
    _

// kernel: transformerfusion_forward.46
$region0: #{transformerfusion_forward.46}
  #allocation0 [shape = 'u32[]', space=smem, size = 0x4, offset = 0x4, fixed_abs, tag = 'smem constant byte address 0x4 - core index']
  #allocation1 [shape = 'u32[144,128]{1,0:T(1,128)}', space=vmem, size = 0x12000, scoped, tag = 'internal scratch']
  #allocation2 [shape = 'f32[64,160]{1,0:T(8,128)}', space=vmem, size = 0x10000, scoped, tag = 'scratch operand']
  %s0 = inlined_call_operand.vmem [shape: bf16[128,1024], index: 0, kind: input, shape index: {}]
  %s1 = inlined_call_operand.vmem [shape: bf16[1024,160], index: 1, kind: input, shape index: {}]
  %s2 = inlined_call_operand.vmem [shape: f32[1,160], index: 2, kind: input, shape index: {}]
  %s3 = inlined_call_operand.vmem [shape: f32[1,160], index: 3, kind: input, shape index: {}]
  %s4 = inlined_call_operand.vmem [shape: f32[128,160], index: 4, kind: output, shape index: {}]
  %s5 = sld [smem:[#allocation0]]
  $region80: #{transformerfusion_forward.46} parent=0
    _
  %s7 = ssub.s32 1, %s5
  %s8 = scalar_select 0, %s7, %s5
  $region1: #{transformerfusion_forward.46} parent=0
    #allocation3 [shape = 'u8[131072]{0}', space=vmem, size = 0x20000, scoped, tag = 'input window, operand 0']
    loop: start=0, step=1, limit=6
    $region2: #{transformerfusion_forward.46} parent=1 // loop_pre_header
      _
    $region3: #{transformerfusion_forward.46} parent=1 // loop_header
      %s10 = sphi 0, %s14
      %p11 = scmp.ge.s32.totalorder %s10, 6
      %s17 = sphi 0, %s36
      %s18 = sphi 0, %s32
      %s19 = sphi 0, %s28
      %s20 = sphi 0, %s17
      %s21 = sphi 0, %s18
      %s22 = sphi 0, %s19
      %s23 = sphi 0, %s20
      %s24 = sphi 0, %s21
      %s25 = sphi 0, %s22
      %s41 = sphi 0, %s43
      %s44 = sphi 0, %s41
      %s45 = sphi 0, %s44
      %s61 = sphi 0, %s45
      %s69 = sphi 0, %s71
      %s72 = sphi 0, %s69
      %s73 = sphi 0, %s72
      %s89 = sphi 0, %s73
      %s95 = sphi 0, %s97
      %s98 = sphi 0, %s95
      %s99 = sphi 0, %s98
      %s115 = sphi 0, %s99
      %s121 = sphi 0, %s123
      %s124 = sphi 0, %s121
      %s125 = sphi 0, %s124
      %s141 = sphi 0, %s125
      %s149 = sphi 0, %s151
      %s152 = sphi 0, %s149
      %s153 = sphi 0, %s152
      %s169 = sphi 0, %s153
    $region4: #{transformerfusion_forward.46} parent=1 // loop_header_branch
      %13 = sbr.rel (%p11) target = $region8
    $region5: #{transformerfusion_forward.46} parent=1 // loop_body
      %s15 = ssub.s32 %s10, 1
      %s16 = ssub.s32 %s10, 2
      %s26 = sadd.s32 1, %s19
      %p27 = scmp.ge.s32.totalorder %s26, 2
      %s28 = scalar_select %p27, 0, %s26
      %s29 = sadd.s32 1, %s18
      %s30 = scalar_select %p27, %s29, %s18
      %p31 = scmp.ge.s32.totalorder %s30, 1
      %s32 = scalar_select %p31, 0, %s30
      %s33 = sadd.s32 1, %s17
      %s34 = scalar_select %p31, %s33, %s17
      %p35 = scmp.ge.s32.totalorder %s34, 2
      %s36 = scalar_select %p35, 0, %s34
      %s37 = ssub.s32 %s17, %s36
      %s38 = ssub.s32 %s19, %s28
      %s39 = sor.u32 %s37, %s38
      %p40 = scmp.eq.s32.totalorder %s39, 0
      %s42 = sadd.s32 %s41, 1
      %s43 = scalar_select %p40, %s41, %s42
      %p46 = pneg %p40
      %p47 = scmp.eq.s32.totalorder %s10, 3
      %p48 = por %p46, %p47
      %p49 = scmp.ne.s32.totalorder %s41, %s44
      %p50 = scmp.eq.s32.totalorder %s10, 0
      %p51 = por %p49, %p50
      %p52 = scmp.ne.s32.totalorder %s41, %s44
      %p53 = scmp.eq.s32.totalorder %s15, 3
      %p54 = por %p52, %p53
      %p55 = scmp.ne.s32.totalorder %s44, %s45
      %p56 = scmp.eq.s32.totalorder %s15, 0
      %p57 = por %p55, %p56
      %p58 = scmp.ne.s32.totalorder %s44, %s45
      %p59 = scmp.eq.s32.totalorder %s16, 3
      %p60 = por %p58, %p59
      %p62 = scmp.ne.s32.totalorder %s45, %s61
      %p63 = scmp.eq.s32.totalorder %s16, 0
      %p64 = por %p62, %p63
      %s65 = ssub.s32 %s19, %s28
      %s66 = ssub.s32 %s18, %s32
      %s67 = sor.u32 %s65, %s66
      %p68 = scmp.eq.s32.totalorder %s67, 0
      %s70 = sadd.s32 %s69, 1
      %s71 = scalar_select %p68, %s69, %s70
      %p74 = pneg %p68
      %p75 = scmp.eq.s32.totalorder %s10, 3
      %p76 = por %p74, %p75
      %p77 = scmp.ne.s32.totalorder %s69, %s72
      %p78 = scmp.eq.s32.totalorder %s10, 0
      %p79 = por %p77, %p78
      %p80 = scmp.ne.s32.totalorder %s69, %s72
      %p81 = scmp.eq.s32.totalorder %s15, 3
      %p82 = por %p80, %p81
      %p83 = scmp.ne.s32.totalorder %s72, %s73
      %p84 = scmp.eq.s32.totalorder %s15, 0
      %p85 = por %p83, %p84
      %p86 = scmp.ne.s32.totalorder %s72, %s73
      %p87 = scmp.eq.s32.totalorder %s16, 3
      %p88 = por %p86, %p87
      %p90 = scmp.ne.s32.totalorder %s73, %s89
      %p91 = scmp.eq.s32.totalorder %s16, 0
      %p92 = por %p90, %p91
      %s93 = ssub.s32 %s18, %s32
      %p94 = scmp.eq.s32.totalorder %s93, 0
      %s96 = sadd.s32 %s95, 1
      %s97 = scalar_select %p94, %s95, %s96
      %p100 = pneg %p94
      %p101 = scmp.eq.s32.totalorder %s10, 3
      %p102 = por %p100, %p101
      %p103 = scmp.ne.s32.totalorder %s95, %s98
      %p104 = scmp.eq.s32.totalorder %s10, 0
      %p105 = por %p103, %p104
      %p106 = scmp.ne.s32.totalorder %s95, %s98
      %p107 = scmp.eq.s32.totalorder %s15, 3
      %p108 = por %p106, %p107
      %p109 = scmp.ne.s32.totalorder %s98, %s99
      %p110 = scmp.eq.s32.totalorder %s15, 0
      %p111 = por %p109, %p110
      %p112 = scmp.ne.s32.totalorder %s98, %s99
      %p113 = scmp.eq.s32.totalorder %s16, 3
      %p114 = por %p112, %p113
      %p116 = scmp.ne.s32.totalorder %s99, %s115
      %p117 = scmp.eq.s32.totalorder %s16, 0
      %p118 = por %p116, %p117
      %s119 = ssub.s32 %s18, %s32
      %p120 = scmp.eq.s32.totalorder %s119, 0
      %s122 = sadd.s32 %s121, 1
      %s123 = scalar_select %p120, %s121, %s122
      %p126 = pneg %p120
      %p127 = scmp.eq.s32.totalorder %s10, 3
      %p128 = por %p126, %p127
      %p129 = scmp.ne.s32.totalorder %s121, %s124
      %p130 = scmp.eq.s32.totalorder %s10, 0
      %p131 = por %p129, %p130
      %p132 = scmp.ne.s32.totalorder %s121, %s124
      %p133 = scmp.eq.s32.totalorder %s15, 3
      %p134 = por %p132, %p133
      %p135 = scmp.ne.s32.totalorder %s124, %s125
      %p136 = scmp.eq.s32.totalorder %s15, 0
      %p137 = por %p135, %p136
      %p138 = scmp.ne.s32.totalorder %s124, %s125
      %p139 = scmp.eq.s32.totalorder %s16, 3
      %p140 = por %p138, %p139
      %p142 = scmp.ne.s32.totalorder %s125, %s141
      %p143 = scmp.eq.s32.totalorder %s16, 0
      %p144 = por %p142, %p143
      %s145 = ssub.s32 %s17, %s36
      %s146 = ssub.s32 %s18, %s32
      %s147 = sor.u32 %s145, %s146
      %p148 = scmp.eq.s32.totalorder %s147, 0
      %s150 = sadd.s32 %s149, 1
      %s151 = scalar_select %p148, %s149, %s150
      %p154 = pneg %p148
      %p155 = scmp.eq.s32.totalorder %s10, 3
      %p156 = por %p154, %p155
      %p157 = scmp.ne.s32.totalorder %s149, %s152
      %p158 = scmp.eq.s32.totalorder %s10, 0
      %p159 = por %p157, %p158
      %p160 = scmp.ne.s32.totalorder %s149, %s152
      %p161 = scmp.eq.s32.totalorder %s15, 3
      %p162 = por %p160, %p161
      %p163 = scmp.ne.s32.totalorder %s152, %s153
      %p164 = scmp.eq.s32.totalorder %s15, 0
      %p165 = por %p163, %p164
      %p166 = scmp.ne.s32.totalorder %s152, %s153
      %p167 = scmp.eq.s32.totalorder %s16, 3
      %p168 = por %p166, %p167
      %p170 = scmp.ne.s32.totalorder %s153, %s169
      %p171 = scmp.eq.s32.totalorder %s16, 0
      %p172 = por %p170, %p171
      %p173 = scmp.le.s32.totalorder 1, %s10
      %p174 = scmp.lt.s32.totalorder %s10, 5
      %p175 = pnand %p173, %p174
      %p176 = pneg %p175
      // Predicated region
      $region9: #{transformerfusion_forward.46} parent=5 // pred_check
        _
      $region10: #{transformerfusion_forward.46} parent=5 // pred_check_branch
        %178 = sbr.rel (%p175) target = $region12
      $region11: #{transformerfusion_forward.46} parent=5 // pred_region
        %s179 = ssub.s32 %s10, 1
        // Predicated region
        $region13: #{transformerfusion_forward.46} parent=11 // pred_check
          %p180 = pneg %p111
        $region14: #{transformerfusion_forward.46} parent=11 // pred_check_branch
          %182 = sbr.rel (%p180) target = $region16
        $region15: #{transformerfusion_forward.46} parent=11 // pred_region
          %s183 = smul.u32 2, %s21
          %p184 = scmp.lt.s32.totalorder %s183, 1
          %s185 = scalar_select %p184, %s183, 1
          %s186 = scalar_lea.vmem %s2, %s185
          %s187 = smul.u32 2, %s21
        $region16: #{transformerfusion_forward.46} parent=11 // pred_fallthru
          _
        // Predicated region
        $region17: #{transformerfusion_forward.46} parent=11 // pred_check
          %p188 = pneg %p137
        $region18: #{transformerfusion_forward.46} parent=11 // pred_check_branch
          %190 = sbr.rel (%p188) target = $region20
        $region19: #{transformerfusion_forward.46} parent=11 // pred_region
          %s191 = smul.u32 2, %s21
          %p192 = scmp.lt.s32.totalorder %s191, 1
          %s193 = scalar_select %p192, %s191, 1
          %s194 = scalar_lea.vmem %s3, %s193
          %s195 = smul.u32 2, %s21
        $region20: #{transformerfusion_forward.46} parent=11 // pred_fallthru
          _
      $region12: #{transformerfusion_forward.46} parent=5 // pred_fallthru
        _
      %p196 = scmp.lt.s32.totalorder %s10, 4
      // Predicated region
      $region21: #{transformerfusion_forward.46} parent=5 // pred_check
        %p197 = pneg %p196
      $region22: #{transformerfusion_forward.46} parent=5 // pred_check_branch
        %199 = sbr.rel (%p197) target = $region24
      $region23: #{transformerfusion_forward.46} parent=5 // pred_region
        // Predicated region
        $region25: #{transformerfusion_forward.46} parent=23 // pred_check
          %p200 = pneg %p51
        $region26: #{transformerfusion_forward.46} parent=23 // pred_check_branch
          %202 = sbr.rel (%p200) target = $region28
        $region27: #{transformerfusion_forward.46} parent=23 // pred_region
          %s203 = sand.u32 %s41, 1
          %s204 = sand.u32 %s41, 1
          %s205 = smul.addr %s204, 128
          %s206 = scalar_lea.vmem [#allocation3], %s205
          %s207 = smul.u32 8, %s17
          %s208 = smul.u32 4, %s19
          %s209 = smul.addr %s207, 8
          %s210 = sadd.s32 %s208, %s209
          %s211 = smul.addr %s210, 4
          %s212 = scalar_lea.vmem %s0, %s211
          // Predicated region
          $region29: #{transformerfusion_forward.46} parent=27 // pred_check
            _
          $region30: #{transformerfusion_forward.46} parent=27 // pred_check_branch
            %214 = sbr.rel (0) target = $region32
          $region31: #{transformerfusion_forward.46} parent=27 // pred_region
            // Predicated region
            $region33: #{transformerfusion_forward.46} parent=31 // pred_check
              _
            $region34: #{transformerfusion_forward.46} parent=31 // pred_check_branch
              %216 = sbr.rel (0) target = $region36
            $region35: #{transformerfusion_forward.46} parent=31 // pred_region
              loop: start=0, step=1, limit=1
              $region37: #{transformerfusion_forward.46} parent=35 // loop_pre_header
                _
              $region38: #{transformerfusion_forward.46} parent=35 // loop_header
                %s218 = sphi 0, %s222
                %p219 = scmp.ge.s32.totalorder %s218, 1
                %s223 = sphi %s212, %s212
                %s224 = sphi %s206, %s206
              $region39: #{transformerfusion_forward.46} parent=35 // loop_header_branch
                %221 = sbr.rel (%p219) target = $region43
              $region40: #{transformerfusion_forward.46} parent=35 // loop_body
                %v225 = vld [vmem:[%s223] sm:$0xff]
                %226 = vst [vmem:[%s224] sm:$0xff] %v225
                %v227 = vld [vmem:[%s223 + $0x8] sm:$0xff]
                %228 = vst [vmem:[%s224 + $0x8] sm:$0xff] %v227
                %v229 = vld [vmem:[%s223 + $0x20] sm:$0xff]
                %230 = vst [vmem:[%s224 + $0x10] sm:$0xff] %v229
                %v231 = vld [vmem:[%s223 + $0x28] sm:$0xff]
                %232 = vst [vmem:[%s224 + $0x18] sm:$0xff] %v231
                %v233 = vld [vmem:[%s223 + $0x40] sm:$0xff]
                %234 = vst [vmem:[%s224 + $0x20] sm:$0xff] %v233
                %v235 = vld [vmem:[%s223 + $0x48] sm:$0xff]
                %236 = vst [vmem:[%s224 + $0x28] sm:$0xff] %v235
                %v237 = vld [vmem:[%s223 + $0x60] sm:$0xff]
                %238 = vst [vmem:[%s224 + $0x30] sm:$0xff] %v237
                %v239 = vld [vmem:[%s223 + $0x68] sm:$0xff]
                %240 = vst [vmem:[%s224 + $0x38] sm:$0xff] %v239
                %v241 = vld [vmem:[%s223 + $0x80] sm:$0xff]
                %242 = vst [vmem:[%s224 + $0x40] sm:$0xff] %v241
                %v243 = vld [vmem:[%s223 + $0x88] sm:$0xff]
                %244 = vst [vmem:[%s224 + $0x48] sm:$0xff] %v243
                %v245 = vld [vmem:[%s223 + $0xa0] sm:$0xff]
                %246 = vst [vmem:[%s224 + $0x50] sm:$0xff] %v245
                %v247 = vld [vmem:[%s223 + $0xa8] sm:$0xff]
                %248 = vst [vmem:[%s224 + $0x58] sm:$0xff] %v247
                %v249 = vld [vmem:[%s223 + $0xc0] sm:$0xff]
                %250 = vst [vmem:[%s224 + $0x60] sm:$0xff] %v249
                %v251 = vld [vmem:[%s223 + $0xc8] sm:$0xff]
                %252 = vst [vmem:[%s224 + $0x68] sm:$0xff] %v251
                %v253 = vld [vmem:[%s223 + $0xe0] sm:$0xff]
                %254 = vst [vmem:[%s224 + $0x70] sm:$0xff] %v253
                %v255 = vld [vmem:[%s223 + $0xe8] sm:$0xff]
                %256 = vst [vmem:[%s224 + $0x78] sm:$0xff] %v255
              $region41: #{transformerfusion_forward.46} parent=35 // loop_footer
                %s222 = sadd.s32 1, %s218
              $region42: #{transformerfusion_forward.46} parent=35 // loop_footer_branch
                %217 = sbr.rel target = $region38
              $region43: #{transformerfusion_forward.46} parent=35 // loop_exit
                _
            $region36: #{transformerfusion_forward.46} parent=31 // pred_fallthru
              _
            // Predicated region
            $region44: #{transformerfusion_forward.46} parent=31 // pred_check
              _
            $region45: #{transformerfusion_forward.46} parent=31 // pred_check_branch
              %258 = sbr.rel target = $region47
            $region46: #{transformerfusion_forward.46} parent=31 // pred_region
              _
            $region47: #{transformerfusion_forward.46} parent=31 // pred_fallthru
              _
          $region32: #{transformerfusion_forward.46} parent=27 // pred_fallthru
            _
          %259 = vnop
        $region28: #{transformerfusion_forward.46} parent=23 // pred_fallthru
          _
        // Predicated region
        $region48: #{transformerfusion_forward.46} parent=23 // pred_check
          %p260 = pneg %p79
        $region49: #{transformerfusion_forward.46} parent=23 // pred_check_branch
          %262 = sbr.rel (%p260) target = $region51
        $region50: #{transformerfusion_forward.46} parent=23 // pred_region
          %s263 = smul.u32 64, %s19
          %s264 = smul.u32 2, %s18
          %p265 = scmp.lt.s32.totalorder %s263, 127
          %s266 = scalar_select %p265, %s263, 127
          %p267 = scmp.lt.s32.totalorder %s264, 1
          %s268 = scalar_select %p267, %s264, 1
          %s269 = smul.addr %s266, 2
          %s270 = sadd.s32 %s268, %s269
          %s271 = smul.addr %s270, 4
          %s272 = scalar_lea.vmem %s1, %s271
          %s273 = smul.u32 64, %s19
          %s274 = smul.u32 2, %s18
        $region51: #{transformerfusion_forward.46} parent=23 // pred_fallthru
          _
      $region24: #{transformerfusion_forward.46} parent=5 // pred_fallthru
        _
      %p275 = scmp.le.s32.totalorder 1, %s10
      %p276 = scmp.lt.s32.totalorder %s10, 5
      %p277 = pnand %p275, %p276
      %p278 = pneg %p277
      // Predicated region
      $region52: #{transformerfusion_forward.46} parent=5 // pred_check
        _
      $region53: #{transformerfusion_forward.46} parent=5 // pred_check_branch
        %280 = sbr.rel (%p277) target = $region55
      $region54: #{transformerfusion_forward.46} parent=5 // pred_region
        %s281 = ssub.s32 %s10, 1
        %s282 = sand.u32 %s44, 1
        %s283 = sand.u32 %s44, 1
        %s284 = smul.addr %s283, 128
        %s285 = scalar_lea.vmem [#allocation3], %s284
        // Predicated region
        $region56: #{transformerfusion_forward.46} parent=54 // pred_check
          %p286 = pneg %p57
        $region57: #{transformerfusion_forward.46} parent=54 // pred_check_branch
          %288 = sbr.rel (%p286) target = $region59
        $region58: #{transformerfusion_forward.46} parent=54 // pred_region
          _
        $region59: #{transformerfusion_forward.46} parent=54 // pred_fallthru
          _
        %s289 = sand.u32 %s44, 1
        %s290 = sand.u32 %s44, 1
        %s291 = smul.addr %s290, 128
        %s292 = scalar_lea.vmem [#allocation3], %s291
        %p293 = pneg %p57
        %p294 = pneg %p54
        %s295 = smul.u32 64, %s22
        %s296 = smul.u32 2, %s21
        %p297 = scmp.lt.s32.totalorder %s295, 127
        %s298 = scalar_select %p297, %s295, 127
        %p299 = scmp.lt.s32.totalorder %s296, 1
        %s300 = scalar_select %p299, %s296, 1
        %s301 = smul.addr %s298, 2
        %s302 = sadd.s32 %s300, %s301
        %s303 = smul.addr %s302, 4
        %s304 = scalar_lea.vmem %s1, %s303
        %p305 = pneg %p85
        %p306 = pneg %p82
        %s307 = smul.u32 2, %s21
        %p308 = scmp.lt.s32.totalorder %s307, 1
        %s309 = scalar_select %p308, %s307, 1
        %s310 = scalar_lea.vmem %s2, %s309
        %p311 = pneg %p111
        %p312 = pneg %p108
        %s313 = smul.u32 2, %s21
        %p314 = scmp.lt.s32.totalorder %s313, 1
        %s315 = scalar_select %p314, %s313, 1
        %s316 = scalar_lea.vmem %s3, %s315
        %p317 = pneg %p137
        %p318 = pneg %p134
        %p319 = pneg %p165
        %p320 = pneg %p162
        %s321 = smul.u32 8, %s20
        %s322 = smul.u32 2, %s21
        %p323 = scmp.lt.s32.totalorder %s321, 15
        %s324 = scalar_select %p323, %s321, 15
        %p325 = scmp.lt.s32.totalorder %s322, 1
        %s326 = scalar_select %p325, %s322, 1
        %s327 = smul.addr %s324, 2
        %s328 = sadd.s32 %s326, %s327
        %s329 = smul.addr %s328, 8
        %s330 = scalar_lea.vmem %s4, %s329
        %s331 = smul.u32 8, %s20
        %s332 = smul.u32 4, %s22
        %s333 = smul.u32 64, %s22
        %s334 = smul.u32 2, %s21
        %p335 = scmp.lt.s32.totalorder %s333, 127
        %s336 = scalar_select %p335, %s333, 127
        %p337 = scmp.lt.s32.totalorder %s334, 1
        %s338 = scalar_select %p337, %s334, 1
        %s339 = smul.addr %s336, 2
        %s340 = sadd.s32 %s338, %s339
        %s341 = smul.addr %s340, 4
        %s342 = scalar_lea.vmem %s1, %s341
        %s343 = smul.u32 64, %s22
        %s344 = smul.u32 2, %s21
        %s345 = smul.u32 2, %s21
        %p346 = scmp.lt.s32.totalorder %s345, 1
        %s347 = scalar_select %p346, %s345, 1
        %s348 = scalar_lea.vmem %s2, %s347
        %s349 = smul.u32 2, %s21
        %s350 = smul.u32 2, %s21
        %p351 = scmp.lt.s32.totalorder %s350, 1
        %s352 = scalar_select %p351, %s350, 1
        %s353 = scalar_lea.vmem %s3, %s352
        %s354 = smul.u32 2, %s21
        %s355 = smul.u32 8, %s20
        %s356 = smul.u32 2, %s21
        %p357 = scmp.lt.s32.totalorder %s355, 15
        %s358 = scalar_select %p357, %s355, 15
        %p359 = scmp.lt.s32.totalorder %s356, 1
        %s360 = scalar_select %p359, %s356, 1
        %s361 = smul.addr %s358, 2
        %s362 = sadd.s32 %s360, %s361
        %s363 = smul.addr %s362, 8
        %s364 = scalar_lea.vmem %s4, %s363
        %s365 = smul.u32 8, %s20
        %s366 = smul.u32 2, %s21
        %p367 = scmp.eq.s32.totalorder %s22, 0
        // Predicated region
        $region60: #{transformerfusion_forward.46} parent=54 // pred_check
          %p368 = pneg %p367
        $region61: #{transformerfusion_forward.46} parent=54 // pred_check_branch
          %370 = sbr.rel (%p368) target = $region63
        $region62: #{transformerfusion_forward.46} parent=54 // pred_region
          %371 = vst [vmem:[#allocation2] sm:$0xff] 0.0
          %vm372 = vcmask 261120
          %373 = vst.msk [vmem:[#allocation2 + $0x8] sm:$0xff] %vm372, 0.0
          %374 = vst [vmem:[#allocation2 + $0x10] sm:$0xff] 0.0
          %375 = vst.msk [vmem:[#allocation2 + $0x18] sm:$0xff] %vm372, 0.0
          %376 = vst [vmem:[#allocation2 + $0x20] sm:$0xff] 0.0
          %377 = vst.msk [vmem:[#allocation2 + $0x28] sm:$0xff] %vm372, 0.0
          %378 = vst [vmem:[#allocation2 + $0x30] sm:$0xff] 0.0
          %379 = vst.msk [vmem:[#allocation2 + $0x38] sm:$0xff] %vm372, 0.0
          %380 = vst [vmem:[#allocation2 + $0x40] sm:$0xff] 0.0
          %381 = vst.msk [vmem:[#allocation2 + $0x48] sm:$0xff] %vm372, 0.0
          %382 = vst [vmem:[#allocation2 + $0x50] sm:$0xff] 0.0
          %383 = vst.msk [vmem:[#allocation2 + $0x58] sm:$0xff] %vm372, 0.0
          %384 = vst [vmem:[#allocation2 + $0x60] sm:$0xff] 0.0
          %385 = vst.msk [vmem:[#allocation2 + $0x68] sm:$0xff] %vm372, 0.0
          %386 = vst [vmem:[#allocation2 + $0x70] sm:$0xff] 0.0
          %387 = vst.msk [vmem:[#allocation2 + $0x78] sm:$0xff] %vm372, 0.0
        $region63: #{transformerfusion_forward.46} parent=54 // pred_fallthru
          _
        %v388 = vld [vmem:[#allocation2] sm:$0xff]
        %v389 = vld [vmem:[#allocation2 + $0x8] sm:$0xff]
        %v390 = vld [vmem:[#allocation2 + $0x10] sm:$0xff]
        %v391 = vld [vmem:[#allocation2 + $0x18] sm:$0xff]
        %v392 = vld [vmem:[#allocation2 + $0x20] sm:$0xff]
        %v393 = vld [vmem:[#allocation2 + $0x28] sm:$0xff]
        %v394 = vld [vmem:[#allocation2 + $0x30] sm:$0xff]
        %v395 = vld [vmem:[#allocation2 + $0x38] sm:$0xff]
        %v396 = vld [vmem:[#allocation2 + $0x40] sm:$0xff]
        %v397 = vld [vmem:[#allocation2 + $0x48] sm:$0xff]
        %v398 = vld [vmem:[#allocation2 + $0x50] sm:$0xff]
        %v399 = vld [vmem:[#allocation2 + $0x58] sm:$0xff]
        %v400 = vld [vmem:[#allocation2 + $0x60] sm:$0xff]
        %v401 = vld [vmem:[#allocation2 + $0x68] sm:$0xff]
        %v402 = vld [vmem:[#allocation2 + $0x70] sm:$0xff]
        %v403 = vld [vmem:[#allocation2 + $0x78] sm:$0xff]
        %v404 = vld [vmem:[%s285] sm:$0xff]
        %v405 = vld [vmem:[%s285 + $0x8] sm:$0xff]
        %v406 = vld [vmem:[%s285 + $0x10] sm:$0xff]
        %v407 = vld [vmem:[%s285 + $0x18] sm:$0xff]
        %v408 = vld [vmem:[%s285 + $0x20] sm:$0xff]
        %v409 = vld [vmem:[%s285 + $0x28] sm:$0xff]
        %v410 = vld [vmem:[%s285 + $0x30] sm:$0xff]
        %v411 = vld [vmem:[%s285 + $0x38] sm:$0xff]
        %v412 = vld [vmem:[%s285 + $0x40] sm:$0xff]
        %v413 = vld [vmem:[%s285 + $0x48] sm:$0xff]
        %v414 = vld [vmem:[%s285 + $0x50] sm:$0xff]
        %v415 = vld [vmem:[%s285 + $0x58] sm:$0xff]
        %v416 = vld [vmem:[%s285 + $0x60] sm:$0xff]
        %v417 = vld [vmem:[%s285 + $0x68] sm:$0xff]
        %v418 = vld [vmem:[%s285 + $0x70] sm:$0xff]
        %v419 = vld [vmem:[%s285 + $0x78] sm:$0xff]
        %v420 = vld [vmem:[%s342] sm:$0xff]
        %v421 = vld [vmem:[%s342 + $0x8] sm:$0xff]
        %v422 = vld [vmem:[%s342 + $0x10] sm:$0xff]
        %v423 = vld [vmem:[%s342 + $0x18] sm:$0xff]
        %v424 = vld [vmem:[%s342 + $0x20] sm:$0xff]
        %v425 = vld [vmem:[%s342 + $0x28] sm:$0xff]
        %v426 = vld [vmem:[%s342 + $0x30] sm:$0xff]
        %v427 = vld [vmem:[%s342 + $0x38] sm:$0xff]
        %v428 = vld [vmem:[%s342 + $0x40] sm:$0xff]
        %v429 = vld [vmem:[%s342 + $0x48] sm:$0xff]
        %v430 = vld [vmem:[%s342 + $0x50] sm:$0xff]
        %v431 = vld [vmem:[%s342 + $0x58] sm:$0xff]
        %v432 = vld [vmem:[%s342 + $0x60] sm:$0xff]
        %v433 = vld [vmem:[%s342 + $0x68] sm:$0xff]
        %v434 = vld [vmem:[%s342 + $0x70] sm:$0xff]
        %v435 = vld [vmem:[%s342 + $0x78] sm:$0xff]
        %v436 = vld [vmem:[%s342 + $0x80] sm:$0xff]
        %v437 = vld [vmem:[%s342 + $0x88] sm:$0xff]
        %v438 = vld [vmem:[%s342 + $0x90] sm:$0xff]
        %v439 = vld [vmem:[%s342 + $0x98] sm:$0xff]
        %v440 = vld [vmem:[%s342 + $0xa0] sm:$0xff]
        %v441 = vld [vmem:[%s342 + $0xa8] sm:$0xff]
        %v442 = vld [vmem:[%s342 + $0xb0] sm:$0xff]
        %v443 = vld [vmem:[%s342 + $0xb8] sm:$0xff]
        %v444 = vld [vmem:[%s342 + $0xc0] sm:$0xff]
        %v445 = vld [vmem:[%s342 + $0xc8] sm:$0xff]
        %v446 = vld [vmem:[%s342 + $0xd0] sm:$0xff]
        %v447 = vld [vmem:[%s342 + $0xd8] sm:$0xff]
        %v448 = vld [vmem:[%s342 + $0xe0] sm:$0xff]
        %v449 = vld [vmem:[%s342 + $0xe8] sm:$0xff]
        %v450 = vld [vmem:[%s342 + $0xf0] sm:$0xff]
        %v451 = vld [vmem:[%s342 + $0xf8] sm:$0xff]
        %v452 = vld [vmem:[%s342 + $0x100] sm:$0xff]
        %v453 = vld [vmem:[%s342 + $0x108] sm:$0xff]
        %v454 = vld [vmem:[%s342 + $0x110] sm:$0xff]
        %v455 = vld [vmem:[%s342 + $0x118] sm:$0xff]
        %v456 = vld [vmem:[%s342 + $0x120] sm:$0xff]
        %v457 = vld [vmem:[%s342 + $0x128] sm:$0xff]
        %v458 = vld [vmem:[%s342 + $0x130] sm:$0xff]
        %v459 = vld [vmem:[%s342 + $0x138] sm:$0xff]
        %v460 = vld [vmem:[%s342 + $0x140] sm:$0xff]
        %v461 = vld [vmem:[%s342 + $0x148] sm:$0xff]
        %v462 = vld [vmem:[%s342 + $0x150] sm:$0xff]
        %v463 = vld [vmem:[%s342 + $0x158] sm:$0xff]
        %v464 = vld [vmem:[%s342 + $0x160] sm:$0xff]
        %v465 = vld [vmem:[%s342 + $0x168] sm:$0xff]
        %v466 = vld [vmem:[%s342 + $0x170] sm:$0xff]
        %v467 = vld [vmem:[%s342 + $0x178] sm:$0xff]
        %v468 = vld [vmem:[%s342 + $0x180] sm:$0xff]
        %v469 = vld [vmem:[%s342 + $0x188] sm:$0xff]
        %v470 = vld [vmem:[%s342 + $0x190] sm:$0xff]
        %v471 = vld [vmem:[%s342 + $0x198] sm:$0xff]
        %v472 = vld [vmem:[%s342 + $0x1a0] sm:$0xff]
        %v473 = vld [vmem:[%s342 + $0x1a8] sm:$0xff]
        %v474 = vld [vmem:[%s342 + $0x1b0] sm:$0xff]
        %v475 = vld [vmem:[%s342 + $0x1b8] sm:$0xff]
        %v476 = vld [vmem:[%s342 + $0x1c0] sm:$0xff]
        %v477 = vld [vmem:[%s342 + $0x1c8] sm:$0xff]
        %v478 = vld [vmem:[%s342 + $0x1d0] sm:$0xff]
        %v479 = vld [vmem:[%s342 + $0x1d8] sm:$0xff]
        %v480 = vld [vmem:[%s342 + $0x1e0] sm:$0xff]
        %v481 = vld [vmem:[%s342 + $0x1e8] sm:$0xff]
        %v482 = vld [vmem:[%s342 + $0x1f0] sm:$0xff]
        %v483 = vld [vmem:[%s342 + $0x1f8] sm:$0xff]
        %v500 = vunpack.c.l.b16 %v404
        %v501 = vunpack.c.h.b16 %v404
        %v502 = vunpack.c.l.b16 %v405
        %v503 = vunpack.c.h.b16 %v405
        %v504 = vunpack.c.l.b16 %v406
        %v505 = vunpack.c.h.b16 %v406
        %v506 = vunpack.c.l.b16 %v407
        %v507 = vunpack.c.h.b16 %v407
        %v508 = vunpack.c.l.b16 %v408
        %v509 = vunpack.c.h.b16 %v408
        %v510 = vunpack.c.l.b16 %v409
        %v511 = vunpack.c.h.b16 %v409
        %v512 = vunpack.c.l.b16 %v410
        %v513 = vunpack.c.h.b16 %v410
        %v514 = vunpack.c.l.b16 %v411
        %v515 = vunpack.c.h.b16 %v411
        %v516 = vunpack.c.l.b16 %v412
        %v517 = vunpack.c.h.b16 %v412
        %v518 = vunpack.c.l.b16 %v413
        %v519 = vunpack.c.h.b16 %v413
        %v520 = vunpack.c.l.b16 %v414
        %v521 = vunpack.c.h.b16 %v414
        %v522 = vunpack.c.l.b16 %v415
        %v523 = vunpack.c.h.b16 %v415
        %v524 = vunpack.c.l.b16 %v416
        %v525 = vunpack.c.h.b16 %v416
        %v526 = vunpack.c.l.b16 %v417
        %v527 = vunpack.c.h.b16 %v417
        %v528 = vunpack.c.l.b16 %v418
        %v529 = vunpack.c.h.b16 %v418
        %v530 = vunpack.c.l.b16 %v419
        %v531 = vunpack.c.h.b16 %v419
        %v532 = vpack.c.b16 %v504, %v500
        %v533 = vpack.c.b16 %v505, %v501
        %v534 = vpack.c.b16 %v506, %v502
        %v535 = vpack.c.b16 %v507, %v503
        %v536 = vpack.c.b16 %v512, %v508
        %v537 = vpack.c.b16 %v513, %v509
        %v538 = vpack.c.b16 %v514, %v510
        %v539 = vpack.c.b16 %v515, %v511
        %v540 = vpack.c.b16 %v520, %v516
        %v541 = vpack.c.b16 %v521, %v517
        %v542 = vpack.c.b16 %v522, %v518
        %v543 = vpack.c.b16 %v523, %v519
        %v544 = vpack.c.b16 %v528, %v524
        %v545 = vpack.c.b16 %v529, %v525
        %v546 = vpack.c.b16 %v530, %v526
        %v547 = vpack.c.b16 %v531, %v527
        %v628 = vunpack.c.l.b16 %v420
        %v629 = vunpack.c.h.b16 %v420
        %v630 = vunpack.c.l.b16 %v421
        %v631 = vunpack.c.h.b16 %v421
        %v632 = vunpack.c.l.b16 %v422
        %v633 = vunpack.c.h.b16 %v422
        %v634 = vunpack.c.l.b16 %v423
        %v635 = vunpack.c.h.b16 %v423
        %v636 = vunpack.c.l.b16 %v424
        %v637 = vunpack.c.h.b16 %v424
        %v638 = vunpack.c.l.b16 %v425
        %v639 = vunpack.c.h.b16 %v425
        %v640 = vunpack.c.l.b16 %v426
        %v641 = vunpack.c.h.b16 %v426
        %v642 = vunpack.c.l.b16 %v427
        %v643 = vunpack.c.h.b16 %v427
        %v644 = vunpack.c.l.b16 %v428
        %v645 = vunpack.c.h.b16 %v428
        %v646 = vunpack.c.l.b16 %v429
        %v647 = vunpack.c.h.b16 %v429
        %v648 = vunpack.c.l.b16 %v430
        %v649 = vunpack.c.h.b16 %v430
        %v650 = vunpack.c.l.b16 %v431
        %v651 = vunpack.c.h.b16 %v431
        %v652 = vunpack.c.l.b16 %v432
        %v653 = vunpack.c.h.b16 %v432
        %v654 = vunpack.c.l.b16 %v433
        %v655 = vunpack.c.h.b16 %v433
        %v656 = vunpack.c.l.b16 %v434
        %v657 = vunpack.c.h.b16 %v434
        %v658 = vunpack.c.l.b16 %v435
        %v659 = vunpack.c.h.b16 %v435
        %v660 = vunpack.c.l.b16 %v436
        %v661 = vunpack.c.h.b16 %v436
        %v662 = vunpack.c.l.b16 %v437
        %v663 = vunpack.c.h.b16 %v437
        %v664 = vunpack.c.l.b16 %v438
        %v665 = vunpack.c.h.b16 %v438
        %v666 = vunpack.c.l.b16 %v439
        %v667 = vunpack.c.h.b16 %v439
        %v668 = vunpack.c.l.b16 %v440
        %v669 = vunpack.c.h.b16 %v440
        %v670 = vunpack.c.l.b16 %v441
        %v671 = vunpack.c.h.b16 %v441
        %v672 = vunpack.c.l.b16 %v442
        %v673 = vunpack.c.h.b16 %v442
        %v674 = vunpack.c.l.b16 %v443
        %v675 = vunpack.c.h.b16 %v443
        %v676 = vunpack.c.l.b16 %v444
        %v677 = vunpack.c.h.b16 %v444
        %v678 = vunpack.c.l.b16 %v445
        %v679 = vunpack.c.h.b16 %v445
        %v680 = vunpack.c.l.b16 %v446
        %v681 = vunpack.c.h.b16 %v446
        %v682 = vunpack.c.l.b16 %v447
        %v683 = vunpack.c.h.b16 %v447
        %v684 = vunpack.c.l.b16 %v448
        %v685 = vunpack.c.h.b16 %v448
        %v686 = vunpack.c.l.b16 %v449
        %v687 = vunpack.c.h.b16 %v449
        %v688 = vunpack.c.l.b16 %v450
        %v689 = vunpack.c.h.b16 %v450
        %v690 = vunpack.c.l.b16 %v451
        %v691 = vunpack.c.h.b16 %v451
        %v692 = vunpack.c.l.b16 %v452
        %v693 = vunpack.c.h.b16 %v452
        %v694 = vunpack.c.l.b16 %v453
        %v695 = vunpack.c.h.b16 %v453
        %v696 = vunpack.c.l.b16 %v454
        %v697 = vunpack.c.h.b16 %v454
        %v698 = vunpack.c.l.b16 %v455
        %v699 = vunpack.c.h.b16 %v455
        %v700 = vunpack.c.l.b16 %v456
        %v701 = vunpack.c.h.b16 %v456
        %v702 = vunpack.c.l.b16 %v457
        %v703 = vunpack.c.h.b16 %v457
        %v704 = vunpack.c.l.b16 %v458
        %v705 = vunpack.c.h.b16 %v458
        %v706 = vunpack.c.l.b16 %v459
        %v707 = vunpack.c.h.b16 %v459
        %v708 = vunpack.c.l.b16 %v460
        %v709 = vunpack.c.h.b16 %v460
        %v710 = vunpack.c.l.b16 %v461
        %v711 = vunpack.c.h.b16 %v461
        %v712 = vunpack.c.l.b16 %v462
        %v713 = vunpack.c.h.b16 %v462
        %v714 = vunpack.c.l.b16 %v463
        %v715 = vunpack.c.h.b16 %v463
        %v716 = vunpack.c.l.b16 %v464
        %v717 = vunpack.c.h.b16 %v464
        %v718 = vunpack.c.l.b16 %v465
        %v719 = vunpack.c.h.b16 %v465
        %v720 = vunpack.c.l.b16 %v466
        %v721 = vunpack.c.h.b16 %v466
        %v722 = vunpack.c.l.b16 %v467
        %v723 = vunpack.c.h.b16 %v467
        %v724 = vunpack.c.l.b16 %v468
        %v725 = vunpack.c.h.b16 %v468
        %v726 = vunpack.c.l.b16 %v469
        %v727 = vunpack.c.h.b16 %v469
        %v728 = vunpack.c.l.b16 %v470
        %v729 = vunpack.c.h.b16 %v470
        %v730 = vunpack.c.l.b16 %v471
        %v731 = vunpack.c.h.b16 %v471
        %v732 = vunpack.c.l.b16 %v472
        %v733 = vunpack.c.h.b16 %v472
        %v734 = vunpack.c.l.b16 %v473
        %v735 = vunpack.c.h.b16 %v473
        %v736 = vunpack.c.l.b16 %v474
        %v737 = vunpack.c.h.b16 %v474
        %v738 = vunpack.c.l.b16 %v475
        %v739 = vunpack.c.h.b16 %v475
        %v740 = vunpack.c.l.b16 %v476
        %v741 = vunpack.c.h.b16 %v476
        %v742 = vunpack.c.l.b16 %v477
        %v743 = vunpack.c.h.b16 %v477
        %v744 = vunpack.c.l.b16 %v478
        %v745 = vunpack.c.h.b16 %v478
        %v746 = vunpack.c.l.b16 %v479
        %v747 = vunpack.c.h.b16 %v479
        %v748 = vunpack.c.l.b16 %v480
        %v749 = vunpack.c.h.b16 %v480
        %v750 = vunpack.c.l.b16 %v481
        %v751 = vunpack.c.h.b16 %v481
        %v752 = vunpack.c.l.b16 %v482
        %v753 = vunpack.c.h.b16 %v482
        %v754 = vunpack.c.l.b16 %v483
        %v755 = vunpack.c.h.b16 %v483
        %v756 = vpack.c.b16 %v630, %v628
        %v757 = vpack.c.b16 %v631, %v629
        %v758 = vpack.c.b16 %v634, %v632
        %v759 = vpack.c.b16 %v635, %v633
        %v760 = vpack.c.b16 %v638, %v636
        %v761 = vpack.c.b16 %v639, %v637
        %v762 = vpack.c.b16 %v642, %v640
        %v763 = vpack.c.b16 %v643, %v641
        %v764 = vpack.c.b16 %v646, %v644
        %v765 = vpack.c.b16 %v647, %v645
        %v766 = vpack.c.b16 %v650, %v648
        %v767 = vpack.c.b16 %v651, %v649
        %v768 = vpack.c.b16 %v654, %v652
        %v769 = vpack.c.b16 %v655, %v653
        %v770 = vpack.c.b16 %v658, %v656
        %v771 = vpack.c.b16 %v659, %v657
        %v772 = vpack.c.b16 %v662, %v660
        %v773 = vpack.c.b16 %v663, %v661
        %v774 = vpack.c.b16 %v666, %v664
        %v775 = vpack.c.b16 %v667, %v665
        %v776 = vpack.c.b16 %v670, %v668
        %v777 = vpack.c.b16 %v671, %v669
        %v778 = vpack.c.b16 %v674, %v672
        %v779 = vpack.c.b16 %v675, %v673
        %v780 = vpack.c.b16 %v678, %v676
        %v781 = vpack.c.b16 %v679, %v677
        %v782 = vpack.c.b16 %v682, %v680
        %v783 = vpack.c.b16 %v683, %v681
        %v784 = vpack.c.b16 %v686, %v684
        %v785 = vpack.c.b16 %v687, %v685
        %v786 = vpack.c.b16 %v690, %v688
        %v787 = vpack.c.b16 %v691, %v689
        %v788 = vpack.c.b16 %v694, %v692
        %v789 = vpack.c.b16 %v695, %v693
        %v790 = vpack.c.b16 %v698, %v696
        %v791 = vpack.c.b16 %v699, %v697
        %v792 = vpack.c.b16 %v702, %v700
        %v793 = vpack.c.b16 %v703, %v701
        %v794 = vpack.c.b16 %v706, %v704
        %v795 = vpack.c.b16 %v707, %v705
        %v796 = vpack.c.b16 %v710, %v708
        %v797 = vpack.c.b16 %v711, %v709
        %v798 = vpack.c.b16 %v714, %v712
        %v799 = vpack.c.b16 %v715, %v713
        %v800 = vpack.c.b16 %v718, %v716
        %v801 = vpack.c.b16 %v719, %v717
        %v802 = vpack.c.b16 %v722, %v720
        %v803 = vpack.c.b16 %v723, %v721
        %v804 = vpack.c.b16 %v726, %v724
        %v805 = vpack.c.b16 %v727, %v725
        %v806 = vpack.c.b16 %v730, %v728
        %v807 = vpack.c.b16 %v731, %v729
        %v808 = vpack.c.b16 %v734, %v732
        %v809 = vpack.c.b16 %v735, %v733
        %v810 = vpack.c.b16 %v738, %v736
        %v811 = vpack.c.b16 %v739, %v737
        %v812 = vpack.c.b16 %v742, %v740
        %v813 = vpack.c.b16 %v743, %v741
        %v814 = vpack.c.b16 %v746, %v744
        %v815 = vpack.c.b16 %v747, %v745
        %v816 = vpack.c.b16 %v750, %v748
        %v817 = vpack.c.b16 %v751, %v749
        %v818 = vpack.c.b16 %v754, %v752
        %v819 = vpack.c.b16 %v755, %v753
        %884 = vmatprep.subr.bf16.mxu0 %v757
        %885 = vmatpush1.bf16.msra.mxu0 %v756
        %886 = vmatprep.subr.bf16.mxu0 %v759
        %887 = vmatpush1.bf16.msra.mxu0 %v758
        %888 = vmatprep.subr.bf16.mxu0 %v761
        %889 = vmatpush1.bf16.msra.mxu0 %v760
        %890 = vmatprep.subr.bf16.mxu0 %v763
        %891 = vmatpush1.bf16.msra.mxu0 %v762
        %892 = vmatprep.subr.bf16.mxu0 %v765
        %893 = vmatpush1.bf16.msra.mxu0 %v764
        %894 = vmatprep.subr.bf16.mxu0 %v767
        %895 = vmatpush1.bf16.msra.mxu0 %v766
        %896 = vmatprep.subr.bf16.mxu0 %v769
        %897 = vmatpush1.bf16.msra.mxu0 %v768
        %898 = vmatprep.subr.bf16.mxu0 %v771
        %899 = vmatpush1.bf16.msra.mxu0 %v770
        %900 = vmatprep.subr.bf16.mxu0 %v773
        %901 = vmatpush1.bf16.msra.mxu0 %v772
        %902 = vmatprep.subr.bf16.mxu0 %v775
        %903 = vmatpush1.bf16.msra.mxu0 %v774
        %904 = vmatprep.subr.bf16.mxu0 %v777
        %905 = vmatpush1.bf16.msra.mxu0 %v776
        %906 = vmatprep.subr.bf16.mxu0 %v779
        %907 = vmatpush1.bf16.msra.mxu0 %v778
        %908 = vmatprep.subr.bf16.mxu0 %v781
        %909 = vmatpush1.bf16.msra.mxu0 %v780
        %910 = vmatprep.subr.bf16.mxu0 %v783
        %911 = vmatpush1.bf16.msra.mxu0 %v782
        %912 = vmatprep.subr.bf16.mxu0 %v785
        %913 = vmatpush1.bf16.msra.mxu0 %v784
        %914 = vmatprep.subr.bf16.mxu0 %v787
        %915 = vmatpush1.bf16.msra.mxu0 %v786
        %916 = vmatprep.mubr.bf16.mxu0 %v533
        %917 = vmatmul.mubr.bf16.gmra.mrb[0].mxu0 %v532
        %v918 = vpop.f32.mrb[0].mxu0
        %v919 = vadd.f32 0.0, %v918
        %v920 = vpop.f32.mrb[0].mxu0
        %v921 = vadd.f32 0.0, %v920
        %v922 = vpop.f32.mrb[0].mxu0
        %v923 = vadd.f32 0.0, %v922
        %v924 = vpop.f32.mrb[0].mxu0
        %v925 = vadd.f32 0.0, %v924
        %926 = vmatprep.mubr.bf16.mxu0 %v537
        %927 = vmatmul.mubr.bf16.gmra.mrb[0].mxu0 %v536
        %v928 = vpop.f32.mrb[0].mxu0
        %v929 = vadd.f32 0.0, %v928
        %v930 = vpop.f32.mrb[0].mxu0
        %v931 = vadd.f32 0.0, %v930
        %v932 = vpop.f32.mrb[0].mxu0
        %v933 = vadd.f32 0.0, %v932
        %v934 = vpop.f32.mrb[0].mxu0
        %v935 = vadd.f32 0.0, %v934
        %936 = vmatprep.mubr.bf16.mxu0 %v541
        %937 = vmatmul.mubr.bf16.gmra.mrb[0].mxu0 %v540
        %v938 = vpop.f32.mrb[0].mxu0
        %v939 = vadd.f32 0.0, %v938
        %v940 = vpop.f32.mrb[0].mxu0
        %v941 = vadd.f32 0.0, %v940
        %v942 = vpop.f32.mrb[0].mxu0
        %v943 = vadd.f32 0.0, %v942
        %v944 = vpop.f32.mrb[0].mxu0
        %v945 = vadd.f32 0.0, %v944
        %946 = vmatprep.mubr.bf16.mxu0 %v545
        %947 = vmatmul.mubr.bf16.gmra.mrb[0].mxu0 %v544
        %v948 = vpop.f32.mrb[0].mxu0
        %v949 = vadd.f32 0.0, %v948
        %v950 = vpop.f32.mrb[0].mxu0
        %v951 = vadd.f32 0.0, %v950
        %v952 = vpop.f32.mrb[0].mxu0
        %v953 = vadd.f32 0.0, %v952
        %v954 = vpop.f32.mrb[0].mxu0
        %v955 = vadd.f32 0.0, %v954
        %956 = vdwg.mxu0
        %957 = vmatprep.subr.bf16.mxu0 %v789
        %958 = vmatpush1.bf16.msra.mxu0 %v788
        %959 = vmatprep.subr.bf16.mxu0 %v791
        %960 = vmatpush1.bf16.msra.mxu0 %v790
        %961 = vmatprep.subr.bf16.mxu0 %v793
        %962 = vmatpush1.bf16.msra.mxu0 %v792
        %963 = vmatprep.subr.bf16.mxu0 %v795
        %964 = vmatpush1.bf16.msra.mxu0 %v794
        %965 = vmatprep.subr.bf16.mxu0 %v797
        %966 = vmatpush1.bf16.msra.mxu0 %v796
        %967 = vmatprep.subr.bf16.mxu0 %v799
        %968 = vmatpush1.bf16.msra.mxu0 %v798
        %969 = vmatprep.subr.bf16.mxu0 %v801
        %970 = vmatpush1.bf16.msra.mxu0 %v800
        %971 = vmatprep.subr.bf16.mxu0 %v803
        %972 = vmatpush1.bf16.msra.mxu0 %v802
        %973 = vmatprep.subr.bf16.mxu0 %v805
        %974 = vmatpush1.bf16.msra.mxu0 %v804
        %975 = vmatprep.subr.bf16.mxu0 %v807
        %976 = vmatpush1.bf16.msra.mxu0 %v806
        %977 = vmatprep.subr.bf16.mxu0 %v809
        %978 = vmatpush1.bf16.msra.mxu0 %v808
        %979 = vmatprep.subr.bf16.mxu0 %v811
        %980 = vmatpush1.bf16.msra.mxu0 %v810
        %981 = vmatprep.subr.bf16.mxu0 %v813
        %982 = vmatpush1.bf16.msra.mxu0 %v812
        %983 = vmatprep.subr.bf16.mxu0 %v815
        %984 = vmatpush1.bf16.msra.mxu0 %v814
        %985 = vmatprep.subr.bf16.mxu0 %v817
        %986 = vmatpush1.bf16.msra.mxu0 %v816
        %987 = vmatprep.subr.bf16.mxu0 %v819
        %988 = vmatpush1.bf16.msra.mxu0 %v818
        %989 = vmatprep.mubr.bf16.mxu0 %v535
        %990 = vmatmul.mubr.bf16.gmra.mrb[0].mxu0 %v534
        %v991 = vpop.f32.mrb[0].mxu0
        %v992 = vadd.f32 %v919, %v991
        %v993 = vpop.f32.mrb[0].mxu0
        %v994 = vadd.f32 %v921, %v993
        %v995 = vpop.f32.mrb[0].mxu0
        %v996 = vadd.f32 %v923, %v995
        %v997 = vpop.f32.mrb[0].mxu0
        %v998 = vadd.f32 %v925, %v997
        %999 = vmatprep.mubr.bf16.mxu0 %v539
        %1000 = vmatmul.mubr.bf16.gmra.mrb[0].mxu0 %v538
        %v1001 = vpop.f32.mrb[0].mxu0
        %v1002 = vadd.f32 %v929, %v1001
        %v1003 = vpop.f32.mrb[0].mxu0
        %v1004 = vadd.f32 %v931, %v1003
        %v1005 = vpop.f32.mrb[0].mxu0
        %v1006 = vadd.f32 %v933, %v1005
        %v1007 = vpop.f32.mrb[0].mxu0
        %v1008 = vadd.f32 %v935, %v1007
        %1009 = vmatprep.mubr.bf16.mxu0 %v543
        %1010 = vmatmul.mubr.bf16.gmra.mrb[0].mxu0 %v542
        %v1011 = vpop.f32.mrb[0].mxu0
        %v1012 = vadd.f32 %v939, %v1011
        %v1013 = vpop.f32.mrb[0].mxu0
        %v1014 = vadd.f32 %v941, %v1013
        %v1015 = vpop.f32.mrb[0].mxu0
        %v1016 = vadd.f32 %v943, %v1015
        %v1017 = vpop.f32.mrb[0].mxu0
        %v1018 = vadd.f32 %v945, %v1017
        %1019 = vmatprep.mubr.bf16.mxu0 %v547
        %1020 = vmatmul.mubr.bf16.gmra.mrb[0].mxu0 %v546
        %v1021 = vpop.f32.mrb[0].mxu0
        %v1022 = vadd.f32 %v949, %v1021
        %v1023 = vpop.f32.mrb[0].mxu0
        %v1024 = vadd.f32 %v951, %v1023
        %v1025 = vpop.f32.mrb[0].mxu0
        %v1026 = vadd.f32 %v953, %v1025
        %v1027 = vpop.f32.mrb[0].mxu0
        %v1028 = vadd.f32 %v955, %v1027
        %1029 = vdwg.mxu0
        %v1030 = vadd.f32 %v388, %v992
        %v1031 = vadd.f32 %v389, %v994
        %v1032 = vadd.f32 %v390, %v996
        %v1033 = vadd.f32 %v391, %v998
        %v1034 = vadd.f32 %v392, %v1002
        %v1035 = vadd.f32 %v393, %v1004
        %v1036 = vadd.f32 %v394, %v1006
        %v1037 = vadd.f32 %v395, %v1008
        %v1038 = vadd.f32 %v396, %v1012
        %v1039 = vadd.f32 %v397, %v1014
        %v1040 = vadd.f32 %v398, %v1016
        %v1041 = vadd.f32 %v399, %v1018
        %v1042 = vadd.f32 %v400, %v1022
        %v1043 = vadd.f32 %v401, %v1024
        %v1044 = vadd.f32 %v402, %v1026
        %v1045 = vadd.f32 %v403, %v1028
        %1046 = vst [vmem:[#allocation2] sm:$0xff] %v1030
        %vm1047 = vcmask 261120
        %1048 = vst.msk [vmem:[#allocation2 + $0x8] sm:$0xff] %vm1047, %v1031
        %1049 = vst [vmem:[#allocation2 + $0x10] sm:$0xff] %v1032
        %1050 = vst.msk [vmem:[#allocation2 + $0x18] sm:$0xff] %vm1047, %v1033
        %1051 = vst [vmem:[#allocation2 + $0x20] sm:$0xff] %v1034
        %1052 = vst.msk [vmem:[#allocation2 + $0x28] sm:$0xff] %vm1047, %v1035
        %1053 = vst [vmem:[#allocation2 + $0x30] sm:$0xff] %v1036
        %1054 = vst.msk [vmem:[#allocation2 + $0x38] sm:$0xff] %vm1047, %v1037
        %1055 = vst [vmem:[#allocation2 + $0x40] sm:$0xff] %v1038
        %1056 = vst.msk [vmem:[#allocation2 + $0x48] sm:$0xff] %vm1047, %v1039
        %1057 = vst [vmem:[#allocation2 + $0x50] sm:$0xff] %v1040
        %1058 = vst.msk [vmem:[#allocation2 + $0x58] sm:$0xff] %vm1047, %v1041
        %1059 = vst [vmem:[#allocation2 + $0x60] sm:$0xff] %v1042
        %1060 = vst.msk [vmem:[#allocation2 + $0x68] sm:$0xff] %vm1047, %v1043
        %1061 = vst [vmem:[#allocation2 + $0x70] sm:$0xff] %v1044
        %1062 = vst.msk [vmem:[#allocation2 + $0x78] sm:$0xff] %vm1047, %v1045
        %p1063 = scmp.eq.s32.totalorder %s22, 1
        // Predicated region
        $region64: #{transformerfusion_forward.46} parent=54 // pred_check
          %p1064 = pneg %p1063
        $region65: #{transformerfusion_forward.46} parent=54 // pred_check_branch
          %1066 = sbr.rel (%p1064) target = $region67
        $region66: #{transformerfusion_forward.46} parent=54 // pred_region
          %v1067 = vld [vmem:[#allocation2] sm:$0xff]
          %v1068 = vld [vmem:[#allocation2 + $0x8] sm:$0xff]
          %v1069 = vld [vmem:[#allocation2 + $0x10] sm:$0xff]
          %v1070 = vld [vmem:[#allocation2 + $0x18] sm:$0xff]
          %v1071 = vld [vmem:[#allocation2 + $0x20] sm:$0xff]
          %v1072 = vld [vmem:[#allocation2 + $0x28] sm:$0xff]
          %v1073 = vld [vmem:[#allocation2 + $0x30] sm:$0xff]
          %v1074 = vld [vmem:[#allocation2 + $0x38] sm:$0xff]
          %v1075 = vld [vmem:[#allocation2 + $0x40] sm:$0xff]
          %v1076 = vld [vmem:[#allocation2 + $0x48] sm:$0xff]
          %v1077 = vld [vmem:[#allocation2 + $0x50] sm:$0xff]
          %v1078 = vld [vmem:[#allocation2 + $0x58] sm:$0xff]
          %v1079 = vld [vmem:[#allocation2 + $0x60] sm:$0xff]
          %v1080 = vld [vmem:[#allocation2 + $0x68] sm:$0xff]
          %v1081 = vld [vmem:[#allocation2 + $0x70] sm:$0xff]
          %v1082 = vld [vmem:[#allocation2 + $0x78] sm:$0xff]
          %v1083 = vld [vmem:[%s348] sm:$0x3]
          %v1085 = vlaneseq
          %v1086 = vshrl.u32 %v1085, 7
          %v1087 = vsub.s32 0, %v1086
          %v1088 = vrot.slane %v1083, %v1087
          %v1089 = vlaneseq
          %v1090 = vshrl.u32 %v1089, 7
          %v1091 = vsub.s32 1, %v1090
          %v1092 = vrot.slane %v1083, %v1091
          %v1095 = vmul.f32 %v1067, %v1088
          %v1096 = vmul.f32 %v1068, %v1092
          %v1097 = vmul.f32 %v1069, %v1088
          %v1098 = vmul.f32 %v1070, %v1092
          %v1099 = vmul.f32 %v1071, %v1088
          %v1100 = vmul.f32 %v1072, %v1092
          %v1101 = vmul.f32 %v1073, %v1088
          %v1102 = vmul.f32 %v1074, %v1092
          %v1103 = vmul.f32 %v1075, %v1088
          %v1104 = vmul.f32 %v1076, %v1092
          %v1105 = vmul.f32 %v1077, %v1088
          %v1106 = vmul.f32 %v1078, %v1092
          %v1107 = vmul.f32 %v1079, %v1088
          %v1108 = vmul.f32 %v1080, %v1092
          %v1109 = vmul.f32 %v1081, %v1088
          %v1110 = vmul.f32 %v1082, %v1092
          %v1111 = vld [vmem:[%s353] sm:$0x3]
          %v1113 = vlaneseq
          %v1114 = vshrl.u32 %v1113, 7
          %v1115 = vsub.s32 0, %v1114
          %v1116 = vrot.slane %v1111, %v1115
          %v1117 = vlaneseq
          %v1118 = vshrl.u32 %v1117, 7
          %v1119 = vsub.s32 1, %v1118
          %v1120 = vrot.slane %v1111, %v1119
          %v1123 = vadd.f32 %v1095, %v1116
          %v1124 = vadd.f32 %v1096, %v1120
          %v1125 = vadd.f32 %v1097, %v1116
          %v1126 = vadd.f32 %v1098, %v1120
          %v1127 = vadd.f32 %v1099, %v1116
          %v1128 = vadd.f32 %v1100, %v1120
          %v1129 = vadd.f32 %v1101, %v1116
          %v1130 = vadd.f32 %v1102, %v1120
          %v1131 = vadd.f32 %v1103, %v1116
          %v1132 = vadd.f32 %v1104, %v1120
          %v1133 = vadd.f32 %v1105, %v1116
          %v1134 = vadd.f32 %v1106, %v1120
          %v1135 = vadd.f32 %v1107, %v1116
          %v1136 = vadd.f32 %v1108, %v1120
          %v1137 = vadd.f32 %v1109, %v1116
          %v1138 = vadd.f32 %v1110, %v1120
          %1139 = vst [vmem:[%s364] sm:$0xff] %v1123
          %1140 = vst.msk [vmem:[%s364 + $0x8] sm:$0xff] %vm1047, %v1124
          %1141 = vst [vmem:[%s364 + $0x10] sm:$0xff] %v1125
          %1142 = vst.msk [vmem:[%s364 + $0x18] sm:$0xff] %vm1047, %v1126
          %1143 = vst [vmem:[%s364 + $0x20] sm:$0xff] %v1127
          %1144 = vst.msk [vmem:[%s364 + $0x28] sm:$0xff] %vm1047, %v1128
          %1145 = vst [vmem:[%s364 + $0x30] sm:$0xff] %v1129
          %1146 = vst.msk [vmem:[%s364 + $0x38] sm:$0xff] %vm1047, %v1130
          %1147 = vst [vmem:[%s364 + $0x40] sm:$0xff] %v1131
          %1148 = vst.msk [vmem:[%s364 + $0x48] sm:$0xff] %vm1047, %v1132
          %1149 = vst [vmem:[%s364 + $0x50] sm:$0xff] %v1133
          %1150 = vst.msk [vmem:[%s364 + $0x58] sm:$0xff] %vm1047, %v1134
          %1151 = vst [vmem:[%s364 + $0x60] sm:$0xff] %v1135
          %1152 = vst.msk [vmem:[%s364 + $0x68] sm:$0xff] %vm1047, %v1136
          %1153 = vst [vmem:[%s364 + $0x70] sm:$0xff] %v1137
          %1154 = vst.msk [vmem:[%s364 + $0x78] sm:$0xff] %vm1047, %v1138
        $region67: #{transformerfusion_forward.46} parent=54 // pred_fallthru
          _
        %s1155 = smul.u32 8, %s20
        %s1156 = smul.u32 2, %s21
        %p1157 = scmp.lt.s32.totalorder %s1155, 15
        %s1158 = scalar_select %p1157, %s1155, 15
        %p1159 = scmp.lt.s32.totalorder %s1156, 1
        %s1160 = scalar_select %p1159, %s1156, 1
        %s1161 = smul.addr %s1158, 2
        %s1162 = sadd.s32 %s1160, %s1161
        %s1163 = smul.addr %s1162, 8
        %s1164 = scalar_lea.vmem %s4, %s1163
        // Predicated region
        $region68: #{transformerfusion_forward.46} parent=54 // pred_check
          %p1165 = pneg %p162
        $region69: #{transformerfusion_forward.46} parent=54 // pred_check_branch
          %1167 = sbr.rel (%p1165) target = $region71
        $region70: #{transformerfusion_forward.46} parent=54 // pred_region
          %s1168 = smul.u32 8, %s20
          %s1169 = smul.u32 2, %s21
        $region71: #{transformerfusion_forward.46} parent=54 // pred_fallthru
          _
      $region55: #{transformerfusion_forward.46} parent=5 // pred_fallthru
        _
      %p1170 = scmp.le.s32.totalorder 2, %s10
      // Predicated region
      $region72: #{transformerfusion_forward.46} parent=5 // pred_check
        %p1171 = pneg %p1170
      $region73: #{transformerfusion_forward.46} parent=5 // pred_check_branch
        %1173 = sbr.rel (%p1171) target = $region75
      $region74: #{transformerfusion_forward.46} parent=5 // pred_region
        %s1174 = ssub.s32 %s10, 2
        // Predicated region
        $region76: #{transformerfusion_forward.46} parent=74 // pred_check
          %p1175 = pneg %p168
        $region77: #{transformerfusion_forward.46} parent=74 // pred_check_branch
          %1177 = sbr.rel (%p1175) target = $region79
        $region78: #{transformerfusion_forward.46} parent=74 // pred_region
          %s1178 = smul.u32 8, %s23
          %s1179 = smul.u32 2, %s24
          %p1180 = scmp.lt.s32.totalorder %s1178, 15
          %s1181 = scalar_select %p1180, %s1178, 15
          %p1182 = scmp.lt.s32.totalorder %s1179, 1
          %s1183 = scalar_select %p1182, %s1179, 1
          %s1184 = smul.addr %s1181, 2
          %s1185 = sadd.s32 %s1183, %s1184
          %s1186 = smul.addr %s1185, 8
          %s1187 = scalar_lea.vmem %s4, %s1186
        $region79: #{transformerfusion_forward.46} parent=74 // pred_fallthru
          _
      $region75: #{transformerfusion_forward.46} parent=5 // pred_fallthru
        _
    $region6: #{transformerfusion_forward.46} parent=1 // loop_footer
      %s14 = sadd.s32 1, %s10
    $region7: #{transformerfusion_forward.46} parent=1 // loop_footer_branch
      %9 = sbr.rel target = $region3
    $region8: #{transformerfusion_forward.46} parent=1 // loop_exit
      _

// kernel: transformerfusion_forward.82
$region0: #{transformerfusion_forward.82}
  #allocation0 [shape = 'u32[]', space=smem, size = 0x4, offset = 0x4, fixed_abs, tag = 'smem constant byte address 0x4 - core index']
  #allocation1 [shape = 'u32[144,128]{1,0:T(1,128)}', space=vmem, size = 0x12000, scoped, tag = 'internal scratch']
  %s0 = inlined_call_operand.vmem [shape: f32[320,64], index: 0, kind: input, shape index: {}]
  %s1 = inlined_call_operand.vmem [shape: f32[1,64], index: 1, kind: input, shape index: {}]
  %s2 = inlined_call_operand.vmem [shape: f32[1,64], index: 2, kind: input, shape index: {}]
  %s3 = inlined_call_operand.vmem [shape: f32[320,64], index: 3, kind: output, shape index: {}]
  %s4 = sld [smem:[#allocation0]]
  $region45: #{transformerfusion_forward.82} parent=0
    _
  %s6 = ssub.s32 1, %s4
  %s7 = scalar_select 0, %s6, %s4
  loop: start=0, step=1, limit=4
  $region2: #{transformerfusion_forward.82} parent=0 // loop_pre_header
    _
  $region3: #{transformerfusion_forward.82} parent=0 // loop_header
    %s9 = sphi 0, %s13
    %p10 = scmp.ge.s32.totalorder %s9, 4
    %s19 = sphi 0, %s21
    %s22 = sphi 0, %s19
    %s23 = sphi 0, %s22
    %s39 = sphi 0, %s23
    %s43 = sphi 0, %s43
    %s45 = sphi 0, %s43
    %s46 = sphi 0, %s45
    %s60 = sphi 0, %s46
    %s64 = sphi 0, %s64
    %s66 = sphi 0, %s64
    %s67 = sphi 0, %s66
    %s81 = sphi 0, %s67
    %s87 = sphi 0, %s89
    %s90 = sphi 0, %s87
    %s91 = sphi 0, %s90
    %s107 = sphi 0, %s91
  $region4: #{transformerfusion_forward.82} parent=0 // loop_header_branch
    %12 = sbr.rel (%p10) target = $region8
  $region5: #{transformerfusion_forward.82} parent=0 // loop_body
    %s14 = ssub.s32 %s9, 1
    %s15 = ssub.s32 %s9, 2
    %s16 = sadd.s32 %s9, 1
    %s17 = ssub.s32 %s9, %s16
    %p18 = scmp.eq.s32.totalorder %s17, 0
    %s20 = sadd.s32 %s19, 1
    %s21 = scalar_select %p18, %s19, %s20
    %p24 = pneg %p18
    %p25 = scmp.eq.s32.totalorder %s9, 1
    %p26 = por %p24, %p25
    %p27 = scmp.ne.s32.totalorder %s19, %s22
    %p28 = scmp.eq.s32.totalorder %s9, 0
    %p29 = por %p27, %p28
    %p30 = scmp.ne.s32.totalorder %s19, %s22
    %p31 = scmp.eq.s32.totalorder %s14, 1
    %p32 = por %p30, %p31
    %p33 = scmp.ne.s32.totalorder %s22, %s23
    %p34 = scmp.eq.s32.totalorder %s14, 0
    %p35 = por %p33, %p34
    %p36 = scmp.ne.s32.totalorder %s22, %s23
    %p37 = scmp.eq.s32.totalorder %s15, 1
    %p38 = por %p36, %p37
    %p40 = scmp.ne.s32.totalorder %s23, %s39
    %p41 = scmp.eq.s32.totalorder %s15, 0
    %p42 = por %p40, %p41
    %s44 = sadd.s32 %s43, 1
    %p47 = scmp.eq.s32.totalorder %s9, 1
    %p48 = scmp.ne.s32.totalorder %s43, %s45
    %p49 = scmp.eq.s32.totalorder %s9, 0
    %p50 = por %p48, %p49
    %p51 = scmp.ne.s32.totalorder %s43, %s45
    %p52 = scmp.eq.s32.totalorder %s14, 1
    %p53 = por %p51, %p52
    %p54 = scmp.ne.s32.totalorder %s45, %s46
    %p55 = scmp.eq.s32.totalorder %s14, 0
    %p56 = por %p54, %p55
    %p57 = scmp.ne.s32.totalorder %s45, %s46
    %p58 = scmp.eq.s32.totalorder %s15, 1
    %p59 = por %p57, %p58
    %p61 = scmp.ne.s32.totalorder %s46, %s60
    %p62 = scmp.eq.s32.totalorder %s15, 0
    %p63 = por %p61, %p62
    %s65 = sadd.s32 %s64, 1
    %p68 = scmp.eq.s32.totalorder %s9, 1
    %p69 = scmp.ne.s32.totalorder %s64, %s66
    %p70 = scmp.eq.s32.totalorder %s9, 0
    %p71 = por %p69, %p70
    %p72 = scmp.ne.s32.totalorder %s64, %s66
    %p73 = scmp.eq.s32.totalorder %s14, 1
    %p74 = por %p72, %p73
    %p75 = scmp.ne.s32.totalorder %s66, %s67
    %p76 = scmp.eq.s32.totalorder %s14, 0
    %p77 = por %p75, %p76
    %p78 = scmp.ne.s32.totalorder %s66, %s67
    %p79 = scmp.eq.s32.totalorder %s15, 1
    %p80 = por %p78, %p79
    %p82 = scmp.ne.s32.totalorder %s67, %s81
    %p83 = scmp.eq.s32.totalorder %s15, 0
    %p84 = por %p82, %p83
    %s85 = ssub.s32 %s9, %s16
    %p86 = scmp.eq.s32.totalorder %s85, 0
    %s88 = sadd.s32 %s87, 1
    %s89 = scalar_select %p86, %s87, %s88
    %p92 = pneg %p86
    %p93 = scmp.eq.s32.totalorder %s9, 1
    %p94 = por %p92, %p93
    %p95 = scmp.ne.s32.totalorder %s87, %s90
    %p96 = scmp.eq.s32.totalorder %s9, 0
    %p97 = por %p95, %p96
    %p98 = scmp.ne.s32.totalorder %s87, %s90
    %p99 = scmp.eq.s32.totalorder %s14, 1
    %p100 = por %p98, %p99
    %p101 = scmp.ne.s32.totalorder %s90, %s91
    %p102 = scmp.eq.s32.totalorder %s14, 0
    %p103 = por %p101, %p102
    %p104 = scmp.ne.s32.totalorder %s90, %s91
    %p105 = scmp.eq.s32.totalorder %s15, 1
    %p106 = por %p104, %p105
    %p108 = scmp.ne.s32.totalorder %s91, %s107
    %p109 = scmp.eq.s32.totalorder %s15, 0
    %p110 = por %p108, %p109
    %p111 = scmp.le.s32.totalorder 1, %s9
    %p112 = scmp.lt.s32.totalorder %s9, 3
    %p113 = pnand %p111, %p112
    %p114 = pneg %p113
    // Predicated region
    $region9: #{transformerfusion_forward.82} parent=5 // pred_check
      _
    $region10: #{transformerfusion_forward.82} parent=5 // pred_check_branch
      %116 = sbr.rel (%p113) target = $region12
    $region11: #{transformerfusion_forward.82} parent=5 // pred_region
      %s117 = ssub.s32 %s9, 1
      // Predicated region
      $region13: #{transformerfusion_forward.82} parent=11 // pred_check
        %p118 = pneg %p56
      $region14: #{transformerfusion_forward.82} parent=11 // pred_check_branch
        %120 = sbr.rel (%p118) target = $region16
      $region15: #{transformerfusion_forward.82} parent=11 // pred_region
        _
      $region16: #{transformerfusion_forward.82} parent=11 // pred_fallthru
        _
      // Predicated region
      $region17: #{transformerfusion_forward.82} parent=11 // pred_check
        %p121 = pneg %p77
      $region18: #{transformerfusion_forward.82} parent=11 // pred_check_branch
        %123 = sbr.rel (%p121) target = $region20
      $region19: #{transformerfusion_forward.82} parent=11 // pred_region
        _
      $region20: #{transformerfusion_forward.82} parent=11 // pred_fallthru
        _
    $region12: #{transformerfusion_forward.82} parent=5 // pred_fallthru
      _
    %p124 = scmp.lt.s32.totalorder %s9, 2
    // Predicated region
    $region21: #{transformerfusion_forward.82} parent=5 // pred_check
      %p125 = pneg %p124
    $region22: #{transformerfusion_forward.82} parent=5 // pred_check_branch
      %127 = sbr.rel (%p125) target = $region24
    $region23: #{transformerfusion_forward.82} parent=5 // pred_region
      // Predicated region
      $region25: #{transformerfusion_forward.82} parent=23 // pred_check
        %p128 = pneg %p29
      $region26: #{transformerfusion_forward.82} parent=23 // pred_check_branch
        %130 = sbr.rel (%p128) target = $region28
      $region27: #{transformerfusion_forward.82} parent=23 // pred_region
        %s131 = smul.u32 20, %s9
        %p132 = scmp.lt.s32.totalorder %s131, 39
        %s133 = scalar_select %p132, %s131, 39
        %s134 = smul.addr %s133, 8
        %s135 = scalar_lea.vmem %s0, %s134
        %s136 = smul.u32 20, %s9
      $region28: #{transformerfusion_forward.82} parent=23 // pred_fallthru
        _
    $region24: #{transformerfusion_forward.82} parent=5 // pred_fallthru
      _
    %p137 = scmp.le.s32.totalorder 1, %s9
    %p138 = scmp.lt.s32.totalorder %s9, 3
    %p139 = pnand %p137, %p138
    %p140 = pneg %p139
    // Predicated region
    $region29: #{transformerfusion_forward.82} parent=5 // pred_check
      _
    $region30: #{transformerfusion_forward.82} parent=5 // pred_check_branch
      %142 = sbr.rel (%p139) target = $region32
    $region31: #{transformerfusion_forward.82} parent=5 // pred_region
      %s143 = ssub.s32 %s9, 1
      %s144 = smul.u32 20, %s14
      %p145 = scmp.lt.s32.totalorder %s144, 39
      %s146 = scalar_select %p145, %s144, 39
      %s147 = smul.addr %s146, 8
      %s148 = scalar_lea.vmem %s0, %s147
      %p149 = pneg %p35
      %p150 = pneg %p32
      %p151 = pneg %p56
      %p152 = pneg %p53
      %p153 = pneg %p77
      %p154 = pneg %p74
      %p155 = pneg %p103
      %p156 = pneg %p100
      %s157 = smul.u32 20, %s14
      %p158 = scmp.lt.s32.totalorder %s157, 39
      %s159 = scalar_select %p158, %s157, 39
      %s160 = smul.addr %s159, 8
      %s161 = scalar_lea.vmem %s3, %s160
      %s162 = smul.u32 20, %s14
      %p163 = scmp.lt.s32.totalorder %s162, 39
      %s164 = scalar_select %p163, %s162, 39
      %s165 = smul.addr %s164, 8
      %s166 = scalar_lea.vmem %s0, %s165
      %s167 = smul.u32 20, %s14
      %s168 = smul.u32 20, %s14
      %p169 = scmp.lt.s32.totalorder %s168, 39
      %s170 = scalar_select %p169, %s168, 39
      %s171 = smul.addr %s170, 8
      %s172 = scalar_lea.vmem %s3, %s171
      %s173 = smul.u32 20, %s14
      %v174 = vld [vmem:[%s166] sm:$0xff]
      %v175 = vld [vmem:[%s166 + $0x8] sm:$0xff]
      %v176 = vld [vmem:[%s166 + $0x10] sm:$0xff]
      %v177 = vld [vmem:[%s166 + $0x18] sm:$0xff]
      %v178 = vld [vmem:[%s166 + $0x20] sm:$0xff]
      %v179 = vld [vmem:[%s166 + $0x28] sm:$0xff]
      %v180 = vld [vmem:[%s166 + $0x30] sm:$0xff]
      %v181 = vld [vmem:[%s166 + $0x38] sm:$0xff]
      %v182 = vld [vmem:[%s166 + $0x40] sm:$0xff]
      %v183 = vld [vmem:[%s166 + $0x48] sm:$0xff]
      %v184 = vld [vmem:[%s166 + $0x50] sm:$0xff]
      %v185 = vld [vmem:[%s166 + $0x58] sm:$0xff]
      %v186 = vld [vmem:[%s166 + $0x60] sm:$0xff]
      %v187 = vld [vmem:[%s166 + $0x68] sm:$0xff]
      %v188 = vld [vmem:[%s166 + $0x70] sm:$0xff]
      %v189 = vld [vmem:[%s166 + $0x78] sm:$0xff]
      %v190 = vld [vmem:[%s166 + $0x80] sm:$0xff]
      %v191 = vld [vmem:[%s166 + $0x88] sm:$0xff]
      %v192 = vld [vmem:[%s166 + $0x90] sm:$0xff]
      %v193 = vld [vmem:[%s166 + $0x98] sm:$0xff]
      %vm194 = vcmask 523264
      %v195 = vsel %vm194, %v174, 0.0
      %196 = vadd.xlane.f32.xlu0 %v195
      %v197 = vpop.xlane.xlu0 %196
      %v198 = vsel %vm194, %v175, 0.0
      %199 = vadd.xlane.f32.xlu0 %v198
      %v200 = vpop.xlane.xlu0 %199
      %v201 = vsel %vm194, %v176, 0.0
      %202 = vadd.xlane.f32.xlu0 %v201
      %v203 = vpop.xlane.xlu0 %202
      %v204 = vsel %vm194, %v177, 0.0
      %205 = vadd.xlane.f32.xlu0 %v204
      %v206 = vpop.xlane.xlu0 %205
      %v207 = vsel %vm194, %v178, 0.0
      %208 = vadd.xlane.f32.xlu0 %v207
      %v209 = vpop.xlane.xlu0 %208
      %v210 = vsel %vm194, %v179, 0.0
      %211 = vadd.xlane.f32.xlu0 %v210
      %v212 = vpop.xlane.xlu0 %211
      %v213 = vsel %vm194, %v180, 0.0
      %214 = vadd.xlane.f32.xlu0 %v213
      %v215 = vpop.xlane.xlu0 %214
      %v216 = vsel %vm194, %v181, 0.0
      %217 = vadd.xlane.f32.xlu0 %v216
      %v218 = vpop.xlane.xlu0 %217
      %v219 = vsel %vm194, %v182, 0.0
      %220 = vadd.xlane.f32.xlu0 %v219
      %v221 = vpop.xlane.xlu0 %220
      %v222 = vsel %vm194, %v183, 0.0
      %223 = vadd.xlane.f32.xlu0 %v222
      %v224 = vpop.xlane.xlu0 %223
      %v225 = vsel %vm194, %v184, 0.0
      %226 = vadd.xlane.f32.xlu0 %v225
      %v227 = vpop.xlane.xlu0 %226
      %v228 = vsel %vm194, %v185, 0.0
      %229 = vadd.xlane.f32.xlu0 %v228
      %v230 = vpop.xlane.xlu0 %229
      %v231 = vsel %vm194, %v186, 0.0
      %232 = vadd.xlane.f32.xlu0 %v231
      %v233 = vpop.xlane.xlu0 %232
      %v234 = vsel %vm194, %v187, 0.0
      %235 = vadd.xlane.f32.xlu0 %v234
      %v236 = vpop.xlane.xlu0 %235
      %v237 = vsel %vm194, %v188, 0.0
      %238 = vadd.xlane.f32.xlu0 %v237
      %v239 = vpop.xlane.xlu0 %238
      %v240 = vsel %vm194, %v189, 0.0
      %241 = vadd.xlane.f32.xlu0 %v240
      %v242 = vpop.xlane.xlu0 %241
      %v243 = vsel %vm194, %v190, 0.0
      %244 = vadd.xlane.f32.xlu0 %v243
      %v245 = vpop.xlane.xlu0 %244
      %v246 = vsel %vm194, %v191, 0.0
      %247 = vadd.xlane.f32.xlu0 %v246
      %v248 = vpop.xlane.xlu0 %247
      %v249 = vsel %vm194, %v192, 0.0
      %250 = vadd.xlane.f32.xlu0 %v249
      %v251 = vpop.xlane.xlu0 %250
      %v252 = vsel %vm194, %v193, 0.0
      %253 = vadd.xlane.f32.xlu0 %v252
      %v254 = vpop.xlane.xlu0 %253
      %v255 = vrcp.pop 64.0
      %v256 = vmul.f32 %v197, %v255
      %v257 = vmul.f32 %v200, %v255
      %v258 = vmul.f32 %v203, %v255
      %v259 = vmul.f32 %v206, %v255
      %v260 = vmul.f32 %v209, %v255
      %v261 = vmul.f32 %v212, %v255
      %v262 = vmul.f32 %v215, %v255
      %v263 = vmul.f32 %v218, %v255
      %v264 = vmul.f32 %v221, %v255
      %v265 = vmul.f32 %v224, %v255
      %v266 = vmul.f32 %v227, %v255
      %v267 = vmul.f32 %v230, %v255
      %v268 = vmul.f32 %v233, %v255
      %v269 = vmul.f32 %v236, %v255
      %v270 = vmul.f32 %v239, %v255
      %v271 = vmul.f32 %v242, %v255
      %v272 = vmul.f32 %v245, %v255
      %v273 = vmul.f32 %v248, %v255
      %v274 = vmul.f32 %v251, %v255
      %v275 = vmul.f32 %v254, %v255
      %v276 = vsub.f32 %v174, %v256
      %v277 = vsub.f32 %v175, %v257
      %v278 = vsub.f32 %v176, %v258
      %v279 = vsub.f32 %v177, %v259
      %v280 = vsub.f32 %v178, %v260
      %v281 = vsub.f32 %v179, %v261
      %v282 = vsub.f32 %v180, %v262
      %v283 = vsub.f32 %v181, %v263
      %v284 = vsub.f32 %v182, %v264
      %v285 = vsub.f32 %v183, %v265
      %v286 = vsub.f32 %v184, %v266
      %v287 = vsub.f32 %v185, %v267
      %v288 = vsub.f32 %v186, %v268
      %v289 = vsub.f32 %v187, %v269
      %v290 = vsub.f32 %v188, %v270
      %v291 = vsub.f32 %v189, %v271
      %v292 = vsub.f32 %v190, %v272
      %v293 = vsub.f32 %v191, %v273
      %v294 = vsub.f32 %v192, %v274
      %v295 = vsub.f32 %v193, %v275
      %v296 = vmul.f32 %v276, %v276
      %v297 = vmul.f32 %v277, %v277
      %v298 = vmul.f32 %v278, %v278
      %v299 = vmul.f32 %v279, %v279
      %v300 = vmul.f32 %v280, %v280
      %v301 = vmul.f32 %v281, %v281
      %v302 = vmul.f32 %v282, %v282
      %v303 = vmul.f32 %v283, %v283
      %v304 = vmul.f32 %v284, %v284
      %v305 = vmul.f32 %v285, %v285
      %v306 = vmul.f32 %v286, %v286
      %v307 = vmul.f32 %v287, %v287
      %v308 = vmul.f32 %v288, %v288
      %v309 = vmul.f32 %v289, %v289
      %v310 = vmul.f32 %v290, %v290
      %v311 = vmul.f32 %v291, %v291
      %v312 = vmul.f32 %v292, %v292
      %v313 = vmul.f32 %v293, %v293
      %v314 = vmul.f32 %v294, %v294
      %v315 = vmul.f32 %v295, %v295
      %v316 = vsel %vm194, %v296, 0.0
      %317 = vadd.xlane.f32.xlu0 %v316
      %v318 = vpop.xlane.xlu0 %317
      %v319 = vsel %vm194, %v297, 0.0
      %320 = vadd.xlane.f32.xlu0 %v319
      %v321 = vpop.xlane.xlu0 %320
      %v322 = vsel %vm194, %v298, 0.0
      %323 = vadd.xlane.f32.xlu0 %v322
      %v324 = vpop.xlane.xlu0 %323
      %v325 = vsel %vm194, %v299, 0.0
      %326 = vadd.xlane.f32.xlu0 %v325
      %v327 = vpop.xlane.xlu0 %326
      %v328 = vsel %vm194, %v300, 0.0
      %329 = vadd.xlane.f32.xlu0 %v328
      %v330 = vpop.xlane.xlu0 %329
      %v331 = vsel %vm194, %v301, 0.0
      %332 = vadd.xlane.f32.xlu0 %v331
      %v333 = vpop.xlane.xlu0 %332
      %v334 = vsel %vm194, %v302, 0.0
      %335 = vadd.xlane.f32.xlu0 %v334
      %v336 = vpop.xlane.xlu0 %335
      %v337 = vsel %vm194, %v303, 0.0
      %338 = vadd.xlane.f32.xlu0 %v337
      %v339 = vpop.xlane.xlu0 %338
      %v340 = vsel %vm194, %v304, 0.0
      %341 = vadd.xlane.f32.xlu0 %v340
      %v342 = vpop.xlane.xlu0 %341
      %v343 = vsel %vm194, %v305, 0.0
      %344 = vadd.xlane.f32.xlu0 %v343
      %v345 = vpop.xlane.xlu0 %344
      %v346 = vsel %vm194, %v306, 0.0
      %347 = vadd.xlane.f32.xlu0 %v346
      %v348 = vpop.xlane.xlu0 %347
      %v349 = vsel %vm194, %v307, 0.0
      %350 = vadd.xlane.f32.xlu0 %v349
      %v351 = vpop.xlane.xlu0 %350
      %v352 = vsel %vm194, %v308, 0.0
      %353 = vadd.xlane.f32.xlu0 %v352
      %v354 = vpop.xlane.xlu0 %353
      %v355 = vsel %vm194, %v309, 0.0
      %356 = vadd.xlane.f32.xlu0 %v355
      %v357 = vpop.xlane.xlu0 %356
      %v358 = vsel %vm194, %v310, 0.0
      %359 = vadd.xlane.f32.xlu0 %v358
      %v360 = vpop.xlane.xlu0 %359
      %v361 = vsel %vm194, %v311, 0.0
      %362 = vadd.xlane.f32.xlu0 %v361
      %v363 = vpop.xlane.xlu0 %362
      %v364 = vsel %vm194, %v312, 0.0
      %365 = vadd.xlane.f32.xlu0 %v364
      %v366 = vpop.xlane.xlu0 %365
      %v367 = vsel %vm194, %v313, 0.0
      %368 = vadd.xlane.f32.xlu0 %v367
      %v369 = vpop.xlane.xlu0 %368
      %v370 = vsel %vm194, %v314, 0.0
      %371 = vadd.xlane.f32.xlu0 %v370
      %v372 = vpop.xlane.xlu0 %371
      %v373 = vsel %vm194, %v315, 0.0
      %374 = vadd.xlane.f32.xlu0 %v373
      %v375 = vpop.xlane.xlu0 %374
      %v376 = vmul.f32 %v318, %v255
      %v377 = vmul.f32 %v321, %v255
      %v378 = vmul.f32 %v324, %v255
      %v379 = vmul.f32 %v327, %v255
      %v380 = vmul.f32 %v330, %v255
      %v381 = vmul.f32 %v333, %v255
      %v382 = vmul.f32 %v336, %v255
      %v383 = vmul.f32 %v339, %v255
      %v384 = vmul.f32 %v342, %v255
      %v385 = vmul.f32 %v345, %v255
      %v386 = vmul.f32 %v348, %v255
      %v387 = vmul.f32 %v351, %v255
      %v388 = vmul.f32 %v354, %v255
      %v389 = vmul.f32 %v357, %v255
      %v390 = vmul.f32 %v360, %v255
      %v391 = vmul.f32 %v363, %v255
      %v392 = vmul.f32 %v366, %v255
      %v393 = vmul.f32 %v369, %v255
      %v394 = vmul.f32 %v372, %v255
      %v395 = vmul.f32 %v375, %v255
      %v396 = vadd.f32 %v376, 1e-05
      %v397 = vadd.f32 %v377, 1e-05
      %v398 = vadd.f32 %v378, 1e-05
      %v399 = vadd.f32 %v379, 1e-05
      %v400 = vadd.f32 %v380, 1e-05
      %v401 = vadd.f32 %v381, 1e-05
      %v402 = vadd.f32 %v382, 1e-05
      %v403 = vadd.f32 %v383, 1e-05
      %v404 = vadd.f32 %v384, 1e-05
      %v405 = vadd.f32 %v385, 1e-05
      %v406 = vadd.f32 %v386, 1e-05
      %v407 = vadd.f32 %v387, 1e-05
      %v408 = vadd.f32 %v388, 1e-05
      %v409 = vadd.f32 %v389, 1e-05
      %v410 = vadd.f32 %v390, 1e-05
      %v411 = vadd.f32 %v391, 1e-05
      %v412 = vadd.f32 %v392, 1e-05
      %v413 = vadd.f32 %v393, 1e-05
      %v414 = vadd.f32 %v394, 1e-05
      %v415 = vadd.f32 %v395, 1e-05
      %v416 = vrsqrt.pop %v396
      %v417 = vrsqrt.pop %v397
      %v418 = vrsqrt.pop %v398
      %v419 = vrsqrt.pop %v399
      %v420 = vrsqrt.pop %v400
      %v421 = vrsqrt.pop %v401
      %v422 = vrsqrt.pop %v402
      %v423 = vrsqrt.pop %v403
      %v424 = vrsqrt.pop %v404
      %v425 = vrsqrt.pop %v405
      %v426 = vrsqrt.pop %v406
      %v427 = vrsqrt.pop %v407
      %v428 = vrsqrt.pop %v408
      %v429 = vrsqrt.pop %v409
      %v430 = vrsqrt.pop %v410
      %v431 = vrsqrt.pop %v411
      %v432 = vrsqrt.pop %v412
      %v433 = vrsqrt.pop %v413
      %v434 = vrsqrt.pop %v414
      %v435 = vrsqrt.pop %v415
      %v436 = vmul.f32 %v276, %v416
      %v437 = vmul.f32 %v277, %v417
      %v438 = vmul.f32 %v278, %v418
      %v439 = vmul.f32 %v279, %v419
      %v440 = vmul.f32 %v280, %v420
      %v441 = vmul.f32 %v281, %v421
      %v442 = vmul.f32 %v282, %v422
      %v443 = vmul.f32 %v283, %v423
      %v444 = vmul.f32 %v284, %v424
      %v445 = vmul.f32 %v285, %v425
      %v446 = vmul.f32 %v286, %v426
      %v447 = vmul.f32 %v287, %v427
      %v448 = vmul.f32 %v288, %v428
      %v449 = vmul.f32 %v289, %v429
      %v450 = vmul.f32 %v290, %v430
      %v451 = vmul.f32 %v291, %v431
      %v452 = vmul.f32 %v292, %v432
      %v453 = vmul.f32 %v293, %v433
      %v454 = vmul.f32 %v294, %v434
      %v455 = vmul.f32 %v295, %v435
      %v456 = vld [vmem:[%s1] sm:$0x1]
      %v458 = vlaneseq
      %v459 = vshrl.u32 %v458, 7
      %v460 = vsub.s32 0, %v459
      %v461 = vrot.slane %v456, %v460
      %v463 = vmul.f32 %v436, %v461
      %v464 = vmul.f32 %v437, %v461
      %v465 = vmul.f32 %v438, %v461
      %v466 = vmul.f32 %v439, %v461
      %v467 = vmul.f32 %v440, %v461
      %v468 = vmul.f32 %v441, %v461
      %v469 = vmul.f32 %v442, %v461
      %v470 = vmul.f32 %v443, %v461
      %v471 = vmul.f32 %v444, %v461
      %v472 = vmul.f32 %v445, %v461
      %v473 = vmul.f32 %v446, %v461
      %v474 = vmul.f32 %v447, %v461
      %v475 = vmul.f32 %v448, %v461
      %v476 = vmul.f32 %v449, %v461
      %v477 = vmul.f32 %v450, %v461
      %v478 = vmul.f32 %v451, %v461
      %v479 = vmul.f32 %v452, %v461
      %v480 = vmul.f32 %v453, %v461
      %v481 = vmul.f32 %v454, %v461
      %v482 = vmul.f32 %v455, %v461
      %v483 = vld [vmem:[%s2] sm:$0x1]
      %v485 = vlaneseq
      %v486 = vshrl.u32 %v485, 7
      %v487 = vsub.s32 0, %v486
      %v488 = vrot.slane %v483, %v487
      %v490 = vadd.f32 %v463, %v488
      %v491 = vadd.f32 %v464, %v488
      %v492 = vadd.f32 %v465, %v488
      %v493 = vadd.f32 %v466, %v488
      %v494 = vadd.f32 %v467, %v488
      %v495 = vadd.f32 %v468, %v488
      %v496 = vadd.f32 %v469, %v488
      %v497 = vadd.f32 %v470, %v488
      %v498 = vadd.f32 %v471, %v488
      %v499 = vadd.f32 %v472, %v488
      %v500 = vadd.f32 %v473, %v488
      %v501 = vadd.f32 %v474, %v488
      %v502 = vadd.f32 %v475, %v488
      %v503 = vadd.f32 %v476, %v488
      %v504 = vadd.f32 %v477, %v488
      %v505 = vadd.f32 %v478, %v488
      %v506 = vadd.f32 %v479, %v488
      %v507 = vadd.f32 %v480, %v488
      %v508 = vadd.f32 %v481, %v488
      %v509 = vadd.f32 %v482, %v488
      %510 = vst.msk [vmem:[%s172] sm:$0xff] %vm194, %v490
      %511 = vst.msk [vmem:[%s172 + $0x8] sm:$0xff] %vm194, %v491
      %512 = vst.msk [vmem:[%s172 + $0x10] sm:$0xff] %vm194, %v492
      %513 = vst.msk [vmem:[%s172 + $0x18] sm:$0xff] %vm194, %v493
      %514 = vst.msk [vmem:[%s172 + $0x20] sm:$0xff] %vm194, %v494
      %515 = vst.msk [vmem:[%s172 + $0x28] sm:$0xff] %vm194, %v495
      %516 = vst.msk [vmem:[%s172 + $0x30] sm:$0xff] %vm194, %v496
      %517 = vst.msk [vmem:[%s172 + $0x38] sm:$0xff] %vm194, %v497
      %518 = vst.msk [vmem:[%s172 + $0x40] sm:$0xff] %vm194, %v498
      %519 = vst.msk [vmem:[%s172 + $0x48] sm:$0xff] %vm194, %v499
      %520 = vst.msk [vmem:[%s172 + $0x50] sm:$0xff] %vm194, %v500
      %521 = vst.msk [vmem:[%s172 + $0x58] sm:$0xff] %vm194, %v501
      %522 = vst.msk [vmem:[%s172 + $0x60] sm:$0xff] %vm194, %v502
      %523 = vst.msk [vmem:[%s172 + $0x68] sm:$0xff] %vm194, %v503
      %524 = vst.msk [vmem:[%s172 + $0x70] sm:$0xff] %vm194, %v504
      %525 = vst.msk [vmem:[%s172 + $0x78] sm:$0xff] %vm194, %v505
      %526 = vst.msk [vmem:[%s172 + $0x80] sm:$0xff] %vm194, %v506
      %527 = vst.msk [vmem:[%s172 + $0x88] sm:$0xff] %vm194, %v507
      %528 = vst.msk [vmem:[%s172 + $0x90] sm:$0xff] %vm194, %v508
      %529 = vst.msk [vmem:[%s172 + $0x98] sm:$0xff] %vm194, %v509
      %s530 = smul.u32 20, %s14
      %p531 = scmp.lt.s32.totalorder %s530, 39
      %s532 = scalar_select %p531, %s530, 39
      %s533 = smul.addr %s532, 8
      %s534 = scalar_lea.vmem %s3, %s533
      // Predicated region
      $region33: #{transformerfusion_forward.82} parent=31 // pred_check
        %p535 = pneg %p100
      $region34: #{transformerfusion_forward.82} parent=31 // pred_check_branch
        %537 = sbr.rel (%p535) target = $region36
      $region35: #{transformerfusion_forward.82} parent=31 // pred_region
        %s538 = smul.u32 20, %s14
      $region36: #{transformerfusion_forward.82} parent=31 // pred_fallthru
        _
    $region32: #{transformerfusion_forward.82} parent=5 // pred_fallthru
      _
    %p539 = scmp.le.s32.totalorder 2, %s9
    // Predicated region
    $region37: #{transformerfusion_forward.82} parent=5 // pred_check
      %p540 = pneg %p539
    $region38: #{transformerfusion_forward.82} parent=5 // pred_check_branch
      %542 = sbr.rel (%p540) target = $region40
    $region39: #{transformerfusion_forward.82} parent=5 // pred_region
      %s543 = ssub.s32 %s9, 2
      // Predicated region
      $region41: #{transformerfusion_forward.82} parent=39 // pred_check
        %p544 = pneg %p106
      $region42: #{transformerfusion_forward.82} parent=39 // pred_check_branch
        %546 = sbr.rel (%p544) target = $region44
      $region43: #{transformerfusion_forward.82} parent=39 // pred_region
        %s547 = smul.u32 20, %s15
        %p548 = scmp.lt.s32.totalorder %s547, 39
        %s549 = scalar_select %p548, %s547, 39
        %s550 = smul.addr %s549, 8
        %s551 = scalar_lea.vmem %s3, %s550
      $region44: #{transformerfusion_forward.82} parent=39 // pred_fallthru
        _
    $region40: #{transformerfusion_forward.82} parent=5 // pred_fallthru
      _
  $region6: #{transformerfusion_forward.82} parent=0 // loop_footer
    %s13 = sadd.s32 1, %s9
  $region7: #{transformerfusion_forward.82} parent=0 // loop_footer_branch
    %8 = sbr.rel target = $region3
  $region8: #{transformerfusion_forward.82} parent=0 // loop_exit
    _

// kernel: transformerfusion_forward.83
$region0: #{transformerfusion_forward.83}
  #allocation0 [shape = 'u32[]', space=smem, size = 0x4, offset = 0x4, fixed_abs, tag = 'smem constant byte address 0x4 - core index']
  #allocation1 [shape = 'u32[144,128]{1,0:T(1,128)}', space=vmem, size = 0x12000, scoped, tag = 'internal scratch']
  %s0 = inlined_call_operand.vmem [shape: bf16[320,128], index: 0, kind: input, shape index: {}]
  %s1 = inlined_call_operand.vmem [shape: bf16[128,64], index: 1, kind: input, shape index: {}]
  %s2 = inlined_call_operand.vmem [shape: f32[1,64], index: 2, kind: input, shape index: {}]
  %s3 = inlined_call_operand.vmem [shape: f32[320,64], index: 3, kind: input, shape index: {}]
  %s4 = inlined_call_operand.vmem [shape: f32[320,64], index: 4, kind: input, shape index: {}]
  %s5 = inlined_call_operand.vmem [shape: f32[320,64], index: 5, kind: input, shape index: {}]
  %s6 = inlined_call_operand.vmem [shape: f32[320,64], index: 6, kind: input, shape index: {}]
  %s7 = inlined_call_operand.vmem [shape: f32[320,64], index: 7, kind: output, shape index: {}]
  %s8 = sld [smem:[#allocation0]]
  $region61: #{transformerfusion_forward.83} parent=0
    _
  %s10 = ssub.s32 1, %s8
  %s11 = scalar_select 0, %s10, %s8
  loop: start=0, step=1, limit=4
  $region2: #{transformerfusion_forward.83} parent=0 // loop_pre_header
    _
  $region3: #{transformerfusion_forward.83} parent=0 // loop_header
    %s13 = sphi 0, %s17
    %p14 = scmp.ge.s32.totalorder %s13, 4
    %s23 = sphi 0, %s25
    %s26 = sphi 0, %s23
    %s27 = sphi 0, %s26
    %s43 = sphi 0, %s27
    %s47 = sphi 0, %s47
    %s49 = sphi 0, %s47
    %s50 = sphi 0, %s49
    %s64 = sphi 0, %s50
    %s68 = sphi 0, %s68
    %s70 = sphi 0, %s68
    %s71 = sphi 0, %s70
    %s85 = sphi 0, %s71
    %s91 = sphi 0, %s93
    %s94 = sphi 0, %s91
    %s95 = sphi 0, %s94
    %s111 = sphi 0, %s95
    %s117 = sphi 0, %s119
    %s120 = sphi 0, %s117
    %s121 = sphi 0, %s120
    %s137 = sphi 0, %s121
    %s143 = sphi 0, %s145
    %s146 = sphi 0, %s143
    %s147 = sphi 0, %s146
    %s163 = sphi 0, %s147
    %s169 = sphi 0, %s171
    %s172 = sphi 0, %s169
    %s173 = sphi 0, %s172
    %s189 = sphi 0, %s173
    %s195 = sphi 0, %s197
    %s198 = sphi 0, %s195
    %s199 = sphi 0, %s198
    %s215 = sphi 0, %s199
  $region4: #{transformerfusion_forward.83} parent=0 // loop_header_branch
    %16 = sbr.rel (%p14) target = $region8
  $region5: #{transformerfusion_forward.83} parent=0 // loop_body
    %s18 = ssub.s32 %s13, 1
    %s19 = ssub.s32 %s13, 2
    %s20 = sadd.s32 %s13, 1
    %s21 = ssub.s32 %s13, %s20
    %p22 = scmp.eq.s32.totalorder %s21, 0
    %s24 = sadd.s32 %s23, 1
    %s25 = scalar_select %p22, %s23, %s24
    %p28 = pneg %p22
    %p29 = scmp.eq.s32.totalorder %s13, 1
    %p30 = por %p28, %p29
    %p31 = scmp.ne.s32.totalorder %s23, %s26
    %p32 = scmp.eq.s32.totalorder %s13, 0
    %p33 = por %p31, %p32
    %p34 = scmp.ne.s32.totalorder %s23, %s26
    %p35 = scmp.eq.s32.totalorder %s18, 1
    %p36 = por %p34, %p35
    %p37 = scmp.ne.s32.totalorder %s26, %s27
    %p38 = scmp.eq.s32.totalorder %s18, 0
    %p39 = por %p37, %p38
    %p40 = scmp.ne.s32.totalorder %s26, %s27
    %p41 = scmp.eq.s32.totalorder %s19, 1
    %p42 = por %p40, %p41
    %p44 = scmp.ne.s32.totalorder %s27, %s43
    %p45 = scmp.eq.s32.totalorder %s19, 0
    %p46 = por %p44, %p45
    %s48 = sadd.s32 %s47, 1
    %p51 = scmp.eq.s32.totalorder %s13, 1
    %p52 = scmp.ne.s32.totalorder %s47, %s49
    %p53 = scmp.eq.s32.totalorder %s13, 0
    %p54 = por %p52, %p53
    %p55 = scmp.ne.s32.totalorder %s47, %s49
    %p56 = scmp.eq.s32.totalorder %s18, 1
    %p57 = por %p55, %p56
    %p58 = scmp.ne.s32.totalorder %s49, %s50
    %p59 = scmp.eq.s32.totalorder %s18, 0
    %p60 = por %p58, %p59
    %p61 = scmp.ne.s32.totalorder %s49, %s50
    %p62 = scmp.eq.s32.totalorder %s19, 1
    %p63 = por %p61, %p62
    %p65 = scmp.ne.s32.totalorder %s50, %s64
    %p66 = scmp.eq.s32.totalorder %s19, 0
    %p67 = por %p65, %p66
    %s69 = sadd.s32 %s68, 1
    %p72 = scmp.eq.s32.totalorder %s13, 1
    %p73 = scmp.ne.s32.totalorder %s68, %s70
    %p74 = scmp.eq.s32.totalorder %s13, 0
    %p75 = por %p73, %p74
    %p76 = scmp.ne.s32.totalorder %s68, %s70
    %p77 = scmp.eq.s32.totalorder %s18, 1
    %p78 = por %p76, %p77
    %p79 = scmp.ne.s32.totalorder %s70, %s71
    %p80 = scmp.eq.s32.totalorder %s18, 0
    %p81 = por %p79, %p80
    %p82 = scmp.ne.s32.totalorder %s70, %s71
    %p83 = scmp.eq.s32.totalorder %s19, 1
    %p84 = por %p82, %p83
    %p86 = scmp.ne.s32.totalorder %s71, %s85
    %p87 = scmp.eq.s32.totalorder %s19, 0
    %p88 = por %p86, %p87
    %s89 = ssub.s32 %s13, %s20
    %p90 = scmp.eq.s32.totalorder %s89, 0
    %s92 = sadd.s32 %s91, 1
    %s93 = scalar_select %p90, %s91, %s92
    %p96 = pneg %p90
    %p97 = scmp.eq.s32.totalorder %s13, 1
    %p98 = por %p96, %p97
    %p99 = scmp.ne.s32.totalorder %s91, %s94
    %p100 = scmp.eq.s32.totalorder %s13, 0
    %p101 = por %p99, %p100
    %p102 = scmp.ne.s32.totalorder %s91, %s94
    %p103 = scmp.eq.s32.totalorder %s18, 1
    %p104 = por %p102, %p103
    %p105 = scmp.ne.s32.totalorder %s94, %s95
    %p106 = scmp.eq.s32.totalorder %s18, 0
    %p107 = por %p105, %p106
    %p108 = scmp.ne.s32.totalorder %s94, %s95
    %p109 = scmp.eq.s32.totalorder %s19, 1
    %p110 = por %p108, %p109
    %p112 = scmp.ne.s32.totalorder %s95, %s111
    %p113 = scmp.eq.s32.totalorder %s19, 0
    %p114 = por %p112, %p113
    %s115 = ssub.s32 %s13, %s20
    %p116 = scmp.eq.s32.totalorder %s115, 0
    %s118 = sadd.s32 %s117, 1
    %s119 = scalar_select %p116, %s117, %s118
    %p122 = pneg %p116
    %p123 = scmp.eq.s32.totalorder %s13, 1
    %p124 = por %p122, %p123
    %p125 = scmp.ne.s32.totalorder %s117, %s120
    %p126 = scmp.eq.s32.totalorder %s13, 0
    %p127 = por %p125, %p126
    %p128 = scmp.ne.s32.totalorder %s117, %s120
    %p129 = scmp.eq.s32.totalorder %s18, 1
    %p130 = por %p128, %p129
    %p131 = scmp.ne.s32.totalorder %s120, %s121
    %p132 = scmp.eq.s32.totalorder %s18, 0
    %p133 = por %p131, %p132
    %p134 = scmp.ne.s32.totalorder %s120, %s121
    %p135 = scmp.eq.s32.totalorder %s19, 1
    %p136 = por %p134, %p135
    %p138 = scmp.ne.s32.totalorder %s121, %s137
    %p139 = scmp.eq.s32.totalorder %s19, 0
    %p140 = por %p138, %p139
    %s141 = ssub.s32 %s13, %s20
    %p142 = scmp.eq.s32.totalorder %s141, 0
    %s144 = sadd.s32 %s143, 1
    %s145 = scalar_select %p142, %s143, %s144
    %p148 = pneg %p142
    %p149 = scmp.eq.s32.totalorder %s13, 1
    %p150 = por %p148, %p149
    %p151 = scmp.ne.s32.totalorder %s143, %s146
    %p152 = scmp.eq.s32.totalorder %s13, 0
    %p153 = por %p151, %p152
    %p154 = scmp.ne.s32.totalorder %s143, %s146
    %p155 = scmp.eq.s32.totalorder %s18, 1
    %p156 = por %p154, %p155
    %p157 = scmp.ne.s32.totalorder %s146, %s147
    %p158 = scmp.eq.s32.totalorder %s18, 0
    %p159 = por %p157, %p158
    %p160 = scmp.ne.s32.totalorder %s146, %s147
    %p161 = scmp.eq.s32.totalorder %s19, 1
    %p162 = por %p160, %p161
    %p164 = scmp.ne.s32.totalorder %s147, %s163
    %p165 = scmp.eq.s32.totalorder %s19, 0
    %p166 = por %p164, %p165
    %s167 = ssub.s32 %s13, %s20
    %p168 = scmp.eq.s32.totalorder %s167, 0
    %s170 = sadd.s32 %s169, 1
    %s171 = scalar_select %p168, %s169, %s170
    %p174 = pneg %p168
    %p175 = scmp.eq.s32.totalorder %s13, 1
    %p176 = por %p174, %p175
    %p177 = scmp.ne.s32.totalorder %s169, %s172
    %p178 = scmp.eq.s32.totalorder %s13, 0
    %p179 = por %p177, %p178
    %p180 = scmp.ne.s32.totalorder %s169, %s172
    %p181 = scmp.eq.s32.totalorder %s18, 1
    %p182 = por %p180, %p181
    %p183 = scmp.ne.s32.totalorder %s172, %s173
    %p184 = scmp.eq.s32.totalorder %s18, 0
    %p185 = por %p183, %p184
    %p186 = scmp.ne.s32.totalorder %s172, %s173
    %p187 = scmp.eq.s32.totalorder %s19, 1
    %p188 = por %p186, %p187
    %p190 = scmp.ne.s32.totalorder %s173, %s189
    %p191 = scmp.eq.s32.totalorder %s19, 0
    %p192 = por %p190, %p191
    %s193 = ssub.s32 %s13, %s20
    %p194 = scmp.eq.s32.totalorder %s193, 0
    %s196 = sadd.s32 %s195, 1
    %s197 = scalar_select %p194, %s195, %s196
    %p200 = pneg %p194
    %p201 = scmp.eq.s32.totalorder %s13, 1
    %p202 = por %p200, %p201
    %p203 = scmp.ne.s32.totalorder %s195, %s198
    %p204 = scmp.eq.s32.totalorder %s13, 0
    %p205 = por %p203, %p204
    %p206 = scmp.ne.s32.totalorder %s195, %s198
    %p207 = scmp.eq.s32.totalorder %s18, 1
    %p208 = por %p206, %p207
    %p209 = scmp.ne.s32.totalorder %s198, %s199
    %p210 = scmp.eq.s32.totalorder %s18, 0
    %p211 = por %p209, %p210
    %p212 = scmp.ne.s32.totalorder %s198, %s199
    %p213 = scmp.eq.s32.totalorder %s19, 1
    %p214 = por %p212, %p213
    %p216 = scmp.ne.s32.totalorder %s199, %s215
    %p217 = scmp.eq.s32.totalorder %s19, 0
    %p218 = por %p216, %p217
    %p219 = scmp.le.s32.totalorder 1, %s13
    %p220 = scmp.lt.s32.totalorder %s13, 3
    %p221 = pnand %p219, %p220
    %p222 = pneg %p221
    // Predicated region
    $region9: #{transformerfusion_forward.83} parent=5 // pred_check
      _
    $region10: #{transformerfusion_forward.83} parent=5 // pred_check_branch
      %224 = sbr.rel (%p221) target = $region12
    $region11: #{transformerfusion_forward.83} parent=5 // pred_region
      %s225 = ssub.s32 %s13, 1
      // Predicated region
      $region13: #{transformerfusion_forward.83} parent=11 // pred_check
        %p226 = pneg %p60
      $region14: #{transformerfusion_forward.83} parent=11 // pred_check_branch
        %228 = sbr.rel (%p226) target = $region16
      $region15: #{transformerfusion_forward.83} parent=11 // pred_region
        _
      $region16: #{transformerfusion_forward.83} parent=11 // pred_fallthru
        _
      // Predicated region
      $region17: #{transformerfusion_forward.83} parent=11 // pred_check
        %p229 = pneg %p81
      $region18: #{transformerfusion_forward.83} parent=11 // pred_check_branch
        %231 = sbr.rel (%p229) target = $region20
      $region19: #{transformerfusion_forward.83} parent=11 // pred_region
        _
      $region20: #{transformerfusion_forward.83} parent=11 // pred_fallthru
        _
    $region12: #{transformerfusion_forward.83} parent=5 // pred_fallthru
      _
    %p232 = scmp.lt.s32.totalorder %s13, 2
    // Predicated region
    $region21: #{transformerfusion_forward.83} parent=5 // pred_check
      %p233 = pneg %p232
    $region22: #{transformerfusion_forward.83} parent=5 // pred_check_branch
      %235 = sbr.rel (%p233) target = $region24
    $region23: #{transformerfusion_forward.83} parent=5 // pred_region
      // Predicated region
      $region25: #{transformerfusion_forward.83} parent=23 // pred_check
        %p236 = pneg %p33
      $region26: #{transformerfusion_forward.83} parent=23 // pred_check_branch
        %238 = sbr.rel (%p236) target = $region28
      $region27: #{transformerfusion_forward.83} parent=23 // pred_region
        %s239 = smul.u32 20, %s13
        %p240 = scmp.lt.s32.totalorder %s239, 39
        %s241 = scalar_select %p240, %s239, 39
        %s242 = smul.addr %s241, 4
        %s243 = scalar_lea.vmem %s0, %s242
        %s244 = smul.u32 20, %s13
      $region28: #{transformerfusion_forward.83} parent=23 // pred_fallthru
        _
      // Predicated region
      $region29: #{transformerfusion_forward.83} parent=23 // pred_check
        %p245 = pneg %p101
      $region30: #{transformerfusion_forward.83} parent=23 // pred_check_branch
        %247 = sbr.rel (%p245) target = $region32
      $region31: #{transformerfusion_forward.83} parent=23 // pred_region
        %s248 = smul.u32 20, %s13
        %p249 = scmp.lt.s32.totalorder %s248, 39
        %s250 = scalar_select %p249, %s248, 39
        %s251 = smul.addr %s250, 8
        %s252 = scalar_lea.vmem %s3, %s251
        %s253 = smul.u32 20, %s13
      $region32: #{transformerfusion_forward.83} parent=23 // pred_fallthru
        _
      // Predicated region
      $region33: #{transformerfusion_forward.83} parent=23 // pred_check
        %p254 = pneg %p127
      $region34: #{transformerfusion_forward.83} parent=23 // pred_check_branch
        %256 = sbr.rel (%p254) target = $region36
      $region35: #{transformerfusion_forward.83} parent=23 // pred_region
        %s257 = smul.u32 20, %s13
        %p258 = scmp.lt.s32.totalorder %s257, 39
        %s259 = scalar_select %p258, %s257, 39
        %s260 = smul.addr %s259, 8
        %s261 = scalar_lea.vmem %s4, %s260
        %s262 = smul.u32 20, %s13
      $region36: #{transformerfusion_forward.83} parent=23 // pred_fallthru
        _
      // Predicated region
      $region37: #{transformerfusion_forward.83} parent=23 // pred_check
        %p263 = pneg %p153
      $region38: #{transformerfusion_forward.83} parent=23 // pred_check_branch
        %265 = sbr.rel (%p263) target = $region40
      $region39: #{transformerfusion_forward.83} parent=23 // pred_region
        %s266 = smul.u32 20, %s13
        %p267 = scmp.lt.s32.totalorder %s266, 39
        %s268 = scalar_select %p267, %s266, 39
        %s269 = smul.addr %s268, 8
        %s270 = scalar_lea.vmem %s5, %s269
        %s271 = smul.u32 20, %s13
      $region40: #{transformerfusion_forward.83} parent=23 // pred_fallthru
        _
      // Predicated region
      $region41: #{transformerfusion_forward.83} parent=23 // pred_check
        %p272 = pneg %p179
      $region42: #{transformerfusion_forward.83} parent=23 // pred_check_branch
        %274 = sbr.rel (%p272) target = $region44
      $region43: #{transformerfusion_forward.83} parent=23 // pred_region
        %s275 = smul.u32 20, %s13
        %p276 = scmp.lt.s32.totalorder %s275, 39
        %s277 = scalar_select %p276, %s275, 39
        %s278 = smul.addr %s277, 8
        %s279 = scalar_lea.vmem %s6, %s278
        %s280 = smul.u32 20, %s13
      $region44: #{transformerfusion_forward.83} parent=23 // pred_fallthru
        _
    $region24: #{transformerfusion_forward.83} parent=5 // pred_fallthru
      _
    %p281 = scmp.le.s32.totalorder 1, %s13
    %p282 = scmp.lt.s32.totalorder %s13, 3
    %p283 = pnand %p281, %p282
    %p284 = pneg %p283
    // Predicated region
    $region45: #{transformerfusion_forward.83} parent=5 // pred_check
      _
    $region46: #{transformerfusion_forward.83} parent=5 // pred_check_branch
      %286 = sbr.rel (%p283) target = $region48
    $region47: #{transformerfusion_forward.83} parent=5 // pred_region
      %s287 = ssub.s32 %s13, 1
      %s288 = smul.u32 20, %s18
      %p289 = scmp.lt.s32.totalorder %s288, 39
      %s290 = scalar_select %p289, %s288, 39
      %s291 = smul.addr %s290, 4
      %s292 = scalar_lea.vmem %s0, %s291
      %p293 = pneg %p39
      %p294 = pneg %p36
      %p295 = pneg %p60
      %p296 = pneg %p57
      %p297 = pneg %p81
      %p298 = pneg %p78
      %s299 = smul.u32 20, %s18
      %p300 = scmp.lt.s32.totalorder %s299, 39
      %s301 = scalar_select %p300, %s299, 39
      %s302 = smul.addr %s301, 8
      %s303 = scalar_lea.vmem %s3, %s302
      %p304 = pneg %p107
      %p305 = pneg %p104
      %s306 = smul.u32 20, %s18
      %p307 = scmp.lt.s32.totalorder %s306, 39
      %s308 = scalar_select %p307, %s306, 39
      %s309 = smul.addr %s308, 8
      %s310 = scalar_lea.vmem %s4, %s309
      %p311 = pneg %p133
      %p312 = pneg %p130
      %s313 = smul.u32 20, %s18
      %p314 = scmp.lt.s32.totalorder %s313, 39
      %s315 = scalar_select %p314, %s313, 39
      %s316 = smul.addr %s315, 8
      %s317 = scalar_lea.vmem %s5, %s316
      %p318 = pneg %p159
      %p319 = pneg %p156
      %s320 = smul.u32 20, %s18
      %p321 = scmp.lt.s32.totalorder %s320, 39
      %s322 = scalar_select %p321, %s320, 39
      %s323 = smul.addr %s322, 8
      %s324 = scalar_lea.vmem %s6, %s323
      %p325 = pneg %p185
      %p326 = pneg %p182
      %p327 = pneg %p211
      %p328 = pneg %p208
      %s329 = smul.u32 20, %s18
      %p330 = scmp.lt.s32.totalorder %s329, 39
      %s331 = scalar_select %p330, %s329, 39
      %s332 = smul.addr %s331, 8
      %s333 = scalar_lea.vmem %s7, %s332
      %s334 = smul.u32 20, %s18
      %p335 = scmp.lt.s32.totalorder %s334, 39
      %s336 = scalar_select %p335, %s334, 39
      %s337 = smul.addr %s336, 4
      %s338 = scalar_lea.vmem %s0, %s337
      %s339 = smul.u32 20, %s18
      %s340 = smul.u32 20, %s18
      %p341 = scmp.lt.s32.totalorder %s340, 39
      %s342 = scalar_select %p341, %s340, 39
      %s343 = smul.addr %s342, 8
      %s344 = scalar_lea.vmem %s3, %s343
      %s345 = smul.u32 20, %s18
      %s346 = smul.u32 20, %s18
      %p347 = scmp.lt.s32.totalorder %s346, 39
      %s348 = scalar_select %p347, %s346, 39
      %s349 = smul.addr %s348, 8
      %s350 = scalar_lea.vmem %s4, %s349
      %s351 = smul.u32 20, %s18
      %s352 = smul.u32 20, %s18
      %p353 = scmp.lt.s32.totalorder %s352, 39
      %s354 = scalar_select %p353, %s352, 39
      %s355 = smul.addr %s354, 8
      %s356 = scalar_lea.vmem %s5, %s355
      %s357 = smul.u32 20, %s18
      %s358 = smul.u32 20, %s18
      %p359 = scmp.lt.s32.totalorder %s358, 39
      %s360 = scalar_select %p359, %s358, 39
      %s361 = smul.addr %s360, 8
      %s362 = scalar_lea.vmem %s6, %s361
      %s363 = smul.u32 20, %s18
      %s364 = smul.u32 20, %s18
      %p365 = scmp.lt.s32.totalorder %s364, 39
      %s366 = scalar_select %p365, %s364, 39
      %s367 = smul.addr %s366, 8
      %s368 = scalar_lea.vmem %s7, %s367
      %s369 = smul.u32 20, %s18
      %v371 = vld [vmem:[%s338] sm:$0xf]
      %v372 = vld [vmem:[%s338 + $0x4] sm:$0xf]
      %v373 = vld [vmem:[%s338 + $0x8] sm:$0xf]
      %v374 = vld [vmem:[%s338 + $0xc] sm:$0xf]
      %v375 = vld [vmem:[%s338 + $0x10] sm:$0xf]
      %v376 = vld [vmem:[%s338 + $0x14] sm:$0xf]
      %v377 = vld [vmem:[%s338 + $0x18] sm:$0xf]
      %v378 = vld [vmem:[%s338 + $0x1c] sm:$0xf]
      %v379 = vld [vmem:[%s338 + $0x20] sm:$0xf]
      %v380 = vld [vmem:[%s338 + $0x24] sm:$0xf]
      %v381 = vld [vmem:[%s338 + $0x28] sm:$0xf]
      %v382 = vld [vmem:[%s338 + $0x2c] sm:$0xf]
      %v383 = vld [vmem:[%s338 + $0x30] sm:$0xf]
      %v384 = vld [vmem:[%s338 + $0x34] sm:$0xf]
      %v385 = vld [vmem:[%s338 + $0x38] sm:$0xf]
      %v386 = vld [vmem:[%s338 + $0x3c] sm:$0xf]
      %v387 = vld [vmem:[%s338 + $0x40] sm:$0xf]
      %v388 = vld [vmem:[%s338 + $0x44] sm:$0xf]
      %v389 = vld [vmem:[%s338 + $0x48] sm:$0xf]
      %v390 = vld [vmem:[%s338 + $0x4c] sm:$0xf]
      %v391 = vld [vmem:[%s1] sm:$0xf]
      %v392 = vld [vmem:[%s1 + $0x4] sm:$0xf]
      %v393 = vld [vmem:[%s1 + $0x8] sm:$0xf]
      %v394 = vld [vmem:[%s1 + $0xc] sm:$0xf]
      %v395 = vld [vmem:[%s1 + $0x10] sm:$0xf]
      %v396 = vld [vmem:[%s1 + $0x14] sm:$0xf]
      %v397 = vld [vmem:[%s1 + $0x18] sm:$0xf]
      %v398 = vld [vmem:[%s1 + $0x1c] sm:$0xf]
      %v399 = vld [vmem:[%s1 + $0x20] sm:$0xf]
      %v400 = vld [vmem:[%s1 + $0x24] sm:$0xf]
      %v401 = vld [vmem:[%s1 + $0x28] sm:$0xf]
      %v402 = vld [vmem:[%s1 + $0x2c] sm:$0xf]
      %v403 = vld [vmem:[%s1 + $0x30] sm:$0xf]
      %v404 = vld [vmem:[%s1 + $0x34] sm:$0xf]
      %v405 = vld [vmem:[%s1 + $0x38] sm:$0xf]
      %v406 = vld [vmem:[%s1 + $0x3c] sm:$0xf]
      %v407 = vld [vmem:[%s2] sm:$0x1]
      %v409 = vlaneseq
      %v410 = vshrl.u32 %v409, 7
      %v411 = vsub.s32 0, %v410
      %v412 = vrot.slane %v407, %v411
      %v434 = vunpack.c.l.b16 %v371
      %v435 = vunpack.c.l.b16 %v372
      %v436 = vunpack.c.l.b16 %v373
      %v437 = vunpack.c.l.b16 %v374
      %v438 = vunpack.c.l.b16 %v375
      %v439 = vunpack.c.l.b16 %v376
      %v440 = vunpack.c.l.b16 %v377
      %v441 = vunpack.c.l.b16 %v378
      %v442 = vunpack.c.l.b16 %v379
      %v443 = vunpack.c.l.b16 %v380
      %v444 = vunpack.c.l.b16 %v381
      %v445 = vunpack.c.l.b16 %v382
      %v446 = vunpack.c.l.b16 %v383
      %v447 = vunpack.c.l.b16 %v384
      %v448 = vunpack.c.l.b16 %v385
      %v449 = vunpack.c.l.b16 %v386
      %v450 = vunpack.c.l.b16 %v387
      %v451 = vunpack.c.l.b16 %v388
      %v452 = vunpack.c.l.b16 %v389
      %v453 = vunpack.c.l.b16 %v390
      %v454 = vpack.c.b16 %v435, %v434
      %v455 = vpack.c.b16 %v437, %v436
      %v456 = vpack.c.b16 %v439, %v438
      %v457 = vpack.c.b16 %v441, %v440
      %v458 = vpack.c.b16 %v443, %v442
      %v459 = vpack.c.b16 %v445, %v444
      %v460 = vpack.c.b16 %v447, %v446
      %v461 = vpack.c.b16 %v449, %v448
      %v462 = vpack.c.b16 %v451, %v450
      %v463 = vpack.c.b16 %v453, %v452
      %v490 = vunpack.c.l.b16 %v391
      %v491 = vunpack.c.l.b16 %v392
      %v492 = vunpack.c.l.b16 %v393
      %v493 = vunpack.c.l.b16 %v394
      %v494 = vunpack.c.l.b16 %v395
      %v495 = vunpack.c.l.b16 %v396
      %v496 = vunpack.c.l.b16 %v397
      %v497 = vunpack.c.l.b16 %v398
      %v498 = vunpack.c.l.b16 %v399
      %v499 = vunpack.c.l.b16 %v400
      %v500 = vunpack.c.l.b16 %v401
      %v501 = vunpack.c.l.b16 %v402
      %v502 = vunpack.c.l.b16 %v403
      %v503 = vunpack.c.l.b16 %v404
      %v504 = vunpack.c.l.b16 %v405
      %v505 = vunpack.c.l.b16 %v406
      %v506 = vpack.c.b16 %v491, %v490
      %v507 = vpack.c.b16 %v493, %v492
      %v508 = vpack.c.b16 %v495, %v494
      %v509 = vpack.c.b16 %v497, %v496
      %v510 = vpack.c.b16 %v499, %v498
      %v511 = vpack.c.b16 %v501, %v500
      %v512 = vpack.c.b16 %v503, %v502
      %v513 = vpack.c.b16 %v505, %v504
      %522 = vmatprep.subr.bf16.mxu0 0
      %523 = vmatpush1.bf16.msra.mxu0 %v506
      %524 = vmatprep.subr.bf16.mxu0 0
      %525 = vmatpush1.bf16.msra.mxu0 %v507
      %526 = vmatprep.subr.bf16.mxu0 0
      %527 = vmatpush1.bf16.msra.mxu0 %v508
      %528 = vmatprep.subr.bf16.mxu0 0
      %529 = vmatpush1.bf16.msra.mxu0 %v509
      %530 = vmatprep.subr.bf16.mxu0 0
      %531 = vmatpush1.bf16.msra.mxu0 %v510
      %532 = vmatprep.subr.bf16.mxu0 0
      %533 = vmatpush1.bf16.msra.mxu0 %v511
      %534 = vmatprep.subr.bf16.mxu0 0
      %535 = vmatpush1.bf16.msra.mxu0 %v512
      %536 = vmatprep.subr.bf16.mxu0 0
      %537 = vmatpush1.bf16.msra.mxu0 %v513
      %538 = vmatprep.subr.bf16.mxu0 0
      %539 = vmatpush1.bf16.msra.mxu0 0
      %540 = vmatprep.subr.bf16.mxu0 0
      %541 = vmatpush1.bf16.msra.mxu0 0
      %542 = vmatprep.subr.bf16.mxu0 0
      %543 = vmatpush1.bf16.msra.mxu0 0
      %544 = vmatprep.subr.bf16.mxu0 0
      %545 = vmatpush1.bf16.msra.mxu0 0
      %546 = vmatprep.subr.bf16.mxu0 0
      %547 = vmatpush1.bf16.msra.mxu0 0
      %548 = vmatprep.subr.bf16.mxu0 0
      %549 = vmatpush1.bf16.msra.mxu0 0
      %550 = vmatprep.subr.bf16.mxu0 0
      %551 = vmatpush1.bf16.msra.mxu0 0
      %552 = vmatprep.subr.bf16.mxu0 0
      %553 = vmatpush1.bf16.msra.mxu0 0
      %554 = vmatprep.mubr.bf16.mxu0 0
      %555 = vmatmul.mubr.bf16.gmra.mrb[0].mxu0 %v454
      %v556 = vpop.f32.mrb[0].mxu0
      %v557 = vadd.f32 %v412, %v556
      %v558 = vpop.f32.mrb[0].mxu0
      %v559 = vpop.f32.mrb[0].mxu0
      %v560 = vadd.f32 %v412, %v559
      %v561 = vpop.f32.mrb[0].mxu0
      %562 = vmatprep.mubr.bf16.mxu0 0
      %563 = vmatmul.mubr.bf16.gmra.mrb[0].mxu0 %v455
      %v564 = vpop.f32.mrb[0].mxu0
      %v565 = vadd.f32 %v412, %v564
      %v566 = vpop.f32.mrb[0].mxu0
      %v567 = vpop.f32.mrb[0].mxu0
      %v568 = vadd.f32 %v412, %v567
      %v569 = vpop.f32.mrb[0].mxu0
      %570 = vmatprep.mubr.bf16.mxu0 0
      %571 = vmatmul.mubr.bf16.gmra.mrb[0].mxu0 %v456
      %v572 = vpop.f32.mrb[0].mxu0
      %v573 = vadd.f32 %v412, %v572
      %v574 = vpop.f32.mrb[0].mxu0
      %v575 = vpop.f32.mrb[0].mxu0
      %v576 = vadd.f32 %v412, %v575
      %v577 = vpop.f32.mrb[0].mxu0
      %578 = vmatprep.mubr.bf16.mxu0 0
      %579 = vmatmul.mubr.bf16.gmra.mrb[0].mxu0 %v457
      %v580 = vpop.f32.mrb[0].mxu0
      %v581 = vadd.f32 %v412, %v580
      %v582 = vpop.f32.mrb[0].mxu0
      %v583 = vpop.f32.mrb[0].mxu0
      %v584 = vadd.f32 %v412, %v583
      %v585 = vpop.f32.mrb[0].mxu0
      %586 = vmatprep.mubr.bf16.mxu0 0
      %587 = vmatmul.mubr.bf16.gmra.mrb[0].mxu0 %v458
      %v588 = vpop.f32.mrb[0].mxu0
      %v589 = vadd.f32 %v412, %v588
      %v590 = vpop.f32.mrb[0].mxu0
      %v591 = vpop.f32.mrb[0].mxu0
      %v592 = vadd.f32 %v412, %v591
      %v593 = vpop.f32.mrb[0].mxu0
      %594 = vmatprep.mubr.bf16.mxu0 0
      %595 = vmatmul.mubr.bf16.gmra.mrb[0].mxu0 %v459
      %v596 = vpop.f32.mrb[0].mxu0
      %v597 = vadd.f32 %v412, %v596
      %v598 = vpop.f32.mrb[0].mxu0
      %v599 = vpop.f32.mrb[0].mxu0
      %v600 = vadd.f32 %v412, %v599
      %v601 = vpop.f32.mrb[0].mxu0
      %602 = vmatprep.mubr.bf16.mxu0 0
      %603 = vmatmul.mubr.bf16.gmra.mrb[0].mxu0 %v460
      %v604 = vpop.f32.mrb[0].mxu0
      %v605 = vadd.f32 %v412, %v604
      %v606 = vpop.f32.mrb[0].mxu0
      %v607 = vpop.f32.mrb[0].mxu0
      %v608 = vadd.f32 %v412, %v607
      %v609 = vpop.f32.mrb[0].mxu0
      %610 = vmatprep.mubr.bf16.mxu0 0
      %611 = vmatmul.mubr.bf16.gmra.mrb[0].mxu0 %v461
      %v612 = vpop.f32.mrb[0].mxu0
      %v613 = vadd.f32 %v412, %v612
      %v614 = vpop.f32.mrb[0].mxu0
      %v615 = vpop.f32.mrb[0].mxu0
      %v616 = vadd.f32 %v412, %v615
      %v617 = vpop.f32.mrb[0].mxu0
      %618 = vmatprep.mubr.bf16.mxu0 0
      %619 = vmatmul.mubr.bf16.gmra.mrb[0].mxu0 %v462
      %v620 = vpop.f32.mrb[0].mxu0
      %v621 = vadd.f32 %v412, %v620
      %v622 = vpop.f32.mrb[0].mxu0
      %v623 = vpop.f32.mrb[0].mxu0
      %v624 = vadd.f32 %v412, %v623
      %v625 = vpop.f32.mrb[0].mxu0
      %626 = vmatprep.mubr.bf16.mxu0 0
      %627 = vmatmul.mubr.bf16.gmra.mrb[0].mxu0 %v463
      %v628 = vpop.f32.mrb[0].mxu0
      %v629 = vadd.f32 %v412, %v628
      %v630 = vpop.f32.mrb[0].mxu0
      %v631 = vpop.f32.mrb[0].mxu0
      %v632 = vadd.f32 %v412, %v631
      %v633 = vpop.f32.mrb[0].mxu0
      %634 = vdwg.mxu0
      %v635 = vsub.f32 0.0, %v557
      %v636 = vsub.f32 0.0, %v560
      %v637 = vsub.f32 0.0, %v565
      %v638 = vsub.f32 0.0, %v568
      %v639 = vsub.f32 0.0, %v573
      %v640 = vsub.f32 0.0, %v576
      %v641 = vsub.f32 0.0, %v581
      %v642 = vsub.f32 0.0, %v584
      %v643 = vsub.f32 0.0, %v589
      %v644 = vsub.f32 0.0, %v592
      %v645 = vsub.f32 0.0, %v597
      %v646 = vsub.f32 0.0, %v600
      %v647 = vsub.f32 0.0, %v605
      %v648 = vsub.f32 0.0, %v608
      %v649 = vsub.f32 0.0, %v613
      %v650 = vsub.f32 0.0, %v616
      %v651 = vsub.f32 0.0, %v621
      %v652 = vsub.f32 0.0, %v624
      %v653 = vsub.f32 0.0, %v629
      %v654 = vsub.f32 0.0, %v632
      %v655 = vmul.f32 %v635, 1.442695
      %v656 = vpow.pop %v655
      %v657 = vmul.f32 %v636, 1.442695
      %v658 = vpow.pop %v657
      %v659 = vmul.f32 %v637, 1.442695
      %v660 = vpow.pop %v659
      %v661 = vmul.f32 %v638, 1.442695
      %v662 = vpow.pop %v661
      %v663 = vmul.f32 %v639, 1.442695
      %v664 = vpow.pop %v663
      %v665 = vmul.f32 %v640, 1.442695
      %v666 = vpow.pop %v665
      %v667 = vmul.f32 %v641, 1.442695
      %v668 = vpow.pop %v667
      %v669 = vmul.f32 %v642, 1.442695
      %v670 = vpow.pop %v669
      %v671 = vmul.f32 %v643, 1.442695
      %v672 = vpow.pop %v671
      %v673 = vmul.f32 %v644, 1.442695
      %v674 = vpow.pop %v673
      %v675 = vmul.f32 %v645, 1.442695
      %v676 = vpow.pop %v675
      %v677 = vmul.f32 %v646, 1.442695
      %v678 = vpow.pop %v677
      %v679 = vmul.f32 %v647, 1.442695
      %v680 = vpow.pop %v679
      %v681 = vmul.f32 %v648, 1.442695
      %v682 = vpow.pop %v681
      %v683 = vmul.f32 %v649, 1.442695
      %v684 = vpow.pop %v683
      %v685 = vmul.f32 %v650, 1.442695
      %v686 = vpow.pop %v685
      %v687 = vmul.f32 %v651, 1.442695
      %v688 = vpow.pop %v687
      %v689 = vmul.f32 %v652, 1.442695
      %v690 = vpow.pop %v689
      %v691 = vmul.f32 %v653, 1.442695
      %v692 = vpow.pop %v691
      %v693 = vmul.f32 %v654, 1.442695
      %v694 = vpow.pop %v693
      %v695 = vadd.f32 %v656, 1.0
      %v696 = vadd.f32 %v658, 1.0
      %v697 = vadd.f32 %v660, 1.0
      %v698 = vadd.f32 %v662, 1.0
      %v699 = vadd.f32 %v664, 1.0
      %v700 = vadd.f32 %v666, 1.0
      %v701 = vadd.f32 %v668, 1.0
      %v702 = vadd.f32 %v670, 1.0
      %v703 = vadd.f32 %v672, 1.0
      %v704 = vadd.f32 %v674, 1.0
      %v705 = vadd.f32 %v676, 1.0
      %v706 = vadd.f32 %v678, 1.0
      %v707 = vadd.f32 %v680, 1.0
      %v708 = vadd.f32 %v682, 1.0
      %v709 = vadd.f32 %v684, 1.0
      %v710 = vadd.f32 %v686, 1.0
      %v711 = vadd.f32 %v688, 1.0
      %v712 = vadd.f32 %v690, 1.0
      %v713 = vadd.f32 %v692, 1.0
      %v714 = vadd.f32 %v694, 1.0
      %v715 = vrcp.pop %v695
      %v716 = vmul.f32 1.0, %v715
      %v717 = vrcp.pop %v696
      %v718 = vmul.f32 1.0, %v717
      %v719 = vrcp.pop %v697
      %v720 = vmul.f32 1.0, %v719
      %v721 = vrcp.pop %v698
      %v722 = vmul.f32 1.0, %v721
      %v723 = vrcp.pop %v699
      %v724 = vmul.f32 1.0, %v723
      %v725 = vrcp.pop %v700
      %v726 = vmul.f32 1.0, %v725
      %v727 = vrcp.pop %v701
      %v728 = vmul.f32 1.0, %v727
      %v729 = vrcp.pop %v702
      %v730 = vmul.f32 1.0, %v729
      %v731 = vrcp.pop %v703
      %v732 = vmul.f32 1.0, %v731
      %v733 = vrcp.pop %v704
      %v734 = vmul.f32 1.0, %v733
      %v735 = vrcp.pop %v705
      %v736 = vmul.f32 1.0, %v735
      %v737 = vrcp.pop %v706
      %v738 = vmul.f32 1.0, %v737
      %v739 = vrcp.pop %v707
      %v740 = vmul.f32 1.0, %v739
      %v741 = vrcp.pop %v708
      %v742 = vmul.f32 1.0, %v741
      %v743 = vrcp.pop %v709
      %v744 = vmul.f32 1.0, %v743
      %v745 = vrcp.pop %v710
      %v746 = vmul.f32 1.0, %v745
      %v747 = vrcp.pop %v711
      %v748 = vmul.f32 1.0, %v747
      %v749 = vrcp.pop %v712
      %v750 = vmul.f32 1.0, %v749
      %v751 = vrcp.pop %v713
      %v752 = vmul.f32 1.0, %v751
      %v753 = vrcp.pop %v714
      %v754 = vmul.f32 1.0, %v753
      %v755 = vld [vmem:[%s344] sm:$0xff]
      %v756 = vld [vmem:[%s344 + $0x8] sm:$0xff]
      %v757 = vld [vmem:[%s344 + $0x10] sm:$0xff]
      %v758 = vld [vmem:[%s344 + $0x18] sm:$0xff]
      %v759 = vld [vmem:[%s344 + $0x20] sm:$0xff]
      %v760 = vld [vmem:[%s344 + $0x28] sm:$0xff]
      %v761 = vld [vmem:[%s344 + $0x30] sm:$0xff]
      %v762 = vld [vmem:[%s344 + $0x38] sm:$0xff]
      %v763 = vld [vmem:[%s344 + $0x40] sm:$0xff]
      %v764 = vld [vmem:[%s344 + $0x48] sm:$0xff]
      %v765 = vld [vmem:[%s344 + $0x50] sm:$0xff]
      %v766 = vld [vmem:[%s344 + $0x58] sm:$0xff]
      %v767 = vld [vmem:[%s344 + $0x60] sm:$0xff]
      %v768 = vld [vmem:[%s344 + $0x68] sm:$0xff]
      %v769 = vld [vmem:[%s344 + $0x70] sm:$0xff]
      %v770 = vld [vmem:[%s344 + $0x78] sm:$0xff]
      %v771 = vld [vmem:[%s344 + $0x80] sm:$0xff]
      %v772 = vld [vmem:[%s344 + $0x88] sm:$0xff]
      %v773 = vld [vmem:[%s344 + $0x90] sm:$0xff]
      %v774 = vld [vmem:[%s344 + $0x98] sm:$0xff]
      %v775 = vmul.f32 %v716, %v755
      %v776 = vmul.f32 %v718, %v756
      %v777 = vmul.f32 %v720, %v757
      %v778 = vmul.f32 %v722, %v758
      %v779 = vmul.f32 %v724, %v759
      %v780 = vmul.f32 %v726, %v760
      %v781 = vmul.f32 %v728, %v761
      %v782 = vmul.f32 %v730, %v762
      %v783 = vmul.f32 %v732, %v763
      %v784 = vmul.f32 %v734, %v764
      %v785 = vmul.f32 %v736, %v765
      %v786 = vmul.f32 %v738, %v766
      %v787 = vmul.f32 %v740, %v767
      %v788 = vmul.f32 %v742, %v768
      %v789 = vmul.f32 %v744, %v769
      %v790 = vmul.f32 %v746, %v770
      %v791 = vmul.f32 %v748, %v771
      %v792 = vmul.f32 %v750, %v772
      %v793 = vmul.f32 %v752, %v773
      %v794 = vmul.f32 %v754, %v774
      %v795 = vsub.f32 1.0, %v716
      %v796 = vsub.f32 1.0, %v718
      %v797 = vsub.f32 1.0, %v720
      %v798 = vsub.f32 1.0, %v722
      %v799 = vsub.f32 1.0, %v724
      %v800 = vsub.f32 1.0, %v726
      %v801 = vsub.f32 1.0, %v728
      %v802 = vsub.f32 1.0, %v730
      %v803 = vsub.f32 1.0, %v732
      %v804 = vsub.f32 1.0, %v734
      %v805 = vsub.f32 1.0, %v736
      %v806 = vsub.f32 1.0, %v738
      %v807 = vsub.f32 1.0, %v740
      %v808 = vsub.f32 1.0, %v742
      %v809 = vsub.f32 1.0, %v744
      %v810 = vsub.f32 1.0, %v746
      %v811 = vsub.f32 1.0, %v748
      %v812 = vsub.f32 1.0, %v750
      %v813 = vsub.f32 1.0, %v752
      %v814 = vsub.f32 1.0, %v754
      %v815 = vld [vmem:[%s350] sm:$0xff]
      %v816 = vld [vmem:[%s350 + $0x8] sm:$0xff]
      %v817 = vld [vmem:[%s350 + $0x10] sm:$0xff]
      %v818 = vld [vmem:[%s350 + $0x18] sm:$0xff]
      %v819 = vld [vmem:[%s350 + $0x20] sm:$0xff]
      %v820 = vld [vmem:[%s350 + $0x28] sm:$0xff]
      %v821 = vld [vmem:[%s350 + $0x30] sm:$0xff]
      %v822 = vld [vmem:[%s350 + $0x38] sm:$0xff]
      %v823 = vld [vmem:[%s350 + $0x40] sm:$0xff]
      %v824 = vld [vmem:[%s350 + $0x48] sm:$0xff]
      %v825 = vld [vmem:[%s350 + $0x50] sm:$0xff]
      %v826 = vld [vmem:[%s350 + $0x58] sm:$0xff]
      %v827 = vld [vmem:[%s350 + $0x60] sm:$0xff]
      %v828 = vld [vmem:[%s350 + $0x68] sm:$0xff]
      %v829 = vld [vmem:[%s350 + $0x70] sm:$0xff]
      %v830 = vld [vmem:[%s350 + $0x78] sm:$0xff]
      %v831 = vld [vmem:[%s350 + $0x80] sm:$0xff]
      %v832 = vld [vmem:[%s350 + $0x88] sm:$0xff]
      %v833 = vld [vmem:[%s350 + $0x90] sm:$0xff]
      %v834 = vld [vmem:[%s350 + $0x98] sm:$0xff]
      %v835 = vmul.f32 %v795, %v815
      %v836 = vmul.f32 %v796, %v816
      %v837 = vmul.f32 %v797, %v817
      %v838 = vmul.f32 %v798, %v818
      %v839 = vmul.f32 %v799, %v819
      %v840 = vmul.f32 %v800, %v820
      %v841 = vmul.f32 %v801, %v821
      %v842 = vmul.f32 %v802, %v822
      %v843 = vmul.f32 %v803, %v823
      %v844 = vmul.f32 %v804, %v824
      %v845 = vmul.f32 %v805, %v825
      %v846 = vmul.f32 %v806, %v826
      %v847 = vmul.f32 %v807, %v827
      %v848 = vmul.f32 %v808, %v828
      %v849 = vmul.f32 %v809, %v829
      %v850 = vmul.f32 %v810, %v830
      %v851 = vmul.f32 %v811, %v831
      %v852 = vmul.f32 %v812, %v832
      %v853 = vmul.f32 %v813, %v833
      %v854 = vmul.f32 %v814, %v834
      %v855 = vadd.f32 %v775, %v835
      %v856 = vadd.f32 %v776, %v836
      %v857 = vadd.f32 %v777, %v837
      %v858 = vadd.f32 %v778, %v838
      %v859 = vadd.f32 %v779, %v839
      %v860 = vadd.f32 %v780, %v840
      %v861 = vadd.f32 %v781, %v841
      %v862 = vadd.f32 %v782, %v842
      %v863 = vadd.f32 %v783, %v843
      %v864 = vadd.f32 %v784, %v844
      %v865 = vadd.f32 %v785, %v845
      %v866 = vadd.f32 %v786, %v846
      %v867 = vadd.f32 %v787, %v847
      %v868 = vadd.f32 %v788, %v848
      %v869 = vadd.f32 %v789, %v849
      %v870 = vadd.f32 %v790, %v850
      %v871 = vadd.f32 %v791, %v851
      %v872 = vadd.f32 %v792, %v852
      %v873 = vadd.f32 %v793, %v853
      %v874 = vadd.f32 %v794, %v854
      %v875 = vld [vmem:[%s356] sm:$0xff]
      %v876 = vld [vmem:[%s356 + $0x8] sm:$0xff]
      %v877 = vld [vmem:[%s356 + $0x10] sm:$0xff]
      %v878 = vld [vmem:[%s356 + $0x18] sm:$0xff]
      %v879 = vld [vmem:[%s356 + $0x20] sm:$0xff]
      %v880 = vld [vmem:[%s356 + $0x28] sm:$0xff]
      %v881 = vld [vmem:[%s356 + $0x30] sm:$0xff]
      %v882 = vld [vmem:[%s356 + $0x38] sm:$0xff]
      %v883 = vld [vmem:[%s356 + $0x40] sm:$0xff]
      %v884 = vld [vmem:[%s356 + $0x48] sm:$0xff]
      %v885 = vld [vmem:[%s356 + $0x50] sm:$0xff]
      %v886 = vld [vmem:[%s356 + $0x58] sm:$0xff]
      %v887 = vld [vmem:[%s356 + $0x60] sm:$0xff]
      %v888 = vld [vmem:[%s356 + $0x68] sm:$0xff]
      %v889 = vld [vmem:[%s356 + $0x70] sm:$0xff]
      %v890 = vld [vmem:[%s356 + $0x78] sm:$0xff]
      %v891 = vld [vmem:[%s356 + $0x80] sm:$0xff]
      %v892 = vld [vmem:[%s356 + $0x88] sm:$0xff]
      %v893 = vld [vmem:[%s356 + $0x90] sm:$0xff]
      %v894 = vld [vmem:[%s356 + $0x98] sm:$0xff]
      %v895 = vadd.f32 %v855, %v875
      %v896 = vadd.f32 %v856, %v876
      %v897 = vadd.f32 %v857, %v877
      %v898 = vadd.f32 %v858, %v878
      %v899 = vadd.f32 %v859, %v879
      %v900 = vadd.f32 %v860, %v880
      %v901 = vadd.f32 %v861, %v881
      %v902 = vadd.f32 %v862, %v882
      %v903 = vadd.f32 %v863, %v883
      %v904 = vadd.f32 %v864, %v884
      %v905 = vadd.f32 %v865, %v885
      %v906 = vadd.f32 %v866, %v886
      %v907 = vadd.f32 %v867, %v887
      %v908 = vadd.f32 %v868, %v888
      %v909 = vadd.f32 %v869, %v889
      %v910 = vadd.f32 %v870, %v890
      %v911 = vadd.f32 %v871, %v891
      %v912 = vadd.f32 %v872, %v892
      %v913 = vadd.f32 %v873, %v893
      %v914 = vadd.f32 %v874, %v894
      %v915 = vld [vmem:[%s362] sm:$0xff]
      %v916 = vld [vmem:[%s362 + $0x8] sm:$0xff]
      %v917 = vld [vmem:[%s362 + $0x10] sm:$0xff]
      %v918 = vld [vmem:[%s362 + $0x18] sm:$0xff]
      %v919 = vld [vmem:[%s362 + $0x20] sm:$0xff]
      %v920 = vld [vmem:[%s362 + $0x28] sm:$0xff]
      %v921 = vld [vmem:[%s362 + $0x30] sm:$0xff]
      %v922 = vld [vmem:[%s362 + $0x38] sm:$0xff]
      %v923 = vld [vmem:[%s362 + $0x40] sm:$0xff]
      %v924 = vld [vmem:[%s362 + $0x48] sm:$0xff]
      %v925 = vld [vmem:[%s362 + $0x50] sm:$0xff]
      %v926 = vld [vmem:[%s362 + $0x58] sm:$0xff]
      %v927 = vld [vmem:[%s362 + $0x60] sm:$0xff]
      %v928 = vld [vmem:[%s362 + $0x68] sm:$0xff]
      %v929 = vld [vmem:[%s362 + $0x70] sm:$0xff]
      %v930 = vld [vmem:[%s362 + $0x78] sm:$0xff]
      %v931 = vld [vmem:[%s362 + $0x80] sm:$0xff]
      %v932 = vld [vmem:[%s362 + $0x88] sm:$0xff]
      %v933 = vld [vmem:[%s362 + $0x90] sm:$0xff]
      %v934 = vld [vmem:[%s362 + $0x98] sm:$0xff]
      %v935 = vadd.f32 %v895, %v915
      %v936 = vadd.f32 %v896, %v916
      %v937 = vadd.f32 %v897, %v917
      %v938 = vadd.f32 %v898, %v918
      %v939 = vadd.f32 %v899, %v919
      %v940 = vadd.f32 %v900, %v920
      %v941 = vadd.f32 %v901, %v921
      %v942 = vadd.f32 %v902, %v922
      %v943 = vadd.f32 %v903, %v923
      %v944 = vadd.f32 %v904, %v924
      %v945 = vadd.f32 %v905, %v925
      %v946 = vadd.f32 %v906, %v926
      %v947 = vadd.f32 %v907, %v927
      %v948 = vadd.f32 %v908, %v928
      %v949 = vadd.f32 %v909, %v929
      %v950 = vadd.f32 %v910, %v930
      %v951 = vadd.f32 %v911, %v931
      %v952 = vadd.f32 %v912, %v932
      %v953 = vadd.f32 %v913, %v933
      %v954 = vadd.f32 %v914, %v934
      %vm955 = vcmask 523264
      %956 = vst.msk [vmem:[%s368] sm:$0xff] %vm955, %v935
      %957 = vst.msk [vmem:[%s368 + $0x8] sm:$0xff] %vm955, %v936
      %958 = vst.msk [vmem:[%s368 + $0x10] sm:$0xff] %vm955, %v937
      %959 = vst.msk [vmem:[%s368 + $0x18] sm:$0xff] %vm955, %v938
      %960 = vst.msk [vmem:[%s368 + $0x20] sm:$0xff] %vm955, %v939
      %961 = vst.msk [vmem:[%s368 + $0x28] sm:$0xff] %vm955, %v940
      %962 = vst.msk [vmem:[%s368 + $0x30] sm:$0xff] %vm955, %v941
      %963 = vst.msk [vmem:[%s368 + $0x38] sm:$0xff] %vm955, %v942
      %964 = vst.msk [vmem:[%s368 + $0x40] sm:$0xff] %vm955, %v943
      %965 = vst.msk [vmem:[%s368 + $0x48] sm:$0xff] %vm955, %v944
      %966 = vst.msk [vmem:[%s368 + $0x50] sm:$0xff] %vm955, %v945
      %967 = vst.msk [vmem:[%s368 + $0x58] sm:$0xff] %vm955, %v946
      %968 = vst.msk [vmem:[%s368 + $0x60] sm:$0xff] %vm955, %v947
      %969 = vst.msk [vmem:[%s368 + $0x68] sm:$0xff] %vm955, %v948
      %970 = vst.msk [vmem:[%s368 + $0x70] sm:$0xff] %vm955, %v949
      %971 = vst.msk [vmem:[%s368 + $0x78] sm:$0xff] %vm955, %v950
      %972 = vst.msk [vmem:[%s368 + $0x80] sm:$0xff] %vm955, %v951
      %973 = vst.msk [vmem:[%s368 + $0x88] sm:$0xff] %vm955, %v952
      %974 = vst.msk [vmem:[%s368 + $0x90] sm:$0xff] %vm955, %v953
      %975 = vst.msk [vmem:[%s368 + $0x98] sm:$0xff] %vm955, %v954
      %s976 = smul.u32 20, %s18
      %p977 = scmp.lt.s32.totalorder %s976, 39
      %s978 = scalar_select %p977, %s976, 39
      %s979 = smul.addr %s978, 8
      %s980 = scalar_lea.vmem %s7, %s979
      // Predicated region
      $region49: #{transformerfusion_forward.83} parent=47 // pred_check
        %p981 = pneg %p208
      $region50: #{transformerfusion_forward.83} parent=47 // pred_check_branch
        %983 = sbr.rel (%p981) target = $region52
      $region51: #{transformerfusion_forward.83} parent=47 // pred_region
        %s984 = smul.u32 20, %s18
      $region52: #{transformerfusion_forward.83} parent=47 // pred_fallthru
        _
    $region48: #{transformerfusion_forward.83} parent=5 // pred_fallthru
      _
    %p985 = scmp.le.s32.totalorder 2, %s13
    // Predicated region
    $region53: #{transformerfusion_forward.83} parent=5 // pred_check
      %p986 = pneg %p985
    $region54: #{transformerfusion_forward.83} parent=5 // pred_check_branch
      %988 = sbr.rel (%p986) target = $region56
    $region55: #{transformerfusion_forward.83} parent=5 // pred_region
      %s989 = ssub.s32 %s13, 2
      // Predicated region
      $region57: #{transformerfusion_forward.83} parent=55 // pred_check
        %p990 = pneg %p214
      $region58: #{transformerfusion_forward.83} parent=55 // pred_check_branch
        %992 = sbr.rel (%p990) target = $region60
      $region59: #{transformerfusion_forward.83} parent=55 // pred_region
        %s993 = smul.u32 20, %s19
        %p994 = scmp.lt.s32.totalorder %s993, 39
        %s995 = scalar_select %p994, %s993, 39
        %s996 = smul.addr %s995, 8
        %s997 = scalar_lea.vmem %s7, %s996
      $region60: #{transformerfusion_forward.83} parent=55 // pred_fallthru
        _
    $region56: #{transformerfusion_forward.83} parent=5 // pred_fallthru
      _
  $region6: #{transformerfusion_forward.83} parent=0 // loop_footer
    %s17 = sadd.s32 1, %s13
  $region7: #{transformerfusion_forward.83} parent=0 // loop_footer_branch
    %12 = sbr.rel target = $region3
  $region8: #{transformerfusion_forward.83} parent=0 // loop_exit
    _

</llo_original>
